<compile_context>
chip_gen: v7x
topology: tpu7x:2x2x1
jax: 0.10.0
libtpu: 0.0.40
codegen_flags: <defaults>
</compile_context>

<pallas_src>
import functools
import math

import jax
import jax.numpy as jnp
from jax.experimental import pallas as pl
from jax.experimental.pallas import tpu as pltpu

_HIDDEN = (512, 512, 512, 256, 64, 1)
_TK_MAX = 4096                      # bf16 W1 K-tile: 4096*512*2 B = 4 MiB/buffer
_VMEM_LIMIT = 32 * 1024 * 1024      # safe on v5e/v6e (128 MiB) and v7x (64 MiB)


def _round_up(x, m):
    return ((x + m - 1) // m) * m


def _padded_k(k):
    # Single resident K block when it fits; otherwise a multiple of the K tile.
    return _round_up(k, 128) if k <= _TK_MAX else _round_up(k, _TK_MAX)


# ----------------------------------------------------------------------------
# Fused kernel: [pad+cast x] -> Linear(+ReLU) -> 4x Linear/ReLU -> Linear/Sigmoid
# ----------------------------------------------------------------------------
def _dense_mlp_kernel(x_ref,
                      w1_ref, b1_ref, w2_ref, b2_ref, w3_ref, b3_ref,
                      w4_ref, b4_ref, w5_ref, b5_ref, w6_ref, b6_ref,
                      o_ref, xb_ref, *acc_scratch, k_steps):
    k_logical = x_ref.shape[1]          # natural spec_length (e.g. 4000)
    k_padded = xb_ref.shape[1]          # padded K (e.g. 4096)
    tk = w1_ref.shape[0]                # layer-1 K tile

    def stage_x():
        # bf16 staging of the input block in VMEM; pad columns explicitly
        # zeroed so they pair with W1's zero-padded rows (never NaN * 0).
        if k_padded > k_logical:
            xb_ref[...] = jnp.zeros_like(xb_ref)
        xb_ref[:, :k_logical] = x_ref[...].astype(xb_ref.dtype)

    def tail(h1):
        # 512 -> 512 -> 512 -> 256 -> 64 -> 1, all weights VMEM-resident.
        def dense(h, w_ref, b_ref):
            return jnp.dot(h.astype(w_ref.dtype), w_ref[...],
                           preferred_element_type=jnp.float32) + b_ref[...]

        h = jnp.maximum(h1, 0.0)                            # ReLU(layer 1)
        h = jnp.maximum(dense(h, w2_ref, b2_ref), 0.0)
        h = jnp.maximum(dense(h, w3_ref, b3_ref), 0.0)
        h = jnp.maximum(dense(h, w4_ref, b4_ref), 0.0)
        h = jnp.maximum(dense(h, w5_ref, b5_ref), 0.0)
        o_ref[...] = jax.nn.sigmoid(dense(h, w6_ref, b6_ref)).astype(o_ref.dtype)

    if k_steps == 1:
        # Single K step: no accumulator scratch, no pl.when phases.
        stage_x()
        h1 = jnp.dot(xb_ref[...], w1_ref[...],
                     preferred_element_type=jnp.float32) + b1_ref[...]
        tail(h1)
    else:
        # General path (very large spec_length): stream W1 along K.
        acc_ref, = acc_scratch
        k = pl.program_id(0)

        @pl.when(k == 0)
        def _():
            stage_x()
            acc_ref[...] = jnp.zeros_like(acc_ref)

        off = pl.multiple_of(k * tk, tk)
        acc_ref[...] += jnp.dot(xb_ref[:, pl.ds(off, tk)], w1_ref[...],
                                preferred_element_type=jnp.float32)

        @pl.when(k == k_steps - 1)
        def _():
            tail(acc_ref[...] + b1_ref[...])


def dense_forward_kernel(x, params):
    """Whole Dense.forward in one pallas_call (one launch, weights in VMEM)."""
    m, k = x.shape
    w1, b1 = params[0]
    kp, n1 = w1.shape
    tk = kp if kp <= _TK_MAX else _TK_MAX
    assert kp % tk == 0
    k_steps = kp // tk

    flat_inputs = [x]
    in_specs = [pl.BlockSpec((m, k), lambda i: (0, 0))]            # x resident
    flat_inputs += [w1, b1]
    in_specs += [pl.BlockSpec((tk, n1), lambda i: (i, 0)),          # W1 streamed
                 pl.BlockSpec(b1.shape, lambda i: (0, 0))]
    for (w, b) in params[1:]:                                       # tail resident
        flat_inputs += [w, b]
        in_specs += [pl.BlockSpec(w.shape, lambda i: (0, 0)),
                     pl.BlockSpec(b.shape, lambda i: (0, 0))]

    scratch = [pltpu.VMEM((m, kp), jnp.bfloat16)]                   # padded bf16 x
    if k_steps > 1:
        scratch.append(pltpu.VMEM((m, _HIDDEN[0]), jnp.float32))    # layer-1 acc

    kernel = functools.partial(_dense_mlp_kernel, k_steps=k_steps)

    return pl.pallas_call(
        kernel,
        out_shape=jax.ShapeDtypeStruct((m, 1), jnp.float32),
        grid_spec=pltpu.PrefetchScalarGridSpec(
            num_scalar_prefetch=0,
            grid=(k_steps,),
            in_specs=in_specs,
            out_specs=pl.BlockSpec((m, 1), lambda i: (0, 0)),
            scratch_shapes=scratch,
        ),
        compiler_params=pltpu.CompilerParams(
            dimension_semantics=("arbitrary",),
            vmem_limit_bytes=_VMEM_LIMIT,
        ),
    )(*flat_inputs)


# ----------------------------------------------------------------------------
# Parameters (PyTorch-default Linear init); transpose/cast/pad hoisted to init
# ----------------------------------------------------------------------------
def init_params(key, spec_length):
    dims = (spec_length,) + _HIDDEN
    params = []
    for i in range(len(_HIDDEN)):
        key, kw, kb = jax.random.split(key, 3)
        fan_in, fan_out = dims[i], dims[i + 1]
        bound = 1.0 / math.sqrt(fan_in)
        w = jax.random.uniform(kw, (fan_in, fan_out), jnp.float32, -bound, bound)
        b = jax.random.uniform(kb, (fan_out,), jnp.float32, -bound, bound)
        if i == 0:
            kpad = _padded_k(fan_in)
            if kpad != fan_in:                      # pad ONCE, not per forward
                w = jnp.pad(w, ((0, kpad - fan_in), (0, 0)))
        params.append((w.astype(jnp.bfloat16),
                       b.reshape(1, fan_out).astype(jnp.float32)))
    return params


# ----------------------------------------------------------------------------
# Forward pass (Dense.forward, eval mode) — a single kernel launch under jit
# ----------------------------------------------------------------------------
@jax.jit
def forward(params, x):
    # No wrapper-side pad/cast dispatch: x enters at its natural (M, K) f32
    # shape; padding + bf16 cast happen in VMEM inside the kernel.
    return dense_forward_kernel(x, params)


def reference_forward(params, x):
    """Pure-JAX reference mirroring the kernel's bf16-input / f32-accum math."""
    (w1, _) = params[0]
    kp = w1.shape[0]
    h = jnp.zeros((x.shape[0], kp), jnp.float32).at[:, :x.shape[1]].set(x)
    for i, (w, b) in enumerate(params):
        y = jnp.dot(h.astype(jnp.bfloat16), w,
                    preferred_element_type=jnp.float32) + b
        h = jnp.maximum(y, 0.0) if i < len(params) - 1 else jax.nn.sigmoid(y)
    return h


# TODO(synk): get_q (torch.distributions.Bernoulli wrapper) returns a
# distribution object, not a tensor op — no Pallas equivalent; forward() gives
# the Bernoulli probability p directly.

# ----------------------------------------------------------------------------
if __name__ == "__main__":
    n, spec_length = 8, 4000          # small batch, spectrum-length input

    key = jax.random.PRNGKey(0)
    kx, kparams = jax.random.split(key)
    x = jax.random.normal(kx, (n, spec_length), jnp.float32)
    params = init_params(kparams, spec_length)

    out = jax.block_until_ready(forward(params, x))

    assert out.shape == (n, 1), out.shape
    assert out.dtype == jnp.float32, out.dtype
    assert bool(jnp.all((out >= 0.0) & (out <= 1.0)))

    ref = reference_forward(params, x)
    assert bool(jnp.allclose(out, ref, atol=2e-3, rtol=2e-2)), (
        float(jnp.max(jnp.abs(out - ref))))

    print("KERNEL_OK")
</pallas_src>

<mosaic_0001>
module attributes {stable_mosaic.version = 11 : i64} {
  func.func @_dense_mlp_kernel(%arg0: i32, %arg1: memref<8x4000xf32, #tpu.memory_space<vmem>>, %arg2: memref<4096x512xbf16, #tpu.memory_space<vmem>>, %arg3: memref<1x512xf32, #tpu.memory_space<vmem>>, %arg4: memref<512x512xbf16, #tpu.memory_space<vmem>>, %arg5: memref<1x512xf32, #tpu.memory_space<vmem>>, %arg6: memref<512x512xbf16, #tpu.memory_space<vmem>>, %arg7: memref<1x512xf32, #tpu.memory_space<vmem>>, %arg8: memref<512x256xbf16, #tpu.memory_space<vmem>>, %arg9: memref<1x256xf32, #tpu.memory_space<vmem>>, %arg10: memref<256x64xbf16, #tpu.memory_space<vmem>>, %arg11: memref<1x64xf32, #tpu.memory_space<vmem>>, %arg12: memref<64x1xbf16, #tpu.memory_space<vmem>>, %arg13: memref<1x1xf32, #tpu.memory_space<vmem>>, %arg14: memref<8x1xf32, #tpu.memory_space<vmem>>, %arg15: memref<8x4096xbf16, #tpu.memory_space<vmem>>) attributes {dimension_semantics = [#tpu.dimension_semantics<arbitrary>], iteration_bounds = array<i64: 1>, scalar_prefetch = 0 : i64, scratch_operands = 1 : i64, tpu.core_type = #tpu.core_type<tc>, window_params = [{pipeline_mode = #tpu.pipeline_mode<synchronous>, transform_indices = @transform_0, window_bounds = array<i64: 8, 4000>}, {transform_indices = @transform_1, window_bounds = array<i64: 4096, 512>}, {pipeline_mode = #tpu.pipeline_mode<synchronous>, transform_indices = @transform_2, window_bounds = array<i64: 1, 512>}, {pipeline_mode = #tpu.pipeline_mode<synchronous>, transform_indices = @transform_3, window_bounds = array<i64: 512, 512>}, {pipeline_mode = #tpu.pipeline_mode<synchronous>, transform_indices = @transform_4, window_bounds = array<i64: 1, 512>}, {pipeline_mode = #tpu.pipeline_mode<synchronous>, transform_indices = @transform_5, window_bounds = array<i64: 512, 512>}, {pipeline_mode = #tpu.pipeline_mode<synchronous>, transform_indices = @transform_6, window_bounds = array<i64: 1, 512>}, {pipeline_mode = #tpu.pipeline_mode<synchronous>, transform_indices = @transform_7, window_bounds = array<i64: 512, 256>}, {pipeline_mode = #tpu.pipeline_mode<synchronous>, transform_indices = @transform_8, window_bounds = array<i64: 1, 256>}, {pipeline_mode = #tpu.pipeline_mode<synchronous>, transform_indices = @transform_9, window_bounds = array<i64: 256, 64>}, {pipeline_mode = #tpu.pipeline_mode<synchronous>, transform_indices = @transform_10, window_bounds = array<i64: 1, 64>}, {pipeline_mode = #tpu.pipeline_mode<synchronous>, transform_indices = @transform_11, window_bounds = array<i64: 64, 1>}, {pipeline_mode = #tpu.pipeline_mode<synchronous>, transform_indices = @transform_12, window_bounds = array<i64: 1, 1>}, {pipeline_mode = #tpu.pipeline_mode<synchronous>, transform_indices = @transform_13, window_bounds = array<i64: 8, 1>}]} {
    %cst = arith.constant 0.000000e+00 : bf16
    %0 = vector.broadcast %cst : bf16 to vector<8x4096xbf16>
    %c0 = arith.constant 0 : index
    %c0_0 = arith.constant 0 : index
    %1 = vector.load %arg15[%c0, %c0_0] : memref<8x4096xbf16, #tpu.memory_space<vmem>>, vector<8x4096xbf16>
    tpu.vector_store %arg15[%c0, %c0_0], %0 {strides = array<i32>} : memref<8x4096xbf16, #tpu.memory_space<vmem>>, vector<8x4096xbf16>,
    %c0_1 = arith.constant 0 : index
    %c0_2 = arith.constant 0 : index
    %2 = vector.load %arg1[%c0_1, %c0_2] : memref<8x4000xf32, #tpu.memory_space<vmem>>, vector<8x4000xf32>
    %3 = arith.truncf %2 : vector<8x4000xf32> to vector<8x4000xbf16>
    %c0_3 = arith.constant 0 : index
    %c0_4 = arith.constant 0 : index
    %4 = vector.load %arg15[%c0_3, %c0_4] : memref<8x4096xbf16, #tpu.memory_space<vmem>>, vector<8x4000xbf16>
    tpu.vector_store %arg15[%c0_3, %c0_4], %3 {strides = array<i32>} : memref<8x4096xbf16, #tpu.memory_space<vmem>>, vector<8x4000xbf16>,
    %c0_5 = arith.constant 0 : index
    %c0_6 = arith.constant 0 : index
    %5 = vector.load %arg15[%c0_5, %c0_6] : memref<8x4096xbf16, #tpu.memory_space<vmem>>, vector<8x4096xbf16>
    %c0_7 = arith.constant 0 : index
    %c0_8 = arith.constant 0 : index
    %6 = vector.load %arg2[%c0_7, %c0_8] : memref<4096x512xbf16, #tpu.memory_space<vmem>>, vector<4096x512xbf16>
    %cst_9 = arith.constant dense<0.000000e+00> : vector<8x512xf32>
    %7 = tpu.matmul %5, %6, %cst_9 {dimension_numbers = #tpu.dot_dimension_numbers<[1], [0], [0], [1], [0, 0, 1, 1], [], []>} : vector<8x4096xbf16>, vector<4096x512xbf16>, vector<8x512xf32> -> vector<8x512xf32>
    %c0_10 = arith.constant 0 : index
    %c0_11 = arith.constant 0 : index
    %8 = vector.load %arg3[%c0_10, %c0_11] : memref<1x512xf32, #tpu.memory_space<vmem>>, vector<1x512xf32>
    %9 = vector.broadcast %8 : vector<1x512xf32> to vector<8x512xf32>
    %10 = arith.addf %7, %9 : vector<8x512xf32>
    %cst_12 = arith.constant 0.000000e+00 : f32
    %11 = vector.broadcast %cst_12 : f32 to vector<8x512xf32>
    %12 = arith.maximumf %10, %11 : vector<8x512xf32>
    %13 = arith.truncf %12 : vector<8x512xf32> to vector<8x512xbf16>
    %c0_13 = arith.constant 0 : index
    %c0_14 = arith.constant 0 : index
    %14 = vector.load %arg4[%c0_13, %c0_14] : memref<512x512xbf16, #tpu.memory_space<vmem>>, vector<512x512xbf16>
    %cst_15 = arith.constant dense<0.000000e+00> : vector<8x512xf32>
    %15 = tpu.matmul %13, %14, %cst_15 {dimension_numbers = #tpu.dot_dimension_numbers<[1], [0], [0], [1], [0, 0, 1, 1], [], []>} : vector<8x512xbf16>, vector<512x512xbf16>, vector<8x512xf32> -> vector<8x512xf32>
    %c0_16 = arith.constant 0 : index
    %c0_17 = arith.constant 0 : index
    %16 = vector.load %arg5[%c0_16, %c0_17] : memref<1x512xf32, #tpu.memory_space<vmem>>, vector<1x512xf32>
    %17 = vector.broadcast %16 : vector<1x512xf32> to vector<8x512xf32>
    %18 = arith.addf %15, %17 : vector<8x512xf32>
    %cst_18 = arith.constant 0.000000e+00 : f32
    %19 = vector.broadcast %cst_18 : f32 to vector<8x512xf32>
    %20 = arith.maximumf %18, %19 : vector<8x512xf32>
    %21 = arith.truncf %20 : vector<8x512xf32> to vector<8x512xbf16>
    %c0_19 = arith.constant 0 : index
    %c0_20 = arith.constant 0 : index
    %22 = vector.load %arg6[%c0_19, %c0_20] : memref<512x512xbf16, #tpu.memory_space<vmem>>, vector<512x512xbf16>
    %cst_21 = arith.constant dense<0.000000e+00> : vector<8x512xf32>
    %23 = tpu.matmul %21, %22, %cst_21 {dimension_numbers = #tpu.dot_dimension_numbers<[1], [0], [0], [1], [0, 0, 1, 1], [], []>} : vector<8x512xbf16>, vector<512x512xbf16>, vector<8x512xf32> -> vector<8x512xf32>
    %c0_22 = arith.constant 0 : index
    %c0_23 = arith.constant 0 : index
    %24 = vector.load %arg7[%c0_22, %c0_23] : memref<1x512xf32, #tpu.memory_space<vmem>>, vector<1x512xf32>
    %25 = vector.broadcast %24 : vector<1x512xf32> to vector<8x512xf32>
    %26 = arith.addf %23, %25 : vector<8x512xf32>
    %cst_24 = arith.constant 0.000000e+00 : f32
    %27 = vector.broadcast %cst_24 : f32 to vector<8x512xf32>
    %28 = arith.maximumf %26, %27 : vector<8x512xf32>
    %29 = arith.truncf %28 : vector<8x512xf32> to vector<8x512xbf16>
    %c0_25 = arith.constant 0 : index
    %c0_26 = arith.constant 0 : index
    %30 = vector.load %arg8[%c0_25, %c0_26] : memref<512x256xbf16, #tpu.memory_space<vmem>>, vector<512x256xbf16>
    %cst_27 = arith.constant dense<0.000000e+00> : vector<8x256xf32>
    %31 = tpu.matmul %29, %30, %cst_27 {dimension_numbers = #tpu.dot_dimension_numbers<[1], [0], [0], [1], [0, 0, 1, 1], [], []>} : vector<8x512xbf16>, vector<512x256xbf16>, vector<8x256xf32> -> vector<8x256xf32>
    %c0_28 = arith.constant 0 : index
    %c0_29 = arith.constant 0 : index
    %32 = vector.load %arg9[%c0_28, %c0_29] : memref<1x256xf32, #tpu.memory_space<vmem>>, vector<1x256xf32>
    %33 = vector.broadcast %32 : vector<1x256xf32> to vector<8x256xf32>
    %34 = arith.addf %31, %33 : vector<8x256xf32>
    %cst_30 = arith.constant 0.000000e+00 : f32
    %35 = vector.broadcast %cst_30 : f32 to vector<8x256xf32>
    %36 = arith.maximumf %34, %35 : vector<8x256xf32>
    %37 = arith.truncf %36 : vector<8x256xf32> to vector<8x256xbf16>
    %c0_31 = arith.constant 0 : index
    %c0_32 = arith.constant 0 : index
    %38 = vector.load %arg10[%c0_31, %c0_32] : memref<256x64xbf16, #tpu.memory_space<vmem>>, vector<256x64xbf16>
    %cst_33 = arith.constant dense<0.000000e+00> : vector<8x64xf32>
    %39 = tpu.matmul %37, %38, %cst_33 {dimension_numbers = #tpu.dot_dimension_numbers<[1], [0], [0], [1], [0, 0, 1, 1], [], []>} : vector<8x256xbf16>, vector<256x64xbf16>, vector<8x64xf32> -> vector<8x64xf32>
    %c0_34 = arith.constant 0 : index
    %c0_35 = arith.constant 0 : index
    %40 = vector.load %arg11[%c0_34, %c0_35] : memref<1x64xf32, #tpu.memory_space<vmem>>, vector<1x64xf32>
    %41 = vector.broadcast %40 : vector<1x64xf32> to vector<8x64xf32>
    %42 = arith.addf %39, %41 : vector<8x64xf32>
    %cst_36 = arith.constant 0.000000e+00 : f32
    %43 = vector.broadcast %cst_36 : f32 to vector<8x64xf32>
    %44 = arith.maximumf %42, %43 : vector<8x64xf32>
    %45 = arith.truncf %44 : vector<8x64xf32> to vector<8x64xbf16>
    %c0_37 = arith.constant 0 : index
    %c0_38 = arith.constant 0 : index
    %46 = vector.load %arg12[%c0_37, %c0_38] : memref<64x1xbf16, #tpu.memory_space<vmem>>, vector<64x1xbf16>
    %cst_39 = arith.constant dense<0.000000e+00> : vector<8x1xf32>
    %47 = tpu.matmul %45, %46, %cst_39 {dimension_numbers = #tpu.dot_dimension_numbers<[1], [0], [0], [1], [0, 0, 1, 1], [], []>} : vector<8x64xbf16>, vector<64x1xbf16>, vector<8x1xf32> -> vector<8x1xf32>
    %c0_40 = arith.constant 0 : index
    %c0_41 = arith.constant 0 : index
    %48 = vector.load %arg13[%c0_40, %c0_41] : memref<1x1xf32, #tpu.memory_space<vmem>>, vector<1x1xf32>
    %49 = vector.broadcast %48 : vector<1x1xf32> to vector<8x1xf32>
    %50 = arith.addf %47, %49 : vector<8x1xf32>
    %51 = arith.negf %50 : vector<8x1xf32>
    %52 = math.exp %51 : vector<8x1xf32>
    %cst_42 = arith.constant 1.000000e+00 : f32
    %53 = vector.broadcast %cst_42 : f32 to vector<8x1xf32>
    %54 = arith.addf %53, %52 : vector<8x1xf32>
    %55 = arith.divf %53, %54 : vector<8x1xf32>
    %c0_43 = arith.constant 0 : index
    %c0_44 = arith.constant 0 : index
    %56 = vector.load %arg14[%c0_43, %c0_44] : memref<8x1xf32, #tpu.memory_space<vmem>>, vector<8x1xf32>
    tpu.vector_store %arg14[%c0_43, %c0_44], %55 {strides = array<i32>} : memref<8x1xf32, #tpu.memory_space<vmem>>, vector<8x1xf32>,
    return
  }
  func.func @transform_0(%arg0: i32) -> (i32, i32) {
    %c0_i32 = arith.constant 0 : i32
    %c0_i32_0 = arith.constant 0 : i32
    %c0_i32_1 = arith.constant 0 : i32
    return %c0_i32, %c0_i32_0 : i32, i32
  }
  func.func @transform_1(%arg0: i32) -> (i32, i32) {
    %c0_i32 = arith.constant 0 : i32
    %c0_i32_0 = arith.constant 0 : i32
    return %arg0, %c0_i32 : i32, i32
  }
  func.func @transform_2(%arg0: i32) -> (i32, i32) {
    %c0_i32 = arith.constant 0 : i32
    %c0_i32_0 = arith.constant 0 : i32
    %c0_i32_1 = arith.constant 0 : i32
    return %c0_i32, %c0_i32_0 : i32, i32
  }
  func.func @transform_3(%arg0: i32) -> (i32, i32) {
    %c0_i32 = arith.constant 0 : i32
    %c0_i32_0 = arith.constant 0 : i32
    %c0_i32_1 = arith.constant 0 : i32
    return %c0_i32, %c0_i32_0 : i32, i32
  }
  func.func @transform_4(%arg0: i32) -> (i32, i32) {
    %c0_i32 = arith.constant 0 : i32
    %c0_i32_0 = arith.constant 0 : i32
    %c0_i32_1 = arith.constant 0 : i32
    return %c0_i32, %c0_i32_0 : i32, i32
  }
  func.func @transform_5(%arg0: i32) -> (i32, i32) {
    %c0_i32 = arith.constant 0 : i32
    %c0_i32_0 = arith.constant 0 : i32
    %c0_i32_1 = arith.constant 0 : i32
    return %c0_i32, %c0_i32_0 : i32, i32
  }
  func.func @transform_6(%arg0: i32) -> (i32, i32) {
    %c0_i32 = arith.constant 0 : i32
    %c0_i32_0 = arith.constant 0 : i32
    %c0_i32_1 = arith.constant 0 : i32
    return %c0_i32, %c0_i32_0 : i32, i32
  }
  func.func @transform_7(%arg0: i32) -> (i32, i32) {
    %c0_i32 = arith.constant 0 : i32
    %c0_i32_0 = arith.constant 0 : i32
    %c0_i32_1 = arith.constant 0 : i32
    return %c0_i32, %c0_i32_0 : i32, i32
  }
  func.func @transform_8(%arg0: i32) -> (i32, i32) {
    %c0_i32 = arith.constant 0 : i32
    %c0_i32_0 = arith.constant 0 : i32
    %c0_i32_1 = arith.constant 0 : i32
    return %c0_i32, %c0_i32_0 : i32, i32
  }
  func.func @transform_9(%arg0: i32) -> (i32, i32) {
    %c0_i32 = arith.constant 0 : i32
    %c0_i32_0 = arith.constant 0 : i32
    %c0_i32_1 = arith.constant 0 : i32
    return %c0_i32, %c0_i32_0 : i32, i32
  }
  func.func @transform_10(%arg0: i32) -> (i32, i32) {
    %c0_i32 = arith.constant 0 : i32
    %c0_i32_0 = arith.constant 0 : i32
    %c0_i32_1 = arith.constant 0 : i32
    return %c0_i32, %c0_i32_0 : i32, i32
  }
  func.func @transform_11(%arg0: i32) -> (i32, i32) {
    %c0_i32 = arith.constant 0 : i32
    %c0_i32_0 = arith.constant 0 : i32
    %c0_i32_1 = arith.constant 0 : i32
    return %c0_i32, %c0_i32_0 : i32, i32
  }
  func.func @transform_12(%arg0: i32) -> (i32, i32) {
    %c0_i32 = arith.constant 0 : i32
    %c0_i32_0 = arith.constant 0 : i32
    %c0_i32_1 = arith.constant 0 : i32
    return %c0_i32, %c0_i32_0 : i32, i32
  }
  func.func @transform_13(%arg0: i32) -> (i32, i32) {
    %c0_i32 = arith.constant 0 : i32
    %c0_i32_0 = arith.constant 0 : i32
    %c0_i32_1 = arith.constant 0 : i32
    return %c0_i32, %c0_i32_0 : i32, i32
  }
}

</mosaic_0001>

<llo_original>
// kernel: forward.1
$region0: #{forward.1}
  #allocation0 [shape = 'u32[]', space=smem, size = 0x4, offset = 0x4, fixed_abs, tag = 'smem constant byte address 0x4 - core index']
  #allocation1 [shape = 'u32[144,128]{1,0:T(1,128)}', space=vmem, size = 0x12000, scoped, tag = 'internal scratch']
  #allocation2 [shape = 'bf16[8,4096]{1,0:T(8,128)(2,1)}', space=vmem, size = 0x10000, scoped, tag = 'scratch operand']
  #allocation3 [shape = 'f32[1,1]{1,0:T(1,128)S(1)}', space=vmem, size = 0x200, scoped, tag = 'scoped memory for forward.1']
  %s0 = inlined_call_operand.hbm [shape: f32[8,4000], index: 0, kind: input, shape index: {}]
  %s1 = inlined_call_operand.hbm [shape: bf16[4096,512], index: 1, kind: input, shape index: {}]
  %s2 = inlined_call_operand.hbm [shape: f32[1,512], index: 2, kind: input, shape index: {}]
  %s3 = inlined_call_operand.hbm [shape: bf16[512,512], index: 3, kind: input, shape index: {}]
  %s4 = inlined_call_operand.hbm [shape: f32[1,512], index: 4, kind: input, shape index: {}]
  %s5 = inlined_call_operand.hbm [shape: bf16[512,512], index: 5, kind: input, shape index: {}]
  %s6 = inlined_call_operand.hbm [shape: f32[1,512], index: 6, kind: input, shape index: {}]
  %s7 = inlined_call_operand.hbm [shape: bf16[512,256], index: 7, kind: input, shape index: {}]
  %s8 = inlined_call_operand.hbm [shape: f32[1,256], index: 8, kind: input, shape index: {}]
  %s9 = inlined_call_operand.vmem [shape: bf16[256,64], index: 9, kind: input, shape index: {}]
  %s10 = inlined_call_operand.hbm [shape: f32[1,64], index: 10, kind: input, shape index: {}]
  %s11 = inlined_call_operand.vmem [shape: bf16[64,1], index: 11, kind: input, shape index: {}]
  %s12 = inlined_call_operand.<no memory space> [shape: f32[1,1], index: 12, kind: input, shape index: {}]
  %s13 = inlined_call_operand.vmem [shape: f32[8,1], index: 13, kind: output, shape index: {}]
  %s14 = sld [smem:[#allocation0]]
  $region102: #{forward.1} parent=0
    _
  %s16 = ssub.s32 1, %s14
  %s17 = scalar_select 0, %s16, %s14
  %v18 = vstv %s12
  %19 = vst [vmem:[#allocation3] sm:$0x1] %v18
  $region1: #{forward.1} parent=0
    #allocation4 [shape = 'u8[131072]{0}', space=vmem, size = 0x20000, scoped, tag = 'input window, operand 0, single buffered']
    #allocation5 [shape = 's32[1]{0}', space=sflag, size = 0x4, scoped, tag = 'scoped memory for forward.1']
    #allocation6 [shape = 'u8[4194304]{0}', space=vmem, size = 0x400000, scoped, tag = 'input window, operand 1, single buffered']
    #allocation7 [shape = 's32[1]{0}', space=sflag, size = 0x4, scoped, tag = 'scoped memory for forward.1']
    #allocation8 [shape = 'u8[2048]{0}', space=vmem, size = 0x800, scoped, tag = 'input window, operand 2, single buffered']
    #allocation9 [shape = 'u8[524288]{0}', space=vmem, size = 0x80000, scoped, tag = 'input window, operand 3, single buffered']
    #allocation10 [shape = 's32[1]{0}', space=sflag, size = 0x4, scoped, tag = 'scoped memory for forward.1']
    #allocation11 [shape = 'u8[2048]{0}', space=vmem, size = 0x800, scoped, tag = 'input window, operand 4, single buffered']
    #allocation12 [shape = 'u8[524288]{0}', space=vmem, size = 0x80000, scoped, tag = 'input window, operand 5, single buffered']
    #allocation13 [shape = 's32[1]{0}', space=sflag, size = 0x4, scoped, tag = 'scoped memory for forward.1']
    #allocation14 [shape = 'u8[2048]{0}', space=vmem, size = 0x800, scoped, tag = 'input window, operand 6, single buffered']
    #allocation15 [shape = 'u8[262144]{0}', space=vmem, size = 0x40000, scoped, tag = 'input window, operand 7, single buffered']
    #allocation16 [shape = 's32[1]{0}', space=sflag, size = 0x4, scoped, tag = 'scoped memory for forward.1']
    #allocation17 [shape = 'u8[1024]{0}', space=vmem, size = 0x400, scoped, tag = 'input window, operand 8, single buffered']
    #allocation18 [shape = 'u8[512]{0}', space=vmem, size = 0x400, scoped, tag = 'input window, operand 10, single buffered']
    #allocation19 [shape = 's32[1]{0}', space=sflag, size = 0x4, scoped, tag = 'scoped memory for forward.1']
    %20 = vsyncpa [#allocation5], 0
    %21 = vsyncpa [#allocation7], 0
    %22 = vsyncpa [#allocation10], 0
    %23 = vsyncpa [#allocation13], 0
    %24 = vsyncpa [#allocation16], 0
    %25 = vsyncpa [#allocation19], 0
    // Predicated region
    $region2: #{forward.1} parent=1 // pred_check
      _
    $region3: #{forward.1} parent=1 // pred_check_branch
      %27 = sbr.rel (0) target = $region5
    $region4: #{forward.1} parent=1 // pred_region
      %s29 = ssub.s32 4096, 4096
      %30 = vsyncadd [#allocation5], %s29
      %s32 = sshll.u32 [#allocation4], 4
      %s33 = int_to_ptr.vmem [resolvable:$true] %s32
      %35 = dma.hbm_to_vmem [thread:$0]  %s0, 4096, %s33, [#allocation5]
    $region5: #{forward.1} parent=1 // pred_fallthru
      _
    // Predicated region
    $region6: #{forward.1} parent=1 // pred_check
      _
    $region7: #{forward.1} parent=1 // pred_check_branch
      %37 = sbr.rel (0) target = $region9
    $region8: #{forward.1} parent=1 // pred_region
      %s39 = ssub.s32 131072, 131072
      %40 = vsyncadd [#allocation7], %s39
      %s41 = sshll.u32 [#allocation6], 4
      %s42 = int_to_ptr.vmem [resolvable:$true] %s41
      %47 = dma.hbm_to_vmem [thread:$0]  %s1, 131072, %s42, [#allocation7], 256, 256, 16
    $region9: #{forward.1} parent=1 // pred_fallthru
      _
    // Predicated region
    $region10: #{forward.1} parent=1 // pred_check
      _
    $region11: #{forward.1} parent=1 // pred_check_branch
      %49 = sbr.rel (0) target = $region13
    $region12: #{forward.1} parent=1 // pred_region
      %s51 = ssub.s32 64, 64
      %52 = vsyncadd [#allocation7], %s51
      %s54 = sshll.u32 [#allocation8], 4
      %s55 = int_to_ptr.vmem [resolvable:$true] %s54
      %57 = dma.hbm_to_vmem [thread:$0]  %s2, 64, %s55, [#allocation7]
    $region13: #{forward.1} parent=1 // pred_fallthru
      _
    // Predicated region
    $region14: #{forward.1} parent=1 // pred_check
      _
    $region15: #{forward.1} parent=1 // pred_check_branch
      %59 = sbr.rel (0) target = $region17
    $region16: #{forward.1} parent=1 // pred_region
      %s61 = ssub.s32 16384, 16384
      %62 = vsyncadd [#allocation10], %s61
      %s63 = sshll.u32 [#allocation9], 4
      %s64 = int_to_ptr.vmem [resolvable:$true] %s63
      %69 = dma.hbm_to_vmem [thread:$0]  %s3, 16384, %s64, [#allocation10], 256, 256, 16
    $region17: #{forward.1} parent=1 // pred_fallthru
      _
    // Predicated region
    $region18: #{forward.1} parent=1 // pred_check
      _
    $region19: #{forward.1} parent=1 // pred_check_branch
      %71 = sbr.rel (0) target = $region21
    $region20: #{forward.1} parent=1 // pred_region
      %s73 = ssub.s32 64, 64
      %74 = vsyncadd [#allocation10], %s73
      %s76 = sshll.u32 [#allocation11], 4
      %s77 = int_to_ptr.vmem [resolvable:$true] %s76
      %79 = dma.hbm_to_vmem [thread:$0]  %s4, 64, %s77, [#allocation10]
    $region21: #{forward.1} parent=1 // pred_fallthru
      _
    // Predicated region
    $region22: #{forward.1} parent=1 // pred_check
      _
    $region23: #{forward.1} parent=1 // pred_check_branch
      %81 = sbr.rel (0) target = $region25
    $region24: #{forward.1} parent=1 // pred_region
      %s83 = ssub.s32 16384, 16384
      %84 = vsyncadd [#allocation13], %s83
      %s85 = sshll.u32 [#allocation12], 4
      %s86 = int_to_ptr.vmem [resolvable:$true] %s85
      %91 = dma.hbm_to_vmem [thread:$0]  %s5, 16384, %s86, [#allocation13], 256, 256, 16
    $region25: #{forward.1} parent=1 // pred_fallthru
      _
    // Predicated region
    $region26: #{forward.1} parent=1 // pred_check
      _
    $region27: #{forward.1} parent=1 // pred_check_branch
      %93 = sbr.rel (0) target = $region29
    $region28: #{forward.1} parent=1 // pred_region
      %s95 = ssub.s32 64, 64
      %96 = vsyncadd [#allocation13], %s95
      %s98 = sshll.u32 [#allocation14], 4
      %s99 = int_to_ptr.vmem [resolvable:$true] %s98
      %101 = dma.hbm_to_vmem [thread:$0]  %s6, 64, %s99, [#allocation13]
    $region29: #{forward.1} parent=1 // pred_fallthru
      _
    // Predicated region
    $region30: #{forward.1} parent=1 // pred_check
      _
    $region31: #{forward.1} parent=1 // pred_check_branch
      %103 = sbr.rel (0) target = $region33
    $region32: #{forward.1} parent=1 // pred_region
      %s105 = ssub.s32 8192, 8192
      %106 = vsyncadd [#allocation16], %s105
      %s107 = sshll.u32 [#allocation15], 4
      %s108 = int_to_ptr.vmem [resolvable:$true] %s107
      %113 = dma.hbm_to_vmem [thread:$0]  %s7, 8192, %s108, [#allocation16], 128, 128, 8
    $region33: #{forward.1} parent=1 // pred_fallthru
      _
    // Predicated region
    $region34: #{forward.1} parent=1 // pred_check
      _
    $region35: #{forward.1} parent=1 // pred_check_branch
      %115 = sbr.rel (0) target = $region37
    $region36: #{forward.1} parent=1 // pred_region
      %s117 = ssub.s32 32, 32
      %118 = vsyncadd [#allocation16], %s117
      %s120 = sshll.u32 [#allocation17], 4
      %s121 = int_to_ptr.vmem [resolvable:$true] %s120
      %123 = dma.hbm_to_vmem [thread:$0]  %s8, 32, %s121, [#allocation16]
    $region37: #{forward.1} parent=1 // pred_fallthru
      _
    // Predicated region
    $region38: #{forward.1} parent=1 // pred_check
      _
    $region39: #{forward.1} parent=1 // pred_check_branch
      %125 = sbr.rel (0) target = $region41
    $region40: #{forward.1} parent=1 // pred_region
      _
    $region41: #{forward.1} parent=1 // pred_fallthru
      _
    // Predicated region
    $region42: #{forward.1} parent=1 // pred_check
      _
    $region43: #{forward.1} parent=1 // pred_check_branch
      %127 = sbr.rel (0) target = $region45
    $region44: #{forward.1} parent=1 // pred_region
      %s129 = ssub.s32 16, 16
      %130 = vsyncadd [#allocation19], %s129
      %s132 = sshll.u32 [#allocation18], 4
      %s133 = int_to_ptr.vmem [resolvable:$true] %s132
      %135 = dma.hbm_to_vmem [thread:$0]  %s10, 16, %s133, [#allocation19]
    $region45: #{forward.1} parent=1 // pred_fallthru
      _
    // Predicated region
    $region46: #{forward.1} parent=1 // pred_check
      _
    $region47: #{forward.1} parent=1 // pred_check_branch
      %137 = sbr.rel (0) target = $region49
    $region48: #{forward.1} parent=1 // pred_region
      _
    $region49: #{forward.1} parent=1 // pred_fallthru
      _
    // Predicated region
    $region50: #{forward.1} parent=1 // pred_check
      _
    $region51: #{forward.1} parent=1 // pred_check_branch
      %139 = sbr.rel (0) target = $region53
    $region52: #{forward.1} parent=1 // pred_region
      _
    $region53: #{forward.1} parent=1 // pred_fallthru
      _
    // Predicated region
    $region54: #{forward.1} parent=1 // pred_check
      _
    $region55: #{forward.1} parent=1 // pred_check_branch
      %141 = sbr.rel (0) target = $region57
    $region56: #{forward.1} parent=1 // pred_region
      %142 = dma.done [#allocation5], 4096
    $region57: #{forward.1} parent=1 // pred_fallthru
      _
    // Predicated region
    $region58: #{forward.1} parent=1 // pred_check
      _
    $region59: #{forward.1} parent=1 // pred_check_branch
      %144 = sbr.rel (0) target = $region61
    $region60: #{forward.1} parent=1 // pred_region
      %145 = dma.done [#allocation7], 131072
    $region61: #{forward.1} parent=1 // pred_fallthru
      _
    // Predicated region
    $region62: #{forward.1} parent=1 // pred_check
      _
    $region63: #{forward.1} parent=1 // pred_check_branch
      %147 = sbr.rel (0) target = $region65
    $region64: #{forward.1} parent=1 // pred_region
      %148 = dma.done [#allocation7], 64
    $region65: #{forward.1} parent=1 // pred_fallthru
      _
    // Predicated region
    $region66: #{forward.1} parent=1 // pred_check
      _
    $region67: #{forward.1} parent=1 // pred_check_branch
      %150 = sbr.rel (0) target = $region69
    $region68: #{forward.1} parent=1 // pred_region
      %151 = dma.done [#allocation10], 16384
    $region69: #{forward.1} parent=1 // pred_fallthru
      _
    // Predicated region
    $region70: #{forward.1} parent=1 // pred_check
      _
    $region71: #{forward.1} parent=1 // pred_check_branch
      %153 = sbr.rel (0) target = $region73
    $region72: #{forward.1} parent=1 // pred_region
      %154 = dma.done [#allocation10], 64
    $region73: #{forward.1} parent=1 // pred_fallthru
      _
    // Predicated region
    $region74: #{forward.1} parent=1 // pred_check
      _
    $region75: #{forward.1} parent=1 // pred_check_branch
      %156 = sbr.rel (0) target = $region77
    $region76: #{forward.1} parent=1 // pred_region
      %157 = dma.done [#allocation13], 16384
    $region77: #{forward.1} parent=1 // pred_fallthru
      _
    // Predicated region
    $region78: #{forward.1} parent=1 // pred_check
      _
    $region79: #{forward.1} parent=1 // pred_check_branch
      %159 = sbr.rel (0) target = $region81
    $region80: #{forward.1} parent=1 // pred_region
      %160 = dma.done [#allocation13], 64
    $region81: #{forward.1} parent=1 // pred_fallthru
      _
    // Predicated region
    $region82: #{forward.1} parent=1 // pred_check
      _
    $region83: #{forward.1} parent=1 // pred_check_branch
      %162 = sbr.rel (0) target = $region85
    $region84: #{forward.1} parent=1 // pred_region
      %163 = dma.done [#allocation16], 8192
    $region85: #{forward.1} parent=1 // pred_fallthru
      _
    // Predicated region
    $region86: #{forward.1} parent=1 // pred_check
      _
    $region87: #{forward.1} parent=1 // pred_check_branch
      %165 = sbr.rel (0) target = $region89
    $region88: #{forward.1} parent=1 // pred_region
      %166 = dma.done [#allocation16], 32
    $region89: #{forward.1} parent=1 // pred_fallthru
      _
    // Predicated region
    $region90: #{forward.1} parent=1 // pred_check
      _
    $region91: #{forward.1} parent=1 // pred_check_branch
      %168 = sbr.rel (0) target = $region93
    $region92: #{forward.1} parent=1 // pred_region
      %169 = dma.done [#allocation19], 16
    $region93: #{forward.1} parent=1 // pred_fallthru
      _
    %171 = vst [vmem:[#allocation2] sm:$0xff] 0
    %172 = vst [vmem:[#allocation2 + $0x8] sm:$0xff] 0
    %173 = vst [vmem:[#allocation2 + $0x10] sm:$0xff] 0
    %174 = vst [vmem:[#allocation2 + $0x18] sm:$0xff] 0
    %175 = vst [vmem:[#allocation2 + $0x20] sm:$0xff] 0
    %176 = vst [vmem:[#allocation2 + $0x28] sm:$0xff] 0
    %177 = vst [vmem:[#allocation2 + $0x30] sm:$0xff] 0
    %178 = vst [vmem:[#allocation2 + $0x38] sm:$0xff] 0
    %179 = vst [vmem:[#allocation2 + $0x40] sm:$0xff] 0
    %180 = vst [vmem:[#allocation2 + $0x48] sm:$0xff] 0
    %181 = vst [vmem:[#allocation2 + $0x50] sm:$0xff] 0
    %182 = vst [vmem:[#allocation2 + $0x58] sm:$0xff] 0
    %183 = vst [vmem:[#allocation2 + $0x60] sm:$0xff] 0
    %184 = vst [vmem:[#allocation2 + $0x68] sm:$0xff] 0
    %185 = vst [vmem:[#allocation2 + $0x70] sm:$0xff] 0
    %186 = vst [vmem:[#allocation2 + $0x78] sm:$0xff] 0
    %v187 = vld [vmem:[#allocation4] sm:$0xff]
    %v188 = vld [vmem:[#allocation4 + $0x8] sm:$0xff]
    %v189 = vld [vmem:[#allocation4 + $0x10] sm:$0xff]
    %v190 = vld [vmem:[#allocation4 + $0x18] sm:$0xff]
    %v191 = vld [vmem:[#allocation4 + $0x20] sm:$0xff]
    %v192 = vld [vmem:[#allocation4 + $0x28] sm:$0xff]
    %v193 = vld [vmem:[#allocation4 + $0x30] sm:$0xff]
    %v194 = vld [vmem:[#allocation4 + $0x38] sm:$0xff]
    %v195 = vld [vmem:[#allocation4 + $0x40] sm:$0xff]
    %v196 = vld [vmem:[#allocation4 + $0x48] sm:$0xff]
    %v197 = vld [vmem:[#allocation4 + $0x50] sm:$0xff]
    %v198 = vld [vmem:[#allocation4 + $0x58] sm:$0xff]
    %v199 = vld [vmem:[#allocation4 + $0x60] sm:$0xff]
    %v200 = vld [vmem:[#allocation4 + $0x68] sm:$0xff]
    %v201 = vld [vmem:[#allocation4 + $0x70] sm:$0xff]
    %v202 = vld [vmem:[#allocation4 + $0x78] sm:$0xff]
    %v203 = vld [vmem:[#allocation4 + $0x80] sm:$0xff]
    %v204 = vld [vmem:[#allocation4 + $0x88] sm:$0xff]
    %v205 = vld [vmem:[#allocation4 + $0x90] sm:$0xff]
    %v206 = vld [vmem:[#allocation4 + $0x98] sm:$0xff]
    %v207 = vld [vmem:[#allocation4 + $0xa0] sm:$0xff]
    %v208 = vld [vmem:[#allocation4 + $0xa8] sm:$0xff]
    %v209 = vld [vmem:[#allocation4 + $0xb0] sm:$0xff]
    %v210 = vld [vmem:[#allocation4 + $0xb8] sm:$0xff]
    %v211 = vld [vmem:[#allocation4 + $0xc0] sm:$0xff]
    %v212 = vld [vmem:[#allocation4 + $0xc8] sm:$0xff]
    %v213 = vld [vmem:[#allocation4 + $0xd0] sm:$0xff]
    %v214 = vld [vmem:[#allocation4 + $0xd8] sm:$0xff]
    %v215 = vld [vmem:[#allocation4 + $0xe0] sm:$0xff]
    %v216 = vld [vmem:[#allocation4 + $0xe8] sm:$0xff]
    %v217 = vld [vmem:[#allocation4 + $0xf0] sm:$0xff]
    %v218 = vld [vmem:[#allocation4 + $0xf8] sm:$0xff]
    %v219 = vpack.c.bf16 %v187, %v187
    %v220 = vpack.c.bf16 %v188, %v188
    %v221 = vpack.c.bf16 %v189, %v189
    %v222 = vpack.c.bf16 %v190, %v190
    %v223 = vpack.c.bf16 %v191, %v191
    %v224 = vpack.c.bf16 %v192, %v192
    %v225 = vpack.c.bf16 %v193, %v193
    %v226 = vpack.c.bf16 %v194, %v194
    %v227 = vpack.c.bf16 %v195, %v195
    %v228 = vpack.c.bf16 %v196, %v196
    %v229 = vpack.c.bf16 %v197, %v197
    %v230 = vpack.c.bf16 %v198, %v198
    %v231 = vpack.c.bf16 %v199, %v199
    %v232 = vpack.c.bf16 %v200, %v200
    %v233 = vpack.c.bf16 %v201, %v201
    %v234 = vpack.c.bf16 %v202, %v202
    %v235 = vpack.c.bf16 %v203, %v203
    %v236 = vpack.c.bf16 %v204, %v204
    %v237 = vpack.c.bf16 %v205, %v205
    %v238 = vpack.c.bf16 %v206, %v206
    %v239 = vpack.c.bf16 %v207, %v207
    %v240 = vpack.c.bf16 %v208, %v208
    %v241 = vpack.c.bf16 %v209, %v209
    %v242 = vpack.c.bf16 %v210, %v210
    %v243 = vpack.c.bf16 %v211, %v211
    %v244 = vpack.c.bf16 %v212, %v212
    %v245 = vpack.c.bf16 %v213, %v213
    %v246 = vpack.c.bf16 %v214, %v214
    %v247 = vpack.c.bf16 %v215, %v215
    %v248 = vpack.c.bf16 %v216, %v216
    %v249 = vpack.c.bf16 %v217, %v217
    %v250 = vpack.c.bf16 %v218, %v218
    %v283 = vunpack.c.l.b16 %v219
    %v284 = vunpack.c.l.b16 %v220
    %v285 = vunpack.c.l.b16 %v221
    %v286 = vunpack.c.l.b16 %v222
    %v287 = vunpack.c.l.b16 %v223
    %v288 = vunpack.c.l.b16 %v224
    %v289 = vunpack.c.l.b16 %v225
    %v290 = vunpack.c.l.b16 %v226
    %v291 = vunpack.c.l.b16 %v227
    %v292 = vunpack.c.l.b16 %v228
    %v293 = vunpack.c.l.b16 %v229
    %v294 = vunpack.c.l.b16 %v230
    %v295 = vunpack.c.l.b16 %v231
    %v296 = vunpack.c.l.b16 %v232
    %v297 = vunpack.c.l.b16 %v233
    %v298 = vunpack.c.l.b16 %v234
    %v299 = vunpack.c.l.b16 %v235
    %v300 = vunpack.c.l.b16 %v236
    %v301 = vunpack.c.l.b16 %v237
    %v302 = vunpack.c.l.b16 %v238
    %v303 = vunpack.c.l.b16 %v239
    %v304 = vunpack.c.l.b16 %v240
    %v305 = vunpack.c.l.b16 %v241
    %v306 = vunpack.c.l.b16 %v242
    %v307 = vunpack.c.l.b16 %v243
    %v308 = vunpack.c.l.b16 %v244
    %v309 = vunpack.c.l.b16 %v245
    %v310 = vunpack.c.l.b16 %v246
    %v311 = vunpack.c.l.b16 %v247
    %v312 = vunpack.c.l.b16 %v248
    %v313 = vunpack.c.l.b16 %v249
    %v314 = vunpack.c.l.b16 %v250
    %v315 = vpack.c.b16 %v284, %v283
    %v316 = vpack.c.b16 %v286, %v285
    %v317 = vpack.c.b16 %v288, %v287
    %v318 = vpack.c.b16 %v290, %v289
    %v319 = vpack.c.b16 %v292, %v291
    %v320 = vpack.c.b16 %v294, %v293
    %v321 = vpack.c.b16 %v296, %v295
    %v322 = vpack.c.b16 %v298, %v297
    %v323 = vpack.c.b16 %v300, %v299
    %v324 = vpack.c.b16 %v302, %v301
    %v325 = vpack.c.b16 %v304, %v303
    %v326 = vpack.c.b16 %v306, %v305
    %v327 = vpack.c.b16 %v308, %v307
    %v328 = vpack.c.b16 %v310, %v309
    %v329 = vpack.c.b16 %v312, %v311
    %v330 = vpack.c.b16 %v314, %v313
    %347 = vst [vmem:[#allocation2] sm:$0xff] %v315
    %348 = vst [vmem:[#allocation2 + $0x8] sm:$0xff] %v316
    %349 = vst [vmem:[#allocation2 + $0x10] sm:$0xff] %v317
    %350 = vst [vmem:[#allocation2 + $0x18] sm:$0xff] %v318
    %351 = vst [vmem:[#allocation2 + $0x20] sm:$0xff] %v319
    %352 = vst [vmem:[#allocation2 + $0x28] sm:$0xff] %v320
    %353 = vst [vmem:[#allocation2 + $0x30] sm:$0xff] %v321
    %354 = vst [vmem:[#allocation2 + $0x38] sm:$0xff] %v322
    %355 = vst [vmem:[#allocation2 + $0x40] sm:$0xff] %v323
    %356 = vst [vmem:[#allocation2 + $0x48] sm:$0xff] %v324
    %357 = vst [vmem:[#allocation2 + $0x50] sm:$0xff] %v325
    %358 = vst [vmem:[#allocation2 + $0x58] sm:$0xff] %v326
    %359 = vst [vmem:[#allocation2 + $0x60] sm:$0xff] %v327
    %360 = vst [vmem:[#allocation2 + $0x68] sm:$0xff] %v328
    %361 = vst [vmem:[#allocation2 + $0x70] sm:$0xff] %v329
    %vm362 = vcmask 1043456
    %vm363 = vcmask 261124
    %vm364 = vmor %vm363, %vm362
    %365 = vst.msk [vmem:[#allocation2 + $0x78] sm:$0xff] %vm364, %v330
    %v366 = vld [vmem:[#allocation2] sm:$0xff]
    %v367 = vld [vmem:[#allocation2 + $0x8] sm:$0xff]
    %v368 = vld [vmem:[#allocation2 + $0x10] sm:$0xff]
    %v369 = vld [vmem:[#allocation2 + $0x18] sm:$0xff]
    %v370 = vld [vmem:[#allocation2 + $0x20] sm:$0xff]
    %v371 = vld [vmem:[#allocation2 + $0x28] sm:$0xff]
    %v372 = vld [vmem:[#allocation2 + $0x30] sm:$0xff]
    %v373 = vld [vmem:[#allocation2 + $0x38] sm:$0xff]
    %v374 = vld [vmem:[#allocation2 + $0x40] sm:$0xff]
    %v375 = vld [vmem:[#allocation2 + $0x48] sm:$0xff]
    %v376 = vld [vmem:[#allocation2 + $0x50] sm:$0xff]
    %v377 = vld [vmem:[#allocation2 + $0x58] sm:$0xff]
    %v378 = vld [vmem:[#allocation2 + $0x60] sm:$0xff]
    %v379 = vld [vmem:[#allocation2 + $0x68] sm:$0xff]
    %v380 = vld [vmem:[#allocation2 + $0x70] sm:$0xff]
    %v381 = vld [vmem:[#allocation2 + $0x78] sm:$0xff]
    %v382 = vld [vmem:[#allocation6] sm:$0xff]
    %v383 = vld [vmem:[#allocation6 + $0x8] sm:$0xff]
    %v384 = vld [vmem:[#allocation6 + $0x10] sm:$0xff]
    %v385 = vld [vmem:[#allocation6 + $0x18] sm:$0xff]
    %v386 = vld [vmem:[#allocation6 + $0x20] sm:$0xff]
    %v387 = vld [vmem:[#allocation6 + $0x28] sm:$0xff]
    %v388 = vld [vmem:[#allocation6 + $0x30] sm:$0xff]
    %v389 = vld [vmem:[#allocation6 + $0x38] sm:$0xff]
    %v390 = vld [vmem:[#allocation6 + $0x40] sm:$0xff]
    %v391 = vld [vmem:[#allocation6 + $0x48] sm:$0xff]
    %v392 = vld [vmem:[#allocation6 + $0x50] sm:$0xff]
    %v393 = vld [vmem:[#allocation6 + $0x58] sm:$0xff]
    %v394 = vld [vmem:[#allocation6 + $0x60] sm:$0xff]
    %v395 = vld [vmem:[#allocation6 + $0x68] sm:$0xff]
    %v396 = vld [vmem:[#allocation6 + $0x70] sm:$0xff]
    %v397 = vld [vmem:[#allocation6 + $0x78] sm:$0xff]
    %v398 = vld [vmem:[#allocation6 + $0x80] sm:$0xff]
    %v399 = vld [vmem:[#allocation6 + $0x88] sm:$0xff]
    %v400 = vld [vmem:[#allocation6 + $0x90] sm:$0xff]
    %v401 = vld [vmem:[#allocation6 + $0x98] sm:$0xff]
    %v402 = vld [vmem:[#allocation6 + $0xa0] sm:$0xff]
    %v403 = vld [vmem:[#allocation6 + $0xa8] sm:$0xff]
    %v404 = vld [vmem:[#allocation6 + $0xb0] sm:$0xff]
    %v405 = vld [vmem:[#allocation6 + $0xb8] sm:$0xff]
    %v406 = vld [vmem:[#allocation6 + $0xc0] sm:$0xff]
    %v407 = vld [vmem:[#allocation6 + $0xc8] sm:$0xff]
    %v408 = vld [vmem:[#allocation6 + $0xd0] sm:$0xff]
    %v409 = vld [vmem:[#allocation6 + $0xd8] sm:$0xff]
    %v410 = vld [vmem:[#allocation6 + $0xe0] sm:$0xff]
    %v411 = vld [vmem:[#allocation6 + $0xe8] sm:$0xff]
    %v412 = vld [vmem:[#allocation6 + $0xf0] sm:$0xff]
    %v413 = vld [vmem:[#allocation6 + $0xf8] sm:$0xff]
    %v414 = vld [vmem:[#allocation6 + $0x100] sm:$0xff]
    %v415 = vld [vmem:[#allocation6 + $0x108] sm:$0xff]
    %v416 = vld [vmem:[#allocation6 + $0x110] sm:$0xff]
    %v417 = vld [vmem:[#allocation6 + $0x118] sm:$0xff]
    %v418 = vld [vmem:[#allocation6 + $0x120] sm:$0xff]
    %v419 = vld [vmem:[#allocation6 + $0x128] sm:$0xff]
    %v420 = vld [vmem:[#allocation6 + $0x130] sm:$0xff]
    %v421 = vld [vmem:[#allocation6 + $0x138] sm:$0xff]
    %v422 = vld [vmem:[#allocation6 + $0x140] sm:$0xff]
    %v423 = vld [vmem:[#allocation6 + $0x148] sm:$0xff]
    %v424 = vld [vmem:[#allocation6 + $0x150] sm:$0xff]
    %v425 = vld [vmem:[#allocation6 + $0x158] sm:$0xff]
    %v426 = vld [vmem:[#allocation6 + $0x160] sm:$0xff]
    %v427 = vld [vmem:[#allocation6 + $0x168] sm:$0xff]
    %v428 = vld [vmem:[#allocation6 + $0x170] sm:$0xff]
    %v429 = vld [vmem:[#allocation6 + $0x178] sm:$0xff]
    %v430 = vld [vmem:[#allocation6 + $0x180] sm:$0xff]
    %v431 = vld [vmem:[#allocation6 + $0x188] sm:$0xff]
    %v432 = vld [vmem:[#allocation6 + $0x190] sm:$0xff]
    %v433 = vld [vmem:[#allocation6 + $0x198] sm:$0xff]
    %v434 = vld [vmem:[#allocation6 + $0x1a0] sm:$0xff]
    %v435 = vld [vmem:[#allocation6 + $0x1a8] sm:$0xff]
    %v436 = vld [vmem:[#allocation6 + $0x1b0] sm:$0xff]
    %v437 = vld [vmem:[#allocation6 + $0x1b8] sm:$0xff]
    %v438 = vld [vmem:[#allocation6 + $0x1c0] sm:$0xff]
    %v439 = vld [vmem:[#allocation6 + $0x1c8] sm:$0xff]
    %v440 = vld [vmem:[#allocation6 + $0x1d0] sm:$0xff]
    %v441 = vld [vmem:[#allocation6 + $0x1d8] sm:$0xff]
    %v442 = vld [vmem:[#allocation6 + $0x1e0] sm:$0xff]
    %v443 = vld [vmem:[#allocation6 + $0x1e8] sm:$0xff]
    %v444 = vld [vmem:[#allocation6 + $0x1f0] sm:$0xff]
    %v445 = vld [vmem:[#allocation6 + $0x1f8] sm:$0xff]
    %v446 = vld [vmem:[#allocation6 + $0x200] sm:$0xff]
    %v447 = vld [vmem:[#allocation6 + $0x208] sm:$0xff]
    %v448 = vld [vmem:[#allocation6 + $0x210] sm:$0xff]
    %v449 = vld [vmem:[#allocation6 + $0x218] sm:$0xff]
    %v450 = vld [vmem:[#allocation6 + $0x220] sm:$0xff]
    %v451 = vld [vmem:[#allocation6 + $0x228] sm:$0xff]
    %v452 = vld [vmem:[#allocation6 + $0x230] sm:$0xff]
    %v453 = vld [vmem:[#allocation6 + $0x238] sm:$0xff]
    %v454 = vld [vmem:[#allocation6 + $0x240] sm:$0xff]
    %v455 = vld [vmem:[#allocation6 + $0x248] sm:$0xff]
    %v456 = vld [vmem:[#allocation6 + $0x250] sm:$0xff]
    %v457 = vld [vmem:[#allocation6 + $0x258] sm:$0xff]
    %v458 = vld [vmem:[#allocation6 + $0x260] sm:$0xff]
    %v459 = vld [vmem:[#allocation6 + $0x268] sm:$0xff]
    %v460 = vld [vmem:[#allocation6 + $0x270] sm:$0xff]
    %v461 = vld [vmem:[#allocation6 + $0x278] sm:$0xff]
    %v462 = vld [vmem:[#allocation6 + $0x280] sm:$0xff]
    %v463 = vld [vmem:[#allocation6 + $0x288] sm:$0xff]
    %v464 = vld [vmem:[#allocation6 + $0x290] sm:$0xff]
    %v465 = vld [vmem:[#allocation6 + $0x298] sm:$0xff]
    %v466 = vld [vmem:[#allocation6 + $0x2a0] sm:$0xff]
    %v467 = vld [vmem:[#allocation6 + $0x2a8] sm:$0xff]
    %v468 = vld [vmem:[#allocation6 + $0x2b0] sm:$0xff]
    %v469 = vld [vmem:[#allocation6 + $0x2b8] sm:$0xff]
    %v470 = vld [vmem:[#allocation6 + $0x2c0] sm:$0xff]
    %v471 = vld [vmem:[#allocation6 + $0x2c8] sm:$0xff]
    %v472 = vld [vmem:[#allocation6 + $0x2d0] sm:$0xff]
    %v473 = vld [vmem:[#allocation6 + $0x2d8] sm:$0xff]
    %v474 = vld [vmem:[#allocation6 + $0x2e0] sm:$0xff]
    %v475 = vld [vmem:[#allocation6 + $0x2e8] sm:$0xff]
    %v476 = vld [vmem:[#allocation6 + $0x2f0] sm:$0xff]
    %v477 = vld [vmem:[#allocation6 + $0x2f8] sm:$0xff]
    %v478 = vld [vmem:[#allocation6 + $0x300] sm:$0xff]
    %v479 = vld [vmem:[#allocation6 + $0x308] sm:$0xff]
    %v480 = vld [vmem:[#allocation6 + $0x310] sm:$0xff]
    %v481 = vld [vmem:[#allocation6 + $0x318] sm:$0xff]
    %v482 = vld [vmem:[#allocation6 + $0x320] sm:$0xff]
    %v483 = vld [vmem:[#allocation6 + $0x328] sm:$0xff]
    %v484 = vld [vmem:[#allocation6 + $0x330] sm:$0xff]
    %v485 = vld [vmem:[#allocation6 + $0x338] sm:$0xff]
    %v486 = vld [vmem:[#allocation6 + $0x340] sm:$0xff]
    %v487 = vld [vmem:[#allocation6 + $0x348] sm:$0xff]
    %v488 = vld [vmem:[#allocation6 + $0x350] sm:$0xff]
    %v489 = vld [vmem:[#allocation6 + $0x358] sm:$0xff]
    %v490 = vld [vmem:[#allocation6 + $0x360] sm:$0xff]
    %v491 = vld [vmem:[#allocation6 + $0x368] sm:$0xff]
    %v492 = vld [vmem:[#allocation6 + $0x370] sm:$0xff]
    %v493 = vld [vmem:[#allocation6 + $0x378] sm:$0xff]
    %v494 = vld [vmem:[#allocation6 + $0x380] sm:$0xff]
    %v495 = vld [vmem:[#allocation6 + $0x388] sm:$0xff]
    %v496 = vld [vmem:[#allocation6 + $0x390] sm:$0xff]
    %v497 = vld [vmem:[#allocation6 + $0x398] sm:$0xff]
    %v498 = vld [vmem:[#allocation6 + $0x3a0] sm:$0xff]
    %v499 = vld [vmem:[#allocation6 + $0x3a8] sm:$0xff]
    %v500 = vld [vmem:[#allocation6 + $0x3b0] sm:$0xff]
    %v501 = vld [vmem:[#allocation6 + $0x3b8] sm:$0xff]
    %v502 = vld [vmem:[#allocation6 + $0x3c0] sm:$0xff]
    %v503 = vld [vmem:[#allocation6 + $0x3c8] sm:$0xff]
    %v504 = vld [vmem:[#allocation6 + $0x3d0] sm:$0xff]
    %v505 = vld [vmem:[#allocation6 + $0x3d8] sm:$0xff]
    %v506 = vld [vmem:[#allocation6 + $0x3e0] sm:$0xff]
    %v507 = vld [vmem:[#allocation6 + $0x3e8] sm:$0xff]
    %v508 = vld [vmem:[#allocation6 + $0x3f0] sm:$0xff]
    %v509 = vld [vmem:[#allocation6 + $0x3f8] sm:$0xff]
    %v510 = vld [vmem:[#allocation6 + $0x400] sm:$0xff]
    %v511 = vld [vmem:[#allocation6 + $0x408] sm:$0xff]
    %v512 = vld [vmem:[#allocation6 + $0x410] sm:$0xff]
    %v513 = vld [vmem:[#allocation6 + $0x418] sm:$0xff]
    %v514 = vld [vmem:[#allocation6 + $0x420] sm:$0xff]
    %v515 = vld [vmem:[#allocation6 + $0x428] sm:$0xff]
    %v516 = vld [vmem:[#allocation6 + $0x430] sm:$0xff]
    %v517 = vld [vmem:[#allocation6 + $0x438] sm:$0xff]
    %v518 = vld [vmem:[#allocation6 + $0x440] sm:$0xff]
    %v519 = vld [vmem:[#allocation6 + $0x448] sm:$0xff]
    %v520 = vld [vmem:[#allocation6 + $0x450] sm:$0xff]
    %v521 = vld [vmem:[#allocation6 + $0x458] sm:$0xff]
    %v522 = vld [vmem:[#allocation6 + $0x460] sm:$0xff]
    %v523 = vld [vmem:[#allocation6 + $0x468] sm:$0xff]
    %v524 = vld [vmem:[#allocation6 + $0x470] sm:$0xff]
    %v525 = vld [vmem:[#allocation6 + $0x478] sm:$0xff]
    %v526 = vld [vmem:[#allocation6 + $0x480] sm:$0xff]
    %v527 = vld [vmem:[#allocation6 + $0x488] sm:$0xff]
    %v528 = vld [vmem:[#allocation6 + $0x490] sm:$0xff]
    %v529 = vld [vmem:[#allocation6 + $0x498] sm:$0xff]
    %v530 = vld [vmem:[#allocation6 + $0x4a0] sm:$0xff]
    %v531 = vld [vmem:[#allocation6 + $0x4a8] sm:$0xff]
    %v532 = vld [vmem:[#allocation6 + $0x4b0] sm:$0xff]
    %v533 = vld [vmem:[#allocation6 + $0x4b8] sm:$0xff]
    %v534 = vld [vmem:[#allocation6 + $0x4c0] sm:$0xff]
    %v535 = vld [vmem:[#allocation6 + $0x4c8] sm:$0xff]
    %v536 = vld [vmem:[#allocation6 + $0x4d0] sm:$0xff]
    %v537 = vld [vmem:[#allocation6 + $0x4d8] sm:$0xff]
    %v538 = vld [vmem:[#allocation6 + $0x4e0] sm:$0xff]
    %v539 = vld [vmem:[#allocation6 + $0x4e8] sm:$0xff]
    %v540 = vld [vmem:[#allocation6 + $0x4f0] sm:$0xff]
    %v541 = vld [vmem:[#allocation6 + $0x4f8] sm:$0xff]
    %v542 = vld [vmem:[#allocation6 + $0x500] sm:$0xff]
    %v543 = vld [vmem:[#allocation6 + $0x508] sm:$0xff]
    %v544 = vld [vmem:[#allocation6 + $0x510] sm:$0xff]
    %v545 = vld [vmem:[#allocation6 + $0x518] sm:$0xff]
    %v546 = vld [vmem:[#allocation6 + $0x520] sm:$0xff]
    %v547 = vld [vmem:[#allocation6 + $0x528] sm:$0xff]
    %v548 = vld [vmem:[#allocation6 + $0x530] sm:$0xff]
    %v549 = vld [vmem:[#allocation6 + $0x538] sm:$0xff]
    %v550 = vld [vmem:[#allocation6 + $0x540] sm:$0xff]
    %v551 = vld [vmem:[#allocation6 + $0x548] sm:$0xff]
    %v552 = vld [vmem:[#allocation6 + $0x550] sm:$0xff]
    %v553 = vld [vmem:[#allocation6 + $0x558] sm:$0xff]
    %v554 = vld [vmem:[#allocation6 + $0x560] sm:$0xff]
    %v555 = vld [vmem:[#allocation6 + $0x568] sm:$0xff]
    %v556 = vld [vmem:[#allocation6 + $0x570] sm:$0xff]
    %v557 = vld [vmem:[#allocation6 + $0x578] sm:$0xff]
    %v558 = vld [vmem:[#allocation6 + $0x580] sm:$0xff]
    %v559 = vld [vmem:[#allocation6 + $0x588] sm:$0xff]
    %v560 = vld [vmem:[#allocation6 + $0x590] sm:$0xff]
    %v561 = vld [vmem:[#allocation6 + $0x598] sm:$0xff]
    %v562 = vld [vmem:[#allocation6 + $0x5a0] sm:$0xff]
    %v563 = vld [vmem:[#allocation6 + $0x5a8] sm:$0xff]
    %v564 = vld [vmem:[#allocation6 + $0x5b0] sm:$0xff]
    %v565 = vld [vmem:[#allocation6 + $0x5b8] sm:$0xff]
    %v566 = vld [vmem:[#allocation6 + $0x5c0] sm:$0xff]
    %v567 = vld [vmem:[#allocation6 + $0x5c8] sm:$0xff]
    %v568 = vld [vmem:[#allocation6 + $0x5d0] sm:$0xff]
    %v569 = vld [vmem:[#allocation6 + $0x5d8] sm:$0xff]
    %v570 = vld [vmem:[#allocation6 + $0x5e0] sm:$0xff]
    %v571 = vld [vmem:[#allocation6 + $0x5e8] sm:$0xff]
    %v572 = vld [vmem:[#allocation6 + $0x5f0] sm:$0xff]
    %v573 = vld [vmem:[#allocation6 + $0x5f8] sm:$0xff]
    %v574 = vld [vmem:[#allocation6 + $0x600] sm:$0xff]
    %v575 = vld [vmem:[#allocation6 + $0x608] sm:$0xff]
    %v576 = vld [vmem:[#allocation6 + $0x610] sm:$0xff]
    %v577 = vld [vmem:[#allocation6 + $0x618] sm:$0xff]
    %v578 = vld [vmem:[#allocation6 + $0x620] sm:$0xff]
    %v579 = vld [vmem:[#allocation6 + $0x628] sm:$0xff]
    %v580 = vld [vmem:[#allocation6 + $0x630] sm:$0xff]
    %v581 = vld [vmem:[#allocation6 + $0x638] sm:$0xff]
    %v582 = vld [vmem:[#allocation6 + $0x640] sm:$0xff]
    %v583 = vld [vmem:[#allocation6 + $0x648] sm:$0xff]
    %v584 = vld [vmem:[#allocation6 + $0x650] sm:$0xff]
    %v585 = vld [vmem:[#allocation6 + $0x658] sm:$0xff]
    %v586 = vld [vmem:[#allocation6 + $0x660] sm:$0xff]
    %v587 = vld [vmem:[#allocation6 + $0x668] sm:$0xff]
    %v588 = vld [vmem:[#allocation6 + $0x670] sm:$0xff]
    %v589 = vld [vmem:[#allocation6 + $0x678] sm:$0xff]
    %v590 = vld [vmem:[#allocation6 + $0x680] sm:$0xff]
    %v591 = vld [vmem:[#allocation6 + $0x688] sm:$0xff]
    %v592 = vld [vmem:[#allocation6 + $0x690] sm:$0xff]
    %v593 = vld [vmem:[#allocation6 + $0x698] sm:$0xff]
    %v594 = vld [vmem:[#allocation6 + $0x6a0] sm:$0xff]
    %v595 = vld [vmem:[#allocation6 + $0x6a8] sm:$0xff]
    %v596 = vld [vmem:[#allocation6 + $0x6b0] sm:$0xff]
    %v597 = vld [vmem:[#allocation6 + $0x6b8] sm:$0xff]
    %v598 = vld [vmem:[#allocation6 + $0x6c0] sm:$0xff]
    %v599 = vld [vmem:[#allocation6 + $0x6c8] sm:$0xff]
    %v600 = vld [vmem:[#allocation6 + $0x6d0] sm:$0xff]
    %v601 = vld [vmem:[#allocation6 + $0x6d8] sm:$0xff]
    %v602 = vld [vmem:[#allocation6 + $0x6e0] sm:$0xff]
    %v603 = vld [vmem:[#allocation6 + $0x6e8] sm:$0xff]
    %v604 = vld [vmem:[#allocation6 + $0x6f0] sm:$0xff]
    %v605 = vld [vmem:[#allocation6 + $0x6f8] sm:$0xff]
    %v606 = vld [vmem:[#allocation6 + $0x700] sm:$0xff]
    %v607 = vld [vmem:[#allocation6 + $0x708] sm:$0xff]
    %v608 = vld [vmem:[#allocation6 + $0x710] sm:$0xff]
    %v609 = vld [vmem:[#allocation6 + $0x718] sm:$0xff]
    %v610 = vld [vmem:[#allocation6 + $0x720] sm:$0xff]
    %v611 = vld [vmem:[#allocation6 + $0x728] sm:$0xff]
    %v612 = vld [vmem:[#allocation6 + $0x730] sm:$0xff]
    %v613 = vld [vmem:[#allocation6 + $0x738] sm:$0xff]
    %v614 = vld [vmem:[#allocation6 + $0x740] sm:$0xff]
    %v615 = vld [vmem:[#allocation6 + $0x748] sm:$0xff]
    %v616 = vld [vmem:[#allocation6 + $0x750] sm:$0xff]
    %v617 = vld [vmem:[#allocation6 + $0x758] sm:$0xff]
    %v618 = vld [vmem:[#allocation6 + $0x760] sm:$0xff]
    %v619 = vld [vmem:[#allocation6 + $0x768] sm:$0xff]
    %v620 = vld [vmem:[#allocation6 + $0x770] sm:$0xff]
    %v621 = vld [vmem:[#allocation6 + $0x778] sm:$0xff]
    %v622 = vld [vmem:[#allocation6 + $0x780] sm:$0xff]
    %v623 = vld [vmem:[#allocation6 + $0x788] sm:$0xff]
    %v624 = vld [vmem:[#allocation6 + $0x790] sm:$0xff]
    %v625 = vld [vmem:[#allocation6 + $0x798] sm:$0xff]
    %v626 = vld [vmem:[#allocation6 + $0x7a0] sm:$0xff]
    %v627 = vld [vmem:[#allocation6 + $0x7a8] sm:$0xff]
    %v628 = vld [vmem:[#allocation6 + $0x7b0] sm:$0xff]
    %v629 = vld [vmem:[#allocation6 + $0x7b8] sm:$0xff]
    %v630 = vld [vmem:[#allocation6 + $0x7c0] sm:$0xff]
    %v631 = vld [vmem:[#allocation6 + $0x7c8] sm:$0xff]
    %v632 = vld [vmem:[#allocation6 + $0x7d0] sm:$0xff]
    %v633 = vld [vmem:[#allocation6 + $0x7d8] sm:$0xff]
    %v634 = vld [vmem:[#allocation6 + $0x7e0] sm:$0xff]
    %v635 = vld [vmem:[#allocation6 + $0x7e8] sm:$0xff]
    %v636 = vld [vmem:[#allocation6 + $0x7f0] sm:$0xff]
    %v637 = vld [vmem:[#allocation6 + $0x7f8] sm:$0xff]
    %v638 = vld [vmem:[#allocation6 + $0x800] sm:$0xff]
    %v639 = vld [vmem:[#allocation6 + $0x808] sm:$0xff]
    %v640 = vld [vmem:[#allocation6 + $0x810] sm:$0xff]
    %v641 = vld [vmem:[#allocation6 + $0x818] sm:$0xff]
    %v642 = vld [vmem:[#allocation6 + $0x820] sm:$0xff]
    %v643 = vld [vmem:[#allocation6 + $0x828] sm:$0xff]
    %v644 = vld [vmem:[#allocation6 + $0x830] sm:$0xff]
    %v645 = vld [vmem:[#allocation6 + $0x838] sm:$0xff]
    %v646 = vld [vmem:[#allocation6 + $0x840] sm:$0xff]
    %v647 = vld [vmem:[#allocation6 + $0x848] sm:$0xff]
    %v648 = vld [vmem:[#allocation6 + $0x850] sm:$0xff]
    %v649 = vld [vmem:[#allocation6 + $0x858] sm:$0xff]
    %v650 = vld [vmem:[#allocation6 + $0x860] sm:$0xff]
    %v651 = vld [vmem:[#allocation6 + $0x868] sm:$0xff]
    %v652 = vld [vmem:[#allocation6 + $0x870] sm:$0xff]
    %v653 = vld [vmem:[#allocation6 + $0x878] sm:$0xff]
    %v654 = vld [vmem:[#allocation6 + $0x880] sm:$0xff]
    %v655 = vld [vmem:[#allocation6 + $0x888] sm:$0xff]
    %v656 = vld [vmem:[#allocation6 + $0x890] sm:$0xff]
    %v657 = vld [vmem:[#allocation6 + $0x898] sm:$0xff]
    %v658 = vld [vmem:[#allocation6 + $0x8a0] sm:$0xff]
    %v659 = vld [vmem:[#allocation6 + $0x8a8] sm:$0xff]
    %v660 = vld [vmem:[#allocation6 + $0x8b0] sm:$0xff]
    %v661 = vld [vmem:[#allocation6 + $0x8b8] sm:$0xff]
    %v662 = vld [vmem:[#allocation6 + $0x8c0] sm:$0xff]
    %v663 = vld [vmem:[#allocation6 + $0x8c8] sm:$0xff]
    %v664 = vld [vmem:[#allocation6 + $0x8d0] sm:$0xff]
    %v665 = vld [vmem:[#allocation6 + $0x8d8] sm:$0xff]
    %v666 = vld [vmem:[#allocation6 + $0x8e0] sm:$0xff]
    %v667 = vld [vmem:[#allocation6 + $0x8e8] sm:$0xff]
    %v668 = vld [vmem:[#allocation6 + $0x8f0] sm:$0xff]
    %v669 = vld [vmem:[#allocation6 + $0x8f8] sm:$0xff]
    %v670 = vld [vmem:[#allocation6 + $0x900] sm:$0xff]
    %v671 = vld [vmem:[#allocation6 + $0x908] sm:$0xff]
    %v672 = vld [vmem:[#allocation6 + $0x910] sm:$0xff]
    %v673 = vld [vmem:[#allocation6 + $0x918] sm:$0xff]
    %v674 = vld [vmem:[#allocation6 + $0x920] sm:$0xff]
    %v675 = vld [vmem:[#allocation6 + $0x928] sm:$0xff]
    %v676 = vld [vmem:[#allocation6 + $0x930] sm:$0xff]
    %v677 = vld [vmem:[#allocation6 + $0x938] sm:$0xff]
    %v678 = vld [vmem:[#allocation6 + $0x940] sm:$0xff]
    %v679 = vld [vmem:[#allocation6 + $0x948] sm:$0xff]
    %v680 = vld [vmem:[#allocation6 + $0x950] sm:$0xff]
    %v681 = vld [vmem:[#allocation6 + $0x958] sm:$0xff]
    %v682 = vld [vmem:[#allocation6 + $0x960] sm:$0xff]
    %v683 = vld [vmem:[#allocation6 + $0x968] sm:$0xff]
    %v684 = vld [vmem:[#allocation6 + $0x970] sm:$0xff]
    %v685 = vld [vmem:[#allocation6 + $0x978] sm:$0xff]
    %v686 = vld [vmem:[#allocation6 + $0x980] sm:$0xff]
    %v687 = vld [vmem:[#allocation6 + $0x988] sm:$0xff]
    %v688 = vld [vmem:[#allocation6 + $0x990] sm:$0xff]
    %v689 = vld [vmem:[#allocation6 + $0x998] sm:$0xff]
    %v690 = vld [vmem:[#allocation6 + $0x9a0] sm:$0xff]
    %v691 = vld [vmem:[#allocation6 + $0x9a8] sm:$0xff]
    %v692 = vld [vmem:[#allocation6 + $0x9b0] sm:$0xff]
    %v693 = vld [vmem:[#allocation6 + $0x9b8] sm:$0xff]
    %v694 = vld [vmem:[#allocation6 + $0x9c0] sm:$0xff]
    %v695 = vld [vmem:[#allocation6 + $0x9c8] sm:$0xff]
    %v696 = vld [vmem:[#allocation6 + $0x9d0] sm:$0xff]
    %v697 = vld [vmem:[#allocation6 + $0x9d8] sm:$0xff]
    %v698 = vld [vmem:[#allocation6 + $0x9e0] sm:$0xff]
    %v699 = vld [vmem:[#allocation6 + $0x9e8] sm:$0xff]
    %v700 = vld [vmem:[#allocation6 + $0x9f0] sm:$0xff]
    %v701 = vld [vmem:[#allocation6 + $0x9f8] sm:$0xff]
    %v702 = vld [vmem:[#allocation6 + $0xa00] sm:$0xff]
    %v703 = vld [vmem:[#allocation6 + $0xa08] sm:$0xff]
    %v704 = vld [vmem:[#allocation6 + $0xa10] sm:$0xff]
    %v705 = vld [vmem:[#allocation6 + $0xa18] sm:$0xff]
    %v706 = vld [vmem:[#allocation6 + $0xa20] sm:$0xff]
    %v707 = vld [vmem:[#allocation6 + $0xa28] sm:$0xff]
    %v708 = vld [vmem:[#allocation6 + $0xa30] sm:$0xff]
    %v709 = vld [vmem:[#allocation6 + $0xa38] sm:$0xff]
    %v710 = vld [vmem:[#allocation6 + $0xa40] sm:$0xff]
    %v711 = vld [vmem:[#allocation6 + $0xa48] sm:$0xff]
    %v712 = vld [vmem:[#allocation6 + $0xa50] sm:$0xff]
    %v713 = vld [vmem:[#allocation6 + $0xa58] sm:$0xff]
    %v714 = vld [vmem:[#allocation6 + $0xa60] sm:$0xff]
    %v715 = vld [vmem:[#allocation6 + $0xa68] sm:$0xff]
    %v716 = vld [vmem:[#allocation6 + $0xa70] sm:$0xff]
    %v717 = vld [vmem:[#allocation6 + $0xa78] sm:$0xff]
    %v718 = vld [vmem:[#allocation6 + $0xa80] sm:$0xff]
    %v719 = vld [vmem:[#allocation6 + $0xa88] sm:$0xff]
    %v720 = vld [vmem:[#allocation6 + $0xa90] sm:$0xff]
    %v721 = vld [vmem:[#allocation6 + $0xa98] sm:$0xff]
    %v722 = vld [vmem:[#allocation6 + $0xaa0] sm:$0xff]
    %v723 = vld [vmem:[#allocation6 + $0xaa8] sm:$0xff]
    %v724 = vld [vmem:[#allocation6 + $0xab0] sm:$0xff]
    %v725 = vld [vmem:[#allocation6 + $0xab8] sm:$0xff]
    %v726 = vld [vmem:[#allocation6 + $0xac0] sm:$0xff]
    %v727 = vld [vmem:[#allocation6 + $0xac8] sm:$0xff]
    %v728 = vld [vmem:[#allocation6 + $0xad0] sm:$0xff]
    %v729 = vld [vmem:[#allocation6 + $0xad8] sm:$0xff]
    %v730 = vld [vmem:[#allocation6 + $0xae0] sm:$0xff]
    %v731 = vld [vmem:[#allocation6 + $0xae8] sm:$0xff]
    %v732 = vld [vmem:[#allocation6 + $0xaf0] sm:$0xff]
    %v733 = vld [vmem:[#allocation6 + $0xaf8] sm:$0xff]
    %v734 = vld [vmem:[#allocation6 + $0xb00] sm:$0xff]
    %v735 = vld [vmem:[#allocation6 + $0xb08] sm:$0xff]
    %v736 = vld [vmem:[#allocation6 + $0xb10] sm:$0xff]
    %v737 = vld [vmem:[#allocation6 + $0xb18] sm:$0xff]
    %v738 = vld [vmem:[#allocation6 + $0xb20] sm:$0xff]
    %v739 = vld [vmem:[#allocation6 + $0xb28] sm:$0xff]
    %v740 = vld [vmem:[#allocation6 + $0xb30] sm:$0xff]
    %v741 = vld [vmem:[#allocation6 + $0xb38] sm:$0xff]
    %v742 = vld [vmem:[#allocation6 + $0xb40] sm:$0xff]
    %v743 = vld [vmem:[#allocation6 + $0xb48] sm:$0xff]
    %v744 = vld [vmem:[#allocation6 + $0xb50] sm:$0xff]
    %v745 = vld [vmem:[#allocation6 + $0xb58] sm:$0xff]
    %v746 = vld [vmem:[#allocation6 + $0xb60] sm:$0xff]
    %v747 = vld [vmem:[#allocation6 + $0xb68] sm:$0xff]
    %v748 = vld [vmem:[#allocation6 + $0xb70] sm:$0xff]
    %v749 = vld [vmem:[#allocation6 + $0xb78] sm:$0xff]
    %v750 = vld [vmem:[#allocation6 + $0xb80] sm:$0xff]
    %v751 = vld [vmem:[#allocation6 + $0xb88] sm:$0xff]
    %v752 = vld [vmem:[#allocation6 + $0xb90] sm:$0xff]
    %v753 = vld [vmem:[#allocation6 + $0xb98] sm:$0xff]
    %v754 = vld [vmem:[#allocation6 + $0xba0] sm:$0xff]
    %v755 = vld [vmem:[#allocation6 + $0xba8] sm:$0xff]
    %v756 = vld [vmem:[#allocation6 + $0xbb0] sm:$0xff]
    %v757 = vld [vmem:[#allocation6 + $0xbb8] sm:$0xff]
    %v758 = vld [vmem:[#allocation6 + $0xbc0] sm:$0xff]
    %v759 = vld [vmem:[#allocation6 + $0xbc8] sm:$0xff]
    %v760 = vld [vmem:[#allocation6 + $0xbd0] sm:$0xff]
    %v761 = vld [vmem:[#allocation6 + $0xbd8] sm:$0xff]
    %v762 = vld [vmem:[#allocation6 + $0xbe0] sm:$0xff]
    %v763 = vld [vmem:[#allocation6 + $0xbe8] sm:$0xff]
    %v764 = vld [vmem:[#allocation6 + $0xbf0] sm:$0xff]
    %v765 = vld [vmem:[#allocation6 + $0xbf8] sm:$0xff]
    %v766 = vld [vmem:[#allocation6 + $0xc00] sm:$0xff]
    %v767 = vld [vmem:[#allocation6 + $0xc08] sm:$0xff]
    %v768 = vld [vmem:[#allocation6 + $0xc10] sm:$0xff]
    %v769 = vld [vmem:[#allocation6 + $0xc18] sm:$0xff]
    %v770 = vld [vmem:[#allocation6 + $0xc20] sm:$0xff]
    %v771 = vld [vmem:[#allocation6 + $0xc28] sm:$0xff]
    %v772 = vld [vmem:[#allocation6 + $0xc30] sm:$0xff]
    %v773 = vld [vmem:[#allocation6 + $0xc38] sm:$0xff]
    %v774 = vld [vmem:[#allocation6 + $0xc40] sm:$0xff]
    %v775 = vld [vmem:[#allocation6 + $0xc48] sm:$0xff]
    %v776 = vld [vmem:[#allocation6 + $0xc50] sm:$0xff]
    %v777 = vld [vmem:[#allocation6 + $0xc58] sm:$0xff]
    %v778 = vld [vmem:[#allocation6 + $0xc60] sm:$0xff]
    %v779 = vld [vmem:[#allocation6 + $0xc68] sm:$0xff]
    %v780 = vld [vmem:[#allocation6 + $0xc70] sm:$0xff]
    %v781 = vld [vmem:[#allocation6 + $0xc78] sm:$0xff]
    %v782 = vld [vmem:[#allocation6 + $0xc80] sm:$0xff]
    %v783 = vld [vmem:[#allocation6 + $0xc88] sm:$0xff]
    %v784 = vld [vmem:[#allocation6 + $0xc90] sm:$0xff]
    %v785 = vld [vmem:[#allocation6 + $0xc98] sm:$0xff]
    %v786 = vld [vmem:[#allocation6 + $0xca0] sm:$0xff]
    %v787 = vld [vmem:[#allocation6 + $0xca8] sm:$0xff]
    %v788 = vld [vmem:[#allocation6 + $0xcb0] sm:$0xff]
    %v789 = vld [vmem:[#allocation6 + $0xcb8] sm:$0xff]
    %v790 = vld [vmem:[#allocation6 + $0xcc0] sm:$0xff]
    %v791 = vld [vmem:[#allocation6 + $0xcc8] sm:$0xff]
    %v792 = vld [vmem:[#allocation6 + $0xcd0] sm:$0xff]
    %v793 = vld [vmem:[#allocation6 + $0xcd8] sm:$0xff]
    %v794 = vld [vmem:[#allocation6 + $0xce0] sm:$0xff]
    %v795 = vld [vmem:[#allocation6 + $0xce8] sm:$0xff]
    %v796 = vld [vmem:[#allocation6 + $0xcf0] sm:$0xff]
    %v797 = vld [vmem:[#allocation6 + $0xcf8] sm:$0xff]
    %v798 = vld [vmem:[#allocation6 + $0xd00] sm:$0xff]
    %v799 = vld [vmem:[#allocation6 + $0xd08] sm:$0xff]
    %v800 = vld [vmem:[#allocation6 + $0xd10] sm:$0xff]
    %v801 = vld [vmem:[#allocation6 + $0xd18] sm:$0xff]
    %v802 = vld [vmem:[#allocation6 + $0xd20] sm:$0xff]
    %v803 = vld [vmem:[#allocation6 + $0xd28] sm:$0xff]
    %v804 = vld [vmem:[#allocation6 + $0xd30] sm:$0xff]
    %v805 = vld [vmem:[#allocation6 + $0xd38] sm:$0xff]
    %v806 = vld [vmem:[#allocation6 + $0xd40] sm:$0xff]
    %v807 = vld [vmem:[#allocation6 + $0xd48] sm:$0xff]
    %v808 = vld [vmem:[#allocation6 + $0xd50] sm:$0xff]
    %v809 = vld [vmem:[#allocation6 + $0xd58] sm:$0xff]
    %v810 = vld [vmem:[#allocation6 + $0xd60] sm:$0xff]
    %v811 = vld [vmem:[#allocation6 + $0xd68] sm:$0xff]
    %v812 = vld [vmem:[#allocation6 + $0xd70] sm:$0xff]
    %v813 = vld [vmem:[#allocation6 + $0xd78] sm:$0xff]
    %v814 = vld [vmem:[#allocation6 + $0xd80] sm:$0xff]
    %v815 = vld [vmem:[#allocation6 + $0xd88] sm:$0xff]
    %v816 = vld [vmem:[#allocation6 + $0xd90] sm:$0xff]
    %v817 = vld [vmem:[#allocation6 + $0xd98] sm:$0xff]
    %v818 = vld [vmem:[#allocation6 + $0xda0] sm:$0xff]
    %v819 = vld [vmem:[#allocation6 + $0xda8] sm:$0xff]
    %v820 = vld [vmem:[#allocation6 + $0xdb0] sm:$0xff]
    %v821 = vld [vmem:[#allocation6 + $0xdb8] sm:$0xff]
    %v822 = vld [vmem:[#allocation6 + $0xdc0] sm:$0xff]
    %v823 = vld [vmem:[#allocation6 + $0xdc8] sm:$0xff]
    %v824 = vld [vmem:[#allocation6 + $0xdd0] sm:$0xff]
    %v825 = vld [vmem:[#allocation6 + $0xdd8] sm:$0xff]
    %v826 = vld [vmem:[#allocation6 + $0xde0] sm:$0xff]
    %v827 = vld [vmem:[#allocation6 + $0xde8] sm:$0xff]
    %v828 = vld [vmem:[#allocation6 + $0xdf0] sm:$0xff]
    %v829 = vld [vmem:[#allocation6 + $0xdf8] sm:$0xff]
    %v830 = vld [vmem:[#allocation6 + $0xe00] sm:$0xff]
    %v831 = vld [vmem:[#allocation6 + $0xe08] sm:$0xff]
    %v832 = vld [vmem:[#allocation6 + $0xe10] sm:$0xff]
    %v833 = vld [vmem:[#allocation6 + $0xe18] sm:$0xff]
    %v834 = vld [vmem:[#allocation6 + $0xe20] sm:$0xff]
    %v835 = vld [vmem:[#allocation6 + $0xe28] sm:$0xff]
    %v836 = vld [vmem:[#allocation6 + $0xe30] sm:$0xff]
    %v837 = vld [vmem:[#allocation6 + $0xe38] sm:$0xff]
    %v838 = vld [vmem:[#allocation6 + $0xe40] sm:$0xff]
    %v839 = vld [vmem:[#allocation6 + $0xe48] sm:$0xff]
    %v840 = vld [vmem:[#allocation6 + $0xe50] sm:$0xff]
    %v841 = vld [vmem:[#allocation6 + $0xe58] sm:$0xff]
    %v842 = vld [vmem:[#allocation6 + $0xe60] sm:$0xff]
    %v843 = vld [vmem:[#allocation6 + $0xe68] sm:$0xff]
    %v844 = vld [vmem:[#allocation6 + $0xe70] sm:$0xff]
    %v845 = vld [vmem:[#allocation6 + $0xe78] sm:$0xff]
    %v846 = vld [vmem:[#allocation6 + $0xe80] sm:$0xff]
    %v847 = vld [vmem:[#allocation6 + $0xe88] sm:$0xff]
    %v848 = vld [vmem:[#allocation6 + $0xe90] sm:$0xff]
    %v849 = vld [vmem:[#allocation6 + $0xe98] sm:$0xff]
    %v850 = vld [vmem:[#allocation6 + $0xea0] sm:$0xff]
    %v851 = vld [vmem:[#allocation6 + $0xea8] sm:$0xff]
    %v852 = vld [vmem:[#allocation6 + $0xeb0] sm:$0xff]
    %v853 = vld [vmem:[#allocation6 + $0xeb8] sm:$0xff]
    %v854 = vld [vmem:[#allocation6 + $0xec0] sm:$0xff]
    %v855 = vld [vmem:[#allocation6 + $0xec8] sm:$0xff]
    %v856 = vld [vmem:[#allocation6 + $0xed0] sm:$0xff]
    %v857 = vld [vmem:[#allocation6 + $0xed8] sm:$0xff]
    %v858 = vld [vmem:[#allocation6 + $0xee0] sm:$0xff]
    %v859 = vld [vmem:[#allocation6 + $0xee8] sm:$0xff]
    %v860 = vld [vmem:[#allocation6 + $0xef0] sm:$0xff]
    %v861 = vld [vmem:[#allocation6 + $0xef8] sm:$0xff]
    %v862 = vld [vmem:[#allocation6 + $0xf00] sm:$0xff]
    %v863 = vld [vmem:[#allocation6 + $0xf08] sm:$0xff]
    %v864 = vld [vmem:[#allocation6 + $0xf10] sm:$0xff]
    %v865 = vld [vmem:[#allocation6 + $0xf18] sm:$0xff]
    %v866 = vld [vmem:[#allocation6 + $0xf20] sm:$0xff]
    %v867 = vld [vmem:[#allocation6 + $0xf28] sm:$0xff]
    %v868 = vld [vmem:[#allocation6 + $0xf30] sm:$0xff]
    %v869 = vld [vmem:[#allocation6 + $0xf38] sm:$0xff]
    %v870 = vld [vmem:[#allocation6 + $0xf40] sm:$0xff]
    %v871 = vld [vmem:[#allocation6 + $0xf48] sm:$0xff]
    %v872 = vld [vmem:[#allocation6 + $0xf50] sm:$0xff]
    %v873 = vld [vmem:[#allocation6 + $0xf58] sm:$0xff]
    %v874 = vld [vmem:[#allocation6 + $0xf60] sm:$0xff]
    %v875 = vld [vmem:[#allocation6 + $0xf68] sm:$0xff]
    %v876 = vld [vmem:[#allocation6 + $0xf70] sm:$0xff]
    %v877 = vld [vmem:[#allocation6 + $0xf78] sm:$0xff]
    %v878 = vld [vmem:[#allocation6 + $0xf80] sm:$0xff]
    %v879 = vld [vmem:[#allocation6 + $0xf88] sm:$0xff]
    %v880 = vld [vmem:[#allocation6 + $0xf90] sm:$0xff]
    %v881 = vld [vmem:[#allocation6 + $0xf98] sm:$0xff]
    %v882 = vld [vmem:[#allocation6 + $0xfa0] sm:$0xff]
    %v883 = vld [vmem:[#allocation6 + $0xfa8] sm:$0xff]
    %v884 = vld [vmem:[#allocation6 + $0xfb0] sm:$0xff]
    %v885 = vld [vmem:[#allocation6 + $0xfb8] sm:$0xff]
    %v886 = vld [vmem:[#allocation6 + $0xfc0] sm:$0xff]
    %v887 = vld [vmem:[#allocation6 + $0xfc8] sm:$0xff]
    %v888 = vld [vmem:[#allocation6 + $0xfd0] sm:$0xff]
    %v889 = vld [vmem:[#allocation6 + $0xfd8] sm:$0xff]
    %v890 = vld [vmem:[#allocation6 + $0xfe0] sm:$0xff]
    %v891 = vld [vmem:[#allocation6 + $0xfe8] sm:$0xff]
    %v892 = vld [vmem:[#allocation6 + $0xff0] sm:$0xff]
    %v893 = vld [vmem:[#allocation6 + $0xff8] sm:$0xff]
    %v894 = vld [vmem:[#allocation6 + $0x1000] sm:$0xff]
    %v895 = vld [vmem:[#allocation6 + $0x1008] sm:$0xff]
    %v896 = vld [vmem:[#allocation6 + $0x1010] sm:$0xff]
    %v897 = vld [vmem:[#allocation6 + $0x1018] sm:$0xff]
    %v898 = vld [vmem:[#allocation6 + $0x1020] sm:$0xff]
    %v899 = vld [vmem:[#allocation6 + $0x1028] sm:$0xff]
    %v900 = vld [vmem:[#allocation6 + $0x1030] sm:$0xff]
    %v901 = vld [vmem:[#allocation6 + $0x1038] sm:$0xff]
    %v902 = vld [vmem:[#allocation6 + $0x1040] sm:$0xff]
    %v903 = vld [vmem:[#allocation6 + $0x1048] sm:$0xff]
    %v904 = vld [vmem:[#allocation6 + $0x1050] sm:$0xff]
    %v905 = vld [vmem:[#allocation6 + $0x1058] sm:$0xff]
    %v906 = vld [vmem:[#allocation6 + $0x1060] sm:$0xff]
    %v907 = vld [vmem:[#allocation6 + $0x1068] sm:$0xff]
    %v908 = vld [vmem:[#allocation6 + $0x1070] sm:$0xff]
    %v909 = vld [vmem:[#allocation6 + $0x1078] sm:$0xff]
    %v910 = vld [vmem:[#allocation6 + $0x1080] sm:$0xff]
    %v911 = vld [vmem:[#allocation6 + $0x1088] sm:$0xff]
    %v912 = vld [vmem:[#allocation6 + $0x1090] sm:$0xff]
    %v913 = vld [vmem:[#allocation6 + $0x1098] sm:$0xff]
    %v914 = vld [vmem:[#allocation6 + $0x10a0] sm:$0xff]
    %v915 = vld [vmem:[#allocation6 + $0x10a8] sm:$0xff]
    %v916 = vld [vmem:[#allocation6 + $0x10b0] sm:$0xff]
    %v917 = vld [vmem:[#allocation6 + $0x10b8] sm:$0xff]
    %v918 = vld [vmem:[#allocation6 + $0x10c0] sm:$0xff]
    %v919 = vld [vmem:[#allocation6 + $0x10c8] sm:$0xff]
    %v920 = vld [vmem:[#allocation6 + $0x10d0] sm:$0xff]
    %v921 = vld [vmem:[#allocation6 + $0x10d8] sm:$0xff]
    %v922 = vld [vmem:[#allocation6 + $0x10e0] sm:$0xff]
    %v923 = vld [vmem:[#allocation6 + $0x10e8] sm:$0xff]
    %v924 = vld [vmem:[#allocation6 + $0x10f0] sm:$0xff]
    %v925 = vld [vmem:[#allocation6 + $0x10f8] sm:$0xff]
    %v926 = vld [vmem:[#allocation6 + $0x1100] sm:$0xff]
    %v927 = vld [vmem:[#allocation6 + $0x1108] sm:$0xff]
    %v928 = vld [vmem:[#allocation6 + $0x1110] sm:$0xff]
    %v929 = vld [vmem:[#allocation6 + $0x1118] sm:$0xff]
    %v930 = vld [vmem:[#allocation6 + $0x1120] sm:$0xff]
    %v931 = vld [vmem:[#allocation6 + $0x1128] sm:$0xff]
    %v932 = vld [vmem:[#allocation6 + $0x1130] sm:$0xff]
    %v933 = vld [vmem:[#allocation6 + $0x1138] sm:$0xff]
    %v934 = vld [vmem:[#allocation6 + $0x1140] sm:$0xff]
    %v935 = vld [vmem:[#allocation6 + $0x1148] sm:$0xff]
    %v936 = vld [vmem:[#allocation6 + $0x1150] sm:$0xff]
    %v937 = vld [vmem:[#allocation6 + $0x1158] sm:$0xff]
    %v938 = vld [vmem:[#allocation6 + $0x1160] sm:$0xff]
    %v939 = vld [vmem:[#allocation6 + $0x1168] sm:$0xff]
    %v940 = vld [vmem:[#allocation6 + $0x1170] sm:$0xff]
    %v941 = vld [vmem:[#allocation6 + $0x1178] sm:$0xff]
    %v942 = vld [vmem:[#allocation6 + $0x1180] sm:$0xff]
    %v943 = vld [vmem:[#allocation6 + $0x1188] sm:$0xff]
    %v944 = vld [vmem:[#allocation6 + $0x1190] sm:$0xff]
    %v945 = vld [vmem:[#allocation6 + $0x1198] sm:$0xff]
    %v946 = vld [vmem:[#allocation6 + $0x11a0] sm:$0xff]
    %v947 = vld [vmem:[#allocation6 + $0x11a8] sm:$0xff]
    %v948 = vld [vmem:[#allocation6 + $0x11b0] sm:$0xff]
    %v949 = vld [vmem:[#allocation6 + $0x11b8] sm:$0xff]
    %v950 = vld [vmem:[#allocation6 + $0x11c0] sm:$0xff]
    %v951 = vld [vmem:[#allocation6 + $0x11c8] sm:$0xff]
    %v952 = vld [vmem:[#allocation6 + $0x11d0] sm:$0xff]
    %v953 = vld [vmem:[#allocation6 + $0x11d8] sm:$0xff]
    %v954 = vld [vmem:[#allocation6 + $0x11e0] sm:$0xff]
    %v955 = vld [vmem:[#allocation6 + $0x11e8] sm:$0xff]
    %v956 = vld [vmem:[#allocation6 + $0x11f0] sm:$0xff]
    %v957 = vld [vmem:[#allocation6 + $0x11f8] sm:$0xff]
    %v958 = vld [vmem:[#allocation6 + $0x1200] sm:$0xff]
    %v959 = vld [vmem:[#allocation6 + $0x1208] sm:$0xff]
    %v960 = vld [vmem:[#allocation6 + $0x1210] sm:$0xff]
    %v961 = vld [vmem:[#allocation6 + $0x1218] sm:$0xff]
    %v962 = vld [vmem:[#allocation6 + $0x1220] sm:$0xff]
    %v963 = vld [vmem:[#allocation6 + $0x1228] sm:$0xff]
    %v964 = vld [vmem:[#allocation6 + $0x1230] sm:$0xff]
    %v965 = vld [vmem:[#allocation6 + $0x1238] sm:$0xff]
    %v966 = vld [vmem:[#allocation6 + $0x1240] sm:$0xff]
    %v967 = vld [vmem:[#allocation6 + $0x1248] sm:$0xff]
    %v968 = vld [vmem:[#allocation6 + $0x1250] sm:$0xff]
    %v969 = vld [vmem:[#allocation6 + $0x1258] sm:$0xff]
    %v970 = vld [vmem:[#allocation6 + $0x1260] sm:$0xff]
    %v971 = vld [vmem:[#allocation6 + $0x1268] sm:$0xff]
    %v972 = vld [vmem:[#allocation6 + $0x1270] sm:$0xff]
    %v973 = vld [vmem:[#allocation6 + $0x1278] sm:$0xff]
    %v974 = vld [vmem:[#allocation6 + $0x1280] sm:$0xff]
    %v975 = vld [vmem:[#allocation6 + $0x1288] sm:$0xff]
    %v976 = vld [vmem:[#allocation6 + $0x1290] sm:$0xff]
    %v977 = vld [vmem:[#allocation6 + $0x1298] sm:$0xff]
    %v978 = vld [vmem:[#allocation6 + $0x12a0] sm:$0xff]
    %v979 = vld [vmem:[#allocation6 + $0x12a8] sm:$0xff]
    %v980 = vld [vmem:[#allocation6 + $0x12b0] sm:$0xff]
    %v981 = vld [vmem:[#allocation6 + $0x12b8] sm:$0xff]
    %v982 = vld [vmem:[#allocation6 + $0x12c0] sm:$0xff]
    %v983 = vld [vmem:[#allocation6 + $0x12c8] sm:$0xff]
    %v984 = vld [vmem:[#allocation6 + $0x12d0] sm:$0xff]
    %v985 = vld [vmem:[#allocation6 + $0x12d8] sm:$0xff]
    %v986 = vld [vmem:[#allocation6 + $0x12e0] sm:$0xff]
    %v987 = vld [vmem:[#allocation6 + $0x12e8] sm:$0xff]
    %v988 = vld [vmem:[#allocation6 + $0x12f0] sm:$0xff]
    %v989 = vld [vmem:[#allocation6 + $0x12f8] sm:$0xff]
    %v990 = vld [vmem:[#allocation6 + $0x1300] sm:$0xff]
    %v991 = vld [vmem:[#allocation6 + $0x1308] sm:$0xff]
    %v992 = vld [vmem:[#allocation6 + $0x1310] sm:$0xff]
    %v993 = vld [vmem:[#allocation6 + $0x1318] sm:$0xff]
    %v994 = vld [vmem:[#allocation6 + $0x1320] sm:$0xff]
    %v995 = vld [vmem:[#allocation6 + $0x1328] sm:$0xff]
    %v996 = vld [vmem:[#allocation6 + $0x1330] sm:$0xff]
    %v997 = vld [vmem:[#allocation6 + $0x1338] sm:$0xff]
    %v998 = vld [vmem:[#allocation6 + $0x1340] sm:$0xff]
    %v999 = vld [vmem:[#allocation6 + $0x1348] sm:$0xff]
    %v1000 = vld [vmem:[#allocation6 + $0x1350] sm:$0xff]
    %v1001 = vld [vmem:[#allocation6 + $0x1358] sm:$0xff]
    %v1002 = vld [vmem:[#allocation6 + $0x1360] sm:$0xff]
    %v1003 = vld [vmem:[#allocation6 + $0x1368] sm:$0xff]
    %v1004 = vld [vmem:[#allocation6 + $0x1370] sm:$0xff]
    %v1005 = vld [vmem:[#allocation6 + $0x1378] sm:$0xff]
    %v1006 = vld [vmem:[#allocation6 + $0x1380] sm:$0xff]
    %v1007 = vld [vmem:[#allocation6 + $0x1388] sm:$0xff]
    %v1008 = vld [vmem:[#allocation6 + $0x1390] sm:$0xff]
    %v1009 = vld [vmem:[#allocation6 + $0x1398] sm:$0xff]
    %v1010 = vld [vmem:[#allocation6 + $0x13a0] sm:$0xff]
    %v1011 = vld [vmem:[#allocation6 + $0x13a8] sm:$0xff]
    %v1012 = vld [vmem:[#allocation6 + $0x13b0] sm:$0xff]
    %v1013 = vld [vmem:[#allocation6 + $0x13b8] sm:$0xff]
    %v1014 = vld [vmem:[#allocation6 + $0x13c0] sm:$0xff]
    %v1015 = vld [vmem:[#allocation6 + $0x13c8] sm:$0xff]
    %v1016 = vld [vmem:[#allocation6 + $0x13d0] sm:$0xff]
    %v1017 = vld [vmem:[#allocation6 + $0x13d8] sm:$0xff]
    %v1018 = vld [vmem:[#allocation6 + $0x13e0] sm:$0xff]
    %v1019 = vld [vmem:[#allocation6 + $0x13e8] sm:$0xff]
    %v1020 = vld [vmem:[#allocation6 + $0x13f0] sm:$0xff]
    %v1021 = vld [vmem:[#allocation6 + $0x13f8] sm:$0xff]
    %v1022 = vld [vmem:[#allocation6 + $0x1400] sm:$0xff]
    %v1023 = vld [vmem:[#allocation6 + $0x1408] sm:$0xff]
    %v1024 = vld [vmem:[#allocation6 + $0x1410] sm:$0xff]
    %v1025 = vld [vmem:[#allocation6 + $0x1418] sm:$0xff]
    %v1026 = vld [vmem:[#allocation6 + $0x1420] sm:$0xff]
    %v1027 = vld [vmem:[#allocation6 + $0x1428] sm:$0xff]
    %v1028 = vld [vmem:[#allocation6 + $0x1430] sm:$0xff]
    %v1029 = vld [vmem:[#allocation6 + $0x1438] sm:$0xff]
    %v1030 = vld [vmem:[#allocation6 + $0x1440] sm:$0xff]
    %v1031 = vld [vmem:[#allocation6 + $0x1448] sm:$0xff]
    %v1032 = vld [vmem:[#allocation6 + $0x1450] sm:$0xff]
    %v1033 = vld [vmem:[#allocation6 + $0x1458] sm:$0xff]
    %v1034 = vld [vmem:[#allocation6 + $0x1460] sm:$0xff]
    %v1035 = vld [vmem:[#allocation6 + $0x1468] sm:$0xff]
    %v1036 = vld [vmem:[#allocation6 + $0x1470] sm:$0xff]
    %v1037 = vld [vmem:[#allocation6 + $0x1478] sm:$0xff]
    %v1038 = vld [vmem:[#allocation6 + $0x1480] sm:$0xff]
    %v1039 = vld [vmem:[#allocation6 + $0x1488] sm:$0xff]
    %v1040 = vld [vmem:[#allocation6 + $0x1490] sm:$0xff]
    %v1041 = vld [vmem:[#allocation6 + $0x1498] sm:$0xff]
    %v1042 = vld [vmem:[#allocation6 + $0x14a0] sm:$0xff]
    %v1043 = vld [vmem:[#allocation6 + $0x14a8] sm:$0xff]
    %v1044 = vld [vmem:[#allocation6 + $0x14b0] sm:$0xff]
    %v1045 = vld [vmem:[#allocation6 + $0x14b8] sm:$0xff]
    %v1046 = vld [vmem:[#allocation6 + $0x14c0] sm:$0xff]
    %v1047 = vld [vmem:[#allocation6 + $0x14c8] sm:$0xff]
    %v1048 = vld [vmem:[#allocation6 + $0x14d0] sm:$0xff]
    %v1049 = vld [vmem:[#allocation6 + $0x14d8] sm:$0xff]
    %v1050 = vld [vmem:[#allocation6 + $0x14e0] sm:$0xff]
    %v1051 = vld [vmem:[#allocation6 + $0x14e8] sm:$0xff]
    %v1052 = vld [vmem:[#allocation6 + $0x14f0] sm:$0xff]
    %v1053 = vld [vmem:[#allocation6 + $0x14f8] sm:$0xff]
    %v1054 = vld [vmem:[#allocation6 + $0x1500] sm:$0xff]
    %v1055 = vld [vmem:[#allocation6 + $0x1508] sm:$0xff]
    %v1056 = vld [vmem:[#allocation6 + $0x1510] sm:$0xff]
    %v1057 = vld [vmem:[#allocation6 + $0x1518] sm:$0xff]
    %v1058 = vld [vmem:[#allocation6 + $0x1520] sm:$0xff]
    %v1059 = vld [vmem:[#allocation6 + $0x1528] sm:$0xff]
    %v1060 = vld [vmem:[#allocation6 + $0x1530] sm:$0xff]
    %v1061 = vld [vmem:[#allocation6 + $0x1538] sm:$0xff]
    %v1062 = vld [vmem:[#allocation6 + $0x1540] sm:$0xff]
    %v1063 = vld [vmem:[#allocation6 + $0x1548] sm:$0xff]
    %v1064 = vld [vmem:[#allocation6 + $0x1550] sm:$0xff]
    %v1065 = vld [vmem:[#allocation6 + $0x1558] sm:$0xff]
    %v1066 = vld [vmem:[#allocation6 + $0x1560] sm:$0xff]
    %v1067 = vld [vmem:[#allocation6 + $0x1568] sm:$0xff]
    %v1068 = vld [vmem:[#allocation6 + $0x1570] sm:$0xff]
    %v1069 = vld [vmem:[#allocation6 + $0x1578] sm:$0xff]
    %v1070 = vld [vmem:[#allocation6 + $0x1580] sm:$0xff]
    %v1071 = vld [vmem:[#allocation6 + $0x1588] sm:$0xff]
    %v1072 = vld [vmem:[#allocation6 + $0x1590] sm:$0xff]
    %v1073 = vld [vmem:[#allocation6 + $0x1598] sm:$0xff]
    %v1074 = vld [vmem:[#allocation6 + $0x15a0] sm:$0xff]
    %v1075 = vld [vmem:[#allocation6 + $0x15a8] sm:$0xff]
    %v1076 = vld [vmem:[#allocation6 + $0x15b0] sm:$0xff]
    %v1077 = vld [vmem:[#allocation6 + $0x15b8] sm:$0xff]
    %v1078 = vld [vmem:[#allocation6 + $0x15c0] sm:$0xff]
    %v1079 = vld [vmem:[#allocation6 + $0x15c8] sm:$0xff]
    %v1080 = vld [vmem:[#allocation6 + $0x15d0] sm:$0xff]
    %v1081 = vld [vmem:[#allocation6 + $0x15d8] sm:$0xff]
    %v1082 = vld [vmem:[#allocation6 + $0x15e0] sm:$0xff]
    %v1083 = vld [vmem:[#allocation6 + $0x15e8] sm:$0xff]
    %v1084 = vld [vmem:[#allocation6 + $0x15f0] sm:$0xff]
    %v1085 = vld [vmem:[#allocation6 + $0x15f8] sm:$0xff]
    %v1086 = vld [vmem:[#allocation6 + $0x1600] sm:$0xff]
    %v1087 = vld [vmem:[#allocation6 + $0x1608] sm:$0xff]
    %v1088 = vld [vmem:[#allocation6 + $0x1610] sm:$0xff]
    %v1089 = vld [vmem:[#allocation6 + $0x1618] sm:$0xff]
    %v1090 = vld [vmem:[#allocation6 + $0x1620] sm:$0xff]
    %v1091 = vld [vmem:[#allocation6 + $0x1628] sm:$0xff]
    %v1092 = vld [vmem:[#allocation6 + $0x1630] sm:$0xff]
    %v1093 = vld [vmem:[#allocation6 + $0x1638] sm:$0xff]
    %v1094 = vld [vmem:[#allocation6 + $0x1640] sm:$0xff]
    %v1095 = vld [vmem:[#allocation6 + $0x1648] sm:$0xff]
    %v1096 = vld [vmem:[#allocation6 + $0x1650] sm:$0xff]
    %v1097 = vld [vmem:[#allocation6 + $0x1658] sm:$0xff]
    %v1098 = vld [vmem:[#allocation6 + $0x1660] sm:$0xff]
    %v1099 = vld [vmem:[#allocation6 + $0x1668] sm:$0xff]
    %v1100 = vld [vmem:[#allocation6 + $0x1670] sm:$0xff]
    %v1101 = vld [vmem:[#allocation6 + $0x1678] sm:$0xff]
    %v1102 = vld [vmem:[#allocation6 + $0x1680] sm:$0xff]
    %v1103 = vld [vmem:[#allocation6 + $0x1688] sm:$0xff]
    %v1104 = vld [vmem:[#allocation6 + $0x1690] sm:$0xff]
    %v1105 = vld [vmem:[#allocation6 + $0x1698] sm:$0xff]
    %v1106 = vld [vmem:[#allocation6 + $0x16a0] sm:$0xff]
    %v1107 = vld [vmem:[#allocation6 + $0x16a8] sm:$0xff]
    %v1108 = vld [vmem:[#allocation6 + $0x16b0] sm:$0xff]
    %v1109 = vld [vmem:[#allocation6 + $0x16b8] sm:$0xff]
    %v1110 = vld [vmem:[#allocation6 + $0x16c0] sm:$0xff]
    %v1111 = vld [vmem:[#allocation6 + $0x16c8] sm:$0xff]
    %v1112 = vld [vmem:[#allocation6 + $0x16d0] sm:$0xff]
    %v1113 = vld [vmem:[#allocation6 + $0x16d8] sm:$0xff]
    %v1114 = vld [vmem:[#allocation6 + $0x16e0] sm:$0xff]
    %v1115 = vld [vmem:[#allocation6 + $0x16e8] sm:$0xff]
    %v1116 = vld [vmem:[#allocation6 + $0x16f0] sm:$0xff]
    %v1117 = vld [vmem:[#allocation6 + $0x16f8] sm:$0xff]
    %v1118 = vld [vmem:[#allocation6 + $0x1700] sm:$0xff]
    %v1119 = vld [vmem:[#allocation6 + $0x1708] sm:$0xff]
    %v1120 = vld [vmem:[#allocation6 + $0x1710] sm:$0xff]
    %v1121 = vld [vmem:[#allocation6 + $0x1718] sm:$0xff]
    %v1122 = vld [vmem:[#allocation6 + $0x1720] sm:$0xff]
    %v1123 = vld [vmem:[#allocation6 + $0x1728] sm:$0xff]
    %v1124 = vld [vmem:[#allocation6 + $0x1730] sm:$0xff]
    %v1125 = vld [vmem:[#allocation6 + $0x1738] sm:$0xff]
    %v1126 = vld [vmem:[#allocation6 + $0x1740] sm:$0xff]
    %v1127 = vld [vmem:[#allocation6 + $0x1748] sm:$0xff]
    %v1128 = vld [vmem:[#allocation6 + $0x1750] sm:$0xff]
    %v1129 = vld [vmem:[#allocation6 + $0x1758] sm:$0xff]
    %v1130 = vld [vmem:[#allocation6 + $0x1760] sm:$0xff]
    %v1131 = vld [vmem:[#allocation6 + $0x1768] sm:$0xff]
    %v1132 = vld [vmem:[#allocation6 + $0x1770] sm:$0xff]
    %v1133 = vld [vmem:[#allocation6 + $0x1778] sm:$0xff]
    %v1134 = vld [vmem:[#allocation6 + $0x1780] sm:$0xff]
    %v1135 = vld [vmem:[#allocation6 + $0x1788] sm:$0xff]
    %v1136 = vld [vmem:[#allocation6 + $0x1790] sm:$0xff]
    %v1137 = vld [vmem:[#allocation6 + $0x1798] sm:$0xff]
    %v1138 = vld [vmem:[#allocation6 + $0x17a0] sm:$0xff]
    %v1139 = vld [vmem:[#allocation6 + $0x17a8] sm:$0xff]
    %v1140 = vld [vmem:[#allocation6 + $0x17b0] sm:$0xff]
    %v1141 = vld [vmem:[#allocation6 + $0x17b8] sm:$0xff]
    %v1142 = vld [vmem:[#allocation6 + $0x17c0] sm:$0xff]
    %v1143 = vld [vmem:[#allocation6 + $0x17c8] sm:$0xff]
    %v1144 = vld [vmem:[#allocation6 + $0x17d0] sm:$0xff]
    %v1145 = vld [vmem:[#allocation6 + $0x17d8] sm:$0xff]
    %v1146 = vld [vmem:[#allocation6 + $0x17e0] sm:$0xff]
    %v1147 = vld [vmem:[#allocation6 + $0x17e8] sm:$0xff]
    %v1148 = vld [vmem:[#allocation6 + $0x17f0] sm:$0xff]
    %v1149 = vld [vmem:[#allocation6 + $0x17f8] sm:$0xff]
    %v1150 = vld [vmem:[#allocation6 + $0x1800] sm:$0xff]
    %v1151 = vld [vmem:[#allocation6 + $0x1808] sm:$0xff]
    %v1152 = vld [vmem:[#allocation6 + $0x1810] sm:$0xff]
    %v1153 = vld [vmem:[#allocation6 + $0x1818] sm:$0xff]
    %v1154 = vld [vmem:[#allocation6 + $0x1820] sm:$0xff]
    %v1155 = vld [vmem:[#allocation6 + $0x1828] sm:$0xff]
    %v1156 = vld [vmem:[#allocation6 + $0x1830] sm:$0xff]
    %v1157 = vld [vmem:[#allocation6 + $0x1838] sm:$0xff]
    %v1158 = vld [vmem:[#allocation6 + $0x1840] sm:$0xff]
    %v1159 = vld [vmem:[#allocation6 + $0x1848] sm:$0xff]
    %v1160 = vld [vmem:[#allocation6 + $0x1850] sm:$0xff]
    %v1161 = vld [vmem:[#allocation6 + $0x1858] sm:$0xff]
    %v1162 = vld [vmem:[#allocation6 + $0x1860] sm:$0xff]
    %v1163 = vld [vmem:[#allocation6 + $0x1868] sm:$0xff]
    %v1164 = vld [vmem:[#allocation6 + $0x1870] sm:$0xff]
    %v1165 = vld [vmem:[#allocation6 + $0x1878] sm:$0xff]
    %v1166 = vld [vmem:[#allocation6 + $0x1880] sm:$0xff]
    %v1167 = vld [vmem:[#allocation6 + $0x1888] sm:$0xff]
    %v1168 = vld [vmem:[#allocation6 + $0x1890] sm:$0xff]
    %v1169 = vld [vmem:[#allocation6 + $0x1898] sm:$0xff]
    %v1170 = vld [vmem:[#allocation6 + $0x18a0] sm:$0xff]
    %v1171 = vld [vmem:[#allocation6 + $0x18a8] sm:$0xff]
    %v1172 = vld [vmem:[#allocation6 + $0x18b0] sm:$0xff]
    %v1173 = vld [vmem:[#allocation6 + $0x18b8] sm:$0xff]
    %v1174 = vld [vmem:[#allocation6 + $0x18c0] sm:$0xff]
    %v1175 = vld [vmem:[#allocation6 + $0x18c8] sm:$0xff]
    %v1176 = vld [vmem:[#allocation6 + $0x18d0] sm:$0xff]
    %v1177 = vld [vmem:[#allocation6 + $0x18d8] sm:$0xff]
    %v1178 = vld [vmem:[#allocation6 + $0x18e0] sm:$0xff]
    %v1179 = vld [vmem:[#allocation6 + $0x18e8] sm:$0xff]
    %v1180 = vld [vmem:[#allocation6 + $0x18f0] sm:$0xff]
    %v1181 = vld [vmem:[#allocation6 + $0x18f8] sm:$0xff]
    %v1182 = vld [vmem:[#allocation6 + $0x1900] sm:$0xff]
    %v1183 = vld [vmem:[#allocation6 + $0x1908] sm:$0xff]
    %v1184 = vld [vmem:[#allocation6 + $0x1910] sm:$0xff]
    %v1185 = vld [vmem:[#allocation6 + $0x1918] sm:$0xff]
    %v1186 = vld [vmem:[#allocation6 + $0x1920] sm:$0xff]
    %v1187 = vld [vmem:[#allocation6 + $0x1928] sm:$0xff]
    %v1188 = vld [vmem:[#allocation6 + $0x1930] sm:$0xff]
    %v1189 = vld [vmem:[#allocation6 + $0x1938] sm:$0xff]
    %v1190 = vld [vmem:[#allocation6 + $0x1940] sm:$0xff]
    %v1191 = vld [vmem:[#allocation6 + $0x1948] sm:$0xff]
    %v1192 = vld [vmem:[#allocation6 + $0x1950] sm:$0xff]
    %v1193 = vld [vmem:[#allocation6 + $0x1958] sm:$0xff]
    %v1194 = vld [vmem:[#allocation6 + $0x1960] sm:$0xff]
    %v1195 = vld [vmem:[#allocation6 + $0x1968] sm:$0xff]
    %v1196 = vld [vmem:[#allocation6 + $0x1970] sm:$0xff]
    %v1197 = vld [vmem:[#allocation6 + $0x1978] sm:$0xff]
    %v1198 = vld [vmem:[#allocation6 + $0x1980] sm:$0xff]
    %v1199 = vld [vmem:[#allocation6 + $0x1988] sm:$0xff]
    %v1200 = vld [vmem:[#allocation6 + $0x1990] sm:$0xff]
    %v1201 = vld [vmem:[#allocation6 + $0x1998] sm:$0xff]
    %v1202 = vld [vmem:[#allocation6 + $0x19a0] sm:$0xff]
    %v1203 = vld [vmem:[#allocation6 + $0x19a8] sm:$0xff]
    %v1204 = vld [vmem:[#allocation6 + $0x19b0] sm:$0xff]
    %v1205 = vld [vmem:[#allocation6 + $0x19b8] sm:$0xff]
    %v1206 = vld [vmem:[#allocation6 + $0x19c0] sm:$0xff]
    %v1207 = vld [vmem:[#allocation6 + $0x19c8] sm:$0xff]
    %v1208 = vld [vmem:[#allocation6 + $0x19d0] sm:$0xff]
    %v1209 = vld [vmem:[#allocation6 + $0x19d8] sm:$0xff]
    %v1210 = vld [vmem:[#allocation6 + $0x19e0] sm:$0xff]
    %v1211 = vld [vmem:[#allocation6 + $0x19e8] sm:$0xff]
    %v1212 = vld [vmem:[#allocation6 + $0x19f0] sm:$0xff]
    %v1213 = vld [vmem:[#allocation6 + $0x19f8] sm:$0xff]
    %v1214 = vld [vmem:[#allocation6 + $0x1a00] sm:$0xff]
    %v1215 = vld [vmem:[#allocation6 + $0x1a08] sm:$0xff]
    %v1216 = vld [vmem:[#allocation6 + $0x1a10] sm:$0xff]
    %v1217 = vld [vmem:[#allocation6 + $0x1a18] sm:$0xff]
    %v1218 = vld [vmem:[#allocation6 + $0x1a20] sm:$0xff]
    %v1219 = vld [vmem:[#allocation6 + $0x1a28] sm:$0xff]
    %v1220 = vld [vmem:[#allocation6 + $0x1a30] sm:$0xff]
    %v1221 = vld [vmem:[#allocation6 + $0x1a38] sm:$0xff]
    %v1222 = vld [vmem:[#allocation6 + $0x1a40] sm:$0xff]
    %v1223 = vld [vmem:[#allocation6 + $0x1a48] sm:$0xff]
    %v1224 = vld [vmem:[#allocation6 + $0x1a50] sm:$0xff]
    %v1225 = vld [vmem:[#allocation6 + $0x1a58] sm:$0xff]
    %v1226 = vld [vmem:[#allocation6 + $0x1a60] sm:$0xff]
    %v1227 = vld [vmem:[#allocation6 + $0x1a68] sm:$0xff]
    %v1228 = vld [vmem:[#allocation6 + $0x1a70] sm:$0xff]
    %v1229 = vld [vmem:[#allocation6 + $0x1a78] sm:$0xff]
    %v1230 = vld [vmem:[#allocation6 + $0x1a80] sm:$0xff]
    %v1231 = vld [vmem:[#allocation6 + $0x1a88] sm:$0xff]
    %v1232 = vld [vmem:[#allocation6 + $0x1a90] sm:$0xff]
    %v1233 = vld [vmem:[#allocation6 + $0x1a98] sm:$0xff]
    %v1234 = vld [vmem:[#allocation6 + $0x1aa0] sm:$0xff]
    %v1235 = vld [vmem:[#allocation6 + $0x1aa8] sm:$0xff]
    %v1236 = vld [vmem:[#allocation6 + $0x1ab0] sm:$0xff]
    %v1237 = vld [vmem:[#allocation6 + $0x1ab8] sm:$0xff]
    %v1238 = vld [vmem:[#allocation6 + $0x1ac0] sm:$0xff]
    %v1239 = vld [vmem:[#allocation6 + $0x1ac8] sm:$0xff]
    %v1240 = vld [vmem:[#allocation6 + $0x1ad0] sm:$0xff]
    %v1241 = vld [vmem:[#allocation6 + $0x1ad8] sm:$0xff]
    %v1242 = vld [vmem:[#allocation6 + $0x1ae0] sm:$0xff]
    %v1243 = vld [vmem:[#allocation6 + $0x1ae8] sm:$0xff]
    %v1244 = vld [vmem:[#allocation6 + $0x1af0] sm:$0xff]
    %v1245 = vld [vmem:[#allocation6 + $0x1af8] sm:$0xff]
    %v1246 = vld [vmem:[#allocation6 + $0x1b00] sm:$0xff]
    %v1247 = vld [vmem:[#allocation6 + $0x1b08] sm:$0xff]
    %v1248 = vld [vmem:[#allocation6 + $0x1b10] sm:$0xff]
    %v1249 = vld [vmem:[#allocation6 + $0x1b18] sm:$0xff]
    %v1250 = vld [vmem:[#allocation6 + $0x1b20] sm:$0xff]
    %v1251 = vld [vmem:[#allocation6 + $0x1b28] sm:$0xff]
    %v1252 = vld [vmem:[#allocation6 + $0x1b30] sm:$0xff]
    %v1253 = vld [vmem:[#allocation6 + $0x1b38] sm:$0xff]
    %v1254 = vld [vmem:[#allocation6 + $0x1b40] sm:$0xff]
    %v1255 = vld [vmem:[#allocation6 + $0x1b48] sm:$0xff]
    %v1256 = vld [vmem:[#allocation6 + $0x1b50] sm:$0xff]
    %v1257 = vld [vmem:[#allocation6 + $0x1b58] sm:$0xff]
    %v1258 = vld [vmem:[#allocation6 + $0x1b60] sm:$0xff]
    %v1259 = vld [vmem:[#allocation6 + $0x1b68] sm:$0xff]
    %v1260 = vld [vmem:[#allocation6 + $0x1b70] sm:$0xff]
    %v1261 = vld [vmem:[#allocation6 + $0x1b78] sm:$0xff]
    %v1262 = vld [vmem:[#allocation6 + $0x1b80] sm:$0xff]
    %v1263 = vld [vmem:[#allocation6 + $0x1b88] sm:$0xff]
    %v1264 = vld [vmem:[#allocation6 + $0x1b90] sm:$0xff]
    %v1265 = vld [vmem:[#allocation6 + $0x1b98] sm:$0xff]
    %v1266 = vld [vmem:[#allocation6 + $0x1ba0] sm:$0xff]
    %v1267 = vld [vmem:[#allocation6 + $0x1ba8] sm:$0xff]
    %v1268 = vld [vmem:[#allocation6 + $0x1bb0] sm:$0xff]
    %v1269 = vld [vmem:[#allocation6 + $0x1bb8] sm:$0xff]
    %v1270 = vld [vmem:[#allocation6 + $0x1bc0] sm:$0xff]
    %v1271 = vld [vmem:[#allocation6 + $0x1bc8] sm:$0xff]
    %v1272 = vld [vmem:[#allocation6 + $0x1bd0] sm:$0xff]
    %v1273 = vld [vmem:[#allocation6 + $0x1bd8] sm:$0xff]
    %v1274 = vld [vmem:[#allocation6 + $0x1be0] sm:$0xff]
    %v1275 = vld [vmem:[#allocation6 + $0x1be8] sm:$0xff]
    %v1276 = vld [vmem:[#allocation6 + $0x1bf0] sm:$0xff]
    %v1277 = vld [vmem:[#allocation6 + $0x1bf8] sm:$0xff]
    %v1278 = vld [vmem:[#allocation6 + $0x1c00] sm:$0xff]
    %v1279 = vld [vmem:[#allocation6 + $0x1c08] sm:$0xff]
    %v1280 = vld [vmem:[#allocation6 + $0x1c10] sm:$0xff]
    %v1281 = vld [vmem:[#allocation6 + $0x1c18] sm:$0xff]
    %v1282 = vld [vmem:[#allocation6 + $0x1c20] sm:$0xff]
    %v1283 = vld [vmem:[#allocation6 + $0x1c28] sm:$0xff]
    %v1284 = vld [vmem:[#allocation6 + $0x1c30] sm:$0xff]
    %v1285 = vld [vmem:[#allocation6 + $0x1c38] sm:$0xff]
    %v1286 = vld [vmem:[#allocation6 + $0x1c40] sm:$0xff]
    %v1287 = vld [vmem:[#allocation6 + $0x1c48] sm:$0xff]
    %v1288 = vld [vmem:[#allocation6 + $0x1c50] sm:$0xff]
    %v1289 = vld [vmem:[#allocation6 + $0x1c58] sm:$0xff]
    %v1290 = vld [vmem:[#allocation6 + $0x1c60] sm:$0xff]
    %v1291 = vld [vmem:[#allocation6 + $0x1c68] sm:$0xff]
    %v1292 = vld [vmem:[#allocation6 + $0x1c70] sm:$0xff]
    %v1293 = vld [vmem:[#allocation6 + $0x1c78] sm:$0xff]
    %v1294 = vld [vmem:[#allocation6 + $0x1c80] sm:$0xff]
    %v1295 = vld [vmem:[#allocation6 + $0x1c88] sm:$0xff]
    %v1296 = vld [vmem:[#allocation6 + $0x1c90] sm:$0xff]
    %v1297 = vld [vmem:[#allocation6 + $0x1c98] sm:$0xff]
    %v1298 = vld [vmem:[#allocation6 + $0x1ca0] sm:$0xff]
    %v1299 = vld [vmem:[#allocation6 + $0x1ca8] sm:$0xff]
    %v1300 = vld [vmem:[#allocation6 + $0x1cb0] sm:$0xff]
    %v1301 = vld [vmem:[#allocation6 + $0x1cb8] sm:$0xff]
    %v1302 = vld [vmem:[#allocation6 + $0x1cc0] sm:$0xff]
    %v1303 = vld [vmem:[#allocation6 + $0x1cc8] sm:$0xff]
    %v1304 = vld [vmem:[#allocation6 + $0x1cd0] sm:$0xff]
    %v1305 = vld [vmem:[#allocation6 + $0x1cd8] sm:$0xff]
    %v1306 = vld [vmem:[#allocation6 + $0x1ce0] sm:$0xff]
    %v1307 = vld [vmem:[#allocation6 + $0x1ce8] sm:$0xff]
    %v1308 = vld [vmem:[#allocation6 + $0x1cf0] sm:$0xff]
    %v1309 = vld [vmem:[#allocation6 + $0x1cf8] sm:$0xff]
    %v1310 = vld [vmem:[#allocation6 + $0x1d00] sm:$0xff]
    %v1311 = vld [vmem:[#allocation6 + $0x1d08] sm:$0xff]
    %v1312 = vld [vmem:[#allocation6 + $0x1d10] sm:$0xff]
    %v1313 = vld [vmem:[#allocation6 + $0x1d18] sm:$0xff]
    %v1314 = vld [vmem:[#allocation6 + $0x1d20] sm:$0xff]
    %v1315 = vld [vmem:[#allocation6 + $0x1d28] sm:$0xff]
    %v1316 = vld [vmem:[#allocation6 + $0x1d30] sm:$0xff]
    %v1317 = vld [vmem:[#allocation6 + $0x1d38] sm:$0xff]
    %v1318 = vld [vmem:[#allocation6 + $0x1d40] sm:$0xff]
    %v1319 = vld [vmem:[#allocation6 + $0x1d48] sm:$0xff]
    %v1320 = vld [vmem:[#allocation6 + $0x1d50] sm:$0xff]
    %v1321 = vld [vmem:[#allocation6 + $0x1d58] sm:$0xff]
    %v1322 = vld [vmem:[#allocation6 + $0x1d60] sm:$0xff]
    %v1323 = vld [vmem:[#allocation6 + $0x1d68] sm:$0xff]
    %v1324 = vld [vmem:[#allocation6 + $0x1d70] sm:$0xff]
    %v1325 = vld [vmem:[#allocation6 + $0x1d78] sm:$0xff]
    %v1326 = vld [vmem:[#allocation6 + $0x1d80] sm:$0xff]
    %v1327 = vld [vmem:[#allocation6 + $0x1d88] sm:$0xff]
    %v1328 = vld [vmem:[#allocation6 + $0x1d90] sm:$0xff]
    %v1329 = vld [vmem:[#allocation6 + $0x1d98] sm:$0xff]
    %v1330 = vld [vmem:[#allocation6 + $0x1da0] sm:$0xff]
    %v1331 = vld [vmem:[#allocation6 + $0x1da8] sm:$0xff]
    %v1332 = vld [vmem:[#allocation6 + $0x1db0] sm:$0xff]
    %v1333 = vld [vmem:[#allocation6 + $0x1db8] sm:$0xff]
    %v1334 = vld [vmem:[#allocation6 + $0x1dc0] sm:$0xff]
    %v1335 = vld [vmem:[#allocation6 + $0x1dc8] sm:$0xff]
    %v1336 = vld [vmem:[#allocation6 + $0x1dd0] sm:$0xff]
    %v1337 = vld [vmem:[#allocation6 + $0x1dd8] sm:$0xff]
    %v1338 = vld [vmem:[#allocation6 + $0x1de0] sm:$0xff]
    %v1339 = vld [vmem:[#allocation6 + $0x1de8] sm:$0xff]
    %v1340 = vld [vmem:[#allocation6 + $0x1df0] sm:$0xff]
    %v1341 = vld [vmem:[#allocation6 + $0x1df8] sm:$0xff]
    %v1342 = vld [vmem:[#allocation6 + $0x1e00] sm:$0xff]
    %v1343 = vld [vmem:[#allocation6 + $0x1e08] sm:$0xff]
    %v1344 = vld [vmem:[#allocation6 + $0x1e10] sm:$0xff]
    %v1345 = vld [vmem:[#allocation6 + $0x1e18] sm:$0xff]
    %v1346 = vld [vmem:[#allocation6 + $0x1e20] sm:$0xff]
    %v1347 = vld [vmem:[#allocation6 + $0x1e28] sm:$0xff]
    %v1348 = vld [vmem:[#allocation6 + $0x1e30] sm:$0xff]
    %v1349 = vld [vmem:[#allocation6 + $0x1e38] sm:$0xff]
    %v1350 = vld [vmem:[#allocation6 + $0x1e40] sm:$0xff]
    %v1351 = vld [vmem:[#allocation6 + $0x1e48] sm:$0xff]
    %v1352 = vld [vmem:[#allocation6 + $0x1e50] sm:$0xff]
    %v1353 = vld [vmem:[#allocation6 + $0x1e58] sm:$0xff]
    %v1354 = vld [vmem:[#allocation6 + $0x1e60] sm:$0xff]
    %v1355 = vld [vmem:[#allocation6 + $0x1e68] sm:$0xff]
    %v1356 = vld [vmem:[#allocation6 + $0x1e70] sm:$0xff]
    %v1357 = vld [vmem:[#allocation6 + $0x1e78] sm:$0xff]
    %v1358 = vld [vmem:[#allocation6 + $0x1e80] sm:$0xff]
    %v1359 = vld [vmem:[#allocation6 + $0x1e88] sm:$0xff]
    %v1360 = vld [vmem:[#allocation6 + $0x1e90] sm:$0xff]
    %v1361 = vld [vmem:[#allocation6 + $0x1e98] sm:$0xff]
    %v1362 = vld [vmem:[#allocation6 + $0x1ea0] sm:$0xff]
    %v1363 = vld [vmem:[#allocation6 + $0x1ea8] sm:$0xff]
    %v1364 = vld [vmem:[#allocation6 + $0x1eb0] sm:$0xff]
    %v1365 = vld [vmem:[#allocation6 + $0x1eb8] sm:$0xff]
    %v1366 = vld [vmem:[#allocation6 + $0x1ec0] sm:$0xff]
    %v1367 = vld [vmem:[#allocation6 + $0x1ec8] sm:$0xff]
    %v1368 = vld [vmem:[#allocation6 + $0x1ed0] sm:$0xff]
    %v1369 = vld [vmem:[#allocation6 + $0x1ed8] sm:$0xff]
    %v1370 = vld [vmem:[#allocation6 + $0x1ee0] sm:$0xff]
    %v1371 = vld [vmem:[#allocation6 + $0x1ee8] sm:$0xff]
    %v1372 = vld [vmem:[#allocation6 + $0x1ef0] sm:$0xff]
    %v1373 = vld [vmem:[#allocation6 + $0x1ef8] sm:$0xff]
    %v1374 = vld [vmem:[#allocation6 + $0x1f00] sm:$0xff]
    %v1375 = vld [vmem:[#allocation6 + $0x1f08] sm:$0xff]
    %v1376 = vld [vmem:[#allocation6 + $0x1f10] sm:$0xff]
    %v1377 = vld [vmem:[#allocation6 + $0x1f18] sm:$0xff]
    %v1378 = vld [vmem:[#allocation6 + $0x1f20] sm:$0xff]
    %v1379 = vld [vmem:[#allocation6 + $0x1f28] sm:$0xff]
    %v1380 = vld [vmem:[#allocation6 + $0x1f30] sm:$0xff]
    %v1381 = vld [vmem:[#allocation6 + $0x1f38] sm:$0xff]
    %v1382 = vld [vmem:[#allocation6 + $0x1f40] sm:$0xff]
    %v1383 = vld [vmem:[#allocation6 + $0x1f48] sm:$0xff]
    %v1384 = vld [vmem:[#allocation6 + $0x1f50] sm:$0xff]
    %v1385 = vld [vmem:[#allocation6 + $0x1f58] sm:$0xff]
    %v1386 = vld [vmem:[#allocation6 + $0x1f60] sm:$0xff]
    %v1387 = vld [vmem:[#allocation6 + $0x1f68] sm:$0xff]
    %v1388 = vld [vmem:[#allocation6 + $0x1f70] sm:$0xff]
    %v1389 = vld [vmem:[#allocation6 + $0x1f78] sm:$0xff]
    %v1390 = vld [vmem:[#allocation6 + $0x1f80] sm:$0xff]
    %v1391 = vld [vmem:[#allocation6 + $0x1f88] sm:$0xff]
    %v1392 = vld [vmem:[#allocation6 + $0x1f90] sm:$0xff]
    %v1393 = vld [vmem:[#allocation6 + $0x1f98] sm:$0xff]
    %v1394 = vld [vmem:[#allocation6 + $0x1fa0] sm:$0xff]
    %v1395 = vld [vmem:[#allocation6 + $0x1fa8] sm:$0xff]
    %v1396 = vld [vmem:[#allocation6 + $0x1fb0] sm:$0xff]
    %v1397 = vld [vmem:[#allocation6 + $0x1fb8] sm:$0xff]
    %v1398 = vld [vmem:[#allocation6 + $0x1fc0] sm:$0xff]
    %v1399 = vld [vmem:[#allocation6 + $0x1fc8] sm:$0xff]
    %v1400 = vld [vmem:[#allocation6 + $0x1fd0] sm:$0xff]
    %v1401 = vld [vmem:[#allocation6 + $0x1fd8] sm:$0xff]
    %v1402 = vld [vmem:[#allocation6 + $0x1fe0] sm:$0xff]
    %v1403 = vld [vmem:[#allocation6 + $0x1fe8] sm:$0xff]
    %v1404 = vld [vmem:[#allocation6 + $0x1ff0] sm:$0xff]
    %v1405 = vld [vmem:[#allocation6 + $0x1ff8] sm:$0xff]
    %v1406 = vld [vmem:[#allocation8] sm:$0xf]
    %v1408 = vlaneseq
    %v1409 = vshrl.u32 %v1408, 7
    %v1410 = vsub.s32 0, %v1409
    %v1411 = vrot.slane %v1406, %v1410
    %v1412 = vlaneseq
    %v1413 = vshrl.u32 %v1412, 7
    %v1414 = vsub.s32 1, %v1413
    %v1415 = vrot.slane %v1406, %v1414
    %v1416 = vlaneseq
    %v1417 = vshrl.u32 %v1416, 7
    %v1418 = vsub.s32 2, %v1417
    %v1419 = vrot.slane %v1406, %v1418
    %v1420 = vlaneseq
    %v1421 = vshrl.u32 %v1420, 7
    %v1422 = vsub.s32 3, %v1421
    %v1423 = vrot.slane %v1406, %v1422
    %v1444 = vunpack.c.l.b16 %v366
    %v1445 = vunpack.c.h.b16 %v366
    %v1446 = vunpack.c.l.b16 %v367
    %v1447 = vunpack.c.h.b16 %v367
    %v1448 = vunpack.c.l.b16 %v368
    %v1449 = vunpack.c.h.b16 %v368
    %v1450 = vunpack.c.l.b16 %v369
    %v1451 = vunpack.c.h.b16 %v369
    %v1452 = vunpack.c.l.b16 %v370
    %v1453 = vunpack.c.h.b16 %v370
    %v1454 = vunpack.c.l.b16 %v371
    %v1455 = vunpack.c.h.b16 %v371
    %v1456 = vunpack.c.l.b16 %v372
    %v1457 = vunpack.c.h.b16 %v372
    %v1458 = vunpack.c.l.b16 %v373
    %v1459 = vunpack.c.h.b16 %v373
    %v1460 = vunpack.c.l.b16 %v374
    %v1461 = vunpack.c.h.b16 %v374
    %v1462 = vunpack.c.l.b16 %v375
    %v1463 = vunpack.c.h.b16 %v375
    %v1464 = vunpack.c.l.b16 %v376
    %v1465 = vunpack.c.h.b16 %v376
    %v1466 = vunpack.c.l.b16 %v377
    %v1467 = vunpack.c.h.b16 %v377
    %v1468 = vunpack.c.l.b16 %v378
    %v1469 = vunpack.c.h.b16 %v378
    %v1470 = vunpack.c.l.b16 %v379
    %v1471 = vunpack.c.h.b16 %v379
    %v1472 = vunpack.c.l.b16 %v380
    %v1473 = vunpack.c.h.b16 %v380
    %v1474 = vunpack.c.l.b16 %v381
    %v1475 = vunpack.c.h.b16 %v381
    %v1476 = vpack.c.b16 %v1444, %v1444
    %v1477 = vpack.c.b16 %v1445, %v1445
    %v1478 = vpack.c.b16 %v1446, %v1446
    %v1479 = vpack.c.b16 %v1447, %v1447
    %v1480 = vpack.c.b16 %v1448, %v1448
    %v1481 = vpack.c.b16 %v1449, %v1449
    %v1482 = vpack.c.b16 %v1450, %v1450
    %v1483 = vpack.c.b16 %v1451, %v1451
    %v1484 = vpack.c.b16 %v1452, %v1452
    %v1485 = vpack.c.b16 %v1453, %v1453
    %v1486 = vpack.c.b16 %v1454, %v1454
    %v1487 = vpack.c.b16 %v1455, %v1455
    %v1488 = vpack.c.b16 %v1456, %v1456
    %v1489 = vpack.c.b16 %v1457, %v1457
    %v1490 = vpack.c.b16 %v1458, %v1458
    %v1491 = vpack.c.b16 %v1459, %v1459
    %v1492 = vpack.c.b16 %v1460, %v1460
    %v1493 = vpack.c.b16 %v1461, %v1461
    %v1494 = vpack.c.b16 %v1462, %v1462
    %v1495 = vpack.c.b16 %v1463, %v1463
    %v1496 = vpack.c.b16 %v1464, %v1464
    %v1497 = vpack.c.b16 %v1465, %v1465
    %v1498 = vpack.c.b16 %v1466, %v1466
    %v1499 = vpack.c.b16 %v1467, %v1467
    %v1500 = vpack.c.b16 %v1468, %v1468
    %v1501 = vpack.c.b16 %v1469, %v1469
    %v1502 = vpack.c.b16 %v1470, %v1470
    %v1503 = vpack.c.b16 %v1471, %v1471
    %v1504 = vpack.c.b16 %v1472, %v1472
    %v1505 = vpack.c.b16 %v1473, %v1473
    %v1506 = vpack.c.b16 %v1474, %v1474
    %v1507 = vpack.c.b16 %v1475, %v1475
    %v2564 = vunpack.c.l.b16 %v382
    %v2565 = vunpack.c.h.b16 %v382
    %v2566 = vunpack.c.l.b16 %v383
    %v2567 = vunpack.c.h.b16 %v383
    %v2568 = vunpack.c.l.b16 %v384
    %v2569 = vunpack.c.h.b16 %v384
    %v2570 = vunpack.c.l.b16 %v385
    %v2571 = vunpack.c.h.b16 %v385
    %v2572 = vunpack.c.l.b16 %v386
    %v2573 = vunpack.c.h.b16 %v386
    %v2574 = vunpack.c.l.b16 %v387
    %v2575 = vunpack.c.h.b16 %v387
    %v2576 = vunpack.c.l.b16 %v388
    %v2577 = vunpack.c.h.b16 %v388
    %v2578 = vunpack.c.l.b16 %v389
    %v2579 = vunpack.c.h.b16 %v389
    %v2580 = vunpack.c.l.b16 %v390
    %v2581 = vunpack.c.h.b16 %v390
    %v2582 = vunpack.c.l.b16 %v391
    %v2583 = vunpack.c.h.b16 %v391
    %v2584 = vunpack.c.l.b16 %v392
    %v2585 = vunpack.c.h.b16 %v392
    %v2586 = vunpack.c.l.b16 %v393
    %v2587 = vunpack.c.h.b16 %v393
    %v2588 = vunpack.c.l.b16 %v394
    %v2589 = vunpack.c.h.b16 %v394
    %v2590 = vunpack.c.l.b16 %v395
    %v2591 = vunpack.c.h.b16 %v395
    %v2592 = vunpack.c.l.b16 %v396
    %v2593 = vunpack.c.h.b16 %v396
    %v2594 = vunpack.c.l.b16 %v397
    %v2595 = vunpack.c.h.b16 %v397
    %v2596 = vunpack.c.l.b16 %v398
    %v2597 = vunpack.c.h.b16 %v398
    %v2598 = vunpack.c.l.b16 %v399
    %v2599 = vunpack.c.h.b16 %v399
    %v2600 = vunpack.c.l.b16 %v400
    %v2601 = vunpack.c.h.b16 %v400
    %v2602 = vunpack.c.l.b16 %v401
    %v2603 = vunpack.c.h.b16 %v401
    %v2604 = vunpack.c.l.b16 %v402
    %v2605 = vunpack.c.h.b16 %v402
    %v2606 = vunpack.c.l.b16 %v403
    %v2607 = vunpack.c.h.b16 %v403
    %v2608 = vunpack.c.l.b16 %v404
    %v2609 = vunpack.c.h.b16 %v404
    %v2610 = vunpack.c.l.b16 %v405
    %v2611 = vunpack.c.h.b16 %v405
    %v2612 = vunpack.c.l.b16 %v406
    %v2613 = vunpack.c.h.b16 %v406
    %v2614 = vunpack.c.l.b16 %v407
    %v2615 = vunpack.c.h.b16 %v407
    %v2616 = vunpack.c.l.b16 %v408
    %v2617 = vunpack.c.h.b16 %v408
    %v2618 = vunpack.c.l.b16 %v409
    %v2619 = vunpack.c.h.b16 %v409
    %v2620 = vunpack.c.l.b16 %v410
    %v2621 = vunpack.c.h.b16 %v410
    %v2622 = vunpack.c.l.b16 %v411
    %v2623 = vunpack.c.h.b16 %v411
    %v2624 = vunpack.c.l.b16 %v412
    %v2625 = vunpack.c.h.b16 %v412
    %v2626 = vunpack.c.l.b16 %v413
    %v2627 = vunpack.c.h.b16 %v413
    %v2628 = vunpack.c.l.b16 %v414
    %v2629 = vunpack.c.h.b16 %v414
    %v2630 = vunpack.c.l.b16 %v415
    %v2631 = vunpack.c.h.b16 %v415
    %v2632 = vunpack.c.l.b16 %v416
    %v2633 = vunpack.c.h.b16 %v416
    %v2634 = vunpack.c.l.b16 %v417
    %v2635 = vunpack.c.h.b16 %v417
    %v2636 = vunpack.c.l.b16 %v418
    %v2637 = vunpack.c.h.b16 %v418
    %v2638 = vunpack.c.l.b16 %v419
    %v2639 = vunpack.c.h.b16 %v419
    %v2640 = vunpack.c.l.b16 %v420
    %v2641 = vunpack.c.h.b16 %v420
    %v2642 = vunpack.c.l.b16 %v421
    %v2643 = vunpack.c.h.b16 %v421
    %v2644 = vunpack.c.l.b16 %v422
    %v2645 = vunpack.c.h.b16 %v422
    %v2646 = vunpack.c.l.b16 %v423
    %v2647 = vunpack.c.h.b16 %v423
    %v2648 = vunpack.c.l.b16 %v424
    %v2649 = vunpack.c.h.b16 %v424
    %v2650 = vunpack.c.l.b16 %v425
    %v2651 = vunpack.c.h.b16 %v425
    %v2652 = vunpack.c.l.b16 %v426
    %v2653 = vunpack.c.h.b16 %v426
    %v2654 = vunpack.c.l.b16 %v427
    %v2655 = vunpack.c.h.b16 %v427
    %v2656 = vunpack.c.l.b16 %v428
    %v2657 = vunpack.c.h.b16 %v428
    %v2658 = vunpack.c.l.b16 %v429
    %v2659 = vunpack.c.h.b16 %v429
    %v2660 = vunpack.c.l.b16 %v430
    %v2661 = vunpack.c.h.b16 %v430
    %v2662 = vunpack.c.l.b16 %v431
    %v2663 = vunpack.c.h.b16 %v431
    %v2664 = vunpack.c.l.b16 %v432
    %v2665 = vunpack.c.h.b16 %v432
    %v2666 = vunpack.c.l.b16 %v433
    %v2667 = vunpack.c.h.b16 %v433
    %v2668 = vunpack.c.l.b16 %v434
    %v2669 = vunpack.c.h.b16 %v434
    %v2670 = vunpack.c.l.b16 %v435
    %v2671 = vunpack.c.h.b16 %v435
    %v2672 = vunpack.c.l.b16 %v436
    %v2673 = vunpack.c.h.b16 %v436
    %v2674 = vunpack.c.l.b16 %v437
    %v2675 = vunpack.c.h.b16 %v437
    %v2676 = vunpack.c.l.b16 %v438
    %v2677 = vunpack.c.h.b16 %v438
    %v2678 = vunpack.c.l.b16 %v439
    %v2679 = vunpack.c.h.b16 %v439
    %v2680 = vunpack.c.l.b16 %v440
    %v2681 = vunpack.c.h.b16 %v440
    %v2682 = vunpack.c.l.b16 %v441
    %v2683 = vunpack.c.h.b16 %v441
    %v2684 = vunpack.c.l.b16 %v442
    %v2685 = vunpack.c.h.b16 %v442
    %v2686 = vunpack.c.l.b16 %v443
    %v2687 = vunpack.c.h.b16 %v443
    %v2688 = vunpack.c.l.b16 %v444
    %v2689 = vunpack.c.h.b16 %v444
    %v2690 = vunpack.c.l.b16 %v445
    %v2691 = vunpack.c.h.b16 %v445
    %v2692 = vunpack.c.l.b16 %v446
    %v2693 = vunpack.c.h.b16 %v446
    %v2694 = vunpack.c.l.b16 %v447
    %v2695 = vunpack.c.h.b16 %v447
    %v2696 = vunpack.c.l.b16 %v448
    %v2697 = vunpack.c.h.b16 %v448
    %v2698 = vunpack.c.l.b16 %v449
    %v2699 = vunpack.c.h.b16 %v449
    %v2700 = vunpack.c.l.b16 %v450
    %v2701 = vunpack.c.h.b16 %v450
    %v2702 = vunpack.c.l.b16 %v451
    %v2703 = vunpack.c.h.b16 %v451
    %v2704 = vunpack.c.l.b16 %v452
    %v2705 = vunpack.c.h.b16 %v452
    %v2706 = vunpack.c.l.b16 %v453
    %v2707 = vunpack.c.h.b16 %v453
    %v2708 = vunpack.c.l.b16 %v454
    %v2709 = vunpack.c.h.b16 %v454
    %v2710 = vunpack.c.l.b16 %v455
    %v2711 = vunpack.c.h.b16 %v455
    %v2712 = vunpack.c.l.b16 %v456
    %v2713 = vunpack.c.h.b16 %v456
    %v2714 = vunpack.c.l.b16 %v457
    %v2715 = vunpack.c.h.b16 %v457
    %v2716 = vunpack.c.l.b16 %v458
    %v2717 = vunpack.c.h.b16 %v458
    %v2718 = vunpack.c.l.b16 %v459
    %v2719 = vunpack.c.h.b16 %v459
    %v2720 = vunpack.c.l.b16 %v460
    %v2721 = vunpack.c.h.b16 %v460
    %v2722 = vunpack.c.l.b16 %v461
    %v2723 = vunpack.c.h.b16 %v461
    %v2724 = vunpack.c.l.b16 %v462
    %v2725 = vunpack.c.h.b16 %v462
    %v2726 = vunpack.c.l.b16 %v463
    %v2727 = vunpack.c.h.b16 %v463
    %v2728 = vunpack.c.l.b16 %v464
    %v2729 = vunpack.c.h.b16 %v464
    %v2730 = vunpack.c.l.b16 %v465
    %v2731 = vunpack.c.h.b16 %v465
    %v2732 = vunpack.c.l.b16 %v466
    %v2733 = vunpack.c.h.b16 %v466
    %v2734 = vunpack.c.l.b16 %v467
    %v2735 = vunpack.c.h.b16 %v467
    %v2736 = vunpack.c.l.b16 %v468
    %v2737 = vunpack.c.h.b16 %v468
    %v2738 = vunpack.c.l.b16 %v469
    %v2739 = vunpack.c.h.b16 %v469
    %v2740 = vunpack.c.l.b16 %v470
    %v2741 = vunpack.c.h.b16 %v470
    %v2742 = vunpack.c.l.b16 %v471
    %v2743 = vunpack.c.h.b16 %v471
    %v2744 = vunpack.c.l.b16 %v472
    %v2745 = vunpack.c.h.b16 %v472
    %v2746 = vunpack.c.l.b16 %v473
    %v2747 = vunpack.c.h.b16 %v473
    %v2748 = vunpack.c.l.b16 %v474
    %v2749 = vunpack.c.h.b16 %v474
    %v2750 = vunpack.c.l.b16 %v475
    %v2751 = vunpack.c.h.b16 %v475
    %v2752 = vunpack.c.l.b16 %v476
    %v2753 = vunpack.c.h.b16 %v476
    %v2754 = vunpack.c.l.b16 %v477
    %v2755 = vunpack.c.h.b16 %v477
    %v2756 = vunpack.c.l.b16 %v478
    %v2757 = vunpack.c.h.b16 %v478
    %v2758 = vunpack.c.l.b16 %v479
    %v2759 = vunpack.c.h.b16 %v479
    %v2760 = vunpack.c.l.b16 %v480
    %v2761 = vunpack.c.h.b16 %v480
    %v2762 = vunpack.c.l.b16 %v481
    %v2763 = vunpack.c.h.b16 %v481
    %v2764 = vunpack.c.l.b16 %v482
    %v2765 = vunpack.c.h.b16 %v482
    %v2766 = vunpack.c.l.b16 %v483
    %v2767 = vunpack.c.h.b16 %v483
    %v2768 = vunpack.c.l.b16 %v484
    %v2769 = vunpack.c.h.b16 %v484
    %v2770 = vunpack.c.l.b16 %v485
    %v2771 = vunpack.c.h.b16 %v485
    %v2772 = vunpack.c.l.b16 %v486
    %v2773 = vunpack.c.h.b16 %v486
    %v2774 = vunpack.c.l.b16 %v487
    %v2775 = vunpack.c.h.b16 %v487
    %v2776 = vunpack.c.l.b16 %v488
    %v2777 = vunpack.c.h.b16 %v488
    %v2778 = vunpack.c.l.b16 %v489
    %v2779 = vunpack.c.h.b16 %v489
    %v2780 = vunpack.c.l.b16 %v490
    %v2781 = vunpack.c.h.b16 %v490
    %v2782 = vunpack.c.l.b16 %v491
    %v2783 = vunpack.c.h.b16 %v491
    %v2784 = vunpack.c.l.b16 %v492
    %v2785 = vunpack.c.h.b16 %v492
    %v2786 = vunpack.c.l.b16 %v493
    %v2787 = vunpack.c.h.b16 %v493
    %v2788 = vunpack.c.l.b16 %v494
    %v2789 = vunpack.c.h.b16 %v494
    %v2790 = vunpack.c.l.b16 %v495
    %v2791 = vunpack.c.h.b16 %v495
    %v2792 = vunpack.c.l.b16 %v496
    %v2793 = vunpack.c.h.b16 %v496
    %v2794 = vunpack.c.l.b16 %v497
    %v2795 = vunpack.c.h.b16 %v497
    %v2796 = vunpack.c.l.b16 %v498
    %v2797 = vunpack.c.h.b16 %v498
    %v2798 = vunpack.c.l.b16 %v499
    %v2799 = vunpack.c.h.b16 %v499
    %v2800 = vunpack.c.l.b16 %v500
    %v2801 = vunpack.c.h.b16 %v500
    %v2802 = vunpack.c.l.b16 %v501
    %v2803 = vunpack.c.h.b16 %v501
    %v2804 = vunpack.c.l.b16 %v502
    %v2805 = vunpack.c.h.b16 %v502
    %v2806 = vunpack.c.l.b16 %v503
    %v2807 = vunpack.c.h.b16 %v503
    %v2808 = vunpack.c.l.b16 %v504
    %v2809 = vunpack.c.h.b16 %v504
    %v2810 = vunpack.c.l.b16 %v505
    %v2811 = vunpack.c.h.b16 %v505
    %v2812 = vunpack.c.l.b16 %v506
    %v2813 = vunpack.c.h.b16 %v506
    %v2814 = vunpack.c.l.b16 %v507
    %v2815 = vunpack.c.h.b16 %v507
    %v2816 = vunpack.c.l.b16 %v508
    %v2817 = vunpack.c.h.b16 %v508
    %v2818 = vunpack.c.l.b16 %v509
    %v2819 = vunpack.c.h.b16 %v509
    %v2820 = vunpack.c.l.b16 %v510
    %v2821 = vunpack.c.h.b16 %v510
    %v2822 = vunpack.c.l.b16 %v511
    %v2823 = vunpack.c.h.b16 %v511
    %v2824 = vunpack.c.l.b16 %v512
    %v2825 = vunpack.c.h.b16 %v512
    %v2826 = vunpack.c.l.b16 %v513
    %v2827 = vunpack.c.h.b16 %v513
    %v2828 = vunpack.c.l.b16 %v514
    %v2829 = vunpack.c.h.b16 %v514
    %v2830 = vunpack.c.l.b16 %v515
    %v2831 = vunpack.c.h.b16 %v515
    %v2832 = vunpack.c.l.b16 %v516
    %v2833 = vunpack.c.h.b16 %v516
    %v2834 = vunpack.c.l.b16 %v517
    %v2835 = vunpack.c.h.b16 %v517
    %v2836 = vunpack.c.l.b16 %v518
    %v2837 = vunpack.c.h.b16 %v518
    %v2838 = vunpack.c.l.b16 %v519
    %v2839 = vunpack.c.h.b16 %v519
    %v2840 = vunpack.c.l.b16 %v520
    %v2841 = vunpack.c.h.b16 %v520
    %v2842 = vunpack.c.l.b16 %v521
    %v2843 = vunpack.c.h.b16 %v521
    %v2844 = vunpack.c.l.b16 %v522
    %v2845 = vunpack.c.h.b16 %v522
    %v2846 = vunpack.c.l.b16 %v523
    %v2847 = vunpack.c.h.b16 %v523
    %v2848 = vunpack.c.l.b16 %v524
    %v2849 = vunpack.c.h.b16 %v524
    %v2850 = vunpack.c.l.b16 %v525
    %v2851 = vunpack.c.h.b16 %v525
    %v2852 = vunpack.c.l.b16 %v526
    %v2853 = vunpack.c.h.b16 %v526
    %v2854 = vunpack.c.l.b16 %v527
    %v2855 = vunpack.c.h.b16 %v527
    %v2856 = vunpack.c.l.b16 %v528
    %v2857 = vunpack.c.h.b16 %v528
    %v2858 = vunpack.c.l.b16 %v529
    %v2859 = vunpack.c.h.b16 %v529
    %v2860 = vunpack.c.l.b16 %v530
    %v2861 = vunpack.c.h.b16 %v530
    %v2862 = vunpack.c.l.b16 %v531
    %v2863 = vunpack.c.h.b16 %v531
    %v2864 = vunpack.c.l.b16 %v532
    %v2865 = vunpack.c.h.b16 %v532
    %v2866 = vunpack.c.l.b16 %v533
    %v2867 = vunpack.c.h.b16 %v533
    %v2868 = vunpack.c.l.b16 %v534
    %v2869 = vunpack.c.h.b16 %v534
    %v2870 = vunpack.c.l.b16 %v535
    %v2871 = vunpack.c.h.b16 %v535
    %v2872 = vunpack.c.l.b16 %v536
    %v2873 = vunpack.c.h.b16 %v536
    %v2874 = vunpack.c.l.b16 %v537
    %v2875 = vunpack.c.h.b16 %v537
    %v2876 = vunpack.c.l.b16 %v538
    %v2877 = vunpack.c.h.b16 %v538
    %v2878 = vunpack.c.l.b16 %v539
    %v2879 = vunpack.c.h.b16 %v539
    %v2880 = vunpack.c.l.b16 %v540
    %v2881 = vunpack.c.h.b16 %v540
    %v2882 = vunpack.c.l.b16 %v541
    %v2883 = vunpack.c.h.b16 %v541
    %v2884 = vunpack.c.l.b16 %v542
    %v2885 = vunpack.c.h.b16 %v542
    %v2886 = vunpack.c.l.b16 %v543
    %v2887 = vunpack.c.h.b16 %v543
    %v2888 = vunpack.c.l.b16 %v544
    %v2889 = vunpack.c.h.b16 %v544
    %v2890 = vunpack.c.l.b16 %v545
    %v2891 = vunpack.c.h.b16 %v545
    %v2892 = vunpack.c.l.b16 %v546
    %v2893 = vunpack.c.h.b16 %v546
    %v2894 = vunpack.c.l.b16 %v547
    %v2895 = vunpack.c.h.b16 %v547
    %v2896 = vunpack.c.l.b16 %v548
    %v2897 = vunpack.c.h.b16 %v548
    %v2898 = vunpack.c.l.b16 %v549
    %v2899 = vunpack.c.h.b16 %v549
    %v2900 = vunpack.c.l.b16 %v550
    %v2901 = vunpack.c.h.b16 %v550
    %v2902 = vunpack.c.l.b16 %v551
    %v2903 = vunpack.c.h.b16 %v551
    %v2904 = vunpack.c.l.b16 %v552
    %v2905 = vunpack.c.h.b16 %v552
    %v2906 = vunpack.c.l.b16 %v553
    %v2907 = vunpack.c.h.b16 %v553
    %v2908 = vunpack.c.l.b16 %v554
    %v2909 = vunpack.c.h.b16 %v554
    %v2910 = vunpack.c.l.b16 %v555
    %v2911 = vunpack.c.h.b16 %v555
    %v2912 = vunpack.c.l.b16 %v556
    %v2913 = vunpack.c.h.b16 %v556
    %v2914 = vunpack.c.l.b16 %v557
    %v2915 = vunpack.c.h.b16 %v557
    %v2916 = vunpack.c.l.b16 %v558
    %v2917 = vunpack.c.h.b16 %v558
    %v2918 = vunpack.c.l.b16 %v559
    %v2919 = vunpack.c.h.b16 %v559
    %v2920 = vunpack.c.l.b16 %v560
    %v2921 = vunpack.c.h.b16 %v560
    %v2922 = vunpack.c.l.b16 %v561
    %v2923 = vunpack.c.h.b16 %v561
    %v2924 = vunpack.c.l.b16 %v562
    %v2925 = vunpack.c.h.b16 %v562
    %v2926 = vunpack.c.l.b16 %v563
    %v2927 = vunpack.c.h.b16 %v563
    %v2928 = vunpack.c.l.b16 %v564
    %v2929 = vunpack.c.h.b16 %v564
    %v2930 = vunpack.c.l.b16 %v565
    %v2931 = vunpack.c.h.b16 %v565
    %v2932 = vunpack.c.l.b16 %v566
    %v2933 = vunpack.c.h.b16 %v566
    %v2934 = vunpack.c.l.b16 %v567
    %v2935 = vunpack.c.h.b16 %v567
    %v2936 = vunpack.c.l.b16 %v568
    %v2937 = vunpack.c.h.b16 %v568
    %v2938 = vunpack.c.l.b16 %v569
    %v2939 = vunpack.c.h.b16 %v569
    %v2940 = vunpack.c.l.b16 %v570
    %v2941 = vunpack.c.h.b16 %v570
    %v2942 = vunpack.c.l.b16 %v571
    %v2943 = vunpack.c.h.b16 %v571
    %v2944 = vunpack.c.l.b16 %v572
    %v2945 = vunpack.c.h.b16 %v572
    %v2946 = vunpack.c.l.b16 %v573
    %v2947 = vunpack.c.h.b16 %v573
    %v2948 = vunpack.c.l.b16 %v574
    %v2949 = vunpack.c.h.b16 %v574
    %v2950 = vunpack.c.l.b16 %v575
    %v2951 = vunpack.c.h.b16 %v575
    %v2952 = vunpack.c.l.b16 %v576
    %v2953 = vunpack.c.h.b16 %v576
    %v2954 = vunpack.c.l.b16 %v577
    %v2955 = vunpack.c.h.b16 %v577
    %v2956 = vunpack.c.l.b16 %v578
    %v2957 = vunpack.c.h.b16 %v578
    %v2958 = vunpack.c.l.b16 %v579
    %v2959 = vunpack.c.h.b16 %v579
    %v2960 = vunpack.c.l.b16 %v580
    %v2961 = vunpack.c.h.b16 %v580
    %v2962 = vunpack.c.l.b16 %v581
    %v2963 = vunpack.c.h.b16 %v581
    %v2964 = vunpack.c.l.b16 %v582
    %v2965 = vunpack.c.h.b16 %v582
    %v2966 = vunpack.c.l.b16 %v583
    %v2967 = vunpack.c.h.b16 %v583
    %v2968 = vunpack.c.l.b16 %v584
    %v2969 = vunpack.c.h.b16 %v584
    %v2970 = vunpack.c.l.b16 %v585
    %v2971 = vunpack.c.h.b16 %v585
    %v2972 = vunpack.c.l.b16 %v586
    %v2973 = vunpack.c.h.b16 %v586
    %v2974 = vunpack.c.l.b16 %v587
    %v2975 = vunpack.c.h.b16 %v587
    %v2976 = vunpack.c.l.b16 %v588
    %v2977 = vunpack.c.h.b16 %v588
    %v2978 = vunpack.c.l.b16 %v589
    %v2979 = vunpack.c.h.b16 %v589
    %v2980 = vunpack.c.l.b16 %v590
    %v2981 = vunpack.c.h.b16 %v590
    %v2982 = vunpack.c.l.b16 %v591
    %v2983 = vunpack.c.h.b16 %v591
    %v2984 = vunpack.c.l.b16 %v592
    %v2985 = vunpack.c.h.b16 %v592
    %v2986 = vunpack.c.l.b16 %v593
    %v2987 = vunpack.c.h.b16 %v593
    %v2988 = vunpack.c.l.b16 %v594
    %v2989 = vunpack.c.h.b16 %v594
    %v2990 = vunpack.c.l.b16 %v595
    %v2991 = vunpack.c.h.b16 %v595
    %v2992 = vunpack.c.l.b16 %v596
    %v2993 = vunpack.c.h.b16 %v596
    %v2994 = vunpack.c.l.b16 %v597
    %v2995 = vunpack.c.h.b16 %v597
    %v2996 = vunpack.c.l.b16 %v598
    %v2997 = vunpack.c.h.b16 %v598
    %v2998 = vunpack.c.l.b16 %v599
    %v2999 = vunpack.c.h.b16 %v599
    %v3000 = vunpack.c.l.b16 %v600
    %v3001 = vunpack.c.h.b16 %v600
    %v3002 = vunpack.c.l.b16 %v601
    %v3003 = vunpack.c.h.b16 %v601
    %v3004 = vunpack.c.l.b16 %v602
    %v3005 = vunpack.c.h.b16 %v602
    %v3006 = vunpack.c.l.b16 %v603
    %v3007 = vunpack.c.h.b16 %v603
    %v3008 = vunpack.c.l.b16 %v604
    %v3009 = vunpack.c.h.b16 %v604
    %v3010 = vunpack.c.l.b16 %v605
    %v3011 = vunpack.c.h.b16 %v605
    %v3012 = vunpack.c.l.b16 %v606
    %v3013 = vunpack.c.h.b16 %v606
    %v3014 = vunpack.c.l.b16 %v607
    %v3015 = vunpack.c.h.b16 %v607
    %v3016 = vunpack.c.l.b16 %v608
    %v3017 = vunpack.c.h.b16 %v608
    %v3018 = vunpack.c.l.b16 %v609
    %v3019 = vunpack.c.h.b16 %v609
    %v3020 = vunpack.c.l.b16 %v610
    %v3021 = vunpack.c.h.b16 %v610
    %v3022 = vunpack.c.l.b16 %v611
    %v3023 = vunpack.c.h.b16 %v611
    %v3024 = vunpack.c.l.b16 %v612
    %v3025 = vunpack.c.h.b16 %v612
    %v3026 = vunpack.c.l.b16 %v613
    %v3027 = vunpack.c.h.b16 %v613
    %v3028 = vunpack.c.l.b16 %v614
    %v3029 = vunpack.c.h.b16 %v614
    %v3030 = vunpack.c.l.b16 %v615
    %v3031 = vunpack.c.h.b16 %v615
    %v3032 = vunpack.c.l.b16 %v616
    %v3033 = vunpack.c.h.b16 %v616
    %v3034 = vunpack.c.l.b16 %v617
    %v3035 = vunpack.c.h.b16 %v617
    %v3036 = vunpack.c.l.b16 %v618
    %v3037 = vunpack.c.h.b16 %v618
    %v3038 = vunpack.c.l.b16 %v619
    %v3039 = vunpack.c.h.b16 %v619
    %v3040 = vunpack.c.l.b16 %v620
    %v3041 = vunpack.c.h.b16 %v620
    %v3042 = vunpack.c.l.b16 %v621
    %v3043 = vunpack.c.h.b16 %v621
    %v3044 = vunpack.c.l.b16 %v622
    %v3045 = vunpack.c.h.b16 %v622
    %v3046 = vunpack.c.l.b16 %v623
    %v3047 = vunpack.c.h.b16 %v623
    %v3048 = vunpack.c.l.b16 %v624
    %v3049 = vunpack.c.h.b16 %v624
    %v3050 = vunpack.c.l.b16 %v625
    %v3051 = vunpack.c.h.b16 %v625
    %v3052 = vunpack.c.l.b16 %v626
    %v3053 = vunpack.c.h.b16 %v626
    %v3054 = vunpack.c.l.b16 %v627
    %v3055 = vunpack.c.h.b16 %v627
    %v3056 = vunpack.c.l.b16 %v628
    %v3057 = vunpack.c.h.b16 %v628
    %v3058 = vunpack.c.l.b16 %v629
    %v3059 = vunpack.c.h.b16 %v629
    %v3060 = vunpack.c.l.b16 %v630
    %v3061 = vunpack.c.h.b16 %v630
    %v3062 = vunpack.c.l.b16 %v631
    %v3063 = vunpack.c.h.b16 %v631
    %v3064 = vunpack.c.l.b16 %v632
    %v3065 = vunpack.c.h.b16 %v632
    %v3066 = vunpack.c.l.b16 %v633
    %v3067 = vunpack.c.h.b16 %v633
    %v3068 = vunpack.c.l.b16 %v634
    %v3069 = vunpack.c.h.b16 %v634
    %v3070 = vunpack.c.l.b16 %v635
    %v3071 = vunpack.c.h.b16 %v635
    %v3072 = vunpack.c.l.b16 %v636
    %v3073 = vunpack.c.h.b16 %v636
    %v3074 = vunpack.c.l.b16 %v637
    %v3075 = vunpack.c.h.b16 %v637
    %v3076 = vunpack.c.l.b16 %v638
    %v3077 = vunpack.c.h.b16 %v638
    %v3078 = vunpack.c.l.b16 %v639
    %v3079 = vunpack.c.h.b16 %v639
    %v3080 = vunpack.c.l.b16 %v640
    %v3081 = vunpack.c.h.b16 %v640
    %v3082 = vunpack.c.l.b16 %v641
    %v3083 = vunpack.c.h.b16 %v641
    %v3084 = vunpack.c.l.b16 %v642
    %v3085 = vunpack.c.h.b16 %v642
    %v3086 = vunpack.c.l.b16 %v643
    %v3087 = vunpack.c.h.b16 %v643
    %v3088 = vunpack.c.l.b16 %v644
    %v3089 = vunpack.c.h.b16 %v644
    %v3090 = vunpack.c.l.b16 %v645
    %v3091 = vunpack.c.h.b16 %v645
    %v3092 = vunpack.c.l.b16 %v646
    %v3093 = vunpack.c.h.b16 %v646
    %v3094 = vunpack.c.l.b16 %v647
    %v3095 = vunpack.c.h.b16 %v647
    %v3096 = vunpack.c.l.b16 %v648
    %v3097 = vunpack.c.h.b16 %v648
    %v3098 = vunpack.c.l.b16 %v649
    %v3099 = vunpack.c.h.b16 %v649
    %v3100 = vunpack.c.l.b16 %v650
    %v3101 = vunpack.c.h.b16 %v650
    %v3102 = vunpack.c.l.b16 %v651
    %v3103 = vunpack.c.h.b16 %v651
    %v3104 = vunpack.c.l.b16 %v652
    %v3105 = vunpack.c.h.b16 %v652
    %v3106 = vunpack.c.l.b16 %v653
    %v3107 = vunpack.c.h.b16 %v653
    %v3108 = vunpack.c.l.b16 %v654
    %v3109 = vunpack.c.h.b16 %v654
    %v3110 = vunpack.c.l.b16 %v655
    %v3111 = vunpack.c.h.b16 %v655
    %v3112 = vunpack.c.l.b16 %v656
    %v3113 = vunpack.c.h.b16 %v656
    %v3114 = vunpack.c.l.b16 %v657
    %v3115 = vunpack.c.h.b16 %v657
    %v3116 = vunpack.c.l.b16 %v658
    %v3117 = vunpack.c.h.b16 %v658
    %v3118 = vunpack.c.l.b16 %v659
    %v3119 = vunpack.c.h.b16 %v659
    %v3120 = vunpack.c.l.b16 %v660
    %v3121 = vunpack.c.h.b16 %v660
    %v3122 = vunpack.c.l.b16 %v661
    %v3123 = vunpack.c.h.b16 %v661
    %v3124 = vunpack.c.l.b16 %v662
    %v3125 = vunpack.c.h.b16 %v662
    %v3126 = vunpack.c.l.b16 %v663
    %v3127 = vunpack.c.h.b16 %v663
    %v3128 = vunpack.c.l.b16 %v664
    %v3129 = vunpack.c.h.b16 %v664
    %v3130 = vunpack.c.l.b16 %v665
    %v3131 = vunpack.c.h.b16 %v665
    %v3132 = vunpack.c.l.b16 %v666
    %v3133 = vunpack.c.h.b16 %v666
    %v3134 = vunpack.c.l.b16 %v667
    %v3135 = vunpack.c.h.b16 %v667
    %v3136 = vunpack.c.l.b16 %v668
    %v3137 = vunpack.c.h.b16 %v668
    %v3138 = vunpack.c.l.b16 %v669
    %v3139 = vunpack.c.h.b16 %v669
    %v3140 = vunpack.c.l.b16 %v670
    %v3141 = vunpack.c.h.b16 %v670
    %v3142 = vunpack.c.l.b16 %v671
    %v3143 = vunpack.c.h.b16 %v671
    %v3144 = vunpack.c.l.b16 %v672
    %v3145 = vunpack.c.h.b16 %v672
    %v3146 = vunpack.c.l.b16 %v673
    %v3147 = vunpack.c.h.b16 %v673
    %v3148 = vunpack.c.l.b16 %v674
    %v3149 = vunpack.c.h.b16 %v674
    %v3150 = vunpack.c.l.b16 %v675
    %v3151 = vunpack.c.h.b16 %v675
    %v3152 = vunpack.c.l.b16 %v676
    %v3153 = vunpack.c.h.b16 %v676
    %v3154 = vunpack.c.l.b16 %v677
    %v3155 = vunpack.c.h.b16 %v677
    %v3156 = vunpack.c.l.b16 %v678
    %v3157 = vunpack.c.h.b16 %v678
    %v3158 = vunpack.c.l.b16 %v679
    %v3159 = vunpack.c.h.b16 %v679
    %v3160 = vunpack.c.l.b16 %v680
    %v3161 = vunpack.c.h.b16 %v680
    %v3162 = vunpack.c.l.b16 %v681
    %v3163 = vunpack.c.h.b16 %v681
    %v3164 = vunpack.c.l.b16 %v682
    %v3165 = vunpack.c.h.b16 %v682
    %v3166 = vunpack.c.l.b16 %v683
    %v3167 = vunpack.c.h.b16 %v683
    %v3168 = vunpack.c.l.b16 %v684
    %v3169 = vunpack.c.h.b16 %v684
    %v3170 = vunpack.c.l.b16 %v685
    %v3171 = vunpack.c.h.b16 %v685
    %v3172 = vunpack.c.l.b16 %v686
    %v3173 = vunpack.c.h.b16 %v686
    %v3174 = vunpack.c.l.b16 %v687
    %v3175 = vunpack.c.h.b16 %v687
    %v3176 = vunpack.c.l.b16 %v688
    %v3177 = vunpack.c.h.b16 %v688
    %v3178 = vunpack.c.l.b16 %v689
    %v3179 = vunpack.c.h.b16 %v689
    %v3180 = vunpack.c.l.b16 %v690
    %v3181 = vunpack.c.h.b16 %v690
    %v3182 = vunpack.c.l.b16 %v691
    %v3183 = vunpack.c.h.b16 %v691
    %v3184 = vunpack.c.l.b16 %v692
    %v3185 = vunpack.c.h.b16 %v692
    %v3186 = vunpack.c.l.b16 %v693
    %v3187 = vunpack.c.h.b16 %v693
    %v3188 = vunpack.c.l.b16 %v694
    %v3189 = vunpack.c.h.b16 %v694
    %v3190 = vunpack.c.l.b16 %v695
    %v3191 = vunpack.c.h.b16 %v695
    %v3192 = vunpack.c.l.b16 %v696
    %v3193 = vunpack.c.h.b16 %v696
    %v3194 = vunpack.c.l.b16 %v697
    %v3195 = vunpack.c.h.b16 %v697
    %v3196 = vunpack.c.l.b16 %v698
    %v3197 = vunpack.c.h.b16 %v698
    %v3198 = vunpack.c.l.b16 %v699
    %v3199 = vunpack.c.h.b16 %v699
    %v3200 = vunpack.c.l.b16 %v700
    %v3201 = vunpack.c.h.b16 %v700
    %v3202 = vunpack.c.l.b16 %v701
    %v3203 = vunpack.c.h.b16 %v701
    %v3204 = vunpack.c.l.b16 %v702
    %v3205 = vunpack.c.h.b16 %v702
    %v3206 = vunpack.c.l.b16 %v703
    %v3207 = vunpack.c.h.b16 %v703
    %v3208 = vunpack.c.l.b16 %v704
    %v3209 = vunpack.c.h.b16 %v704
    %v3210 = vunpack.c.l.b16 %v705
    %v3211 = vunpack.c.h.b16 %v705
    %v3212 = vunpack.c.l.b16 %v706
    %v3213 = vunpack.c.h.b16 %v706
    %v3214 = vunpack.c.l.b16 %v707
    %v3215 = vunpack.c.h.b16 %v707
    %v3216 = vunpack.c.l.b16 %v708
    %v3217 = vunpack.c.h.b16 %v708
    %v3218 = vunpack.c.l.b16 %v709
    %v3219 = vunpack.c.h.b16 %v709
    %v3220 = vunpack.c.l.b16 %v710
    %v3221 = vunpack.c.h.b16 %v710
    %v3222 = vunpack.c.l.b16 %v711
    %v3223 = vunpack.c.h.b16 %v711
    %v3224 = vunpack.c.l.b16 %v712
    %v3225 = vunpack.c.h.b16 %v712
    %v3226 = vunpack.c.l.b16 %v713
    %v3227 = vunpack.c.h.b16 %v713
    %v3228 = vunpack.c.l.b16 %v714
    %v3229 = vunpack.c.h.b16 %v714
    %v3230 = vunpack.c.l.b16 %v715
    %v3231 = vunpack.c.h.b16 %v715
    %v3232 = vunpack.c.l.b16 %v716
    %v3233 = vunpack.c.h.b16 %v716
    %v3234 = vunpack.c.l.b16 %v717
    %v3235 = vunpack.c.h.b16 %v717
    %v3236 = vunpack.c.l.b16 %v718
    %v3237 = vunpack.c.h.b16 %v718
    %v3238 = vunpack.c.l.b16 %v719
    %v3239 = vunpack.c.h.b16 %v719
    %v3240 = vunpack.c.l.b16 %v720
    %v3241 = vunpack.c.h.b16 %v720
    %v3242 = vunpack.c.l.b16 %v721
    %v3243 = vunpack.c.h.b16 %v721
    %v3244 = vunpack.c.l.b16 %v722
    %v3245 = vunpack.c.h.b16 %v722
    %v3246 = vunpack.c.l.b16 %v723
    %v3247 = vunpack.c.h.b16 %v723
    %v3248 = vunpack.c.l.b16 %v724
    %v3249 = vunpack.c.h.b16 %v724
    %v3250 = vunpack.c.l.b16 %v725
    %v3251 = vunpack.c.h.b16 %v725
    %v3252 = vunpack.c.l.b16 %v726
    %v3253 = vunpack.c.h.b16 %v726
    %v3254 = vunpack.c.l.b16 %v727
    %v3255 = vunpack.c.h.b16 %v727
    %v3256 = vunpack.c.l.b16 %v728
    %v3257 = vunpack.c.h.b16 %v728
    %v3258 = vunpack.c.l.b16 %v729
    %v3259 = vunpack.c.h.b16 %v729
    %v3260 = vunpack.c.l.b16 %v730
    %v3261 = vunpack.c.h.b16 %v730
    %v3262 = vunpack.c.l.b16 %v731
    %v3263 = vunpack.c.h.b16 %v731
    %v3264 = vunpack.c.l.b16 %v732
    %v3265 = vunpack.c.h.b16 %v732
    %v3266 = vunpack.c.l.b16 %v733
    %v3267 = vunpack.c.h.b16 %v733
    %v3268 = vunpack.c.l.b16 %v734
    %v3269 = vunpack.c.h.b16 %v734
    %v3270 = vunpack.c.l.b16 %v735
    %v3271 = vunpack.c.h.b16 %v735
    %v3272 = vunpack.c.l.b16 %v736
    %v3273 = vunpack.c.h.b16 %v736
    %v3274 = vunpack.c.l.b16 %v737
    %v3275 = vunpack.c.h.b16 %v737
    %v3276 = vunpack.c.l.b16 %v738
    %v3277 = vunpack.c.h.b16 %v738
    %v3278 = vunpack.c.l.b16 %v739
    %v3279 = vunpack.c.h.b16 %v739
    %v3280 = vunpack.c.l.b16 %v740
    %v3281 = vunpack.c.h.b16 %v740
    %v3282 = vunpack.c.l.b16 %v741
    %v3283 = vunpack.c.h.b16 %v741
    %v3284 = vunpack.c.l.b16 %v742
    %v3285 = vunpack.c.h.b16 %v742
    %v3286 = vunpack.c.l.b16 %v743
    %v3287 = vunpack.c.h.b16 %v743
    %v3288 = vunpack.c.l.b16 %v744
    %v3289 = vunpack.c.h.b16 %v744
    %v3290 = vunpack.c.l.b16 %v745
    %v3291 = vunpack.c.h.b16 %v745
    %v3292 = vunpack.c.l.b16 %v746
    %v3293 = vunpack.c.h.b16 %v746
    %v3294 = vunpack.c.l.b16 %v747
    %v3295 = vunpack.c.h.b16 %v747
    %v3296 = vunpack.c.l.b16 %v748
    %v3297 = vunpack.c.h.b16 %v748
    %v3298 = vunpack.c.l.b16 %v749
    %v3299 = vunpack.c.h.b16 %v749
    %v3300 = vunpack.c.l.b16 %v750
    %v3301 = vunpack.c.h.b16 %v750
    %v3302 = vunpack.c.l.b16 %v751
    %v3303 = vunpack.c.h.b16 %v751
    %v3304 = vunpack.c.l.b16 %v752
    %v3305 = vunpack.c.h.b16 %v752
    %v3306 = vunpack.c.l.b16 %v753
    %v3307 = vunpack.c.h.b16 %v753
    %v3308 = vunpack.c.l.b16 %v754
    %v3309 = vunpack.c.h.b16 %v754
    %v3310 = vunpack.c.l.b16 %v755
    %v3311 = vunpack.c.h.b16 %v755
    %v3312 = vunpack.c.l.b16 %v756
    %v3313 = vunpack.c.h.b16 %v756
    %v3314 = vunpack.c.l.b16 %v757
    %v3315 = vunpack.c.h.b16 %v757
    %v3316 = vunpack.c.l.b16 %v758
    %v3317 = vunpack.c.h.b16 %v758
    %v3318 = vunpack.c.l.b16 %v759
    %v3319 = vunpack.c.h.b16 %v759
    %v3320 = vunpack.c.l.b16 %v760
    %v3321 = vunpack.c.h.b16 %v760
    %v3322 = vunpack.c.l.b16 %v761
    %v3323 = vunpack.c.h.b16 %v761
    %v3324 = vunpack.c.l.b16 %v762
    %v3325 = vunpack.c.h.b16 %v762
    %v3326 = vunpack.c.l.b16 %v763
    %v3327 = vunpack.c.h.b16 %v763
    %v3328 = vunpack.c.l.b16 %v764
    %v3329 = vunpack.c.h.b16 %v764
    %v3330 = vunpack.c.l.b16 %v765
    %v3331 = vunpack.c.h.b16 %v765
    %v3332 = vunpack.c.l.b16 %v766
    %v3333 = vunpack.c.h.b16 %v766
    %v3334 = vunpack.c.l.b16 %v767
    %v3335 = vunpack.c.h.b16 %v767
    %v3336 = vunpack.c.l.b16 %v768
    %v3337 = vunpack.c.h.b16 %v768
    %v3338 = vunpack.c.l.b16 %v769
    %v3339 = vunpack.c.h.b16 %v769
    %v3340 = vunpack.c.l.b16 %v770
    %v3341 = vunpack.c.h.b16 %v770
    %v3342 = vunpack.c.l.b16 %v771
    %v3343 = vunpack.c.h.b16 %v771
    %v3344 = vunpack.c.l.b16 %v772
    %v3345 = vunpack.c.h.b16 %v772
    %v3346 = vunpack.c.l.b16 %v773
    %v3347 = vunpack.c.h.b16 %v773
    %v3348 = vunpack.c.l.b16 %v774
    %v3349 = vunpack.c.h.b16 %v774
    %v3350 = vunpack.c.l.b16 %v775
    %v3351 = vunpack.c.h.b16 %v775
    %v3352 = vunpack.c.l.b16 %v776
    %v3353 = vunpack.c.h.b16 %v776
    %v3354 = vunpack.c.l.b16 %v777
    %v3355 = vunpack.c.h.b16 %v777
    %v3356 = vunpack.c.l.b16 %v778
    %v3357 = vunpack.c.h.b16 %v778
    %v3358 = vunpack.c.l.b16 %v779
    %v3359 = vunpack.c.h.b16 %v779
    %v3360 = vunpack.c.l.b16 %v780
    %v3361 = vunpack.c.h.b16 %v780
    %v3362 = vunpack.c.l.b16 %v781
    %v3363 = vunpack.c.h.b16 %v781
    %v3364 = vunpack.c.l.b16 %v782
    %v3365 = vunpack.c.h.b16 %v782
    %v3366 = vunpack.c.l.b16 %v783
    %v3367 = vunpack.c.h.b16 %v783
    %v3368 = vunpack.c.l.b16 %v784
    %v3369 = vunpack.c.h.b16 %v784
    %v3370 = vunpack.c.l.b16 %v785
    %v3371 = vunpack.c.h.b16 %v785
    %v3372 = vunpack.c.l.b16 %v786
    %v3373 = vunpack.c.h.b16 %v786
    %v3374 = vunpack.c.l.b16 %v787
    %v3375 = vunpack.c.h.b16 %v787
    %v3376 = vunpack.c.l.b16 %v788
    %v3377 = vunpack.c.h.b16 %v788
    %v3378 = vunpack.c.l.b16 %v789
    %v3379 = vunpack.c.h.b16 %v789
    %v3380 = vunpack.c.l.b16 %v790
    %v3381 = vunpack.c.h.b16 %v790
    %v3382 = vunpack.c.l.b16 %v791
    %v3383 = vunpack.c.h.b16 %v791
    %v3384 = vunpack.c.l.b16 %v792
    %v3385 = vunpack.c.h.b16 %v792
    %v3386 = vunpack.c.l.b16 %v793
    %v3387 = vunpack.c.h.b16 %v793
    %v3388 = vunpack.c.l.b16 %v794
    %v3389 = vunpack.c.h.b16 %v794
    %v3390 = vunpack.c.l.b16 %v795
    %v3391 = vunpack.c.h.b16 %v795
    %v3392 = vunpack.c.l.b16 %v796
    %v3393 = vunpack.c.h.b16 %v796
    %v3394 = vunpack.c.l.b16 %v797
    %v3395 = vunpack.c.h.b16 %v797
    %v3396 = vunpack.c.l.b16 %v798
    %v3397 = vunpack.c.h.b16 %v798
    %v3398 = vunpack.c.l.b16 %v799
    %v3399 = vunpack.c.h.b16 %v799
    %v3400 = vunpack.c.l.b16 %v800
    %v3401 = vunpack.c.h.b16 %v800
    %v3402 = vunpack.c.l.b16 %v801
    %v3403 = vunpack.c.h.b16 %v801
    %v3404 = vunpack.c.l.b16 %v802
    %v3405 = vunpack.c.h.b16 %v802
    %v3406 = vunpack.c.l.b16 %v803
    %v3407 = vunpack.c.h.b16 %v803
    %v3408 = vunpack.c.l.b16 %v804
    %v3409 = vunpack.c.h.b16 %v804
    %v3410 = vunpack.c.l.b16 %v805
    %v3411 = vunpack.c.h.b16 %v805
    %v3412 = vunpack.c.l.b16 %v806
    %v3413 = vunpack.c.h.b16 %v806
    %v3414 = vunpack.c.l.b16 %v807
    %v3415 = vunpack.c.h.b16 %v807
    %v3416 = vunpack.c.l.b16 %v808
    %v3417 = vunpack.c.h.b16 %v808
    %v3418 = vunpack.c.l.b16 %v809
    %v3419 = vunpack.c.h.b16 %v809
    %v3420 = vunpack.c.l.b16 %v810
    %v3421 = vunpack.c.h.b16 %v810
    %v3422 = vunpack.c.l.b16 %v811
    %v3423 = vunpack.c.h.b16 %v811
    %v3424 = vunpack.c.l.b16 %v812
    %v3425 = vunpack.c.h.b16 %v812
    %v3426 = vunpack.c.l.b16 %v813
    %v3427 = vunpack.c.h.b16 %v813
    %v3428 = vunpack.c.l.b16 %v814
    %v3429 = vunpack.c.h.b16 %v814
    %v3430 = vunpack.c.l.b16 %v815
    %v3431 = vunpack.c.h.b16 %v815
    %v3432 = vunpack.c.l.b16 %v816
    %v3433 = vunpack.c.h.b16 %v816
    %v3434 = vunpack.c.l.b16 %v817
    %v3435 = vunpack.c.h.b16 %v817
    %v3436 = vunpack.c.l.b16 %v818
    %v3437 = vunpack.c.h.b16 %v818
    %v3438 = vunpack.c.l.b16 %v819
    %v3439 = vunpack.c.h.b16 %v819
    %v3440 = vunpack.c.l.b16 %v820
    %v3441 = vunpack.c.h.b16 %v820
    %v3442 = vunpack.c.l.b16 %v821
    %v3443 = vunpack.c.h.b16 %v821
    %v3444 = vunpack.c.l.b16 %v822
    %v3445 = vunpack.c.h.b16 %v822
    %v3446 = vunpack.c.l.b16 %v823
    %v3447 = vunpack.c.h.b16 %v823
    %v3448 = vunpack.c.l.b16 %v824
    %v3449 = vunpack.c.h.b16 %v824
    %v3450 = vunpack.c.l.b16 %v825
    %v3451 = vunpack.c.h.b16 %v825
    %v3452 = vunpack.c.l.b16 %v826
    %v3453 = vunpack.c.h.b16 %v826
    %v3454 = vunpack.c.l.b16 %v827
    %v3455 = vunpack.c.h.b16 %v827
    %v3456 = vunpack.c.l.b16 %v828
    %v3457 = vunpack.c.h.b16 %v828
    %v3458 = vunpack.c.l.b16 %v829
    %v3459 = vunpack.c.h.b16 %v829
    %v3460 = vunpack.c.l.b16 %v830
    %v3461 = vunpack.c.h.b16 %v830
    %v3462 = vunpack.c.l.b16 %v831
    %v3463 = vunpack.c.h.b16 %v831
    %v3464 = vunpack.c.l.b16 %v832
    %v3465 = vunpack.c.h.b16 %v832
    %v3466 = vunpack.c.l.b16 %v833
    %v3467 = vunpack.c.h.b16 %v833
    %v3468 = vunpack.c.l.b16 %v834
    %v3469 = vunpack.c.h.b16 %v834
    %v3470 = vunpack.c.l.b16 %v835
    %v3471 = vunpack.c.h.b16 %v835
    %v3472 = vunpack.c.l.b16 %v836
    %v3473 = vunpack.c.h.b16 %v836
    %v3474 = vunpack.c.l.b16 %v837
    %v3475 = vunpack.c.h.b16 %v837
    %v3476 = vunpack.c.l.b16 %v838
    %v3477 = vunpack.c.h.b16 %v838
    %v3478 = vunpack.c.l.b16 %v839
    %v3479 = vunpack.c.h.b16 %v839
    %v3480 = vunpack.c.l.b16 %v840
    %v3481 = vunpack.c.h.b16 %v840
    %v3482 = vunpack.c.l.b16 %v841
    %v3483 = vunpack.c.h.b16 %v841
    %v3484 = vunpack.c.l.b16 %v842
    %v3485 = vunpack.c.h.b16 %v842
    %v3486 = vunpack.c.l.b16 %v843
    %v3487 = vunpack.c.h.b16 %v843
    %v3488 = vunpack.c.l.b16 %v844
    %v3489 = vunpack.c.h.b16 %v844
    %v3490 = vunpack.c.l.b16 %v845
    %v3491 = vunpack.c.h.b16 %v845
    %v3492 = vunpack.c.l.b16 %v846
    %v3493 = vunpack.c.h.b16 %v846
    %v3494 = vunpack.c.l.b16 %v847
    %v3495 = vunpack.c.h.b16 %v847
    %v3496 = vunpack.c.l.b16 %v848
    %v3497 = vunpack.c.h.b16 %v848
    %v3498 = vunpack.c.l.b16 %v849
    %v3499 = vunpack.c.h.b16 %v849
    %v3500 = vunpack.c.l.b16 %v850
    %v3501 = vunpack.c.h.b16 %v850
    %v3502 = vunpack.c.l.b16 %v851
    %v3503 = vunpack.c.h.b16 %v851
    %v3504 = vunpack.c.l.b16 %v852
    %v3505 = vunpack.c.h.b16 %v852
    %v3506 = vunpack.c.l.b16 %v853
    %v3507 = vunpack.c.h.b16 %v853
    %v3508 = vunpack.c.l.b16 %v854
    %v3509 = vunpack.c.h.b16 %v854
    %v3510 = vunpack.c.l.b16 %v855
    %v3511 = vunpack.c.h.b16 %v855
    %v3512 = vunpack.c.l.b16 %v856
    %v3513 = vunpack.c.h.b16 %v856
    %v3514 = vunpack.c.l.b16 %v857
    %v3515 = vunpack.c.h.b16 %v857
    %v3516 = vunpack.c.l.b16 %v858
    %v3517 = vunpack.c.h.b16 %v858
    %v3518 = vunpack.c.l.b16 %v859
    %v3519 = vunpack.c.h.b16 %v859
    %v3520 = vunpack.c.l.b16 %v860
    %v3521 = vunpack.c.h.b16 %v860
    %v3522 = vunpack.c.l.b16 %v861
    %v3523 = vunpack.c.h.b16 %v861
    %v3524 = vunpack.c.l.b16 %v862
    %v3525 = vunpack.c.h.b16 %v862
    %v3526 = vunpack.c.l.b16 %v863
    %v3527 = vunpack.c.h.b16 %v863
    %v3528 = vunpack.c.l.b16 %v864
    %v3529 = vunpack.c.h.b16 %v864
    %v3530 = vunpack.c.l.b16 %v865
    %v3531 = vunpack.c.h.b16 %v865
    %v3532 = vunpack.c.l.b16 %v866
    %v3533 = vunpack.c.h.b16 %v866
    %v3534 = vunpack.c.l.b16 %v867
    %v3535 = vunpack.c.h.b16 %v867
    %v3536 = vunpack.c.l.b16 %v868
    %v3537 = vunpack.c.h.b16 %v868
    %v3538 = vunpack.c.l.b16 %v869
    %v3539 = vunpack.c.h.b16 %v869
    %v3540 = vunpack.c.l.b16 %v870
    %v3541 = vunpack.c.h.b16 %v870
    %v3542 = vunpack.c.l.b16 %v871
    %v3543 = vunpack.c.h.b16 %v871
    %v3544 = vunpack.c.l.b16 %v872
    %v3545 = vunpack.c.h.b16 %v872
    %v3546 = vunpack.c.l.b16 %v873
    %v3547 = vunpack.c.h.b16 %v873
    %v3548 = vunpack.c.l.b16 %v874
    %v3549 = vunpack.c.h.b16 %v874
    %v3550 = vunpack.c.l.b16 %v875
    %v3551 = vunpack.c.h.b16 %v875
    %v3552 = vunpack.c.l.b16 %v876
    %v3553 = vunpack.c.h.b16 %v876
    %v3554 = vunpack.c.l.b16 %v877
    %v3555 = vunpack.c.h.b16 %v877
    %v3556 = vunpack.c.l.b16 %v878
    %v3557 = vunpack.c.h.b16 %v878
    %v3558 = vunpack.c.l.b16 %v879
    %v3559 = vunpack.c.h.b16 %v879
    %v3560 = vunpack.c.l.b16 %v880
    %v3561 = vunpack.c.h.b16 %v880
    %v3562 = vunpack.c.l.b16 %v881
    %v3563 = vunpack.c.h.b16 %v881
    %v3564 = vunpack.c.l.b16 %v882
    %v3565 = vunpack.c.h.b16 %v882
    %v3566 = vunpack.c.l.b16 %v883
    %v3567 = vunpack.c.h.b16 %v883
    %v3568 = vunpack.c.l.b16 %v884
    %v3569 = vunpack.c.h.b16 %v884
    %v3570 = vunpack.c.l.b16 %v885
    %v3571 = vunpack.c.h.b16 %v885
    %v3572 = vunpack.c.l.b16 %v886
    %v3573 = vunpack.c.h.b16 %v886
    %v3574 = vunpack.c.l.b16 %v887
    %v3575 = vunpack.c.h.b16 %v887
    %v3576 = vunpack.c.l.b16 %v888
    %v3577 = vunpack.c.h.b16 %v888
    %v3578 = vunpack.c.l.b16 %v889
    %v3579 = vunpack.c.h.b16 %v889
    %v3580 = vunpack.c.l.b16 %v890
    %v3581 = vunpack.c.h.b16 %v890
    %v3582 = vunpack.c.l.b16 %v891
    %v3583 = vunpack.c.h.b16 %v891
    %v3584 = vunpack.c.l.b16 %v892
    %v3585 = vunpack.c.h.b16 %v892
    %v3586 = vunpack.c.l.b16 %v893
    %v3587 = vunpack.c.h.b16 %v893
    %v3588 = vunpack.c.l.b16 %v894
    %v3589 = vunpack.c.h.b16 %v894
    %v3590 = vunpack.c.l.b16 %v895
    %v3591 = vunpack.c.h.b16 %v895
    %v3592 = vunpack.c.l.b16 %v896
    %v3593 = vunpack.c.h.b16 %v896
    %v3594 = vunpack.c.l.b16 %v897
    %v3595 = vunpack.c.h.b16 %v897
    %v3596 = vunpack.c.l.b16 %v898
    %v3597 = vunpack.c.h.b16 %v898
    %v3598 = vunpack.c.l.b16 %v899
    %v3599 = vunpack.c.h.b16 %v899
    %v3600 = vunpack.c.l.b16 %v900
    %v3601 = vunpack.c.h.b16 %v900
    %v3602 = vunpack.c.l.b16 %v901
    %v3603 = vunpack.c.h.b16 %v901
    %v3604 = vunpack.c.l.b16 %v902
    %v3605 = vunpack.c.h.b16 %v902
    %v3606 = vunpack.c.l.b16 %v903
    %v3607 = vunpack.c.h.b16 %v903
    %v3608 = vunpack.c.l.b16 %v904
    %v3609 = vunpack.c.h.b16 %v904
    %v3610 = vunpack.c.l.b16 %v905
    %v3611 = vunpack.c.h.b16 %v905
    %v3612 = vunpack.c.l.b16 %v906
    %v3613 = vunpack.c.h.b16 %v906
    %v3614 = vunpack.c.l.b16 %v907
    %v3615 = vunpack.c.h.b16 %v907
    %v3616 = vunpack.c.l.b16 %v908
    %v3617 = vunpack.c.h.b16 %v908
    %v3618 = vunpack.c.l.b16 %v909
    %v3619 = vunpack.c.h.b16 %v909
    %v3620 = vunpack.c.l.b16 %v910
    %v3621 = vunpack.c.h.b16 %v910
    %v3622 = vunpack.c.l.b16 %v911
    %v3623 = vunpack.c.h.b16 %v911
    %v3624 = vunpack.c.l.b16 %v912
    %v3625 = vunpack.c.h.b16 %v912
    %v3626 = vunpack.c.l.b16 %v913
    %v3627 = vunpack.c.h.b16 %v913
    %v3628 = vunpack.c.l.b16 %v914
    %v3629 = vunpack.c.h.b16 %v914
    %v3630 = vunpack.c.l.b16 %v915
    %v3631 = vunpack.c.h.b16 %v915
    %v3632 = vunpack.c.l.b16 %v916
    %v3633 = vunpack.c.h.b16 %v916
    %v3634 = vunpack.c.l.b16 %v917
    %v3635 = vunpack.c.h.b16 %v917
    %v3636 = vunpack.c.l.b16 %v918
    %v3637 = vunpack.c.h.b16 %v918
    %v3638 = vunpack.c.l.b16 %v919
    %v3639 = vunpack.c.h.b16 %v919
    %v3640 = vunpack.c.l.b16 %v920
    %v3641 = vunpack.c.h.b16 %v920
    %v3642 = vunpack.c.l.b16 %v921
    %v3643 = vunpack.c.h.b16 %v921
    %v3644 = vunpack.c.l.b16 %v922
    %v3645 = vunpack.c.h.b16 %v922
    %v3646 = vunpack.c.l.b16 %v923
    %v3647 = vunpack.c.h.b16 %v923
    %v3648 = vunpack.c.l.b16 %v924
    %v3649 = vunpack.c.h.b16 %v924
    %v3650 = vunpack.c.l.b16 %v925
    %v3651 = vunpack.c.h.b16 %v925
    %v3652 = vunpack.c.l.b16 %v926
    %v3653 = vunpack.c.h.b16 %v926
    %v3654 = vunpack.c.l.b16 %v927
    %v3655 = vunpack.c.h.b16 %v927
    %v3656 = vunpack.c.l.b16 %v928
    %v3657 = vunpack.c.h.b16 %v928
    %v3658 = vunpack.c.l.b16 %v929
    %v3659 = vunpack.c.h.b16 %v929
    %v3660 = vunpack.c.l.b16 %v930
    %v3661 = vunpack.c.h.b16 %v930
    %v3662 = vunpack.c.l.b16 %v931
    %v3663 = vunpack.c.h.b16 %v931
    %v3664 = vunpack.c.l.b16 %v932
    %v3665 = vunpack.c.h.b16 %v932
    %v3666 = vunpack.c.l.b16 %v933
    %v3667 = vunpack.c.h.b16 %v933
    %v3668 = vunpack.c.l.b16 %v934
    %v3669 = vunpack.c.h.b16 %v934
    %v3670 = vunpack.c.l.b16 %v935
    %v3671 = vunpack.c.h.b16 %v935
    %v3672 = vunpack.c.l.b16 %v936
    %v3673 = vunpack.c.h.b16 %v936
    %v3674 = vunpack.c.l.b16 %v937
    %v3675 = vunpack.c.h.b16 %v937
    %v3676 = vunpack.c.l.b16 %v938
    %v3677 = vunpack.c.h.b16 %v938
    %v3678 = vunpack.c.l.b16 %v939
    %v3679 = vunpack.c.h.b16 %v939
    %v3680 = vunpack.c.l.b16 %v940
    %v3681 = vunpack.c.h.b16 %v940
    %v3682 = vunpack.c.l.b16 %v941
    %v3683 = vunpack.c.h.b16 %v941
    %v3684 = vunpack.c.l.b16 %v942
    %v3685 = vunpack.c.h.b16 %v942
    %v3686 = vunpack.c.l.b16 %v943
    %v3687 = vunpack.c.h.b16 %v943
    %v3688 = vunpack.c.l.b16 %v944
    %v3689 = vunpack.c.h.b16 %v944
    %v3690 = vunpack.c.l.b16 %v945
    %v3691 = vunpack.c.h.b16 %v945
    %v3692 = vunpack.c.l.b16 %v946
    %v3693 = vunpack.c.h.b16 %v946
    %v3694 = vunpack.c.l.b16 %v947
    %v3695 = vunpack.c.h.b16 %v947
    %v3696 = vunpack.c.l.b16 %v948
    %v3697 = vunpack.c.h.b16 %v948
    %v3698 = vunpack.c.l.b16 %v949
    %v3699 = vunpack.c.h.b16 %v949
    %v3700 = vunpack.c.l.b16 %v950
    %v3701 = vunpack.c.h.b16 %v950
    %v3702 = vunpack.c.l.b16 %v951
    %v3703 = vunpack.c.h.b16 %v951
    %v3704 = vunpack.c.l.b16 %v952
    %v3705 = vunpack.c.h.b16 %v952
    %v3706 = vunpack.c.l.b16 %v953
    %v3707 = vunpack.c.h.b16 %v953
    %v3708 = vunpack.c.l.b16 %v954
    %v3709 = vunpack.c.h.b16 %v954
    %v3710 = vunpack.c.l.b16 %v955
    %v3711 = vunpack.c.h.b16 %v955
    %v3712 = vunpack.c.l.b16 %v956
    %v3713 = vunpack.c.h.b16 %v956
    %v3714 = vunpack.c.l.b16 %v957
    %v3715 = vunpack.c.h.b16 %v957
    %v3716 = vunpack.c.l.b16 %v958
    %v3717 = vunpack.c.h.b16 %v958
    %v3718 = vunpack.c.l.b16 %v959
    %v3719 = vunpack.c.h.b16 %v959
    %v3720 = vunpack.c.l.b16 %v960
    %v3721 = vunpack.c.h.b16 %v960
    %v3722 = vunpack.c.l.b16 %v961
    %v3723 = vunpack.c.h.b16 %v961
    %v3724 = vunpack.c.l.b16 %v962
    %v3725 = vunpack.c.h.b16 %v962
    %v3726 = vunpack.c.l.b16 %v963
    %v3727 = vunpack.c.h.b16 %v963
    %v3728 = vunpack.c.l.b16 %v964
    %v3729 = vunpack.c.h.b16 %v964
    %v3730 = vunpack.c.l.b16 %v965
    %v3731 = vunpack.c.h.b16 %v965
    %v3732 = vunpack.c.l.b16 %v966
    %v3733 = vunpack.c.h.b16 %v966
    %v3734 = vunpack.c.l.b16 %v967
    %v3735 = vunpack.c.h.b16 %v967
    %v3736 = vunpack.c.l.b16 %v968
    %v3737 = vunpack.c.h.b16 %v968
    %v3738 = vunpack.c.l.b16 %v969
    %v3739 = vunpack.c.h.b16 %v969
    %v3740 = vunpack.c.l.b16 %v970
    %v3741 = vunpack.c.h.b16 %v970
    %v3742 = vunpack.c.l.b16 %v971
    %v3743 = vunpack.c.h.b16 %v971
    %v3744 = vunpack.c.l.b16 %v972
    %v3745 = vunpack.c.h.b16 %v972
    %v3746 = vunpack.c.l.b16 %v973
    %v3747 = vunpack.c.h.b16 %v973
    %v3748 = vunpack.c.l.b16 %v974
    %v3749 = vunpack.c.h.b16 %v974
    %v3750 = vunpack.c.l.b16 %v975
    %v3751 = vunpack.c.h.b16 %v975
    %v3752 = vunpack.c.l.b16 %v976
    %v3753 = vunpack.c.h.b16 %v976
    %v3754 = vunpack.c.l.b16 %v977
    %v3755 = vunpack.c.h.b16 %v977
    %v3756 = vunpack.c.l.b16 %v978
    %v3757 = vunpack.c.h.b16 %v978
    %v3758 = vunpack.c.l.b16 %v979
    %v3759 = vunpack.c.h.b16 %v979
    %v3760 = vunpack.c.l.b16 %v980
    %v3761 = vunpack.c.h.b16 %v980
    %v3762 = vunpack.c.l.b16 %v981
    %v3763 = vunpack.c.h.b16 %v981
    %v3764 = vunpack.c.l.b16 %v982
    %v3765 = vunpack.c.h.b16 %v982
    %v3766 = vunpack.c.l.b16 %v983
    %v3767 = vunpack.c.h.b16 %v983
    %v3768 = vunpack.c.l.b16 %v984
    %v3769 = vunpack.c.h.b16 %v984
    %v3770 = vunpack.c.l.b16 %v985
    %v3771 = vunpack.c.h.b16 %v985
    %v3772 = vunpack.c.l.b16 %v986
    %v3773 = vunpack.c.h.b16 %v986
    %v3774 = vunpack.c.l.b16 %v987
    %v3775 = vunpack.c.h.b16 %v987
    %v3776 = vunpack.c.l.b16 %v988
    %v3777 = vunpack.c.h.b16 %v988
    %v3778 = vunpack.c.l.b16 %v989
    %v3779 = vunpack.c.h.b16 %v989
    %v3780 = vunpack.c.l.b16 %v990
    %v3781 = vunpack.c.h.b16 %v990
    %v3782 = vunpack.c.l.b16 %v991
    %v3783 = vunpack.c.h.b16 %v991
    %v3784 = vunpack.c.l.b16 %v992
    %v3785 = vunpack.c.h.b16 %v992
    %v3786 = vunpack.c.l.b16 %v993
    %v3787 = vunpack.c.h.b16 %v993
    %v3788 = vunpack.c.l.b16 %v994
    %v3789 = vunpack.c.h.b16 %v994
    %v3790 = vunpack.c.l.b16 %v995
    %v3791 = vunpack.c.h.b16 %v995
    %v3792 = vunpack.c.l.b16 %v996
    %v3793 = vunpack.c.h.b16 %v996
    %v3794 = vunpack.c.l.b16 %v997
    %v3795 = vunpack.c.h.b16 %v997
    %v3796 = vunpack.c.l.b16 %v998
    %v3797 = vunpack.c.h.b16 %v998
    %v3798 = vunpack.c.l.b16 %v999
    %v3799 = vunpack.c.h.b16 %v999
    %v3800 = vunpack.c.l.b16 %v1000
    %v3801 = vunpack.c.h.b16 %v1000
    %v3802 = vunpack.c.l.b16 %v1001
    %v3803 = vunpack.c.h.b16 %v1001
    %v3804 = vunpack.c.l.b16 %v1002
    %v3805 = vunpack.c.h.b16 %v1002
    %v3806 = vunpack.c.l.b16 %v1003
    %v3807 = vunpack.c.h.b16 %v1003
    %v3808 = vunpack.c.l.b16 %v1004
    %v3809 = vunpack.c.h.b16 %v1004
    %v3810 = vunpack.c.l.b16 %v1005
    %v3811 = vunpack.c.h.b16 %v1005
    %v3812 = vunpack.c.l.b16 %v1006
    %v3813 = vunpack.c.h.b16 %v1006
    %v3814 = vunpack.c.l.b16 %v1007
    %v3815 = vunpack.c.h.b16 %v1007
    %v3816 = vunpack.c.l.b16 %v1008
    %v3817 = vunpack.c.h.b16 %v1008
    %v3818 = vunpack.c.l.b16 %v1009
    %v3819 = vunpack.c.h.b16 %v1009
    %v3820 = vunpack.c.l.b16 %v1010
    %v3821 = vunpack.c.h.b16 %v1010
    %v3822 = vunpack.c.l.b16 %v1011
    %v3823 = vunpack.c.h.b16 %v1011
    %v3824 = vunpack.c.l.b16 %v1012
    %v3825 = vunpack.c.h.b16 %v1012
    %v3826 = vunpack.c.l.b16 %v1013
    %v3827 = vunpack.c.h.b16 %v1013
    %v3828 = vunpack.c.l.b16 %v1014
    %v3829 = vunpack.c.h.b16 %v1014
    %v3830 = vunpack.c.l.b16 %v1015
    %v3831 = vunpack.c.h.b16 %v1015
    %v3832 = vunpack.c.l.b16 %v1016
    %v3833 = vunpack.c.h.b16 %v1016
    %v3834 = vunpack.c.l.b16 %v1017
    %v3835 = vunpack.c.h.b16 %v1017
    %v3836 = vunpack.c.l.b16 %v1018
    %v3837 = vunpack.c.h.b16 %v1018
    %v3838 = vunpack.c.l.b16 %v1019
    %v3839 = vunpack.c.h.b16 %v1019
    %v3840 = vunpack.c.l.b16 %v1020
    %v3841 = vunpack.c.h.b16 %v1020
    %v3842 = vunpack.c.l.b16 %v1021
    %v3843 = vunpack.c.h.b16 %v1021
    %v3844 = vunpack.c.l.b16 %v1022
    %v3845 = vunpack.c.h.b16 %v1022
    %v3846 = vunpack.c.l.b16 %v1023
    %v3847 = vunpack.c.h.b16 %v1023
    %v3848 = vunpack.c.l.b16 %v1024
    %v3849 = vunpack.c.h.b16 %v1024
    %v3850 = vunpack.c.l.b16 %v1025
    %v3851 = vunpack.c.h.b16 %v1025
    %v3852 = vunpack.c.l.b16 %v1026
    %v3853 = vunpack.c.h.b16 %v1026
    %v3854 = vunpack.c.l.b16 %v1027
    %v3855 = vunpack.c.h.b16 %v1027
    %v3856 = vunpack.c.l.b16 %v1028
    %v3857 = vunpack.c.h.b16 %v1028
    %v3858 = vunpack.c.l.b16 %v1029
    %v3859 = vunpack.c.h.b16 %v1029
    %v3860 = vunpack.c.l.b16 %v1030
    %v3861 = vunpack.c.h.b16 %v1030
    %v3862 = vunpack.c.l.b16 %v1031
    %v3863 = vunpack.c.h.b16 %v1031
    %v3864 = vunpack.c.l.b16 %v1032
    %v3865 = vunpack.c.h.b16 %v1032
    %v3866 = vunpack.c.l.b16 %v1033
    %v3867 = vunpack.c.h.b16 %v1033
    %v3868 = vunpack.c.l.b16 %v1034
    %v3869 = vunpack.c.h.b16 %v1034
    %v3870 = vunpack.c.l.b16 %v1035
    %v3871 = vunpack.c.h.b16 %v1035
    %v3872 = vunpack.c.l.b16 %v1036
    %v3873 = vunpack.c.h.b16 %v1036
    %v3874 = vunpack.c.l.b16 %v1037
    %v3875 = vunpack.c.h.b16 %v1037
    %v3876 = vunpack.c.l.b16 %v1038
    %v3877 = vunpack.c.h.b16 %v1038
    %v3878 = vunpack.c.l.b16 %v1039
    %v3879 = vunpack.c.h.b16 %v1039
    %v3880 = vunpack.c.l.b16 %v1040
    %v3881 = vunpack.c.h.b16 %v1040
    %v3882 = vunpack.c.l.b16 %v1041
    %v3883 = vunpack.c.h.b16 %v1041
    %v3884 = vunpack.c.l.b16 %v1042
    %v3885 = vunpack.c.h.b16 %v1042
    %v3886 = vunpack.c.l.b16 %v1043
    %v3887 = vunpack.c.h.b16 %v1043
    %v3888 = vunpack.c.l.b16 %v1044
    %v3889 = vunpack.c.h.b16 %v1044
    %v3890 = vunpack.c.l.b16 %v1045
    %v3891 = vunpack.c.h.b16 %v1045
    %v3892 = vunpack.c.l.b16 %v1046
    %v3893 = vunpack.c.h.b16 %v1046
    %v3894 = vunpack.c.l.b16 %v1047
    %v3895 = vunpack.c.h.b16 %v1047
    %v3896 = vunpack.c.l.b16 %v1048
    %v3897 = vunpack.c.h.b16 %v1048
    %v3898 = vunpack.c.l.b16 %v1049
    %v3899 = vunpack.c.h.b16 %v1049
    %v3900 = vunpack.c.l.b16 %v1050
    %v3901 = vunpack.c.h.b16 %v1050
    %v3902 = vunpack.c.l.b16 %v1051
    %v3903 = vunpack.c.h.b16 %v1051
    %v3904 = vunpack.c.l.b16 %v1052
    %v3905 = vunpack.c.h.b16 %v1052
    %v3906 = vunpack.c.l.b16 %v1053
    %v3907 = vunpack.c.h.b16 %v1053
    %v3908 = vunpack.c.l.b16 %v1054
    %v3909 = vunpack.c.h.b16 %v1054
    %v3910 = vunpack.c.l.b16 %v1055
    %v3911 = vunpack.c.h.b16 %v1055
    %v3912 = vunpack.c.l.b16 %v1056
    %v3913 = vunpack.c.h.b16 %v1056
    %v3914 = vunpack.c.l.b16 %v1057
    %v3915 = vunpack.c.h.b16 %v1057
    %v3916 = vunpack.c.l.b16 %v1058
    %v3917 = vunpack.c.h.b16 %v1058
    %v3918 = vunpack.c.l.b16 %v1059
    %v3919 = vunpack.c.h.b16 %v1059
    %v3920 = vunpack.c.l.b16 %v1060
    %v3921 = vunpack.c.h.b16 %v1060
    %v3922 = vunpack.c.l.b16 %v1061
    %v3923 = vunpack.c.h.b16 %v1061
    %v3924 = vunpack.c.l.b16 %v1062
    %v3925 = vunpack.c.h.b16 %v1062
    %v3926 = vunpack.c.l.b16 %v1063
    %v3927 = vunpack.c.h.b16 %v1063
    %v3928 = vunpack.c.l.b16 %v1064
    %v3929 = vunpack.c.h.b16 %v1064
    %v3930 = vunpack.c.l.b16 %v1065
    %v3931 = vunpack.c.h.b16 %v1065
    %v3932 = vunpack.c.l.b16 %v1066
    %v3933 = vunpack.c.h.b16 %v1066
    %v3934 = vunpack.c.l.b16 %v1067
    %v3935 = vunpack.c.h.b16 %v1067
    %v3936 = vunpack.c.l.b16 %v1068
    %v3937 = vunpack.c.h.b16 %v1068
    %v3938 = vunpack.c.l.b16 %v1069
    %v3939 = vunpack.c.h.b16 %v1069
    %v3940 = vunpack.c.l.b16 %v1070
    %v3941 = vunpack.c.h.b16 %v1070
    %v3942 = vunpack.c.l.b16 %v1071
    %v3943 = vunpack.c.h.b16 %v1071
    %v3944 = vunpack.c.l.b16 %v1072
    %v3945 = vunpack.c.h.b16 %v1072
    %v3946 = vunpack.c.l.b16 %v1073
    %v3947 = vunpack.c.h.b16 %v1073
    %v3948 = vunpack.c.l.b16 %v1074
    %v3949 = vunpack.c.h.b16 %v1074
    %v3950 = vunpack.c.l.b16 %v1075
    %v3951 = vunpack.c.h.b16 %v1075
    %v3952 = vunpack.c.l.b16 %v1076
    %v3953 = vunpack.c.h.b16 %v1076
    %v3954 = vunpack.c.l.b16 %v1077
    %v3955 = vunpack.c.h.b16 %v1077
    %v3956 = vunpack.c.l.b16 %v1078
    %v3957 = vunpack.c.h.b16 %v1078
    %v3958 = vunpack.c.l.b16 %v1079
    %v3959 = vunpack.c.h.b16 %v1079
    %v3960 = vunpack.c.l.b16 %v1080
    %v3961 = vunpack.c.h.b16 %v1080
    %v3962 = vunpack.c.l.b16 %v1081
    %v3963 = vunpack.c.h.b16 %v1081
    %v3964 = vunpack.c.l.b16 %v1082
    %v3965 = vunpack.c.h.b16 %v1082
    %v3966 = vunpack.c.l.b16 %v1083
    %v3967 = vunpack.c.h.b16 %v1083
    %v3968 = vunpack.c.l.b16 %v1084
    %v3969 = vunpack.c.h.b16 %v1084
    %v3970 = vunpack.c.l.b16 %v1085
    %v3971 = vunpack.c.h.b16 %v1085
    %v3972 = vunpack.c.l.b16 %v1086
    %v3973 = vunpack.c.h.b16 %v1086
    %v3974 = vunpack.c.l.b16 %v1087
    %v3975 = vunpack.c.h.b16 %v1087
    %v3976 = vunpack.c.l.b16 %v1088
    %v3977 = vunpack.c.h.b16 %v1088
    %v3978 = vunpack.c.l.b16 %v1089
    %v3979 = vunpack.c.h.b16 %v1089
    %v3980 = vunpack.c.l.b16 %v1090
    %v3981 = vunpack.c.h.b16 %v1090
    %v3982 = vunpack.c.l.b16 %v1091
    %v3983 = vunpack.c.h.b16 %v1091
    %v3984 = vunpack.c.l.b16 %v1092
    %v3985 = vunpack.c.h.b16 %v1092
    %v3986 = vunpack.c.l.b16 %v1093
    %v3987 = vunpack.c.h.b16 %v1093
    %v3988 = vunpack.c.l.b16 %v1094
    %v3989 = vunpack.c.h.b16 %v1094
    %v3990 = vunpack.c.l.b16 %v1095
    %v3991 = vunpack.c.h.b16 %v1095
    %v3992 = vunpack.c.l.b16 %v1096
    %v3993 = vunpack.c.h.b16 %v1096
    %v3994 = vunpack.c.l.b16 %v1097
    %v3995 = vunpack.c.h.b16 %v1097
    %v3996 = vunpack.c.l.b16 %v1098
    %v3997 = vunpack.c.h.b16 %v1098
    %v3998 = vunpack.c.l.b16 %v1099
    %v3999 = vunpack.c.h.b16 %v1099
    %v4000 = vunpack.c.l.b16 %v1100
    %v4001 = vunpack.c.h.b16 %v1100
    %v4002 = vunpack.c.l.b16 %v1101
    %v4003 = vunpack.c.h.b16 %v1101
    %v4004 = vunpack.c.l.b16 %v1102
    %v4005 = vunpack.c.h.b16 %v1102
    %v4006 = vunpack.c.l.b16 %v1103
    %v4007 = vunpack.c.h.b16 %v1103
    %v4008 = vunpack.c.l.b16 %v1104
    %v4009 = vunpack.c.h.b16 %v1104
    %v4010 = vunpack.c.l.b16 %v1105
    %v4011 = vunpack.c.h.b16 %v1105
    %v4012 = vunpack.c.l.b16 %v1106
    %v4013 = vunpack.c.h.b16 %v1106
    %v4014 = vunpack.c.l.b16 %v1107
    %v4015 = vunpack.c.h.b16 %v1107
    %v4016 = vunpack.c.l.b16 %v1108
    %v4017 = vunpack.c.h.b16 %v1108
    %v4018 = vunpack.c.l.b16 %v1109
    %v4019 = vunpack.c.h.b16 %v1109
    %v4020 = vunpack.c.l.b16 %v1110
    %v4021 = vunpack.c.h.b16 %v1110
    %v4022 = vunpack.c.l.b16 %v1111
    %v4023 = vunpack.c.h.b16 %v1111
    %v4024 = vunpack.c.l.b16 %v1112
    %v4025 = vunpack.c.h.b16 %v1112
    %v4026 = vunpack.c.l.b16 %v1113
    %v4027 = vunpack.c.h.b16 %v1113
    %v4028 = vunpack.c.l.b16 %v1114
    %v4029 = vunpack.c.h.b16 %v1114
    %v4030 = vunpack.c.l.b16 %v1115
    %v4031 = vunpack.c.h.b16 %v1115
    %v4032 = vunpack.c.l.b16 %v1116
    %v4033 = vunpack.c.h.b16 %v1116
    %v4034 = vunpack.c.l.b16 %v1117
    %v4035 = vunpack.c.h.b16 %v1117
    %v4036 = vunpack.c.l.b16 %v1118
    %v4037 = vunpack.c.h.b16 %v1118
    %v4038 = vunpack.c.l.b16 %v1119
    %v4039 = vunpack.c.h.b16 %v1119
    %v4040 = vunpack.c.l.b16 %v1120
    %v4041 = vunpack.c.h.b16 %v1120
    %v4042 = vunpack.c.l.b16 %v1121
    %v4043 = vunpack.c.h.b16 %v1121
    %v4044 = vunpack.c.l.b16 %v1122
    %v4045 = vunpack.c.h.b16 %v1122
    %v4046 = vunpack.c.l.b16 %v1123
    %v4047 = vunpack.c.h.b16 %v1123
    %v4048 = vunpack.c.l.b16 %v1124
    %v4049 = vunpack.c.h.b16 %v1124
    %v4050 = vunpack.c.l.b16 %v1125
    %v4051 = vunpack.c.h.b16 %v1125
    %v4052 = vunpack.c.l.b16 %v1126
    %v4053 = vunpack.c.h.b16 %v1126
    %v4054 = vunpack.c.l.b16 %v1127
    %v4055 = vunpack.c.h.b16 %v1127
    %v4056 = vunpack.c.l.b16 %v1128
    %v4057 = vunpack.c.h.b16 %v1128
    %v4058 = vunpack.c.l.b16 %v1129
    %v4059 = vunpack.c.h.b16 %v1129
    %v4060 = vunpack.c.l.b16 %v1130
    %v4061 = vunpack.c.h.b16 %v1130
    %v4062 = vunpack.c.l.b16 %v1131
    %v4063 = vunpack.c.h.b16 %v1131
    %v4064 = vunpack.c.l.b16 %v1132
    %v4065 = vunpack.c.h.b16 %v1132
    %v4066 = vunpack.c.l.b16 %v1133
    %v4067 = vunpack.c.h.b16 %v1133
    %v4068 = vunpack.c.l.b16 %v1134
    %v4069 = vunpack.c.h.b16 %v1134
    %v4070 = vunpack.c.l.b16 %v1135
    %v4071 = vunpack.c.h.b16 %v1135
    %v4072 = vunpack.c.l.b16 %v1136
    %v4073 = vunpack.c.h.b16 %v1136
    %v4074 = vunpack.c.l.b16 %v1137
    %v4075 = vunpack.c.h.b16 %v1137
    %v4076 = vunpack.c.l.b16 %v1138
    %v4077 = vunpack.c.h.b16 %v1138
    %v4078 = vunpack.c.l.b16 %v1139
    %v4079 = vunpack.c.h.b16 %v1139
    %v4080 = vunpack.c.l.b16 %v1140
    %v4081 = vunpack.c.h.b16 %v1140
    %v4082 = vunpack.c.l.b16 %v1141
    %v4083 = vunpack.c.h.b16 %v1141
    %v4084 = vunpack.c.l.b16 %v1142
    %v4085 = vunpack.c.h.b16 %v1142
    %v4086 = vunpack.c.l.b16 %v1143
    %v4087 = vunpack.c.h.b16 %v1143
    %v4088 = vunpack.c.l.b16 %v1144
    %v4089 = vunpack.c.h.b16 %v1144
    %v4090 = vunpack.c.l.b16 %v1145
    %v4091 = vunpack.c.h.b16 %v1145
    %v4092 = vunpack.c.l.b16 %v1146
    %v4093 = vunpack.c.h.b16 %v1146
    %v4094 = vunpack.c.l.b16 %v1147
    %v4095 = vunpack.c.h.b16 %v1147
    %v4096 = vunpack.c.l.b16 %v1148
    %v4097 = vunpack.c.h.b16 %v1148
    %v4098 = vunpack.c.l.b16 %v1149
    %v4099 = vunpack.c.h.b16 %v1149
    %v4100 = vunpack.c.l.b16 %v1150
    %v4101 = vunpack.c.h.b16 %v1150
    %v4102 = vunpack.c.l.b16 %v1151
    %v4103 = vunpack.c.h.b16 %v1151
    %v4104 = vunpack.c.l.b16 %v1152
    %v4105 = vunpack.c.h.b16 %v1152
    %v4106 = vunpack.c.l.b16 %v1153
    %v4107 = vunpack.c.h.b16 %v1153
    %v4108 = vunpack.c.l.b16 %v1154
    %v4109 = vunpack.c.h.b16 %v1154
    %v4110 = vunpack.c.l.b16 %v1155
    %v4111 = vunpack.c.h.b16 %v1155
    %v4112 = vunpack.c.l.b16 %v1156
    %v4113 = vunpack.c.h.b16 %v1156
    %v4114 = vunpack.c.l.b16 %v1157
    %v4115 = vunpack.c.h.b16 %v1157
    %v4116 = vunpack.c.l.b16 %v1158
    %v4117 = vunpack.c.h.b16 %v1158
    %v4118 = vunpack.c.l.b16 %v1159
    %v4119 = vunpack.c.h.b16 %v1159
    %v4120 = vunpack.c.l.b16 %v1160
    %v4121 = vunpack.c.h.b16 %v1160
    %v4122 = vunpack.c.l.b16 %v1161
    %v4123 = vunpack.c.h.b16 %v1161
    %v4124 = vunpack.c.l.b16 %v1162
    %v4125 = vunpack.c.h.b16 %v1162
    %v4126 = vunpack.c.l.b16 %v1163
    %v4127 = vunpack.c.h.b16 %v1163
    %v4128 = vunpack.c.l.b16 %v1164
    %v4129 = vunpack.c.h.b16 %v1164
    %v4130 = vunpack.c.l.b16 %v1165
    %v4131 = vunpack.c.h.b16 %v1165
    %v4132 = vunpack.c.l.b16 %v1166
    %v4133 = vunpack.c.h.b16 %v1166
    %v4134 = vunpack.c.l.b16 %v1167
    %v4135 = vunpack.c.h.b16 %v1167
    %v4136 = vunpack.c.l.b16 %v1168
    %v4137 = vunpack.c.h.b16 %v1168
    %v4138 = vunpack.c.l.b16 %v1169
    %v4139 = vunpack.c.h.b16 %v1169
    %v4140 = vunpack.c.l.b16 %v1170
    %v4141 = vunpack.c.h.b16 %v1170
    %v4142 = vunpack.c.l.b16 %v1171
    %v4143 = vunpack.c.h.b16 %v1171
    %v4144 = vunpack.c.l.b16 %v1172
    %v4145 = vunpack.c.h.b16 %v1172
    %v4146 = vunpack.c.l.b16 %v1173
    %v4147 = vunpack.c.h.b16 %v1173
    %v4148 = vunpack.c.l.b16 %v1174
    %v4149 = vunpack.c.h.b16 %v1174
    %v4150 = vunpack.c.l.b16 %v1175
    %v4151 = vunpack.c.h.b16 %v1175
    %v4152 = vunpack.c.l.b16 %v1176
    %v4153 = vunpack.c.h.b16 %v1176
    %v4154 = vunpack.c.l.b16 %v1177
    %v4155 = vunpack.c.h.b16 %v1177
    %v4156 = vunpack.c.l.b16 %v1178
    %v4157 = vunpack.c.h.b16 %v1178
    %v4158 = vunpack.c.l.b16 %v1179
    %v4159 = vunpack.c.h.b16 %v1179
    %v4160 = vunpack.c.l.b16 %v1180
    %v4161 = vunpack.c.h.b16 %v1180
    %v4162 = vunpack.c.l.b16 %v1181
    %v4163 = vunpack.c.h.b16 %v1181
    %v4164 = vunpack.c.l.b16 %v1182
    %v4165 = vunpack.c.h.b16 %v1182
    %v4166 = vunpack.c.l.b16 %v1183
    %v4167 = vunpack.c.h.b16 %v1183
    %v4168 = vunpack.c.l.b16 %v1184
    %v4169 = vunpack.c.h.b16 %v1184
    %v4170 = vunpack.c.l.b16 %v1185
    %v4171 = vunpack.c.h.b16 %v1185
    %v4172 = vunpack.c.l.b16 %v1186
    %v4173 = vunpack.c.h.b16 %v1186
    %v4174 = vunpack.c.l.b16 %v1187
    %v4175 = vunpack.c.h.b16 %v1187
    %v4176 = vunpack.c.l.b16 %v1188
    %v4177 = vunpack.c.h.b16 %v1188
    %v4178 = vunpack.c.l.b16 %v1189
    %v4179 = vunpack.c.h.b16 %v1189
    %v4180 = vunpack.c.l.b16 %v1190
    %v4181 = vunpack.c.h.b16 %v1190
    %v4182 = vunpack.c.l.b16 %v1191
    %v4183 = vunpack.c.h.b16 %v1191
    %v4184 = vunpack.c.l.b16 %v1192
    %v4185 = vunpack.c.h.b16 %v1192
    %v4186 = vunpack.c.l.b16 %v1193
    %v4187 = vunpack.c.h.b16 %v1193
    %v4188 = vunpack.c.l.b16 %v1194
    %v4189 = vunpack.c.h.b16 %v1194
    %v4190 = vunpack.c.l.b16 %v1195
    %v4191 = vunpack.c.h.b16 %v1195
    %v4192 = vunpack.c.l.b16 %v1196
    %v4193 = vunpack.c.h.b16 %v1196
    %v4194 = vunpack.c.l.b16 %v1197
    %v4195 = vunpack.c.h.b16 %v1197
    %v4196 = vunpack.c.l.b16 %v1198
    %v4197 = vunpack.c.h.b16 %v1198
    %v4198 = vunpack.c.l.b16 %v1199
    %v4199 = vunpack.c.h.b16 %v1199
    %v4200 = vunpack.c.l.b16 %v1200
    %v4201 = vunpack.c.h.b16 %v1200
    %v4202 = vunpack.c.l.b16 %v1201
    %v4203 = vunpack.c.h.b16 %v1201
    %v4204 = vunpack.c.l.b16 %v1202
    %v4205 = vunpack.c.h.b16 %v1202
    %v4206 = vunpack.c.l.b16 %v1203
    %v4207 = vunpack.c.h.b16 %v1203
    %v4208 = vunpack.c.l.b16 %v1204
    %v4209 = vunpack.c.h.b16 %v1204
    %v4210 = vunpack.c.l.b16 %v1205
    %v4211 = vunpack.c.h.b16 %v1205
    %v4212 = vunpack.c.l.b16 %v1206
    %v4213 = vunpack.c.h.b16 %v1206
    %v4214 = vunpack.c.l.b16 %v1207
    %v4215 = vunpack.c.h.b16 %v1207
    %v4216 = vunpack.c.l.b16 %v1208
    %v4217 = vunpack.c.h.b16 %v1208
    %v4218 = vunpack.c.l.b16 %v1209
    %v4219 = vunpack.c.h.b16 %v1209
    %v4220 = vunpack.c.l.b16 %v1210
    %v4221 = vunpack.c.h.b16 %v1210
    %v4222 = vunpack.c.l.b16 %v1211
    %v4223 = vunpack.c.h.b16 %v1211
    %v4224 = vunpack.c.l.b16 %v1212
    %v4225 = vunpack.c.h.b16 %v1212
    %v4226 = vunpack.c.l.b16 %v1213
    %v4227 = vunpack.c.h.b16 %v1213
    %v4228 = vunpack.c.l.b16 %v1214
    %v4229 = vunpack.c.h.b16 %v1214
    %v4230 = vunpack.c.l.b16 %v1215
    %v4231 = vunpack.c.h.b16 %v1215
    %v4232 = vunpack.c.l.b16 %v1216
    %v4233 = vunpack.c.h.b16 %v1216
    %v4234 = vunpack.c.l.b16 %v1217
    %v4235 = vunpack.c.h.b16 %v1217
    %v4236 = vunpack.c.l.b16 %v1218
    %v4237 = vunpack.c.h.b16 %v1218
    %v4238 = vunpack.c.l.b16 %v1219
    %v4239 = vunpack.c.h.b16 %v1219
    %v4240 = vunpack.c.l.b16 %v1220
    %v4241 = vunpack.c.h.b16 %v1220
    %v4242 = vunpack.c.l.b16 %v1221
    %v4243 = vunpack.c.h.b16 %v1221
    %v4244 = vunpack.c.l.b16 %v1222
    %v4245 = vunpack.c.h.b16 %v1222
    %v4246 = vunpack.c.l.b16 %v1223
    %v4247 = vunpack.c.h.b16 %v1223
    %v4248 = vunpack.c.l.b16 %v1224
    %v4249 = vunpack.c.h.b16 %v1224
    %v4250 = vunpack.c.l.b16 %v1225
    %v4251 = vunpack.c.h.b16 %v1225
    %v4252 = vunpack.c.l.b16 %v1226
    %v4253 = vunpack.c.h.b16 %v1226
    %v4254 = vunpack.c.l.b16 %v1227
    %v4255 = vunpack.c.h.b16 %v1227
    %v4256 = vunpack.c.l.b16 %v1228
    %v4257 = vunpack.c.h.b16 %v1228
    %v4258 = vunpack.c.l.b16 %v1229
    %v4259 = vunpack.c.h.b16 %v1229
    %v4260 = vunpack.c.l.b16 %v1230
    %v4261 = vunpack.c.h.b16 %v1230
    %v4262 = vunpack.c.l.b16 %v1231
    %v4263 = vunpack.c.h.b16 %v1231
    %v4264 = vunpack.c.l.b16 %v1232
    %v4265 = vunpack.c.h.b16 %v1232
    %v4266 = vunpack.c.l.b16 %v1233
    %v4267 = vunpack.c.h.b16 %v1233
    %v4268 = vunpack.c.l.b16 %v1234
    %v4269 = vunpack.c.h.b16 %v1234
    %v4270 = vunpack.c.l.b16 %v1235
    %v4271 = vunpack.c.h.b16 %v1235
    %v4272 = vunpack.c.l.b16 %v1236
    %v4273 = vunpack.c.h.b16 %v1236
    %v4274 = vunpack.c.l.b16 %v1237
    %v4275 = vunpack.c.h.b16 %v1237
    %v4276 = vunpack.c.l.b16 %v1238
    %v4277 = vunpack.c.h.b16 %v1238
    %v4278 = vunpack.c.l.b16 %v1239
    %v4279 = vunpack.c.h.b16 %v1239
    %v4280 = vunpack.c.l.b16 %v1240
    %v4281 = vunpack.c.h.b16 %v1240
    %v4282 = vunpack.c.l.b16 %v1241
    %v4283 = vunpack.c.h.b16 %v1241
    %v4284 = vunpack.c.l.b16 %v1242
    %v4285 = vunpack.c.h.b16 %v1242
    %v4286 = vunpack.c.l.b16 %v1243
    %v4287 = vunpack.c.h.b16 %v1243
    %v4288 = vunpack.c.l.b16 %v1244
    %v4289 = vunpack.c.h.b16 %v1244
    %v4290 = vunpack.c.l.b16 %v1245
    %v4291 = vunpack.c.h.b16 %v1245
    %v4292 = vunpack.c.l.b16 %v1246
    %v4293 = vunpack.c.h.b16 %v1246
    %v4294 = vunpack.c.l.b16 %v1247
    %v4295 = vunpack.c.h.b16 %v1247
    %v4296 = vunpack.c.l.b16 %v1248
    %v4297 = vunpack.c.h.b16 %v1248
    %v4298 = vunpack.c.l.b16 %v1249
    %v4299 = vunpack.c.h.b16 %v1249
    %v4300 = vunpack.c.l.b16 %v1250
    %v4301 = vunpack.c.h.b16 %v1250
    %v4302 = vunpack.c.l.b16 %v1251
    %v4303 = vunpack.c.h.b16 %v1251
    %v4304 = vunpack.c.l.b16 %v1252
    %v4305 = vunpack.c.h.b16 %v1252
    %v4306 = vunpack.c.l.b16 %v1253
    %v4307 = vunpack.c.h.b16 %v1253
    %v4308 = vunpack.c.l.b16 %v1254
    %v4309 = vunpack.c.h.b16 %v1254
    %v4310 = vunpack.c.l.b16 %v1255
    %v4311 = vunpack.c.h.b16 %v1255
    %v4312 = vunpack.c.l.b16 %v1256
    %v4313 = vunpack.c.h.b16 %v1256
    %v4314 = vunpack.c.l.b16 %v1257
    %v4315 = vunpack.c.h.b16 %v1257
    %v4316 = vunpack.c.l.b16 %v1258
    %v4317 = vunpack.c.h.b16 %v1258
    %v4318 = vunpack.c.l.b16 %v1259
    %v4319 = vunpack.c.h.b16 %v1259
    %v4320 = vunpack.c.l.b16 %v1260
    %v4321 = vunpack.c.h.b16 %v1260
    %v4322 = vunpack.c.l.b16 %v1261
    %v4323 = vunpack.c.h.b16 %v1261
    %v4324 = vunpack.c.l.b16 %v1262
    %v4325 = vunpack.c.h.b16 %v1262
    %v4326 = vunpack.c.l.b16 %v1263
    %v4327 = vunpack.c.h.b16 %v1263
    %v4328 = vunpack.c.l.b16 %v1264
    %v4329 = vunpack.c.h.b16 %v1264
    %v4330 = vunpack.c.l.b16 %v1265
    %v4331 = vunpack.c.h.b16 %v1265
    %v4332 = vunpack.c.l.b16 %v1266
    %v4333 = vunpack.c.h.b16 %v1266
    %v4334 = vunpack.c.l.b16 %v1267
    %v4335 = vunpack.c.h.b16 %v1267
    %v4336 = vunpack.c.l.b16 %v1268
    %v4337 = vunpack.c.h.b16 %v1268
    %v4338 = vunpack.c.l.b16 %v1269
    %v4339 = vunpack.c.h.b16 %v1269
    %v4340 = vunpack.c.l.b16 %v1270
    %v4341 = vunpack.c.h.b16 %v1270
    %v4342 = vunpack.c.l.b16 %v1271
    %v4343 = vunpack.c.h.b16 %v1271
    %v4344 = vunpack.c.l.b16 %v1272
    %v4345 = vunpack.c.h.b16 %v1272
    %v4346 = vunpack.c.l.b16 %v1273
    %v4347 = vunpack.c.h.b16 %v1273
    %v4348 = vunpack.c.l.b16 %v1274
    %v4349 = vunpack.c.h.b16 %v1274
    %v4350 = vunpack.c.l.b16 %v1275
    %v4351 = vunpack.c.h.b16 %v1275
    %v4352 = vunpack.c.l.b16 %v1276
    %v4353 = vunpack.c.h.b16 %v1276
    %v4354 = vunpack.c.l.b16 %v1277
    %v4355 = vunpack.c.h.b16 %v1277
    %v4356 = vunpack.c.l.b16 %v1278
    %v4357 = vunpack.c.h.b16 %v1278
    %v4358 = vunpack.c.l.b16 %v1279
    %v4359 = vunpack.c.h.b16 %v1279
    %v4360 = vunpack.c.l.b16 %v1280
    %v4361 = vunpack.c.h.b16 %v1280
    %v4362 = vunpack.c.l.b16 %v1281
    %v4363 = vunpack.c.h.b16 %v1281
    %v4364 = vunpack.c.l.b16 %v1282
    %v4365 = vunpack.c.h.b16 %v1282
    %v4366 = vunpack.c.l.b16 %v1283
    %v4367 = vunpack.c.h.b16 %v1283
    %v4368 = vunpack.c.l.b16 %v1284
    %v4369 = vunpack.c.h.b16 %v1284
    %v4370 = vunpack.c.l.b16 %v1285
    %v4371 = vunpack.c.h.b16 %v1285
    %v4372 = vunpack.c.l.b16 %v1286
    %v4373 = vunpack.c.h.b16 %v1286
    %v4374 = vunpack.c.l.b16 %v1287
    %v4375 = vunpack.c.h.b16 %v1287
    %v4376 = vunpack.c.l.b16 %v1288
    %v4377 = vunpack.c.h.b16 %v1288
    %v4378 = vunpack.c.l.b16 %v1289
    %v4379 = vunpack.c.h.b16 %v1289
    %v4380 = vunpack.c.l.b16 %v1290
    %v4381 = vunpack.c.h.b16 %v1290
    %v4382 = vunpack.c.l.b16 %v1291
    %v4383 = vunpack.c.h.b16 %v1291
    %v4384 = vunpack.c.l.b16 %v1292
    %v4385 = vunpack.c.h.b16 %v1292
    %v4386 = vunpack.c.l.b16 %v1293
    %v4387 = vunpack.c.h.b16 %v1293
    %v4388 = vunpack.c.l.b16 %v1294
    %v4389 = vunpack.c.h.b16 %v1294
    %v4390 = vunpack.c.l.b16 %v1295
    %v4391 = vunpack.c.h.b16 %v1295
    %v4392 = vunpack.c.l.b16 %v1296
    %v4393 = vunpack.c.h.b16 %v1296
    %v4394 = vunpack.c.l.b16 %v1297
    %v4395 = vunpack.c.h.b16 %v1297
    %v4396 = vunpack.c.l.b16 %v1298
    %v4397 = vunpack.c.h.b16 %v1298
    %v4398 = vunpack.c.l.b16 %v1299
    %v4399 = vunpack.c.h.b16 %v1299
    %v4400 = vunpack.c.l.b16 %v1300
    %v4401 = vunpack.c.h.b16 %v1300
    %v4402 = vunpack.c.l.b16 %v1301
    %v4403 = vunpack.c.h.b16 %v1301
    %v4404 = vunpack.c.l.b16 %v1302
    %v4405 = vunpack.c.h.b16 %v1302
    %v4406 = vunpack.c.l.b16 %v1303
    %v4407 = vunpack.c.h.b16 %v1303
    %v4408 = vunpack.c.l.b16 %v1304
    %v4409 = vunpack.c.h.b16 %v1304
    %v4410 = vunpack.c.l.b16 %v1305
    %v4411 = vunpack.c.h.b16 %v1305
    %v4412 = vunpack.c.l.b16 %v1306
    %v4413 = vunpack.c.h.b16 %v1306
    %v4414 = vunpack.c.l.b16 %v1307
    %v4415 = vunpack.c.h.b16 %v1307
    %v4416 = vunpack.c.l.b16 %v1308
    %v4417 = vunpack.c.h.b16 %v1308
    %v4418 = vunpack.c.l.b16 %v1309
    %v4419 = vunpack.c.h.b16 %v1309
    %v4420 = vunpack.c.l.b16 %v1310
    %v4421 = vunpack.c.h.b16 %v1310
    %v4422 = vunpack.c.l.b16 %v1311
    %v4423 = vunpack.c.h.b16 %v1311
    %v4424 = vunpack.c.l.b16 %v1312
    %v4425 = vunpack.c.h.b16 %v1312
    %v4426 = vunpack.c.l.b16 %v1313
    %v4427 = vunpack.c.h.b16 %v1313
    %v4428 = vunpack.c.l.b16 %v1314
    %v4429 = vunpack.c.h.b16 %v1314
    %v4430 = vunpack.c.l.b16 %v1315
    %v4431 = vunpack.c.h.b16 %v1315
    %v4432 = vunpack.c.l.b16 %v1316
    %v4433 = vunpack.c.h.b16 %v1316
    %v4434 = vunpack.c.l.b16 %v1317
    %v4435 = vunpack.c.h.b16 %v1317
    %v4436 = vunpack.c.l.b16 %v1318
    %v4437 = vunpack.c.h.b16 %v1318
    %v4438 = vunpack.c.l.b16 %v1319
    %v4439 = vunpack.c.h.b16 %v1319
    %v4440 = vunpack.c.l.b16 %v1320
    %v4441 = vunpack.c.h.b16 %v1320
    %v4442 = vunpack.c.l.b16 %v1321
    %v4443 = vunpack.c.h.b16 %v1321
    %v4444 = vunpack.c.l.b16 %v1322
    %v4445 = vunpack.c.h.b16 %v1322
    %v4446 = vunpack.c.l.b16 %v1323
    %v4447 = vunpack.c.h.b16 %v1323
    %v4448 = vunpack.c.l.b16 %v1324
    %v4449 = vunpack.c.h.b16 %v1324
    %v4450 = vunpack.c.l.b16 %v1325
    %v4451 = vunpack.c.h.b16 %v1325
    %v4452 = vunpack.c.l.b16 %v1326
    %v4453 = vunpack.c.h.b16 %v1326
    %v4454 = vunpack.c.l.b16 %v1327
    %v4455 = vunpack.c.h.b16 %v1327
    %v4456 = vunpack.c.l.b16 %v1328
    %v4457 = vunpack.c.h.b16 %v1328
    %v4458 = vunpack.c.l.b16 %v1329
    %v4459 = vunpack.c.h.b16 %v1329
    %v4460 = vunpack.c.l.b16 %v1330
    %v4461 = vunpack.c.h.b16 %v1330
    %v4462 = vunpack.c.l.b16 %v1331
    %v4463 = vunpack.c.h.b16 %v1331
    %v4464 = vunpack.c.l.b16 %v1332
    %v4465 = vunpack.c.h.b16 %v1332
    %v4466 = vunpack.c.l.b16 %v1333
    %v4467 = vunpack.c.h.b16 %v1333
    %v4468 = vunpack.c.l.b16 %v1334
    %v4469 = vunpack.c.h.b16 %v1334
    %v4470 = vunpack.c.l.b16 %v1335
    %v4471 = vunpack.c.h.b16 %v1335
    %v4472 = vunpack.c.l.b16 %v1336
    %v4473 = vunpack.c.h.b16 %v1336
    %v4474 = vunpack.c.l.b16 %v1337
    %v4475 = vunpack.c.h.b16 %v1337
    %v4476 = vunpack.c.l.b16 %v1338
    %v4477 = vunpack.c.h.b16 %v1338
    %v4478 = vunpack.c.l.b16 %v1339
    %v4479 = vunpack.c.h.b16 %v1339
    %v4480 = vunpack.c.l.b16 %v1340
    %v4481 = vunpack.c.h.b16 %v1340
    %v4482 = vunpack.c.l.b16 %v1341
    %v4483 = vunpack.c.h.b16 %v1341
    %v4484 = vunpack.c.l.b16 %v1342
    %v4485 = vunpack.c.h.b16 %v1342
    %v4486 = vunpack.c.l.b16 %v1343
    %v4487 = vunpack.c.h.b16 %v1343
    %v4488 = vunpack.c.l.b16 %v1344
    %v4489 = vunpack.c.h.b16 %v1344
    %v4490 = vunpack.c.l.b16 %v1345
    %v4491 = vunpack.c.h.b16 %v1345
    %v4492 = vunpack.c.l.b16 %v1346
    %v4493 = vunpack.c.h.b16 %v1346
    %v4494 = vunpack.c.l.b16 %v1347
    %v4495 = vunpack.c.h.b16 %v1347
    %v4496 = vunpack.c.l.b16 %v1348
    %v4497 = vunpack.c.h.b16 %v1348
    %v4498 = vunpack.c.l.b16 %v1349
    %v4499 = vunpack.c.h.b16 %v1349
    %v4500 = vunpack.c.l.b16 %v1350
    %v4501 = vunpack.c.h.b16 %v1350
    %v4502 = vunpack.c.l.b16 %v1351
    %v4503 = vunpack.c.h.b16 %v1351
    %v4504 = vunpack.c.l.b16 %v1352
    %v4505 = vunpack.c.h.b16 %v1352
    %v4506 = vunpack.c.l.b16 %v1353
    %v4507 = vunpack.c.h.b16 %v1353
    %v4508 = vunpack.c.l.b16 %v1354
    %v4509 = vunpack.c.h.b16 %v1354
    %v4510 = vunpack.c.l.b16 %v1355
    %v4511 = vunpack.c.h.b16 %v1355
    %v4512 = vunpack.c.l.b16 %v1356
    %v4513 = vunpack.c.h.b16 %v1356
    %v4514 = vunpack.c.l.b16 %v1357
    %v4515 = vunpack.c.h.b16 %v1357
    %v4516 = vunpack.c.l.b16 %v1358
    %v4517 = vunpack.c.h.b16 %v1358
    %v4518 = vunpack.c.l.b16 %v1359
    %v4519 = vunpack.c.h.b16 %v1359
    %v4520 = vunpack.c.l.b16 %v1360
    %v4521 = vunpack.c.h.b16 %v1360
    %v4522 = vunpack.c.l.b16 %v1361
    %v4523 = vunpack.c.h.b16 %v1361
    %v4524 = vunpack.c.l.b16 %v1362
    %v4525 = vunpack.c.h.b16 %v1362
    %v4526 = vunpack.c.l.b16 %v1363
    %v4527 = vunpack.c.h.b16 %v1363
    %v4528 = vunpack.c.l.b16 %v1364
    %v4529 = vunpack.c.h.b16 %v1364
    %v4530 = vunpack.c.l.b16 %v1365
    %v4531 = vunpack.c.h.b16 %v1365
    %v4532 = vunpack.c.l.b16 %v1366
    %v4533 = vunpack.c.h.b16 %v1366
    %v4534 = vunpack.c.l.b16 %v1367
    %v4535 = vunpack.c.h.b16 %v1367
    %v4536 = vunpack.c.l.b16 %v1368
    %v4537 = vunpack.c.h.b16 %v1368
    %v4538 = vunpack.c.l.b16 %v1369
    %v4539 = vunpack.c.h.b16 %v1369
    %v4540 = vunpack.c.l.b16 %v1370
    %v4541 = vunpack.c.h.b16 %v1370
    %v4542 = vunpack.c.l.b16 %v1371
    %v4543 = vunpack.c.h.b16 %v1371
    %v4544 = vunpack.c.l.b16 %v1372
    %v4545 = vunpack.c.h.b16 %v1372
    %v4546 = vunpack.c.l.b16 %v1373
    %v4547 = vunpack.c.h.b16 %v1373
    %v4548 = vunpack.c.l.b16 %v1374
    %v4549 = vunpack.c.h.b16 %v1374
    %v4550 = vunpack.c.l.b16 %v1375
    %v4551 = vunpack.c.h.b16 %v1375
    %v4552 = vunpack.c.l.b16 %v1376
    %v4553 = vunpack.c.h.b16 %v1376
    %v4554 = vunpack.c.l.b16 %v1377
    %v4555 = vunpack.c.h.b16 %v1377
    %v4556 = vunpack.c.l.b16 %v1378
    %v4557 = vunpack.c.h.b16 %v1378
    %v4558 = vunpack.c.l.b16 %v1379
    %v4559 = vunpack.c.h.b16 %v1379
    %v4560 = vunpack.c.l.b16 %v1380
    %v4561 = vunpack.c.h.b16 %v1380
    %v4562 = vunpack.c.l.b16 %v1381
    %v4563 = vunpack.c.h.b16 %v1381
    %v4564 = vunpack.c.l.b16 %v1382
    %v4565 = vunpack.c.h.b16 %v1382
    %v4566 = vunpack.c.l.b16 %v1383
    %v4567 = vunpack.c.h.b16 %v1383
    %v4568 = vunpack.c.l.b16 %v1384
    %v4569 = vunpack.c.h.b16 %v1384
    %v4570 = vunpack.c.l.b16 %v1385
    %v4571 = vunpack.c.h.b16 %v1385
    %v4572 = vunpack.c.l.b16 %v1386
    %v4573 = vunpack.c.h.b16 %v1386
    %v4574 = vunpack.c.l.b16 %v1387
    %v4575 = vunpack.c.h.b16 %v1387
    %v4576 = vunpack.c.l.b16 %v1388
    %v4577 = vunpack.c.h.b16 %v1388
    %v4578 = vunpack.c.l.b16 %v1389
    %v4579 = vunpack.c.h.b16 %v1389
    %v4580 = vunpack.c.l.b16 %v1390
    %v4581 = vunpack.c.h.b16 %v1390
    %v4582 = vunpack.c.l.b16 %v1391
    %v4583 = vunpack.c.h.b16 %v1391
    %v4584 = vunpack.c.l.b16 %v1392
    %v4585 = vunpack.c.h.b16 %v1392
    %v4586 = vunpack.c.l.b16 %v1393
    %v4587 = vunpack.c.h.b16 %v1393
    %v4588 = vunpack.c.l.b16 %v1394
    %v4589 = vunpack.c.h.b16 %v1394
    %v4590 = vunpack.c.l.b16 %v1395
    %v4591 = vunpack.c.h.b16 %v1395
    %v4592 = vunpack.c.l.b16 %v1396
    %v4593 = vunpack.c.h.b16 %v1396
    %v4594 = vunpack.c.l.b16 %v1397
    %v4595 = vunpack.c.h.b16 %v1397
    %v4596 = vunpack.c.l.b16 %v1398
    %v4597 = vunpack.c.h.b16 %v1398
    %v4598 = vunpack.c.l.b16 %v1399
    %v4599 = vunpack.c.h.b16 %v1399
    %v4600 = vunpack.c.l.b16 %v1400
    %v4601 = vunpack.c.h.b16 %v1400
    %v4602 = vunpack.c.l.b16 %v1401
    %v4603 = vunpack.c.h.b16 %v1401
    %v4604 = vunpack.c.l.b16 %v1402
    %v4605 = vunpack.c.h.b16 %v1402
    %v4606 = vunpack.c.l.b16 %v1403
    %v4607 = vunpack.c.h.b16 %v1403
    %v4608 = vunpack.c.l.b16 %v1404
    %v4609 = vunpack.c.h.b16 %v1404
    %v4610 = vunpack.c.l.b16 %v1405
    %v4611 = vunpack.c.h.b16 %v1405
    %v4612 = vpack.c.b16 %v2568, %v2564
    %v4613 = vpack.c.b16 %v2569, %v2565
    %v4614 = vpack.c.b16 %v2570, %v2566
    %v4615 = vpack.c.b16 %v2571, %v2567
    %v4616 = vpack.c.b16 %v2576, %v2572
    %v4617 = vpack.c.b16 %v2577, %v2573
    %v4618 = vpack.c.b16 %v2578, %v2574
    %v4619 = vpack.c.b16 %v2579, %v2575
    %v4620 = vpack.c.b16 %v2584, %v2580
    %v4621 = vpack.c.b16 %v2585, %v2581
    %v4622 = vpack.c.b16 %v2586, %v2582
    %v4623 = vpack.c.b16 %v2587, %v2583
    %v4624 = vpack.c.b16 %v2592, %v2588
    %v4625 = vpack.c.b16 %v2593, %v2589
    %v4626 = vpack.c.b16 %v2594, %v2590
    %v4627 = vpack.c.b16 %v2595, %v2591
    %v4628 = vpack.c.b16 %v2600, %v2596
    %v4629 = vpack.c.b16 %v2601, %v2597
    %v4630 = vpack.c.b16 %v2602, %v2598
    %v4631 = vpack.c.b16 %v2603, %v2599
    %v4632 = vpack.c.b16 %v2608, %v2604
    %v4633 = vpack.c.b16 %v2609, %v2605
    %v4634 = vpack.c.b16 %v2610, %v2606
    %v4635 = vpack.c.b16 %v2611, %v2607
    %v4636 = vpack.c.b16 %v2616, %v2612
    %v4637 = vpack.c.b16 %v2617, %v2613
    %v4638 = vpack.c.b16 %v2618, %v2614
    %v4639 = vpack.c.b16 %v2619, %v2615
    %v4640 = vpack.c.b16 %v2624, %v2620
    %v4641 = vpack.c.b16 %v2625, %v2621
    %v4642 = vpack.c.b16 %v2626, %v2622
    %v4643 = vpack.c.b16 %v2627, %v2623
    %v4644 = vpack.c.b16 %v2632, %v2628
    %v4645 = vpack.c.b16 %v2633, %v2629
    %v4646 = vpack.c.b16 %v2634, %v2630
    %v4647 = vpack.c.b16 %v2635, %v2631
    %v4648 = vpack.c.b16 %v2640, %v2636
    %v4649 = vpack.c.b16 %v2641, %v2637
    %v4650 = vpack.c.b16 %v2642, %v2638
    %v4651 = vpack.c.b16 %v2643, %v2639
    %v4652 = vpack.c.b16 %v2648, %v2644
    %v4653 = vpack.c.b16 %v2649, %v2645
    %v4654 = vpack.c.b16 %v2650, %v2646
    %v4655 = vpack.c.b16 %v2651, %v2647
    %v4656 = vpack.c.b16 %v2656, %v2652
    %v4657 = vpack.c.b16 %v2657, %v2653
    %v4658 = vpack.c.b16 %v2658, %v2654
    %v4659 = vpack.c.b16 %v2659, %v2655
    %v4660 = vpack.c.b16 %v2664, %v2660
    %v4661 = vpack.c.b16 %v2665, %v2661
    %v4662 = vpack.c.b16 %v2666, %v2662
    %v4663 = vpack.c.b16 %v2667, %v2663
    %v4664 = vpack.c.b16 %v2672, %v2668
    %v4665 = vpack.c.b16 %v2673, %v2669
    %v4666 = vpack.c.b16 %v2674, %v2670
    %v4667 = vpack.c.b16 %v2675, %v2671
    %v4668 = vpack.c.b16 %v2680, %v2676
    %v4669 = vpack.c.b16 %v2681, %v2677
    %v4670 = vpack.c.b16 %v2682, %v2678
    %v4671 = vpack.c.b16 %v2683, %v2679
    %v4672 = vpack.c.b16 %v2688, %v2684
    %v4673 = vpack.c.b16 %v2689, %v2685
    %v4674 = vpack.c.b16 %v2690, %v2686
    %v4675 = vpack.c.b16 %v2691, %v2687
    %v4676 = vpack.c.b16 %v2696, %v2692
    %v4677 = vpack.c.b16 %v2697, %v2693
    %v4678 = vpack.c.b16 %v2698, %v2694
    %v4679 = vpack.c.b16 %v2699, %v2695
    %v4680 = vpack.c.b16 %v2704, %v2700
    %v4681 = vpack.c.b16 %v2705, %v2701
    %v4682 = vpack.c.b16 %v2706, %v2702
    %v4683 = vpack.c.b16 %v2707, %v2703
    %v4684 = vpack.c.b16 %v2712, %v2708
    %v4685 = vpack.c.b16 %v2713, %v2709
    %v4686 = vpack.c.b16 %v2714, %v2710
    %v4687 = vpack.c.b16 %v2715, %v2711
    %v4688 = vpack.c.b16 %v2720, %v2716
    %v4689 = vpack.c.b16 %v2721, %v2717
    %v4690 = vpack.c.b16 %v2722, %v2718
    %v4691 = vpack.c.b16 %v2723, %v2719
    %v4692 = vpack.c.b16 %v2728, %v2724
    %v4693 = vpack.c.b16 %v2729, %v2725
    %v4694 = vpack.c.b16 %v2730, %v2726
    %v4695 = vpack.c.b16 %v2731, %v2727
    %v4696 = vpack.c.b16 %v2736, %v2732
    %v4697 = vpack.c.b16 %v2737, %v2733
    %v4698 = vpack.c.b16 %v2738, %v2734
    %v4699 = vpack.c.b16 %v2739, %v2735
    %v4700 = vpack.c.b16 %v2744, %v2740
    %v4701 = vpack.c.b16 %v2745, %v2741
    %v4702 = vpack.c.b16 %v2746, %v2742
    %v4703 = vpack.c.b16 %v2747, %v2743
    %v4704 = vpack.c.b16 %v2752, %v2748
    %v4705 = vpack.c.b16 %v2753, %v2749
    %v4706 = vpack.c.b16 %v2754, %v2750
    %v4707 = vpack.c.b16 %v2755, %v2751
    %v4708 = vpack.c.b16 %v2760, %v2756
    %v4709 = vpack.c.b16 %v2761, %v2757
    %v4710 = vpack.c.b16 %v2762, %v2758
    %v4711 = vpack.c.b16 %v2763, %v2759
    %v4712 = vpack.c.b16 %v2768, %v2764
    %v4713 = vpack.c.b16 %v2769, %v2765
    %v4714 = vpack.c.b16 %v2770, %v2766
    %v4715 = vpack.c.b16 %v2771, %v2767
    %v4716 = vpack.c.b16 %v2776, %v2772
    %v4717 = vpack.c.b16 %v2777, %v2773
    %v4718 = vpack.c.b16 %v2778, %v2774
    %v4719 = vpack.c.b16 %v2779, %v2775
    %v4720 = vpack.c.b16 %v2784, %v2780
    %v4721 = vpack.c.b16 %v2785, %v2781
    %v4722 = vpack.c.b16 %v2786, %v2782
    %v4723 = vpack.c.b16 %v2787, %v2783
    %v4724 = vpack.c.b16 %v2792, %v2788
    %v4725 = vpack.c.b16 %v2793, %v2789
    %v4726 = vpack.c.b16 %v2794, %v2790
    %v4727 = vpack.c.b16 %v2795, %v2791
    %v4728 = vpack.c.b16 %v2800, %v2796
    %v4729 = vpack.c.b16 %v2801, %v2797
    %v4730 = vpack.c.b16 %v2802, %v2798
    %v4731 = vpack.c.b16 %v2803, %v2799
    %v4732 = vpack.c.b16 %v2808, %v2804
    %v4733 = vpack.c.b16 %v2809, %v2805
    %v4734 = vpack.c.b16 %v2810, %v2806
    %v4735 = vpack.c.b16 %v2811, %v2807
    %v4736 = vpack.c.b16 %v2816, %v2812
    %v4737 = vpack.c.b16 %v2817, %v2813
    %v4738 = vpack.c.b16 %v2818, %v2814
    %v4739 = vpack.c.b16 %v2819, %v2815
    %v4740 = vpack.c.b16 %v2824, %v2820
    %v4741 = vpack.c.b16 %v2825, %v2821
    %v4742 = vpack.c.b16 %v2826, %v2822
    %v4743 = vpack.c.b16 %v2827, %v2823
    %v4744 = vpack.c.b16 %v2832, %v2828
    %v4745 = vpack.c.b16 %v2833, %v2829
    %v4746 = vpack.c.b16 %v2834, %v2830
    %v4747 = vpack.c.b16 %v2835, %v2831
    %v4748 = vpack.c.b16 %v2840, %v2836
    %v4749 = vpack.c.b16 %v2841, %v2837
    %v4750 = vpack.c.b16 %v2842, %v2838
    %v4751 = vpack.c.b16 %v2843, %v2839
    %v4752 = vpack.c.b16 %v2848, %v2844
    %v4753 = vpack.c.b16 %v2849, %v2845
    %v4754 = vpack.c.b16 %v2850, %v2846
    %v4755 = vpack.c.b16 %v2851, %v2847
    %v4756 = vpack.c.b16 %v2856, %v2852
    %v4757 = vpack.c.b16 %v2857, %v2853
    %v4758 = vpack.c.b16 %v2858, %v2854
    %v4759 = vpack.c.b16 %v2859, %v2855
    %v4760 = vpack.c.b16 %v2864, %v2860
    %v4761 = vpack.c.b16 %v2865, %v2861
    %v4762 = vpack.c.b16 %v2866, %v2862
    %v4763 = vpack.c.b16 %v2867, %v2863
    %v4764 = vpack.c.b16 %v2872, %v2868
    %v4765 = vpack.c.b16 %v2873, %v2869
    %v4766 = vpack.c.b16 %v2874, %v2870
    %v4767 = vpack.c.b16 %v2875, %v2871
    %v4768 = vpack.c.b16 %v2880, %v2876
    %v4769 = vpack.c.b16 %v2881, %v2877
    %v4770 = vpack.c.b16 %v2882, %v2878
    %v4771 = vpack.c.b16 %v2883, %v2879
    %v4772 = vpack.c.b16 %v2888, %v2884
    %v4773 = vpack.c.b16 %v2889, %v2885
    %v4774 = vpack.c.b16 %v2890, %v2886
    %v4775 = vpack.c.b16 %v2891, %v2887
    %v4776 = vpack.c.b16 %v2896, %v2892
    %v4777 = vpack.c.b16 %v2897, %v2893
    %v4778 = vpack.c.b16 %v2898, %v2894
    %v4779 = vpack.c.b16 %v2899, %v2895
    %v4780 = vpack.c.b16 %v2904, %v2900
    %v4781 = vpack.c.b16 %v2905, %v2901
    %v4782 = vpack.c.b16 %v2906, %v2902
    %v4783 = vpack.c.b16 %v2907, %v2903
    %v4784 = vpack.c.b16 %v2912, %v2908
    %v4785 = vpack.c.b16 %v2913, %v2909
    %v4786 = vpack.c.b16 %v2914, %v2910
    %v4787 = vpack.c.b16 %v2915, %v2911
    %v4788 = vpack.c.b16 %v2920, %v2916
    %v4789 = vpack.c.b16 %v2921, %v2917
    %v4790 = vpack.c.b16 %v2922, %v2918
    %v4791 = vpack.c.b16 %v2923, %v2919
    %v4792 = vpack.c.b16 %v2928, %v2924
    %v4793 = vpack.c.b16 %v2929, %v2925
    %v4794 = vpack.c.b16 %v2930, %v2926
    %v4795 = vpack.c.b16 %v2931, %v2927
    %v4796 = vpack.c.b16 %v2936, %v2932
    %v4797 = vpack.c.b16 %v2937, %v2933
    %v4798 = vpack.c.b16 %v2938, %v2934
    %v4799 = vpack.c.b16 %v2939, %v2935
    %v4800 = vpack.c.b16 %v2944, %v2940
    %v4801 = vpack.c.b16 %v2945, %v2941
    %v4802 = vpack.c.b16 %v2946, %v2942
    %v4803 = vpack.c.b16 %v2947, %v2943
    %v4804 = vpack.c.b16 %v2952, %v2948
    %v4805 = vpack.c.b16 %v2953, %v2949
    %v4806 = vpack.c.b16 %v2954, %v2950
    %v4807 = vpack.c.b16 %v2955, %v2951
    %v4808 = vpack.c.b16 %v2960, %v2956
    %v4809 = vpack.c.b16 %v2961, %v2957
    %v4810 = vpack.c.b16 %v2962, %v2958
    %v4811 = vpack.c.b16 %v2963, %v2959
    %v4812 = vpack.c.b16 %v2968, %v2964
    %v4813 = vpack.c.b16 %v2969, %v2965
    %v4814 = vpack.c.b16 %v2970, %v2966
    %v4815 = vpack.c.b16 %v2971, %v2967
    %v4816 = vpack.c.b16 %v2976, %v2972
    %v4817 = vpack.c.b16 %v2977, %v2973
    %v4818 = vpack.c.b16 %v2978, %v2974
    %v4819 = vpack.c.b16 %v2979, %v2975
    %v4820 = vpack.c.b16 %v2984, %v2980
    %v4821 = vpack.c.b16 %v2985, %v2981
    %v4822 = vpack.c.b16 %v2986, %v2982
    %v4823 = vpack.c.b16 %v2987, %v2983
    %v4824 = vpack.c.b16 %v2992, %v2988
    %v4825 = vpack.c.b16 %v2993, %v2989
    %v4826 = vpack.c.b16 %v2994, %v2990
    %v4827 = vpack.c.b16 %v2995, %v2991
    %v4828 = vpack.c.b16 %v3000, %v2996
    %v4829 = vpack.c.b16 %v3001, %v2997
    %v4830 = vpack.c.b16 %v3002, %v2998
    %v4831 = vpack.c.b16 %v3003, %v2999
    %v4832 = vpack.c.b16 %v3008, %v3004
    %v4833 = vpack.c.b16 %v3009, %v3005
    %v4834 = vpack.c.b16 %v3010, %v3006
    %v4835 = vpack.c.b16 %v3011, %v3007
    %v4836 = vpack.c.b16 %v3016, %v3012
    %v4837 = vpack.c.b16 %v3017, %v3013
    %v4838 = vpack.c.b16 %v3018, %v3014
    %v4839 = vpack.c.b16 %v3019, %v3015
    %v4840 = vpack.c.b16 %v3024, %v3020
    %v4841 = vpack.c.b16 %v3025, %v3021
    %v4842 = vpack.c.b16 %v3026, %v3022
    %v4843 = vpack.c.b16 %v3027, %v3023
    %v4844 = vpack.c.b16 %v3032, %v3028
    %v4845 = vpack.c.b16 %v3033, %v3029
    %v4846 = vpack.c.b16 %v3034, %v3030
    %v4847 = vpack.c.b16 %v3035, %v3031
    %v4848 = vpack.c.b16 %v3040, %v3036
    %v4849 = vpack.c.b16 %v3041, %v3037
    %v4850 = vpack.c.b16 %v3042, %v3038
    %v4851 = vpack.c.b16 %v3043, %v3039
    %v4852 = vpack.c.b16 %v3048, %v3044
    %v4853 = vpack.c.b16 %v3049, %v3045
    %v4854 = vpack.c.b16 %v3050, %v3046
    %v4855 = vpack.c.b16 %v3051, %v3047
    %v4856 = vpack.c.b16 %v3056, %v3052
    %v4857 = vpack.c.b16 %v3057, %v3053
    %v4858 = vpack.c.b16 %v3058, %v3054
    %v4859 = vpack.c.b16 %v3059, %v3055
    %v4860 = vpack.c.b16 %v3064, %v3060
    %v4861 = vpack.c.b16 %v3065, %v3061
    %v4862 = vpack.c.b16 %v3066, %v3062
    %v4863 = vpack.c.b16 %v3067, %v3063
    %v4864 = vpack.c.b16 %v3072, %v3068
    %v4865 = vpack.c.b16 %v3073, %v3069
    %v4866 = vpack.c.b16 %v3074, %v3070
    %v4867 = vpack.c.b16 %v3075, %v3071
    %v4868 = vpack.c.b16 %v3080, %v3076
    %v4869 = vpack.c.b16 %v3081, %v3077
    %v4870 = vpack.c.b16 %v3082, %v3078
    %v4871 = vpack.c.b16 %v3083, %v3079
    %v4872 = vpack.c.b16 %v3088, %v3084
    %v4873 = vpack.c.b16 %v3089, %v3085
    %v4874 = vpack.c.b16 %v3090, %v3086
    %v4875 = vpack.c.b16 %v3091, %v3087
    %v4876 = vpack.c.b16 %v3096, %v3092
    %v4877 = vpack.c.b16 %v3097, %v3093
    %v4878 = vpack.c.b16 %v3098, %v3094
    %v4879 = vpack.c.b16 %v3099, %v3095
    %v4880 = vpack.c.b16 %v3104, %v3100
    %v4881 = vpack.c.b16 %v3105, %v3101
    %v4882 = vpack.c.b16 %v3106, %v3102
    %v4883 = vpack.c.b16 %v3107, %v3103
    %v4884 = vpack.c.b16 %v3112, %v3108
    %v4885 = vpack.c.b16 %v3113, %v3109
    %v4886 = vpack.c.b16 %v3114, %v3110
    %v4887 = vpack.c.b16 %v3115, %v3111
    %v4888 = vpack.c.b16 %v3120, %v3116
    %v4889 = vpack.c.b16 %v3121, %v3117
    %v4890 = vpack.c.b16 %v3122, %v3118
    %v4891 = vpack.c.b16 %v3123, %v3119
    %v4892 = vpack.c.b16 %v3128, %v3124
    %v4893 = vpack.c.b16 %v3129, %v3125
    %v4894 = vpack.c.b16 %v3130, %v3126
    %v4895 = vpack.c.b16 %v3131, %v3127
    %v4896 = vpack.c.b16 %v3136, %v3132
    %v4897 = vpack.c.b16 %v3137, %v3133
    %v4898 = vpack.c.b16 %v3138, %v3134
    %v4899 = vpack.c.b16 %v3139, %v3135
    %v4900 = vpack.c.b16 %v3144, %v3140
    %v4901 = vpack.c.b16 %v3145, %v3141
    %v4902 = vpack.c.b16 %v3146, %v3142
    %v4903 = vpack.c.b16 %v3147, %v3143
    %v4904 = vpack.c.b16 %v3152, %v3148
    %v4905 = vpack.c.b16 %v3153, %v3149
    %v4906 = vpack.c.b16 %v3154, %v3150
    %v4907 = vpack.c.b16 %v3155, %v3151
    %v4908 = vpack.c.b16 %v3160, %v3156
    %v4909 = vpack.c.b16 %v3161, %v3157
    %v4910 = vpack.c.b16 %v3162, %v3158
    %v4911 = vpack.c.b16 %v3163, %v3159
    %v4912 = vpack.c.b16 %v3168, %v3164
    %v4913 = vpack.c.b16 %v3169, %v3165
    %v4914 = vpack.c.b16 %v3170, %v3166
    %v4915 = vpack.c.b16 %v3171, %v3167
    %v4916 = vpack.c.b16 %v3176, %v3172
    %v4917 = vpack.c.b16 %v3177, %v3173
    %v4918 = vpack.c.b16 %v3178, %v3174
    %v4919 = vpack.c.b16 %v3179, %v3175
    %v4920 = vpack.c.b16 %v3184, %v3180
    %v4921 = vpack.c.b16 %v3185, %v3181
    %v4922 = vpack.c.b16 %v3186, %v3182
    %v4923 = vpack.c.b16 %v3187, %v3183
    %v4924 = vpack.c.b16 %v3192, %v3188
    %v4925 = vpack.c.b16 %v3193, %v3189
    %v4926 = vpack.c.b16 %v3194, %v3190
    %v4927 = vpack.c.b16 %v3195, %v3191
    %v4928 = vpack.c.b16 %v3200, %v3196
    %v4929 = vpack.c.b16 %v3201, %v3197
    %v4930 = vpack.c.b16 %v3202, %v3198
    %v4931 = vpack.c.b16 %v3203, %v3199
    %v4932 = vpack.c.b16 %v3208, %v3204
    %v4933 = vpack.c.b16 %v3209, %v3205
    %v4934 = vpack.c.b16 %v3210, %v3206
    %v4935 = vpack.c.b16 %v3211, %v3207
    %v4936 = vpack.c.b16 %v3216, %v3212
    %v4937 = vpack.c.b16 %v3217, %v3213
    %v4938 = vpack.c.b16 %v3218, %v3214
    %v4939 = vpack.c.b16 %v3219, %v3215
    %v4940 = vpack.c.b16 %v3224, %v3220
    %v4941 = vpack.c.b16 %v3225, %v3221
    %v4942 = vpack.c.b16 %v3226, %v3222
    %v4943 = vpack.c.b16 %v3227, %v3223
    %v4944 = vpack.c.b16 %v3232, %v3228
    %v4945 = vpack.c.b16 %v3233, %v3229
    %v4946 = vpack.c.b16 %v3234, %v3230
    %v4947 = vpack.c.b16 %v3235, %v3231
    %v4948 = vpack.c.b16 %v3240, %v3236
    %v4949 = vpack.c.b16 %v3241, %v3237
    %v4950 = vpack.c.b16 %v3242, %v3238
    %v4951 = vpack.c.b16 %v3243, %v3239
    %v4952 = vpack.c.b16 %v3248, %v3244
    %v4953 = vpack.c.b16 %v3249, %v3245
    %v4954 = vpack.c.b16 %v3250, %v3246
    %v4955 = vpack.c.b16 %v3251, %v3247
    %v4956 = vpack.c.b16 %v3256, %v3252
    %v4957 = vpack.c.b16 %v3257, %v3253
    %v4958 = vpack.c.b16 %v3258, %v3254
    %v4959 = vpack.c.b16 %v3259, %v3255
    %v4960 = vpack.c.b16 %v3264, %v3260
    %v4961 = vpack.c.b16 %v3265, %v3261
    %v4962 = vpack.c.b16 %v3266, %v3262
    %v4963 = vpack.c.b16 %v3267, %v3263
    %v4964 = vpack.c.b16 %v3272, %v3268
    %v4965 = vpack.c.b16 %v3273, %v3269
    %v4966 = vpack.c.b16 %v3274, %v3270
    %v4967 = vpack.c.b16 %v3275, %v3271
    %v4968 = vpack.c.b16 %v3280, %v3276
    %v4969 = vpack.c.b16 %v3281, %v3277
    %v4970 = vpack.c.b16 %v3282, %v3278
    %v4971 = vpack.c.b16 %v3283, %v3279
    %v4972 = vpack.c.b16 %v3288, %v3284
    %v4973 = vpack.c.b16 %v3289, %v3285
    %v4974 = vpack.c.b16 %v3290, %v3286
    %v4975 = vpack.c.b16 %v3291, %v3287
    %v4976 = vpack.c.b16 %v3296, %v3292
    %v4977 = vpack.c.b16 %v3297, %v3293
    %v4978 = vpack.c.b16 %v3298, %v3294
    %v4979 = vpack.c.b16 %v3299, %v3295
    %v4980 = vpack.c.b16 %v3304, %v3300
    %v4981 = vpack.c.b16 %v3305, %v3301
    %v4982 = vpack.c.b16 %v3306, %v3302
    %v4983 = vpack.c.b16 %v3307, %v3303
    %v4984 = vpack.c.b16 %v3312, %v3308
    %v4985 = vpack.c.b16 %v3313, %v3309
    %v4986 = vpack.c.b16 %v3314, %v3310
    %v4987 = vpack.c.b16 %v3315, %v3311
    %v4988 = vpack.c.b16 %v3320, %v3316
    %v4989 = vpack.c.b16 %v3321, %v3317
    %v4990 = vpack.c.b16 %v3322, %v3318
    %v4991 = vpack.c.b16 %v3323, %v3319
    %v4992 = vpack.c.b16 %v3328, %v3324
    %v4993 = vpack.c.b16 %v3329, %v3325
    %v4994 = vpack.c.b16 %v3330, %v3326
    %v4995 = vpack.c.b16 %v3331, %v3327
    %v4996 = vpack.c.b16 %v3336, %v3332
    %v4997 = vpack.c.b16 %v3337, %v3333
    %v4998 = vpack.c.b16 %v3338, %v3334
    %v4999 = vpack.c.b16 %v3339, %v3335
    %v5000 = vpack.c.b16 %v3344, %v3340
    %v5001 = vpack.c.b16 %v3345, %v3341
    %v5002 = vpack.c.b16 %v3346, %v3342
    %v5003 = vpack.c.b16 %v3347, %v3343
    %v5004 = vpack.c.b16 %v3352, %v3348
    %v5005 = vpack.c.b16 %v3353, %v3349
    %v5006 = vpack.c.b16 %v3354, %v3350
    %v5007 = vpack.c.b16 %v3355, %v3351
    %v5008 = vpack.c.b16 %v3360, %v3356
    %v5009 = vpack.c.b16 %v3361, %v3357
    %v5010 = vpack.c.b16 %v3362, %v3358
    %v5011 = vpack.c.b16 %v3363, %v3359
    %v5012 = vpack.c.b16 %v3368, %v3364
    %v5013 = vpack.c.b16 %v3369, %v3365
    %v5014 = vpack.c.b16 %v3370, %v3366
    %v5015 = vpack.c.b16 %v3371, %v3367
    %v5016 = vpack.c.b16 %v3376, %v3372
    %v5017 = vpack.c.b16 %v3377, %v3373
    %v5018 = vpack.c.b16 %v3378, %v3374
    %v5019 = vpack.c.b16 %v3379, %v3375
    %v5020 = vpack.c.b16 %v3384, %v3380
    %v5021 = vpack.c.b16 %v3385, %v3381
    %v5022 = vpack.c.b16 %v3386, %v3382
    %v5023 = vpack.c.b16 %v3387, %v3383
    %v5024 = vpack.c.b16 %v3392, %v3388
    %v5025 = vpack.c.b16 %v3393, %v3389
    %v5026 = vpack.c.b16 %v3394, %v3390
    %v5027 = vpack.c.b16 %v3395, %v3391
    %v5028 = vpack.c.b16 %v3400, %v3396
    %v5029 = vpack.c.b16 %v3401, %v3397
    %v5030 = vpack.c.b16 %v3402, %v3398
    %v5031 = vpack.c.b16 %v3403, %v3399
    %v5032 = vpack.c.b16 %v3408, %v3404
    %v5033 = vpack.c.b16 %v3409, %v3405
    %v5034 = vpack.c.b16 %v3410, %v3406
    %v5035 = vpack.c.b16 %v3411, %v3407
    %v5036 = vpack.c.b16 %v3416, %v3412
    %v5037 = vpack.c.b16 %v3417, %v3413
    %v5038 = vpack.c.b16 %v3418, %v3414
    %v5039 = vpack.c.b16 %v3419, %v3415
    %v5040 = vpack.c.b16 %v3424, %v3420
    %v5041 = vpack.c.b16 %v3425, %v3421
    %v5042 = vpack.c.b16 %v3426, %v3422
    %v5043 = vpack.c.b16 %v3427, %v3423
    %v5044 = vpack.c.b16 %v3432, %v3428
    %v5045 = vpack.c.b16 %v3433, %v3429
    %v5046 = vpack.c.b16 %v3434, %v3430
    %v5047 = vpack.c.b16 %v3435, %v3431
    %v5048 = vpack.c.b16 %v3440, %v3436
    %v5049 = vpack.c.b16 %v3441, %v3437
    %v5050 = vpack.c.b16 %v3442, %v3438
    %v5051 = vpack.c.b16 %v3443, %v3439
    %v5052 = vpack.c.b16 %v3448, %v3444
    %v5053 = vpack.c.b16 %v3449, %v3445
    %v5054 = vpack.c.b16 %v3450, %v3446
    %v5055 = vpack.c.b16 %v3451, %v3447
    %v5056 = vpack.c.b16 %v3456, %v3452
    %v5057 = vpack.c.b16 %v3457, %v3453
    %v5058 = vpack.c.b16 %v3458, %v3454
    %v5059 = vpack.c.b16 %v3459, %v3455
    %v5060 = vpack.c.b16 %v3464, %v3460
    %v5061 = vpack.c.b16 %v3465, %v3461
    %v5062 = vpack.c.b16 %v3466, %v3462
    %v5063 = vpack.c.b16 %v3467, %v3463
    %v5064 = vpack.c.b16 %v3472, %v3468
    %v5065 = vpack.c.b16 %v3473, %v3469
    %v5066 = vpack.c.b16 %v3474, %v3470
    %v5067 = vpack.c.b16 %v3475, %v3471
    %v5068 = vpack.c.b16 %v3480, %v3476
    %v5069 = vpack.c.b16 %v3481, %v3477
    %v5070 = vpack.c.b16 %v3482, %v3478
    %v5071 = vpack.c.b16 %v3483, %v3479
    %v5072 = vpack.c.b16 %v3488, %v3484
    %v5073 = vpack.c.b16 %v3489, %v3485
    %v5074 = vpack.c.b16 %v3490, %v3486
    %v5075 = vpack.c.b16 %v3491, %v3487
    %v5076 = vpack.c.b16 %v3496, %v3492
    %v5077 = vpack.c.b16 %v3497, %v3493
    %v5078 = vpack.c.b16 %v3498, %v3494
    %v5079 = vpack.c.b16 %v3499, %v3495
    %v5080 = vpack.c.b16 %v3504, %v3500
    %v5081 = vpack.c.b16 %v3505, %v3501
    %v5082 = vpack.c.b16 %v3506, %v3502
    %v5083 = vpack.c.b16 %v3507, %v3503
    %v5084 = vpack.c.b16 %v3512, %v3508
    %v5085 = vpack.c.b16 %v3513, %v3509
    %v5086 = vpack.c.b16 %v3514, %v3510
    %v5087 = vpack.c.b16 %v3515, %v3511
    %v5088 = vpack.c.b16 %v3520, %v3516
    %v5089 = vpack.c.b16 %v3521, %v3517
    %v5090 = vpack.c.b16 %v3522, %v3518
    %v5091 = vpack.c.b16 %v3523, %v3519
    %v5092 = vpack.c.b16 %v3528, %v3524
    %v5093 = vpack.c.b16 %v3529, %v3525
    %v5094 = vpack.c.b16 %v3530, %v3526
    %v5095 = vpack.c.b16 %v3531, %v3527
    %v5096 = vpack.c.b16 %v3536, %v3532
    %v5097 = vpack.c.b16 %v3537, %v3533
    %v5098 = vpack.c.b16 %v3538, %v3534
    %v5099 = vpack.c.b16 %v3539, %v3535
    %v5100 = vpack.c.b16 %v3544, %v3540
    %v5101 = vpack.c.b16 %v3545, %v3541
    %v5102 = vpack.c.b16 %v3546, %v3542
    %v5103 = vpack.c.b16 %v3547, %v3543
    %v5104 = vpack.c.b16 %v3552, %v3548
    %v5105 = vpack.c.b16 %v3553, %v3549
    %v5106 = vpack.c.b16 %v3554, %v3550
    %v5107 = vpack.c.b16 %v3555, %v3551
    %v5108 = vpack.c.b16 %v3560, %v3556
    %v5109 = vpack.c.b16 %v3561, %v3557
    %v5110 = vpack.c.b16 %v3562, %v3558
    %v5111 = vpack.c.b16 %v3563, %v3559
    %v5112 = vpack.c.b16 %v3568, %v3564
    %v5113 = vpack.c.b16 %v3569, %v3565
    %v5114 = vpack.c.b16 %v3570, %v3566
    %v5115 = vpack.c.b16 %v3571, %v3567
    %v5116 = vpack.c.b16 %v3576, %v3572
    %v5117 = vpack.c.b16 %v3577, %v3573
    %v5118 = vpack.c.b16 %v3578, %v3574
    %v5119 = vpack.c.b16 %v3579, %v3575
    %v5120 = vpack.c.b16 %v3584, %v3580
    %v5121 = vpack.c.b16 %v3585, %v3581
    %v5122 = vpack.c.b16 %v3586, %v3582
    %v5123 = vpack.c.b16 %v3587, %v3583
    %v5124 = vpack.c.b16 %v3592, %v3588
    %v5125 = vpack.c.b16 %v3593, %v3589
    %v5126 = vpack.c.b16 %v3594, %v3590
    %v5127 = vpack.c.b16 %v3595, %v3591
    %v5128 = vpack.c.b16 %v3600, %v3596
    %v5129 = vpack.c.b16 %v3601, %v3597
    %v5130 = vpack.c.b16 %v3602, %v3598
    %v5131 = vpack.c.b16 %v3603, %v3599
    %v5132 = vpack.c.b16 %v3608, %v3604
    %v5133 = vpack.c.b16 %v3609, %v3605
    %v5134 = vpack.c.b16 %v3610, %v3606
    %v5135 = vpack.c.b16 %v3611, %v3607
    %v5136 = vpack.c.b16 %v3616, %v3612
    %v5137 = vpack.c.b16 %v3617, %v3613
    %v5138 = vpack.c.b16 %v3618, %v3614
    %v5139 = vpack.c.b16 %v3619, %v3615
    %v5140 = vpack.c.b16 %v3624, %v3620
    %v5141 = vpack.c.b16 %v3625, %v3621
    %v5142 = vpack.c.b16 %v3626, %v3622
    %v5143 = vpack.c.b16 %v3627, %v3623
    %v5144 = vpack.c.b16 %v3632, %v3628
    %v5145 = vpack.c.b16 %v3633, %v3629
    %v5146 = vpack.c.b16 %v3634, %v3630
    %v5147 = vpack.c.b16 %v3635, %v3631
    %v5148 = vpack.c.b16 %v3640, %v3636
    %v5149 = vpack.c.b16 %v3641, %v3637
    %v5150 = vpack.c.b16 %v3642, %v3638
    %v5151 = vpack.c.b16 %v3643, %v3639
    %v5152 = vpack.c.b16 %v3648, %v3644
    %v5153 = vpack.c.b16 %v3649, %v3645
    %v5154 = vpack.c.b16 %v3650, %v3646
    %v5155 = vpack.c.b16 %v3651, %v3647
    %v5156 = vpack.c.b16 %v3656, %v3652
    %v5157 = vpack.c.b16 %v3657, %v3653
    %v5158 = vpack.c.b16 %v3658, %v3654
    %v5159 = vpack.c.b16 %v3659, %v3655
    %v5160 = vpack.c.b16 %v3664, %v3660
    %v5161 = vpack.c.b16 %v3665, %v3661
    %v5162 = vpack.c.b16 %v3666, %v3662
    %v5163 = vpack.c.b16 %v3667, %v3663
    %v5164 = vpack.c.b16 %v3672, %v3668
    %v5165 = vpack.c.b16 %v3673, %v3669
    %v5166 = vpack.c.b16 %v3674, %v3670
    %v5167 = vpack.c.b16 %v3675, %v3671
    %v5168 = vpack.c.b16 %v3680, %v3676
    %v5169 = vpack.c.b16 %v3681, %v3677
    %v5170 = vpack.c.b16 %v3682, %v3678
    %v5171 = vpack.c.b16 %v3683, %v3679
    %v5172 = vpack.c.b16 %v3688, %v3684
    %v5173 = vpack.c.b16 %v3689, %v3685
    %v5174 = vpack.c.b16 %v3690, %v3686
    %v5175 = vpack.c.b16 %v3691, %v3687
    %v5176 = vpack.c.b16 %v3696, %v3692
    %v5177 = vpack.c.b16 %v3697, %v3693
    %v5178 = vpack.c.b16 %v3698, %v3694
    %v5179 = vpack.c.b16 %v3699, %v3695
    %v5180 = vpack.c.b16 %v3704, %v3700
    %v5181 = vpack.c.b16 %v3705, %v3701
    %v5182 = vpack.c.b16 %v3706, %v3702
    %v5183 = vpack.c.b16 %v3707, %v3703
    %v5184 = vpack.c.b16 %v3712, %v3708
    %v5185 = vpack.c.b16 %v3713, %v3709
    %v5186 = vpack.c.b16 %v3714, %v3710
    %v5187 = vpack.c.b16 %v3715, %v3711
    %v5188 = vpack.c.b16 %v3720, %v3716
    %v5189 = vpack.c.b16 %v3721, %v3717
    %v5190 = vpack.c.b16 %v3722, %v3718
    %v5191 = vpack.c.b16 %v3723, %v3719
    %v5192 = vpack.c.b16 %v3728, %v3724
    %v5193 = vpack.c.b16 %v3729, %v3725
    %v5194 = vpack.c.b16 %v3730, %v3726
    %v5195 = vpack.c.b16 %v3731, %v3727
    %v5196 = vpack.c.b16 %v3736, %v3732
    %v5197 = vpack.c.b16 %v3737, %v3733
    %v5198 = vpack.c.b16 %v3738, %v3734
    %v5199 = vpack.c.b16 %v3739, %v3735
    %v5200 = vpack.c.b16 %v3744, %v3740
    %v5201 = vpack.c.b16 %v3745, %v3741
    %v5202 = vpack.c.b16 %v3746, %v3742
    %v5203 = vpack.c.b16 %v3747, %v3743
    %v5204 = vpack.c.b16 %v3752, %v3748
    %v5205 = vpack.c.b16 %v3753, %v3749
    %v5206 = vpack.c.b16 %v3754, %v3750
    %v5207 = vpack.c.b16 %v3755, %v3751
    %v5208 = vpack.c.b16 %v3760, %v3756
    %v5209 = vpack.c.b16 %v3761, %v3757
    %v5210 = vpack.c.b16 %v3762, %v3758
    %v5211 = vpack.c.b16 %v3763, %v3759
    %v5212 = vpack.c.b16 %v3768, %v3764
    %v5213 = vpack.c.b16 %v3769, %v3765
    %v5214 = vpack.c.b16 %v3770, %v3766
    %v5215 = vpack.c.b16 %v3771, %v3767
    %v5216 = vpack.c.b16 %v3776, %v3772
    %v5217 = vpack.c.b16 %v3777, %v3773
    %v5218 = vpack.c.b16 %v3778, %v3774
    %v5219 = vpack.c.b16 %v3779, %v3775
    %v5220 = vpack.c.b16 %v3784, %v3780
    %v5221 = vpack.c.b16 %v3785, %v3781
    %v5222 = vpack.c.b16 %v3786, %v3782
    %v5223 = vpack.c.b16 %v3787, %v3783
    %v5224 = vpack.c.b16 %v3792, %v3788
    %v5225 = vpack.c.b16 %v3793, %v3789
    %v5226 = vpack.c.b16 %v3794, %v3790
    %v5227 = vpack.c.b16 %v3795, %v3791
    %v5228 = vpack.c.b16 %v3800, %v3796
    %v5229 = vpack.c.b16 %v3801, %v3797
    %v5230 = vpack.c.b16 %v3802, %v3798
    %v5231 = vpack.c.b16 %v3803, %v3799
    %v5232 = vpack.c.b16 %v3808, %v3804
    %v5233 = vpack.c.b16 %v3809, %v3805
    %v5234 = vpack.c.b16 %v3810, %v3806
    %v5235 = vpack.c.b16 %v3811, %v3807
    %v5236 = vpack.c.b16 %v3816, %v3812
    %v5237 = vpack.c.b16 %v3817, %v3813
    %v5238 = vpack.c.b16 %v3818, %v3814
    %v5239 = vpack.c.b16 %v3819, %v3815
    %v5240 = vpack.c.b16 %v3824, %v3820
    %v5241 = vpack.c.b16 %v3825, %v3821
    %v5242 = vpack.c.b16 %v3826, %v3822
    %v5243 = vpack.c.b16 %v3827, %v3823
    %v5244 = vpack.c.b16 %v3832, %v3828
    %v5245 = vpack.c.b16 %v3833, %v3829
    %v5246 = vpack.c.b16 %v3834, %v3830
    %v5247 = vpack.c.b16 %v3835, %v3831
    %v5248 = vpack.c.b16 %v3840, %v3836
    %v5249 = vpack.c.b16 %v3841, %v3837
    %v5250 = vpack.c.b16 %v3842, %v3838
    %v5251 = vpack.c.b16 %v3843, %v3839
    %v5252 = vpack.c.b16 %v3848, %v3844
    %v5253 = vpack.c.b16 %v3849, %v3845
    %v5254 = vpack.c.b16 %v3850, %v3846
    %v5255 = vpack.c.b16 %v3851, %v3847
    %v5256 = vpack.c.b16 %v3856, %v3852
    %v5257 = vpack.c.b16 %v3857, %v3853
    %v5258 = vpack.c.b16 %v3858, %v3854
    %v5259 = vpack.c.b16 %v3859, %v3855
    %v5260 = vpack.c.b16 %v3864, %v3860
    %v5261 = vpack.c.b16 %v3865, %v3861
    %v5262 = vpack.c.b16 %v3866, %v3862
    %v5263 = vpack.c.b16 %v3867, %v3863
    %v5264 = vpack.c.b16 %v3872, %v3868
    %v5265 = vpack.c.b16 %v3873, %v3869
    %v5266 = vpack.c.b16 %v3874, %v3870
    %v5267 = vpack.c.b16 %v3875, %v3871
    %v5268 = vpack.c.b16 %v3880, %v3876
    %v5269 = vpack.c.b16 %v3881, %v3877
    %v5270 = vpack.c.b16 %v3882, %v3878
    %v5271 = vpack.c.b16 %v3883, %v3879
    %v5272 = vpack.c.b16 %v3888, %v3884
    %v5273 = vpack.c.b16 %v3889, %v3885
    %v5274 = vpack.c.b16 %v3890, %v3886
    %v5275 = vpack.c.b16 %v3891, %v3887
    %v5276 = vpack.c.b16 %v3896, %v3892
    %v5277 = vpack.c.b16 %v3897, %v3893
    %v5278 = vpack.c.b16 %v3898, %v3894
    %v5279 = vpack.c.b16 %v3899, %v3895
    %v5280 = vpack.c.b16 %v3904, %v3900
    %v5281 = vpack.c.b16 %v3905, %v3901
    %v5282 = vpack.c.b16 %v3906, %v3902
    %v5283 = vpack.c.b16 %v3907, %v3903
    %v5284 = vpack.c.b16 %v3912, %v3908
    %v5285 = vpack.c.b16 %v3913, %v3909
    %v5286 = vpack.c.b16 %v3914, %v3910
    %v5287 = vpack.c.b16 %v3915, %v3911
    %v5288 = vpack.c.b16 %v3920, %v3916
    %v5289 = vpack.c.b16 %v3921, %v3917
    %v5290 = vpack.c.b16 %v3922, %v3918
    %v5291 = vpack.c.b16 %v3923, %v3919
    %v5292 = vpack.c.b16 %v3928, %v3924
    %v5293 = vpack.c.b16 %v3929, %v3925
    %v5294 = vpack.c.b16 %v3930, %v3926
    %v5295 = vpack.c.b16 %v3931, %v3927
    %v5296 = vpack.c.b16 %v3936, %v3932
    %v5297 = vpack.c.b16 %v3937, %v3933
    %v5298 = vpack.c.b16 %v3938, %v3934
    %v5299 = vpack.c.b16 %v3939, %v3935
    %v5300 = vpack.c.b16 %v3944, %v3940
    %v5301 = vpack.c.b16 %v3945, %v3941
    %v5302 = vpack.c.b16 %v3946, %v3942
    %v5303 = vpack.c.b16 %v3947, %v3943
    %v5304 = vpack.c.b16 %v3952, %v3948
    %v5305 = vpack.c.b16 %v3953, %v3949
    %v5306 = vpack.c.b16 %v3954, %v3950
    %v5307 = vpack.c.b16 %v3955, %v3951
    %v5308 = vpack.c.b16 %v3960, %v3956
    %v5309 = vpack.c.b16 %v3961, %v3957
    %v5310 = vpack.c.b16 %v3962, %v3958
    %v5311 = vpack.c.b16 %v3963, %v3959
    %v5312 = vpack.c.b16 %v3968, %v3964
    %v5313 = vpack.c.b16 %v3969, %v3965
    %v5314 = vpack.c.b16 %v3970, %v3966
    %v5315 = vpack.c.b16 %v3971, %v3967
    %v5316 = vpack.c.b16 %v3976, %v3972
    %v5317 = vpack.c.b16 %v3977, %v3973
    %v5318 = vpack.c.b16 %v3978, %v3974
    %v5319 = vpack.c.b16 %v3979, %v3975
    %v5320 = vpack.c.b16 %v3984, %v3980
    %v5321 = vpack.c.b16 %v3985, %v3981
    %v5322 = vpack.c.b16 %v3986, %v3982
    %v5323 = vpack.c.b16 %v3987, %v3983
    %v5324 = vpack.c.b16 %v3992, %v3988
    %v5325 = vpack.c.b16 %v3993, %v3989
    %v5326 = vpack.c.b16 %v3994, %v3990
    %v5327 = vpack.c.b16 %v3995, %v3991
    %v5328 = vpack.c.b16 %v4000, %v3996
    %v5329 = vpack.c.b16 %v4001, %v3997
    %v5330 = vpack.c.b16 %v4002, %v3998
    %v5331 = vpack.c.b16 %v4003, %v3999
    %v5332 = vpack.c.b16 %v4008, %v4004
    %v5333 = vpack.c.b16 %v4009, %v4005
    %v5334 = vpack.c.b16 %v4010, %v4006
    %v5335 = vpack.c.b16 %v4011, %v4007
    %v5336 = vpack.c.b16 %v4016, %v4012
    %v5337 = vpack.c.b16 %v4017, %v4013
    %v5338 = vpack.c.b16 %v4018, %v4014
    %v5339 = vpack.c.b16 %v4019, %v4015
    %v5340 = vpack.c.b16 %v4024, %v4020
    %v5341 = vpack.c.b16 %v4025, %v4021
    %v5342 = vpack.c.b16 %v4026, %v4022
    %v5343 = vpack.c.b16 %v4027, %v4023
    %v5344 = vpack.c.b16 %v4032, %v4028
    %v5345 = vpack.c.b16 %v4033, %v4029
    %v5346 = vpack.c.b16 %v4034, %v4030
    %v5347 = vpack.c.b16 %v4035, %v4031
    %v5348 = vpack.c.b16 %v4040, %v4036
    %v5349 = vpack.c.b16 %v4041, %v4037
    %v5350 = vpack.c.b16 %v4042, %v4038
    %v5351 = vpack.c.b16 %v4043, %v4039
    %v5352 = vpack.c.b16 %v4048, %v4044
    %v5353 = vpack.c.b16 %v4049, %v4045
    %v5354 = vpack.c.b16 %v4050, %v4046
    %v5355 = vpack.c.b16 %v4051, %v4047
    %v5356 = vpack.c.b16 %v4056, %v4052
    %v5357 = vpack.c.b16 %v4057, %v4053
    %v5358 = vpack.c.b16 %v4058, %v4054
    %v5359 = vpack.c.b16 %v4059, %v4055
    %v5360 = vpack.c.b16 %v4064, %v4060
    %v5361 = vpack.c.b16 %v4065, %v4061
    %v5362 = vpack.c.b16 %v4066, %v4062
    %v5363 = vpack.c.b16 %v4067, %v4063
    %v5364 = vpack.c.b16 %v4072, %v4068
    %v5365 = vpack.c.b16 %v4073, %v4069
    %v5366 = vpack.c.b16 %v4074, %v4070
    %v5367 = vpack.c.b16 %v4075, %v4071
    %v5368 = vpack.c.b16 %v4080, %v4076
    %v5369 = vpack.c.b16 %v4081, %v4077
    %v5370 = vpack.c.b16 %v4082, %v4078
    %v5371 = vpack.c.b16 %v4083, %v4079
    %v5372 = vpack.c.b16 %v4088, %v4084
    %v5373 = vpack.c.b16 %v4089, %v4085
    %v5374 = vpack.c.b16 %v4090, %v4086
    %v5375 = vpack.c.b16 %v4091, %v4087
    %v5376 = vpack.c.b16 %v4096, %v4092
    %v5377 = vpack.c.b16 %v4097, %v4093
    %v5378 = vpack.c.b16 %v4098, %v4094
    %v5379 = vpack.c.b16 %v4099, %v4095
    %v5380 = vpack.c.b16 %v4104, %v4100
    %v5381 = vpack.c.b16 %v4105, %v4101
    %v5382 = vpack.c.b16 %v4106, %v4102
    %v5383 = vpack.c.b16 %v4107, %v4103
    %v5384 = vpack.c.b16 %v4112, %v4108
    %v5385 = vpack.c.b16 %v4113, %v4109
    %v5386 = vpack.c.b16 %v4114, %v4110
    %v5387 = vpack.c.b16 %v4115, %v4111
    %v5388 = vpack.c.b16 %v4120, %v4116
    %v5389 = vpack.c.b16 %v4121, %v4117
    %v5390 = vpack.c.b16 %v4122, %v4118
    %v5391 = vpack.c.b16 %v4123, %v4119
    %v5392 = vpack.c.b16 %v4128, %v4124
    %v5393 = vpack.c.b16 %v4129, %v4125
    %v5394 = vpack.c.b16 %v4130, %v4126
    %v5395 = vpack.c.b16 %v4131, %v4127
    %v5396 = vpack.c.b16 %v4136, %v4132
    %v5397 = vpack.c.b16 %v4137, %v4133
    %v5398 = vpack.c.b16 %v4138, %v4134
    %v5399 = vpack.c.b16 %v4139, %v4135
    %v5400 = vpack.c.b16 %v4144, %v4140
    %v5401 = vpack.c.b16 %v4145, %v4141
    %v5402 = vpack.c.b16 %v4146, %v4142
    %v5403 = vpack.c.b16 %v4147, %v4143
    %v5404 = vpack.c.b16 %v4152, %v4148
    %v5405 = vpack.c.b16 %v4153, %v4149
    %v5406 = vpack.c.b16 %v4154, %v4150
    %v5407 = vpack.c.b16 %v4155, %v4151
    %v5408 = vpack.c.b16 %v4160, %v4156
    %v5409 = vpack.c.b16 %v4161, %v4157
    %v5410 = vpack.c.b16 %v4162, %v4158
    %v5411 = vpack.c.b16 %v4163, %v4159
    %v5412 = vpack.c.b16 %v4168, %v4164
    %v5413 = vpack.c.b16 %v4169, %v4165
    %v5414 = vpack.c.b16 %v4170, %v4166
    %v5415 = vpack.c.b16 %v4171, %v4167
    %v5416 = vpack.c.b16 %v4176, %v4172
    %v5417 = vpack.c.b16 %v4177, %v4173
    %v5418 = vpack.c.b16 %v4178, %v4174
    %v5419 = vpack.c.b16 %v4179, %v4175
    %v5420 = vpack.c.b16 %v4184, %v4180
    %v5421 = vpack.c.b16 %v4185, %v4181
    %v5422 = vpack.c.b16 %v4186, %v4182
    %v5423 = vpack.c.b16 %v4187, %v4183
    %v5424 = vpack.c.b16 %v4192, %v4188
    %v5425 = vpack.c.b16 %v4193, %v4189
    %v5426 = vpack.c.b16 %v4194, %v4190
    %v5427 = vpack.c.b16 %v4195, %v4191
    %v5428 = vpack.c.b16 %v4200, %v4196
    %v5429 = vpack.c.b16 %v4201, %v4197
    %v5430 = vpack.c.b16 %v4202, %v4198
    %v5431 = vpack.c.b16 %v4203, %v4199
    %v5432 = vpack.c.b16 %v4208, %v4204
    %v5433 = vpack.c.b16 %v4209, %v4205
    %v5434 = vpack.c.b16 %v4210, %v4206
    %v5435 = vpack.c.b16 %v4211, %v4207
    %v5436 = vpack.c.b16 %v4216, %v4212
    %v5437 = vpack.c.b16 %v4217, %v4213
    %v5438 = vpack.c.b16 %v4218, %v4214
    %v5439 = vpack.c.b16 %v4219, %v4215
    %v5440 = vpack.c.b16 %v4224, %v4220
    %v5441 = vpack.c.b16 %v4225, %v4221
    %v5442 = vpack.c.b16 %v4226, %v4222
    %v5443 = vpack.c.b16 %v4227, %v4223
    %v5444 = vpack.c.b16 %v4232, %v4228
    %v5445 = vpack.c.b16 %v4233, %v4229
    %v5446 = vpack.c.b16 %v4234, %v4230
    %v5447 = vpack.c.b16 %v4235, %v4231
    %v5448 = vpack.c.b16 %v4240, %v4236
    %v5449 = vpack.c.b16 %v4241, %v4237
    %v5450 = vpack.c.b16 %v4242, %v4238
    %v5451 = vpack.c.b16 %v4243, %v4239
    %v5452 = vpack.c.b16 %v4248, %v4244
    %v5453 = vpack.c.b16 %v4249, %v4245
    %v5454 = vpack.c.b16 %v4250, %v4246
    %v5455 = vpack.c.b16 %v4251, %v4247
    %v5456 = vpack.c.b16 %v4256, %v4252
    %v5457 = vpack.c.b16 %v4257, %v4253
    %v5458 = vpack.c.b16 %v4258, %v4254
    %v5459 = vpack.c.b16 %v4259, %v4255
    %v5460 = vpack.c.b16 %v4264, %v4260
    %v5461 = vpack.c.b16 %v4265, %v4261
    %v5462 = vpack.c.b16 %v4266, %v4262
    %v5463 = vpack.c.b16 %v4267, %v4263
    %v5464 = vpack.c.b16 %v4272, %v4268
    %v5465 = vpack.c.b16 %v4273, %v4269
    %v5466 = vpack.c.b16 %v4274, %v4270
    %v5467 = vpack.c.b16 %v4275, %v4271
    %v5468 = vpack.c.b16 %v4280, %v4276
    %v5469 = vpack.c.b16 %v4281, %v4277
    %v5470 = vpack.c.b16 %v4282, %v4278
    %v5471 = vpack.c.b16 %v4283, %v4279
    %v5472 = vpack.c.b16 %v4288, %v4284
    %v5473 = vpack.c.b16 %v4289, %v4285
    %v5474 = vpack.c.b16 %v4290, %v4286
    %v5475 = vpack.c.b16 %v4291, %v4287
    %v5476 = vpack.c.b16 %v4296, %v4292
    %v5477 = vpack.c.b16 %v4297, %v4293
    %v5478 = vpack.c.b16 %v4298, %v4294
    %v5479 = vpack.c.b16 %v4299, %v4295
    %v5480 = vpack.c.b16 %v4304, %v4300
    %v5481 = vpack.c.b16 %v4305, %v4301
    %v5482 = vpack.c.b16 %v4306, %v4302
    %v5483 = vpack.c.b16 %v4307, %v4303
    %v5484 = vpack.c.b16 %v4312, %v4308
    %v5485 = vpack.c.b16 %v4313, %v4309
    %v5486 = vpack.c.b16 %v4314, %v4310
    %v5487 = vpack.c.b16 %v4315, %v4311
    %v5488 = vpack.c.b16 %v4320, %v4316
    %v5489 = vpack.c.b16 %v4321, %v4317
    %v5490 = vpack.c.b16 %v4322, %v4318
    %v5491 = vpack.c.b16 %v4323, %v4319
    %v5492 = vpack.c.b16 %v4328, %v4324
    %v5493 = vpack.c.b16 %v4329, %v4325
    %v5494 = vpack.c.b16 %v4330, %v4326
    %v5495 = vpack.c.b16 %v4331, %v4327
    %v5496 = vpack.c.b16 %v4336, %v4332
    %v5497 = vpack.c.b16 %v4337, %v4333
    %v5498 = vpack.c.b16 %v4338, %v4334
    %v5499 = vpack.c.b16 %v4339, %v4335
    %v5500 = vpack.c.b16 %v4344, %v4340
    %v5501 = vpack.c.b16 %v4345, %v4341
    %v5502 = vpack.c.b16 %v4346, %v4342
    %v5503 = vpack.c.b16 %v4347, %v4343
    %v5504 = vpack.c.b16 %v4352, %v4348
    %v5505 = vpack.c.b16 %v4353, %v4349
    %v5506 = vpack.c.b16 %v4354, %v4350
    %v5507 = vpack.c.b16 %v4355, %v4351
    %v5508 = vpack.c.b16 %v4360, %v4356
    %v5509 = vpack.c.b16 %v4361, %v4357
    %v5510 = vpack.c.b16 %v4362, %v4358
    %v5511 = vpack.c.b16 %v4363, %v4359
    %v5512 = vpack.c.b16 %v4368, %v4364
    %v5513 = vpack.c.b16 %v4369, %v4365
    %v5514 = vpack.c.b16 %v4370, %v4366
    %v5515 = vpack.c.b16 %v4371, %v4367
    %v5516 = vpack.c.b16 %v4376, %v4372
    %v5517 = vpack.c.b16 %v4377, %v4373
    %v5518 = vpack.c.b16 %v4378, %v4374
    %v5519 = vpack.c.b16 %v4379, %v4375
    %v5520 = vpack.c.b16 %v4384, %v4380
    %v5521 = vpack.c.b16 %v4385, %v4381
    %v5522 = vpack.c.b16 %v4386, %v4382
    %v5523 = vpack.c.b16 %v4387, %v4383
    %v5524 = vpack.c.b16 %v4392, %v4388
    %v5525 = vpack.c.b16 %v4393, %v4389
    %v5526 = vpack.c.b16 %v4394, %v4390
    %v5527 = vpack.c.b16 %v4395, %v4391
    %v5528 = vpack.c.b16 %v4400, %v4396
    %v5529 = vpack.c.b16 %v4401, %v4397
    %v5530 = vpack.c.b16 %v4402, %v4398
    %v5531 = vpack.c.b16 %v4403, %v4399
    %v5532 = vpack.c.b16 %v4408, %v4404
    %v5533 = vpack.c.b16 %v4409, %v4405
    %v5534 = vpack.c.b16 %v4410, %v4406
    %v5535 = vpack.c.b16 %v4411, %v4407
    %v5536 = vpack.c.b16 %v4416, %v4412
    %v5537 = vpack.c.b16 %v4417, %v4413
    %v5538 = vpack.c.b16 %v4418, %v4414
    %v5539 = vpack.c.b16 %v4419, %v4415
    %v5540 = vpack.c.b16 %v4424, %v4420
    %v5541 = vpack.c.b16 %v4425, %v4421
    %v5542 = vpack.c.b16 %v4426, %v4422
    %v5543 = vpack.c.b16 %v4427, %v4423
    %v5544 = vpack.c.b16 %v4432, %v4428
    %v5545 = vpack.c.b16 %v4433, %v4429
    %v5546 = vpack.c.b16 %v4434, %v4430
    %v5547 = vpack.c.b16 %v4435, %v4431
    %v5548 = vpack.c.b16 %v4440, %v4436
    %v5549 = vpack.c.b16 %v4441, %v4437
    %v5550 = vpack.c.b16 %v4442, %v4438
    %v5551 = vpack.c.b16 %v4443, %v4439
    %v5552 = vpack.c.b16 %v4448, %v4444
    %v5553 = vpack.c.b16 %v4449, %v4445
    %v5554 = vpack.c.b16 %v4450, %v4446
    %v5555 = vpack.c.b16 %v4451, %v4447
    %v5556 = vpack.c.b16 %v4456, %v4452
    %v5557 = vpack.c.b16 %v4457, %v4453
    %v5558 = vpack.c.b16 %v4458, %v4454
    %v5559 = vpack.c.b16 %v4459, %v4455
    %v5560 = vpack.c.b16 %v4464, %v4460
    %v5561 = vpack.c.b16 %v4465, %v4461
    %v5562 = vpack.c.b16 %v4466, %v4462
    %v5563 = vpack.c.b16 %v4467, %v4463
    %v5564 = vpack.c.b16 %v4472, %v4468
    %v5565 = vpack.c.b16 %v4473, %v4469
    %v5566 = vpack.c.b16 %v4474, %v4470
    %v5567 = vpack.c.b16 %v4475, %v4471
    %v5568 = vpack.c.b16 %v4480, %v4476
    %v5569 = vpack.c.b16 %v4481, %v4477
    %v5570 = vpack.c.b16 %v4482, %v4478
    %v5571 = vpack.c.b16 %v4483, %v4479
    %v5572 = vpack.c.b16 %v4488, %v4484
    %v5573 = vpack.c.b16 %v4489, %v4485
    %v5574 = vpack.c.b16 %v4490, %v4486
    %v5575 = vpack.c.b16 %v4491, %v4487
    %v5576 = vpack.c.b16 %v4496, %v4492
    %v5577 = vpack.c.b16 %v4497, %v4493
    %v5578 = vpack.c.b16 %v4498, %v4494
    %v5579 = vpack.c.b16 %v4499, %v4495
    %v5580 = vpack.c.b16 %v4504, %v4500
    %v5581 = vpack.c.b16 %v4505, %v4501
    %v5582 = vpack.c.b16 %v4506, %v4502
    %v5583 = vpack.c.b16 %v4507, %v4503
    %v5584 = vpack.c.b16 %v4512, %v4508
    %v5585 = vpack.c.b16 %v4513, %v4509
    %v5586 = vpack.c.b16 %v4514, %v4510
    %v5587 = vpack.c.b16 %v4515, %v4511
    %v5588 = vpack.c.b16 %v4520, %v4516
    %v5589 = vpack.c.b16 %v4521, %v4517
    %v5590 = vpack.c.b16 %v4522, %v4518
    %v5591 = vpack.c.b16 %v4523, %v4519
    %v5592 = vpack.c.b16 %v4528, %v4524
    %v5593 = vpack.c.b16 %v4529, %v4525
    %v5594 = vpack.c.b16 %v4530, %v4526
    %v5595 = vpack.c.b16 %v4531, %v4527
    %v5596 = vpack.c.b16 %v4536, %v4532
    %v5597 = vpack.c.b16 %v4537, %v4533
    %v5598 = vpack.c.b16 %v4538, %v4534
    %v5599 = vpack.c.b16 %v4539, %v4535
    %v5600 = vpack.c.b16 %v4544, %v4540
    %v5601 = vpack.c.b16 %v4545, %v4541
    %v5602 = vpack.c.b16 %v4546, %v4542
    %v5603 = vpack.c.b16 %v4547, %v4543
    %v5604 = vpack.c.b16 %v4552, %v4548
    %v5605 = vpack.c.b16 %v4553, %v4549
    %v5606 = vpack.c.b16 %v4554, %v4550
    %v5607 = vpack.c.b16 %v4555, %v4551
    %v5608 = vpack.c.b16 %v4560, %v4556
    %v5609 = vpack.c.b16 %v4561, %v4557
    %v5610 = vpack.c.b16 %v4562, %v4558
    %v5611 = vpack.c.b16 %v4563, %v4559
    %v5612 = vpack.c.b16 %v4568, %v4564
    %v5613 = vpack.c.b16 %v4569, %v4565
    %v5614 = vpack.c.b16 %v4570, %v4566
    %v5615 = vpack.c.b16 %v4571, %v4567
    %v5616 = vpack.c.b16 %v4576, %v4572
    %v5617 = vpack.c.b16 %v4577, %v4573
    %v5618 = vpack.c.b16 %v4578, %v4574
    %v5619 = vpack.c.b16 %v4579, %v4575
    %v5620 = vpack.c.b16 %v4584, %v4580
    %v5621 = vpack.c.b16 %v4585, %v4581
    %v5622 = vpack.c.b16 %v4586, %v4582
    %v5623 = vpack.c.b16 %v4587, %v4583
    %v5624 = vpack.c.b16 %v4592, %v4588
    %v5625 = vpack.c.b16 %v4593, %v4589
    %v5626 = vpack.c.b16 %v4594, %v4590
    %v5627 = vpack.c.b16 %v4595, %v4591
    %v5628 = vpack.c.b16 %v4600, %v4596
    %v5629 = vpack.c.b16 %v4601, %v4597
    %v5630 = vpack.c.b16 %v4602, %v4598
    %v5631 = vpack.c.b16 %v4603, %v4599
    %v5632 = vpack.c.b16 %v4608, %v4604
    %v5633 = vpack.c.b16 %v4609, %v4605
    %v5634 = vpack.c.b16 %v4610, %v4606
    %v5635 = vpack.c.b16 %v4611, %v4607
    %6660 = vmatprep.subr.bf16.mxu0 %v4613
    %6661 = vmatpush1.bf16.msra.mxu0 %v4612
    %6662 = vmatprep.subr.bf16.mxu0 %v4617
    %6663 = vmatpush1.bf16.msra.mxu0 %v4616
    %6664 = vmatprep.subr.bf16.mxu0 %v4621
    %6665 = vmatpush1.bf16.msra.mxu0 %v4620
    %6666 = vmatprep.subr.bf16.mxu0 %v4625
    %6667 = vmatpush1.bf16.msra.mxu0 %v4624
    %6668 = vmatprep.subr.bf16.mxu0 %v4629
    %6669 = vmatpush1.bf16.msra.mxu0 %v4628
    %6670 = vmatprep.subr.bf16.mxu0 %v4633
    %6671 = vmatpush1.bf16.msra.mxu0 %v4632
    %6672 = vmatprep.subr.bf16.mxu0 %v4637
    %6673 = vmatpush1.bf16.msra.mxu0 %v4636
    %6674 = vmatprep.subr.bf16.mxu0 %v4641
    %6675 = vmatpush1.bf16.msra.mxu0 %v4640
    %6676 = vmatprep.subr.bf16.mxu0 %v4645
    %6677 = vmatpush1.bf16.msra.mxu0 %v4644
    %6678 = vmatprep.subr.bf16.mxu0 %v4649
    %6679 = vmatpush1.bf16.msra.mxu0 %v4648
    %6680 = vmatprep.subr.bf16.mxu0 %v4653
    %6681 = vmatpush1.bf16.msra.mxu0 %v4652
    %6682 = vmatprep.subr.bf16.mxu0 %v4657
    %6683 = vmatpush1.bf16.msra.mxu0 %v4656
    %6684 = vmatprep.subr.bf16.mxu0 %v4661
    %6685 = vmatpush1.bf16.msra.mxu0 %v4660
    %6686 = vmatprep.subr.bf16.mxu0 %v4665
    %6687 = vmatpush1.bf16.msra.mxu0 %v4664
    %6688 = vmatprep.subr.bf16.mxu0 %v4669
    %6689 = vmatpush1.bf16.msra.mxu0 %v4668
    %6690 = vmatprep.subr.bf16.mxu0 %v4673
    %6691 = vmatpush1.bf16.msra.mxu0 %v4672
    %6692 = vmatprep.mubr.bf16.mxu0 %v1477
    %6693 = vmatmul.mubr.bf16.gmra.mrb[0].mxu0 %v1476
    %v6694 = vpop.f32.mrb[0].mxu0
    %v6695 = vadd.f32 %v1411, %v6694
    %v6696 = vpop.f32.mrb[0].mxu0
    %v6697 = vadd.f32 %v1415, %v6696
    %v6698 = vpop.f32.mrb[0].mxu0
    %v6699 = vpop.f32.mrb[0].mxu0
    %6700 = vdwg.mxu0
    %6701 = vmatprep.subr.bf16.mxu0 %v4677
    %6702 = vmatpush1.bf16.msra.mxu0 %v4676
    %6703 = vmatprep.subr.bf16.mxu0 %v4681
    %6704 = vmatpush1.bf16.msra.mxu0 %v4680
    %6705 = vmatprep.subr.bf16.mxu0 %v4685
    %6706 = vmatpush1.bf16.msra.mxu0 %v4684
    %6707 = vmatprep.subr.bf16.mxu0 %v4689
    %6708 = vmatpush1.bf16.msra.mxu0 %v4688
    %6709 = vmatprep.subr.bf16.mxu0 %v4693
    %6710 = vmatpush1.bf16.msra.mxu0 %v4692
    %6711 = vmatprep.subr.bf16.mxu0 %v4697
    %6712 = vmatpush1.bf16.msra.mxu0 %v4696
    %6713 = vmatprep.subr.bf16.mxu0 %v4701
    %6714 = vmatpush1.bf16.msra.mxu0 %v4700
    %6715 = vmatprep.subr.bf16.mxu0 %v4705
    %6716 = vmatpush1.bf16.msra.mxu0 %v4704
    %6717 = vmatprep.subr.bf16.mxu0 %v4709
    %6718 = vmatpush1.bf16.msra.mxu0 %v4708
    %6719 = vmatprep.subr.bf16.mxu0 %v4713
    %6720 = vmatpush1.bf16.msra.mxu0 %v4712
    %6721 = vmatprep.subr.bf16.mxu0 %v4717
    %6722 = vmatpush1.bf16.msra.mxu0 %v4716
    %6723 = vmatprep.subr.bf16.mxu0 %v4721
    %6724 = vmatpush1.bf16.msra.mxu0 %v4720
    %6725 = vmatprep.subr.bf16.mxu0 %v4725
    %6726 = vmatpush1.bf16.msra.mxu0 %v4724
    %6727 = vmatprep.subr.bf16.mxu0 %v4729
    %6728 = vmatpush1.bf16.msra.mxu0 %v4728
    %6729 = vmatprep.subr.bf16.mxu0 %v4733
    %6730 = vmatpush1.bf16.msra.mxu0 %v4732
    %6731 = vmatprep.subr.bf16.mxu0 %v4737
    %6732 = vmatpush1.bf16.msra.mxu0 %v4736
    %6733 = vmatprep.mubr.bf16.mxu0 %v1479
    %6734 = vmatmul.mubr.bf16.gmra.mrb[0].mxu0 %v1478
    %v6735 = vpop.f32.mrb[0].mxu0
    %v6736 = vadd.f32 %v6695, %v6735
    %v6737 = vpop.f32.mrb[0].mxu0
    %v6738 = vadd.f32 %v6697, %v6737
    %v6739 = vpop.f32.mrb[0].mxu0
    %v6740 = vpop.f32.mrb[0].mxu0
    %6741 = vdwg.mxu0
    %6742 = vmatprep.subr.bf16.mxu0 %v4741
    %6743 = vmatpush1.bf16.msra.mxu0 %v4740
    %6744 = vmatprep.subr.bf16.mxu0 %v4745
    %6745 = vmatpush1.bf16.msra.mxu0 %v4744
    %6746 = vmatprep.subr.bf16.mxu0 %v4749
    %6747 = vmatpush1.bf16.msra.mxu0 %v4748
    %6748 = vmatprep.subr.bf16.mxu0 %v4753
    %6749 = vmatpush1.bf16.msra.mxu0 %v4752
    %6750 = vmatprep.subr.bf16.mxu0 %v4757
    %6751 = vmatpush1.bf16.msra.mxu0 %v4756
    %6752 = vmatprep.subr.bf16.mxu0 %v4761
    %6753 = vmatpush1.bf16.msra.mxu0 %v4760
    %6754 = vmatprep.subr.bf16.mxu0 %v4765
    %6755 = vmatpush1.bf16.msra.mxu0 %v4764
    %6756 = vmatprep.subr.bf16.mxu0 %v4769
    %6757 = vmatpush1.bf16.msra.mxu0 %v4768
    %6758 = vmatprep.subr.bf16.mxu0 %v4773
    %6759 = vmatpush1.bf16.msra.mxu0 %v4772
    %6760 = vmatprep.subr.bf16.mxu0 %v4777
    %6761 = vmatpush1.bf16.msra.mxu0 %v4776
    %6762 = vmatprep.subr.bf16.mxu0 %v4781
    %6763 = vmatpush1.bf16.msra.mxu0 %v4780
    %6764 = vmatprep.subr.bf16.mxu0 %v4785
    %6765 = vmatpush1.bf16.msra.mxu0 %v4784
    %6766 = vmatprep.subr.bf16.mxu0 %v4789
    %6767 = vmatpush1.bf16.msra.mxu0 %v4788
    %6768 = vmatprep.subr.bf16.mxu0 %v4793
    %6769 = vmatpush1.bf16.msra.mxu0 %v4792
    %6770 = vmatprep.subr.bf16.mxu0 %v4797
    %6771 = vmatpush1.bf16.msra.mxu0 %v4796
    %6772 = vmatprep.subr.bf16.mxu0 %v4801
    %6773 = vmatpush1.bf16.msra.mxu0 %v4800
    %6774 = vmatprep.mubr.bf16.mxu0 %v1481
    %6775 = vmatmul.mubr.bf16.gmra.mrb[0].mxu0 %v1480
    %v6776 = vpop.f32.mrb[0].mxu0
    %v6777 = vadd.f32 %v6736, %v6776
    %v6778 = vpop.f32.mrb[0].mxu0
    %v6779 = vadd.f32 %v6738, %v6778
    %v6780 = vpop.f32.mrb[0].mxu0
    %v6781 = vpop.f32.mrb[0].mxu0
    %6782 = vdwg.mxu0
    %6783 = vmatprep.subr.bf16.mxu0 %v4805
    %6784 = vmatpush1.bf16.msra.mxu0 %v4804
    %6785 = vmatprep.subr.bf16.mxu0 %v4809
    %6786 = vmatpush1.bf16.msra.mxu0 %v4808
    %6787 = vmatprep.subr.bf16.mxu0 %v4813
    %6788 = vmatpush1.bf16.msra.mxu0 %v4812
    %6789 = vmatprep.subr.bf16.mxu0 %v4817
    %6790 = vmatpush1.bf16.msra.mxu0 %v4816
    %6791 = vmatprep.subr.bf16.mxu0 %v4821
    %6792 = vmatpush1.bf16.msra.mxu0 %v4820
    %6793 = vmatprep.subr.bf16.mxu0 %v4825
    %6794 = vmatpush1.bf16.msra.mxu0 %v4824
    %6795 = vmatprep.subr.bf16.mxu0 %v4829
    %6796 = vmatpush1.bf16.msra.mxu0 %v4828
    %6797 = vmatprep.subr.bf16.mxu0 %v4833
    %6798 = vmatpush1.bf16.msra.mxu0 %v4832
    %6799 = vmatprep.subr.bf16.mxu0 %v4837
    %6800 = vmatpush1.bf16.msra.mxu0 %v4836
    %6801 = vmatprep.subr.bf16.mxu0 %v4841
    %6802 = vmatpush1.bf16.msra.mxu0 %v4840
    %6803 = vmatprep.subr.bf16.mxu0 %v4845
    %6804 = vmatpush1.bf16.msra.mxu0 %v4844
    %6805 = vmatprep.subr.bf16.mxu0 %v4849
    %6806 = vmatpush1.bf16.msra.mxu0 %v4848
    %6807 = vmatprep.subr.bf16.mxu0 %v4853
    %6808 = vmatpush1.bf16.msra.mxu0 %v4852
    %6809 = vmatprep.subr.bf16.mxu0 %v4857
    %6810 = vmatpush1.bf16.msra.mxu0 %v4856
    %6811 = vmatprep.subr.bf16.mxu0 %v4861
    %6812 = vmatpush1.bf16.msra.mxu0 %v4860
    %6813 = vmatprep.subr.bf16.mxu0 %v4865
    %6814 = vmatpush1.bf16.msra.mxu0 %v4864
    %6815 = vmatprep.mubr.bf16.mxu0 %v1483
    %6816 = vmatmul.mubr.bf16.gmra.mrb[0].mxu0 %v1482
    %v6817 = vpop.f32.mrb[0].mxu0
    %v6818 = vadd.f32 %v6777, %v6817
    %v6819 = vpop.f32.mrb[0].mxu0
    %v6820 = vadd.f32 %v6779, %v6819
    %v6821 = vpop.f32.mrb[0].mxu0
    %v6822 = vpop.f32.mrb[0].mxu0
    %6823 = vdwg.mxu0
    %6824 = vmatprep.subr.bf16.mxu0 %v4869
    %6825 = vmatpush1.bf16.msra.mxu0 %v4868
    %6826 = vmatprep.subr.bf16.mxu0 %v4873
    %6827 = vmatpush1.bf16.msra.mxu0 %v4872
    %6828 = vmatprep.subr.bf16.mxu0 %v4877
    %6829 = vmatpush1.bf16.msra.mxu0 %v4876
    %6830 = vmatprep.subr.bf16.mxu0 %v4881
    %6831 = vmatpush1.bf16.msra.mxu0 %v4880
    %6832 = vmatprep.subr.bf16.mxu0 %v4885
    %6833 = vmatpush1.bf16.msra.mxu0 %v4884
    %6834 = vmatprep.subr.bf16.mxu0 %v4889
    %6835 = vmatpush1.bf16.msra.mxu0 %v4888
    %6836 = vmatprep.subr.bf16.mxu0 %v4893
    %6837 = vmatpush1.bf16.msra.mxu0 %v4892
    %6838 = vmatprep.subr.bf16.mxu0 %v4897
    %6839 = vmatpush1.bf16.msra.mxu0 %v4896
    %6840 = vmatprep.subr.bf16.mxu0 %v4901
    %6841 = vmatpush1.bf16.msra.mxu0 %v4900
    %6842 = vmatprep.subr.bf16.mxu0 %v4905
    %6843 = vmatpush1.bf16.msra.mxu0 %v4904
    %6844 = vmatprep.subr.bf16.mxu0 %v4909
    %6845 = vmatpush1.bf16.msra.mxu0 %v4908
    %6846 = vmatprep.subr.bf16.mxu0 %v4913
    %6847 = vmatpush1.bf16.msra.mxu0 %v4912
    %6848 = vmatprep.subr.bf16.mxu0 %v4917
    %6849 = vmatpush1.bf16.msra.mxu0 %v4916
    %6850 = vmatprep.subr.bf16.mxu0 %v4921
    %6851 = vmatpush1.bf16.msra.mxu0 %v4920
    %6852 = vmatprep.subr.bf16.mxu0 %v4925
    %6853 = vmatpush1.bf16.msra.mxu0 %v4924
    %6854 = vmatprep.subr.bf16.mxu0 %v4929
    %6855 = vmatpush1.bf16.msra.mxu0 %v4928
    %6856 = vmatprep.mubr.bf16.mxu0 %v1485
    %6857 = vmatmul.mubr.bf16.gmra.mrb[0].mxu0 %v1484
    %v6858 = vpop.f32.mrb[0].mxu0
    %v6859 = vadd.f32 %v6818, %v6858
    %v6860 = vpop.f32.mrb[0].mxu0
    %v6861 = vadd.f32 %v6820, %v6860
    %v6862 = vpop.f32.mrb[0].mxu0
    %v6863 = vpop.f32.mrb[0].mxu0
    %6864 = vdwg.mxu0
    %6865 = vmatprep.subr.bf16.mxu0 %v4933
    %6866 = vmatpush1.bf16.msra.mxu0 %v4932
    %6867 = vmatprep.subr.bf16.mxu0 %v4937
    %6868 = vmatpush1.bf16.msra.mxu0 %v4936
    %6869 = vmatprep.subr.bf16.mxu0 %v4941
    %6870 = vmatpush1.bf16.msra.mxu0 %v4940
    %6871 = vmatprep.subr.bf16.mxu0 %v4945
    %6872 = vmatpush1.bf16.msra.mxu0 %v4944
    %6873 = vmatprep.subr.bf16.mxu0 %v4949
    %6874 = vmatpush1.bf16.msra.mxu0 %v4948
    %6875 = vmatprep.subr.bf16.mxu0 %v4953
    %6876 = vmatpush1.bf16.msra.mxu0 %v4952
    %6877 = vmatprep.subr.bf16.mxu0 %v4957
    %6878 = vmatpush1.bf16.msra.mxu0 %v4956
    %6879 = vmatprep.subr.bf16.mxu0 %v4961
    %6880 = vmatpush1.bf16.msra.mxu0 %v4960
    %6881 = vmatprep.subr.bf16.mxu0 %v4965
    %6882 = vmatpush1.bf16.msra.mxu0 %v4964
    %6883 = vmatprep.subr.bf16.mxu0 %v4969
    %6884 = vmatpush1.bf16.msra.mxu0 %v4968
    %6885 = vmatprep.subr.bf16.mxu0 %v4973
    %6886 = vmatpush1.bf16.msra.mxu0 %v4972
    %6887 = vmatprep.subr.bf16.mxu0 %v4977
    %6888 = vmatpush1.bf16.msra.mxu0 %v4976
    %6889 = vmatprep.subr.bf16.mxu0 %v4981
    %6890 = vmatpush1.bf16.msra.mxu0 %v4980
    %6891 = vmatprep.subr.bf16.mxu0 %v4985
    %6892 = vmatpush1.bf16.msra.mxu0 %v4984
    %6893 = vmatprep.subr.bf16.mxu0 %v4989
    %6894 = vmatpush1.bf16.msra.mxu0 %v4988
    %6895 = vmatprep.subr.bf16.mxu0 %v4993
    %6896 = vmatpush1.bf16.msra.mxu0 %v4992
    %6897 = vmatprep.mubr.bf16.mxu0 %v1487
    %6898 = vmatmul.mubr.bf16.gmra.mrb[0].mxu0 %v1486
    %v6899 = vpop.f32.mrb[0].mxu0
    %v6900 = vadd.f32 %v6859, %v6899
    %v6901 = vpop.f32.mrb[0].mxu0
    %v6902 = vadd.f32 %v6861, %v6901
    %v6903 = vpop.f32.mrb[0].mxu0
    %v6904 = vpop.f32.mrb[0].mxu0
    %6905 = vdwg.mxu0
    %6906 = vmatprep.subr.bf16.mxu0 %v4997
    %6907 = vmatpush1.bf16.msra.mxu0 %v4996
    %6908 = vmatprep.subr.bf16.mxu0 %v5001
    %6909 = vmatpush1.bf16.msra.mxu0 %v5000
    %6910 = vmatprep.subr.bf16.mxu0 %v5005
    %6911 = vmatpush1.bf16.msra.mxu0 %v5004
    %6912 = vmatprep.subr.bf16.mxu0 %v5009
    %6913 = vmatpush1.bf16.msra.mxu0 %v5008
    %6914 = vmatprep.subr.bf16.mxu0 %v5013
    %6915 = vmatpush1.bf16.msra.mxu0 %v5012
    %6916 = vmatprep.subr.bf16.mxu0 %v5017
    %6917 = vmatpush1.bf16.msra.mxu0 %v5016
    %6918 = vmatprep.subr.bf16.mxu0 %v5021
    %6919 = vmatpush1.bf16.msra.mxu0 %v5020
    %6920 = vmatprep.subr.bf16.mxu0 %v5025
    %6921 = vmatpush1.bf16.msra.mxu0 %v5024
    %6922 = vmatprep.subr.bf16.mxu0 %v5029
    %6923 = vmatpush1.bf16.msra.mxu0 %v5028
    %6924 = vmatprep.subr.bf16.mxu0 %v5033
    %6925 = vmatpush1.bf16.msra.mxu0 %v5032
    %6926 = vmatprep.subr.bf16.mxu0 %v5037
    %6927 = vmatpush1.bf16.msra.mxu0 %v5036
    %6928 = vmatprep.subr.bf16.mxu0 %v5041
    %6929 = vmatpush1.bf16.msra.mxu0 %v5040
    %6930 = vmatprep.subr.bf16.mxu0 %v5045
    %6931 = vmatpush1.bf16.msra.mxu0 %v5044
    %6932 = vmatprep.subr.bf16.mxu0 %v5049
    %6933 = vmatpush1.bf16.msra.mxu0 %v5048
    %6934 = vmatprep.subr.bf16.mxu0 %v5053
    %6935 = vmatpush1.bf16.msra.mxu0 %v5052
    %6936 = vmatprep.subr.bf16.mxu0 %v5057
    %6937 = vmatpush1.bf16.msra.mxu0 %v5056
    %6938 = vmatprep.mubr.bf16.mxu0 %v1489
    %6939 = vmatmul.mubr.bf16.gmra.mrb[0].mxu0 %v1488
    %v6940 = vpop.f32.mrb[0].mxu0
    %v6941 = vadd.f32 %v6900, %v6940
    %v6942 = vpop.f32.mrb[0].mxu0
    %v6943 = vadd.f32 %v6902, %v6942
    %v6944 = vpop.f32.mrb[0].mxu0
    %v6945 = vpop.f32.mrb[0].mxu0
    %6946 = vdwg.mxu0
    %6947 = vmatprep.subr.bf16.mxu0 %v5061
    %6948 = vmatpush1.bf16.msra.mxu0 %v5060
    %6949 = vmatprep.subr.bf16.mxu0 %v5065
    %6950 = vmatpush1.bf16.msra.mxu0 %v5064
    %6951 = vmatprep.subr.bf16.mxu0 %v5069
    %6952 = vmatpush1.bf16.msra.mxu0 %v5068
    %6953 = vmatprep.subr.bf16.mxu0 %v5073
    %6954 = vmatpush1.bf16.msra.mxu0 %v5072
    %6955 = vmatprep.subr.bf16.mxu0 %v5077
    %6956 = vmatpush1.bf16.msra.mxu0 %v5076
    %6957 = vmatprep.subr.bf16.mxu0 %v5081
    %6958 = vmatpush1.bf16.msra.mxu0 %v5080
    %6959 = vmatprep.subr.bf16.mxu0 %v5085
    %6960 = vmatpush1.bf16.msra.mxu0 %v5084
    %6961 = vmatprep.subr.bf16.mxu0 %v5089
    %6962 = vmatpush1.bf16.msra.mxu0 %v5088
    %6963 = vmatprep.subr.bf16.mxu0 %v5093
    %6964 = vmatpush1.bf16.msra.mxu0 %v5092
    %6965 = vmatprep.subr.bf16.mxu0 %v5097
    %6966 = vmatpush1.bf16.msra.mxu0 %v5096
    %6967 = vmatprep.subr.bf16.mxu0 %v5101
    %6968 = vmatpush1.bf16.msra.mxu0 %v5100
    %6969 = vmatprep.subr.bf16.mxu0 %v5105
    %6970 = vmatpush1.bf16.msra.mxu0 %v5104
    %6971 = vmatprep.subr.bf16.mxu0 %v5109
    %6972 = vmatpush1.bf16.msra.mxu0 %v5108
    %6973 = vmatprep.subr.bf16.mxu0 %v5113
    %6974 = vmatpush1.bf16.msra.mxu0 %v5112
    %6975 = vmatprep.subr.bf16.mxu0 %v5117
    %6976 = vmatpush1.bf16.msra.mxu0 %v5116
    %6977 = vmatprep.subr.bf16.mxu0 %v5121
    %6978 = vmatpush1.bf16.msra.mxu0 %v5120
    %6979 = vmatprep.mubr.bf16.mxu0 %v1491
    %6980 = vmatmul.mubr.bf16.gmra.mrb[0].mxu0 %v1490
    %v6981 = vpop.f32.mrb[0].mxu0
    %v6982 = vadd.f32 %v6941, %v6981
    %v6983 = vpop.f32.mrb[0].mxu0
    %v6984 = vadd.f32 %v6943, %v6983
    %v6985 = vpop.f32.mrb[0].mxu0
    %v6986 = vpop.f32.mrb[0].mxu0
    %6987 = vdwg.mxu0
    %6988 = vmatprep.subr.bf16.mxu0 %v5125
    %6989 = vmatpush1.bf16.msra.mxu0 %v5124
    %6990 = vmatprep.subr.bf16.mxu0 %v5129
    %6991 = vmatpush1.bf16.msra.mxu0 %v5128
    %6992 = vmatprep.subr.bf16.mxu0 %v5133
    %6993 = vmatpush1.bf16.msra.mxu0 %v5132
    %6994 = vmatprep.subr.bf16.mxu0 %v5137
    %6995 = vmatpush1.bf16.msra.mxu0 %v5136
    %6996 = vmatprep.subr.bf16.mxu0 %v5141
    %6997 = vmatpush1.bf16.msra.mxu0 %v5140
    %6998 = vmatprep.subr.bf16.mxu0 %v5145
    %6999 = vmatpush1.bf16.msra.mxu0 %v5144
    %7000 = vmatprep.subr.bf16.mxu0 %v5149
    %7001 = vmatpush1.bf16.msra.mxu0 %v5148
    %7002 = vmatprep.subr.bf16.mxu0 %v5153
    %7003 = vmatpush1.bf16.msra.mxu0 %v5152
    %7004 = vmatprep.subr.bf16.mxu0 %v5157
    %7005 = vmatpush1.bf16.msra.mxu0 %v5156
    %7006 = vmatprep.subr.bf16.mxu0 %v5161
    %7007 = vmatpush1.bf16.msra.mxu0 %v5160
    %7008 = vmatprep.subr.bf16.mxu0 %v5165
    %7009 = vmatpush1.bf16.msra.mxu0 %v5164
    %7010 = vmatprep.subr.bf16.mxu0 %v5169
    %7011 = vmatpush1.bf16.msra.mxu0 %v5168
    %7012 = vmatprep.subr.bf16.mxu0 %v5173
    %7013 = vmatpush1.bf16.msra.mxu0 %v5172
    %7014 = vmatprep.subr.bf16.mxu0 %v5177
    %7015 = vmatpush1.bf16.msra.mxu0 %v5176
    %7016 = vmatprep.subr.bf16.mxu0 %v5181
    %7017 = vmatpush1.bf16.msra.mxu0 %v5180
    %7018 = vmatprep.subr.bf16.mxu0 %v5185
    %7019 = vmatpush1.bf16.msra.mxu0 %v5184
    %7020 = vmatprep.mubr.bf16.mxu0 %v1493
    %7021 = vmatmul.mubr.bf16.gmra.mrb[0].mxu0 %v1492
    %v7022 = vpop.f32.mrb[0].mxu0
    %v7023 = vadd.f32 %v6982, %v7022
    %v7024 = vpop.f32.mrb[0].mxu0
    %v7025 = vadd.f32 %v6984, %v7024
    %v7026 = vpop.f32.mrb[0].mxu0
    %v7027 = vpop.f32.mrb[0].mxu0
    %7028 = vdwg.mxu0
    %7029 = vmatprep.subr.bf16.mxu0 %v5189
    %7030 = vmatpush1.bf16.msra.mxu0 %v5188
    %7031 = vmatprep.subr.bf16.mxu0 %v5193
    %7032 = vmatpush1.bf16.msra.mxu0 %v5192
    %7033 = vmatprep.subr.bf16.mxu0 %v5197
    %7034 = vmatpush1.bf16.msra.mxu0 %v5196
    %7035 = vmatprep.subr.bf16.mxu0 %v5201
    %7036 = vmatpush1.bf16.msra.mxu0 %v5200
    %7037 = vmatprep.subr.bf16.mxu0 %v5205
    %7038 = vmatpush1.bf16.msra.mxu0 %v5204
    %7039 = vmatprep.subr.bf16.mxu0 %v5209
    %7040 = vmatpush1.bf16.msra.mxu0 %v5208
    %7041 = vmatprep.subr.bf16.mxu0 %v5213
    %7042 = vmatpush1.bf16.msra.mxu0 %v5212
    %7043 = vmatprep.subr.bf16.mxu0 %v5217
    %7044 = vmatpush1.bf16.msra.mxu0 %v5216
    %7045 = vmatprep.subr.bf16.mxu0 %v5221
    %7046 = vmatpush1.bf16.msra.mxu0 %v5220
    %7047 = vmatprep.subr.bf16.mxu0 %v5225
    %7048 = vmatpush1.bf16.msra.mxu0 %v5224
    %7049 = vmatprep.subr.bf16.mxu0 %v5229
    %7050 = vmatpush1.bf16.msra.mxu0 %v5228
    %7051 = vmatprep.subr.bf16.mxu0 %v5233
    %7052 = vmatpush1.bf16.msra.mxu0 %v5232
    %7053 = vmatprep.subr.bf16.mxu0 %v5237
    %7054 = vmatpush1.bf16.msra.mxu0 %v5236
    %7055 = vmatprep.subr.bf16.mxu0 %v5241
    %7056 = vmatpush1.bf16.msra.mxu0 %v5240
    %7057 = vmatprep.subr.bf16.mxu0 %v5245
    %7058 = vmatpush1.bf16.msra.mxu0 %v5244
    %7059 = vmatprep.subr.bf16.mxu0 %v5249
    %7060 = vmatpush1.bf16.msra.mxu0 %v5248
    %7061 = vmatprep.mubr.bf16.mxu0 %v1495
    %7062 = vmatmul.mubr.bf16.gmra.mrb[0].mxu0 %v1494
    %v7063 = vpop.f32.mrb[0].mxu0
    %v7064 = vadd.f32 %v7023, %v7063
    %v7065 = vpop.f32.mrb[0].mxu0
    %v7066 = vadd.f32 %v7025, %v7065
    %v7067 = vpop.f32.mrb[0].mxu0
    %v7068 = vpop.f32.mrb[0].mxu0
    %7069 = vdwg.mxu0
    %7070 = vmatprep.subr.bf16.mxu0 %v5253
    %7071 = vmatpush1.bf16.msra.mxu0 %v5252
    %7072 = vmatprep.subr.bf16.mxu0 %v5257
    %7073 = vmatpush1.bf16.msra.mxu0 %v5256
    %7074 = vmatprep.subr.bf16.mxu0 %v5261
    %7075 = vmatpush1.bf16.msra.mxu0 %v5260
    %7076 = vmatprep.subr.bf16.mxu0 %v5265
    %7077 = vmatpush1.bf16.msra.mxu0 %v5264
    %7078 = vmatprep.subr.bf16.mxu0 %v5269
    %7079 = vmatpush1.bf16.msra.mxu0 %v5268
    %7080 = vmatprep.subr.bf16.mxu0 %v5273
    %7081 = vmatpush1.bf16.msra.mxu0 %v5272
    %7082 = vmatprep.subr.bf16.mxu0 %v5277
    %7083 = vmatpush1.bf16.msra.mxu0 %v5276
    %7084 = vmatprep.subr.bf16.mxu0 %v5281
    %7085 = vmatpush1.bf16.msra.mxu0 %v5280
    %7086 = vmatprep.subr.bf16.mxu0 %v5285
    %7087 = vmatpush1.bf16.msra.mxu0 %v5284
    %7088 = vmatprep.subr.bf16.mxu0 %v5289
    %7089 = vmatpush1.bf16.msra.mxu0 %v5288
    %7090 = vmatprep.subr.bf16.mxu0 %v5293
    %7091 = vmatpush1.bf16.msra.mxu0 %v5292
    %7092 = vmatprep.subr.bf16.mxu0 %v5297
    %7093 = vmatpush1.bf16.msra.mxu0 %v5296
    %7094 = vmatprep.subr.bf16.mxu0 %v5301
    %7095 = vmatpush1.bf16.msra.mxu0 %v5300
    %7096 = vmatprep.subr.bf16.mxu0 %v5305
    %7097 = vmatpush1.bf16.msra.mxu0 %v5304
    %7098 = vmatprep.subr.bf16.mxu0 %v5309
    %7099 = vmatpush1.bf16.msra.mxu0 %v5308
    %7100 = vmatprep.subr.bf16.mxu0 %v5313
    %7101 = vmatpush1.bf16.msra.mxu0 %v5312
    %7102 = vmatprep.mubr.bf16.mxu0 %v1497
    %7103 = vmatmul.mubr.bf16.gmra.mrb[0].mxu0 %v1496
    %v7104 = vpop.f32.mrb[0].mxu0
    %v7105 = vadd.f32 %v7064, %v7104
    %v7106 = vpop.f32.mrb[0].mxu0
    %v7107 = vadd.f32 %v7066, %v7106
    %v7108 = vpop.f32.mrb[0].mxu0
    %v7109 = vpop.f32.mrb[0].mxu0
    %7110 = vdwg.mxu0
    %7111 = vmatprep.subr.bf16.mxu0 %v5317
    %7112 = vmatpush1.bf16.msra.mxu0 %v5316
    %7113 = vmatprep.subr.bf16.mxu0 %v5321
    %7114 = vmatpush1.bf16.msra.mxu0 %v5320
    %7115 = vmatprep.subr.bf16.mxu0 %v5325
    %7116 = vmatpush1.bf16.msra.mxu0 %v5324
    %7117 = vmatprep.subr.bf16.mxu0 %v5329
    %7118 = vmatpush1.bf16.msra.mxu0 %v5328
    %7119 = vmatprep.subr.bf16.mxu0 %v5333
    %7120 = vmatpush1.bf16.msra.mxu0 %v5332
    %7121 = vmatprep.subr.bf16.mxu0 %v5337
    %7122 = vmatpush1.bf16.msra.mxu0 %v5336
    %7123 = vmatprep.subr.bf16.mxu0 %v5341
    %7124 = vmatpush1.bf16.msra.mxu0 %v5340
    %7125 = vmatprep.subr.bf16.mxu0 %v5345
    %7126 = vmatpush1.bf16.msra.mxu0 %v5344
    %7127 = vmatprep.subr.bf16.mxu0 %v5349
    %7128 = vmatpush1.bf16.msra.mxu0 %v5348
    %7129 = vmatprep.subr.bf16.mxu0 %v5353
    %7130 = vmatpush1.bf16.msra.mxu0 %v5352
    %7131 = vmatprep.subr.bf16.mxu0 %v5357
    %7132 = vmatpush1.bf16.msra.mxu0 %v5356
    %7133 = vmatprep.subr.bf16.mxu0 %v5361
    %7134 = vmatpush1.bf16.msra.mxu0 %v5360
    %7135 = vmatprep.subr.bf16.mxu0 %v5365
    %7136 = vmatpush1.bf16.msra.mxu0 %v5364
    %7137 = vmatprep.subr.bf16.mxu0 %v5369
    %7138 = vmatpush1.bf16.msra.mxu0 %v5368
    %7139 = vmatprep.subr.bf16.mxu0 %v5373
    %7140 = vmatpush1.bf16.msra.mxu0 %v5372
    %7141 = vmatprep.subr.bf16.mxu0 %v5377
    %7142 = vmatpush1.bf16.msra.mxu0 %v5376
    %7143 = vmatprep.mubr.bf16.mxu0 %v1499
    %7144 = vmatmul.mubr.bf16.gmra.mrb[0].mxu0 %v1498
    %v7145 = vpop.f32.mrb[0].mxu0
    %v7146 = vadd.f32 %v7105, %v7145
    %v7147 = vpop.f32.mrb[0].mxu0
    %v7148 = vadd.f32 %v7107, %v7147
    %v7149 = vpop.f32.mrb[0].mxu0
    %v7150 = vpop.f32.mrb[0].mxu0
    %7151 = vdwg.mxu0
    %7152 = vmatprep.subr.bf16.mxu0 %v5381
    %7153 = vmatpush1.bf16.msra.mxu0 %v5380
    %7154 = vmatprep.subr.bf16.mxu0 %v5385
    %7155 = vmatpush1.bf16.msra.mxu0 %v5384
    %7156 = vmatprep.subr.bf16.mxu0 %v5389
    %7157 = vmatpush1.bf16.msra.mxu0 %v5388
    %7158 = vmatprep.subr.bf16.mxu0 %v5393
    %7159 = vmatpush1.bf16.msra.mxu0 %v5392
    %7160 = vmatprep.subr.bf16.mxu0 %v5397
    %7161 = vmatpush1.bf16.msra.mxu0 %v5396
    %7162 = vmatprep.subr.bf16.mxu0 %v5401
    %7163 = vmatpush1.bf16.msra.mxu0 %v5400
    %7164 = vmatprep.subr.bf16.mxu0 %v5405
    %7165 = vmatpush1.bf16.msra.mxu0 %v5404
    %7166 = vmatprep.subr.bf16.mxu0 %v5409
    %7167 = vmatpush1.bf16.msra.mxu0 %v5408
    %7168 = vmatprep.subr.bf16.mxu0 %v5413
    %7169 = vmatpush1.bf16.msra.mxu0 %v5412
    %7170 = vmatprep.subr.bf16.mxu0 %v5417
    %7171 = vmatpush1.bf16.msra.mxu0 %v5416
    %7172 = vmatprep.subr.bf16.mxu0 %v5421
    %7173 = vmatpush1.bf16.msra.mxu0 %v5420
    %7174 = vmatprep.subr.bf16.mxu0 %v5425
    %7175 = vmatpush1.bf16.msra.mxu0 %v5424
    %7176 = vmatprep.subr.bf16.mxu0 %v5429
    %7177 = vmatpush1.bf16.msra.mxu0 %v5428
    %7178 = vmatprep.subr.bf16.mxu0 %v5433
    %7179 = vmatpush1.bf16.msra.mxu0 %v5432
    %7180 = vmatprep.subr.bf16.mxu0 %v5437
    %7181 = vmatpush1.bf16.msra.mxu0 %v5436
    %7182 = vmatprep.subr.bf16.mxu0 %v5441
    %7183 = vmatpush1.bf16.msra.mxu0 %v5440
    %7184 = vmatprep.mubr.bf16.mxu0 %v1501
    %7185 = vmatmul.mubr.bf16.gmra.mrb[0].mxu0 %v1500
    %v7186 = vpop.f32.mrb[0].mxu0
    %v7187 = vadd.f32 %v7146, %v7186
    %v7188 = vpop.f32.mrb[0].mxu0
    %v7189 = vadd.f32 %v7148, %v7188
    %v7190 = vpop.f32.mrb[0].mxu0
    %v7191 = vpop.f32.mrb[0].mxu0
    %7192 = vdwg.mxu0
    %7193 = vmatprep.subr.bf16.mxu0 %v5445
    %7194 = vmatpush1.bf16.msra.mxu0 %v5444
    %7195 = vmatprep.subr.bf16.mxu0 %v5449
    %7196 = vmatpush1.bf16.msra.mxu0 %v5448
    %7197 = vmatprep.subr.bf16.mxu0 %v5453
    %7198 = vmatpush1.bf16.msra.mxu0 %v5452
    %7199 = vmatprep.subr.bf16.mxu0 %v5457
    %7200 = vmatpush1.bf16.msra.mxu0 %v5456
    %7201 = vmatprep.subr.bf16.mxu0 %v5461
    %7202 = vmatpush1.bf16.msra.mxu0 %v5460
    %7203 = vmatprep.subr.bf16.mxu0 %v5465
    %7204 = vmatpush1.bf16.msra.mxu0 %v5464
    %7205 = vmatprep.subr.bf16.mxu0 %v5469
    %7206 = vmatpush1.bf16.msra.mxu0 %v5468
    %7207 = vmatprep.subr.bf16.mxu0 %v5473
    %7208 = vmatpush1.bf16.msra.mxu0 %v5472
    %7209 = vmatprep.subr.bf16.mxu0 %v5477
    %7210 = vmatpush1.bf16.msra.mxu0 %v5476
    %7211 = vmatprep.subr.bf16.mxu0 %v5481
    %7212 = vmatpush1.bf16.msra.mxu0 %v5480
    %7213 = vmatprep.subr.bf16.mxu0 %v5485
    %7214 = vmatpush1.bf16.msra.mxu0 %v5484
    %7215 = vmatprep.subr.bf16.mxu0 %v5489
    %7216 = vmatpush1.bf16.msra.mxu0 %v5488
    %7217 = vmatprep.subr.bf16.mxu0 %v5493
    %7218 = vmatpush1.bf16.msra.mxu0 %v5492
    %7219 = vmatprep.subr.bf16.mxu0 %v5497
    %7220 = vmatpush1.bf16.msra.mxu0 %v5496
    %7221 = vmatprep.subr.bf16.mxu0 %v5501
    %7222 = vmatpush1.bf16.msra.mxu0 %v5500
    %7223 = vmatprep.subr.bf16.mxu0 %v5505
    %7224 = vmatpush1.bf16.msra.mxu0 %v5504
    %7225 = vmatprep.mubr.bf16.mxu0 %v1503
    %7226 = vmatmul.mubr.bf16.gmra.mrb[0].mxu0 %v1502
    %v7227 = vpop.f32.mrb[0].mxu0
    %v7228 = vadd.f32 %v7187, %v7227
    %v7229 = vpop.f32.mrb[0].mxu0
    %v7230 = vadd.f32 %v7189, %v7229
    %v7231 = vpop.f32.mrb[0].mxu0
    %v7232 = vpop.f32.mrb[0].mxu0
    %7233 = vdwg.mxu0
    %7234 = vmatprep.subr.bf16.mxu0 %v5509
    %7235 = vmatpush1.bf16.msra.mxu0 %v5508
    %7236 = vmatprep.subr.bf16.mxu0 %v5513
    %7237 = vmatpush1.bf16.msra.mxu0 %v5512
    %7238 = vmatprep.subr.bf16.mxu0 %v5517
    %7239 = vmatpush1.bf16.msra.mxu0 %v5516
    %7240 = vmatprep.subr.bf16.mxu0 %v5521
    %7241 = vmatpush1.bf16.msra.mxu0 %v5520
    %7242 = vmatprep.subr.bf16.mxu0 %v5525
    %7243 = vmatpush1.bf16.msra.mxu0 %v5524
    %7244 = vmatprep.subr.bf16.mxu0 %v5529
    %7245 = vmatpush1.bf16.msra.mxu0 %v5528
    %7246 = vmatprep.subr.bf16.mxu0 %v5533
    %7247 = vmatpush1.bf16.msra.mxu0 %v5532
    %7248 = vmatprep.subr.bf16.mxu0 %v5537
    %7249 = vmatpush1.bf16.msra.mxu0 %v5536
    %7250 = vmatprep.subr.bf16.mxu0 %v5541
    %7251 = vmatpush1.bf16.msra.mxu0 %v5540
    %7252 = vmatprep.subr.bf16.mxu0 %v5545
    %7253 = vmatpush1.bf16.msra.mxu0 %v5544
    %7254 = vmatprep.subr.bf16.mxu0 %v5549
    %7255 = vmatpush1.bf16.msra.mxu0 %v5548
    %7256 = vmatprep.subr.bf16.mxu0 %v5553
    %7257 = vmatpush1.bf16.msra.mxu0 %v5552
    %7258 = vmatprep.subr.bf16.mxu0 %v5557
    %7259 = vmatpush1.bf16.msra.mxu0 %v5556
    %7260 = vmatprep.subr.bf16.mxu0 %v5561
    %7261 = vmatpush1.bf16.msra.mxu0 %v5560
    %7262 = vmatprep.subr.bf16.mxu0 %v5565
    %7263 = vmatpush1.bf16.msra.mxu0 %v5564
    %7264 = vmatprep.subr.bf16.mxu0 %v5569
    %7265 = vmatpush1.bf16.msra.mxu0 %v5568
    %7266 = vmatprep.mubr.bf16.mxu0 %v1505
    %7267 = vmatmul.mubr.bf16.gmra.mrb[0].mxu0 %v1504
    %v7268 = vpop.f32.mrb[0].mxu0
    %v7269 = vadd.f32 %v7228, %v7268
    %v7270 = vpop.f32.mrb[0].mxu0
    %v7271 = vadd.f32 %v7230, %v7270
    %v7272 = vpop.f32.mrb[0].mxu0
    %v7273 = vpop.f32.mrb[0].mxu0
    %7274 = vdwg.mxu0
    %7275 = vmatprep.subr.bf16.mxu0 %v5573
    %7276 = vmatpush1.bf16.msra.mxu0 %v5572
    %7277 = vmatprep.subr.bf16.mxu0 %v5577
    %7278 = vmatpush1.bf16.msra.mxu0 %v5576
    %7279 = vmatprep.subr.bf16.mxu0 %v5581
    %7280 = vmatpush1.bf16.msra.mxu0 %v5580
    %7281 = vmatprep.subr.bf16.mxu0 %v5585
    %7282 = vmatpush1.bf16.msra.mxu0 %v5584
    %7283 = vmatprep.subr.bf16.mxu0 %v5589
    %7284 = vmatpush1.bf16.msra.mxu0 %v5588
    %7285 = vmatprep.subr.bf16.mxu0 %v5593
    %7286 = vmatpush1.bf16.msra.mxu0 %v5592
    %7287 = vmatprep.subr.bf16.mxu0 %v5597
    %7288 = vmatpush1.bf16.msra.mxu0 %v5596
    %7289 = vmatprep.subr.bf16.mxu0 %v5601
    %7290 = vmatpush1.bf16.msra.mxu0 %v5600
    %7291 = vmatprep.subr.bf16.mxu0 %v5605
    %7292 = vmatpush1.bf16.msra.mxu0 %v5604
    %7293 = vmatprep.subr.bf16.mxu0 %v5609
    %7294 = vmatpush1.bf16.msra.mxu0 %v5608
    %7295 = vmatprep.subr.bf16.mxu0 %v5613
    %7296 = vmatpush1.bf16.msra.mxu0 %v5612
    %7297 = vmatprep.subr.bf16.mxu0 %v5617
    %7298 = vmatpush1.bf16.msra.mxu0 %v5616
    %7299 = vmatprep.subr.bf16.mxu0 %v5621
    %7300 = vmatpush1.bf16.msra.mxu0 %v5620
    %7301 = vmatprep.subr.bf16.mxu0 %v5625
    %7302 = vmatpush1.bf16.msra.mxu0 %v5624
    %7303 = vmatprep.subr.bf16.mxu0 %v5629
    %7304 = vmatpush1.bf16.msra.mxu0 %v5628
    %7305 = vmatprep.subr.bf16.mxu0 %v5633
    %7306 = vmatpush1.bf16.msra.mxu0 %v5632
    %7307 = vmatprep.mubr.bf16.mxu0 %v1507
    %7308 = vmatmul.mubr.bf16.gmra.mrb[0].mxu0 %v1506
    %v7309 = vpop.f32.mrb[0].mxu0
    %v7310 = vadd.f32 %v7269, %v7309
    %v7311 = vpop.f32.mrb[0].mxu0
    %v7312 = vadd.f32 %v7271, %v7311
    %v7313 = vpop.f32.mrb[0].mxu0
    %v7314 = vpop.f32.mrb[0].mxu0
    %7315 = vdwg.mxu0
    %7316 = vmatprep.subr.bf16.mxu0 %v4615
    %7317 = vmatpush1.bf16.msra.mxu0 %v4614
    %7318 = vmatprep.subr.bf16.mxu0 %v4619
    %7319 = vmatpush1.bf16.msra.mxu0 %v4618
    %7320 = vmatprep.subr.bf16.mxu0 %v4623
    %7321 = vmatpush1.bf16.msra.mxu0 %v4622
    %7322 = vmatprep.subr.bf16.mxu0 %v4627
    %7323 = vmatpush1.bf16.msra.mxu0 %v4626
    %7324 = vmatprep.subr.bf16.mxu0 %v4631
    %7325 = vmatpush1.bf16.msra.mxu0 %v4630
    %7326 = vmatprep.subr.bf16.mxu0 %v4635
    %7327 = vmatpush1.bf16.msra.mxu0 %v4634
    %7328 = vmatprep.subr.bf16.mxu0 %v4639
    %7329 = vmatpush1.bf16.msra.mxu0 %v4638
    %7330 = vmatprep.subr.bf16.mxu0 %v4643
    %7331 = vmatpush1.bf16.msra.mxu0 %v4642
    %7332 = vmatprep.subr.bf16.mxu0 %v4647
    %7333 = vmatpush1.bf16.msra.mxu0 %v4646
    %7334 = vmatprep.subr.bf16.mxu0 %v4651
    %7335 = vmatpush1.bf16.msra.mxu0 %v4650
    %7336 = vmatprep.subr.bf16.mxu0 %v4655
    %7337 = vmatpush1.bf16.msra.mxu0 %v4654
    %7338 = vmatprep.subr.bf16.mxu0 %v4659
    %7339 = vmatpush1.bf16.msra.mxu0 %v4658
    %7340 = vmatprep.subr.bf16.mxu0 %v4663
    %7341 = vmatpush1.bf16.msra.mxu0 %v4662
    %7342 = vmatprep.subr.bf16.mxu0 %v4667
    %7343 = vmatpush1.bf16.msra.mxu0 %v4666
    %7344 = vmatprep.subr.bf16.mxu0 %v4671
    %7345 = vmatpush1.bf16.msra.mxu0 %v4670
    %7346 = vmatprep.subr.bf16.mxu0 %v4675
    %7347 = vmatpush1.bf16.msra.mxu0 %v4674
    %7348 = vmatprep.mubr.bf16.mxu0 %v1477
    %7349 = vmatmul.mubr.bf16.gmra.mrb[0].mxu0 %v1476
    %v7350 = vpop.f32.mrb[0].mxu0
    %v7351 = vadd.f32 %v1419, %v7350
    %v7352 = vpop.f32.mrb[0].mxu0
    %v7353 = vadd.f32 %v1423, %v7352
    %v7354 = vpop.f32.mrb[0].mxu0
    %v7355 = vpop.f32.mrb[0].mxu0
    %7356 = vdwg.mxu0
    %7357 = vmatprep.subr.bf16.mxu0 %v4679
    %7358 = vmatpush1.bf16.msra.mxu0 %v4678
    %7359 = vmatprep.subr.bf16.mxu0 %v4683
    %7360 = vmatpush1.bf16.msra.mxu0 %v4682
    %7361 = vmatprep.subr.bf16.mxu0 %v4687
    %7362 = vmatpush1.bf16.msra.mxu0 %v4686
    %7363 = vmatprep.subr.bf16.mxu0 %v4691
    %7364 = vmatpush1.bf16.msra.mxu0 %v4690
    %7365 = vmatprep.subr.bf16.mxu0 %v4695
    %7366 = vmatpush1.bf16.msra.mxu0 %v4694
    %7367 = vmatprep.subr.bf16.mxu0 %v4699
    %7368 = vmatpush1.bf16.msra.mxu0 %v4698
    %7369 = vmatprep.subr.bf16.mxu0 %v4703
    %7370 = vmatpush1.bf16.msra.mxu0 %v4702
    %7371 = vmatprep.subr.bf16.mxu0 %v4707
    %7372 = vmatpush1.bf16.msra.mxu0 %v4706
    %7373 = vmatprep.subr.bf16.mxu0 %v4711
    %7374 = vmatpush1.bf16.msra.mxu0 %v4710
    %7375 = vmatprep.subr.bf16.mxu0 %v4715
    %7376 = vmatpush1.bf16.msra.mxu0 %v4714
    %7377 = vmatprep.subr.bf16.mxu0 %v4719
    %7378 = vmatpush1.bf16.msra.mxu0 %v4718
    %7379 = vmatprep.subr.bf16.mxu0 %v4723
    %7380 = vmatpush1.bf16.msra.mxu0 %v4722
    %7381 = vmatprep.subr.bf16.mxu0 %v4727
    %7382 = vmatpush1.bf16.msra.mxu0 %v4726
    %7383 = vmatprep.subr.bf16.mxu0 %v4731
    %7384 = vmatpush1.bf16.msra.mxu0 %v4730
    %7385 = vmatprep.subr.bf16.mxu0 %v4735
    %7386 = vmatpush1.bf16.msra.mxu0 %v4734
    %7387 = vmatprep.subr.bf16.mxu0 %v4739
    %7388 = vmatpush1.bf16.msra.mxu0 %v4738
    %7389 = vmatprep.mubr.bf16.mxu0 %v1479
    %7390 = vmatmul.mubr.bf16.gmra.mrb[0].mxu0 %v1478
    %v7391 = vpop.f32.mrb[0].mxu0
    %v7392 = vadd.f32 %v7351, %v7391
    %v7393 = vpop.f32.mrb[0].mxu0
    %v7394 = vadd.f32 %v7353, %v7393
    %v7395 = vpop.f32.mrb[0].mxu0
    %v7396 = vpop.f32.mrb[0].mxu0
    %7397 = vdwg.mxu0
    %7398 = vmatprep.subr.bf16.mxu0 %v4743
    %7399 = vmatpush1.bf16.msra.mxu0 %v4742
    %7400 = vmatprep.subr.bf16.mxu0 %v4747
    %7401 = vmatpush1.bf16.msra.mxu0 %v4746
    %7402 = vmatprep.subr.bf16.mxu0 %v4751
    %7403 = vmatpush1.bf16.msra.mxu0 %v4750
    %7404 = vmatprep.subr.bf16.mxu0 %v4755
    %7405 = vmatpush1.bf16.msra.mxu0 %v4754
    %7406 = vmatprep.subr.bf16.mxu0 %v4759
    %7407 = vmatpush1.bf16.msra.mxu0 %v4758
    %7408 = vmatprep.subr.bf16.mxu0 %v4763
    %7409 = vmatpush1.bf16.msra.mxu0 %v4762
    %7410 = vmatprep.subr.bf16.mxu0 %v4767
    %7411 = vmatpush1.bf16.msra.mxu0 %v4766
    %7412 = vmatprep.subr.bf16.mxu0 %v4771
    %7413 = vmatpush1.bf16.msra.mxu0 %v4770
    %7414 = vmatprep.subr.bf16.mxu0 %v4775
    %7415 = vmatpush1.bf16.msra.mxu0 %v4774
    %7416 = vmatprep.subr.bf16.mxu0 %v4779
    %7417 = vmatpush1.bf16.msra.mxu0 %v4778
    %7418 = vmatprep.subr.bf16.mxu0 %v4783
    %7419 = vmatpush1.bf16.msra.mxu0 %v4782
    %7420 = vmatprep.subr.bf16.mxu0 %v4787
    %7421 = vmatpush1.bf16.msra.mxu0 %v4786
    %7422 = vmatprep.subr.bf16.mxu0 %v4791
    %7423 = vmatpush1.bf16.msra.mxu0 %v4790
    %7424 = vmatprep.subr.bf16.mxu0 %v4795
    %7425 = vmatpush1.bf16.msra.mxu0 %v4794
    %7426 = vmatprep.subr.bf16.mxu0 %v4799
    %7427 = vmatpush1.bf16.msra.mxu0 %v4798
    %7428 = vmatprep.subr.bf16.mxu0 %v4803
    %7429 = vmatpush1.bf16.msra.mxu0 %v4802
    %7430 = vmatprep.mubr.bf16.mxu0 %v1481
    %7431 = vmatmul.mubr.bf16.gmra.mrb[0].mxu0 %v1480
    %v7432 = vpop.f32.mrb[0].mxu0
    %v7433 = vadd.f32 %v7392, %v7432
    %v7434 = vpop.f32.mrb[0].mxu0
    %v7435 = vadd.f32 %v7394, %v7434
    %v7436 = vpop.f32.mrb[0].mxu0
    %v7437 = vpop.f32.mrb[0].mxu0
    %7438 = vdwg.mxu0
    %7439 = vmatprep.subr.bf16.mxu0 %v4807
    %7440 = vmatpush1.bf16.msra.mxu0 %v4806
    %7441 = vmatprep.subr.bf16.mxu0 %v4811
    %7442 = vmatpush1.bf16.msra.mxu0 %v4810
    %7443 = vmatprep.subr.bf16.mxu0 %v4815
    %7444 = vmatpush1.bf16.msra.mxu0 %v4814
    %7445 = vmatprep.subr.bf16.mxu0 %v4819
    %7446 = vmatpush1.bf16.msra.mxu0 %v4818
    %7447 = vmatprep.subr.bf16.mxu0 %v4823
    %7448 = vmatpush1.bf16.msra.mxu0 %v4822
    %7449 = vmatprep.subr.bf16.mxu0 %v4827
    %7450 = vmatpush1.bf16.msra.mxu0 %v4826
    %7451 = vmatprep.subr.bf16.mxu0 %v4831
    %7452 = vmatpush1.bf16.msra.mxu0 %v4830
    %7453 = vmatprep.subr.bf16.mxu0 %v4835
    %7454 = vmatpush1.bf16.msra.mxu0 %v4834
    %7455 = vmatprep.subr.bf16.mxu0 %v4839
    %7456 = vmatpush1.bf16.msra.mxu0 %v4838
    %7457 = vmatprep.subr.bf16.mxu0 %v4843
    %7458 = vmatpush1.bf16.msra.mxu0 %v4842
    %7459 = vmatprep.subr.bf16.mxu0 %v4847
    %7460 = vmatpush1.bf16.msra.mxu0 %v4846
    %7461 = vmatprep.subr.bf16.mxu0 %v4851
    %7462 = vmatpush1.bf16.msra.mxu0 %v4850
    %7463 = vmatprep.subr.bf16.mxu0 %v4855
    %7464 = vmatpush1.bf16.msra.mxu0 %v4854
    %7465 = vmatprep.subr.bf16.mxu0 %v4859
    %7466 = vmatpush1.bf16.msra.mxu0 %v4858
    %7467 = vmatprep.subr.bf16.mxu0 %v4863
    %7468 = vmatpush1.bf16.msra.mxu0 %v4862
    %7469 = vmatprep.subr.bf16.mxu0 %v4867
    %7470 = vmatpush1.bf16.msra.mxu0 %v4866
    %7471 = vmatprep.mubr.bf16.mxu0 %v1483
    %7472 = vmatmul.mubr.bf16.gmra.mrb[0].mxu0 %v1482
    %v7473 = vpop.f32.mrb[0].mxu0
    %v7474 = vadd.f32 %v7433, %v7473
    %v7475 = vpop.f32.mrb[0].mxu0
    %v7476 = vadd.f32 %v7435, %v7475
    %v7477 = vpop.f32.mrb[0].mxu0
    %v7478 = vpop.f32.mrb[0].mxu0
    %7479 = vdwg.mxu0
    %7480 = vmatprep.subr.bf16.mxu0 %v4871
    %7481 = vmatpush1.bf16.msra.mxu0 %v4870
    %7482 = vmatprep.subr.bf16.mxu0 %v4875
    %7483 = vmatpush1.bf16.msra.mxu0 %v4874
    %7484 = vmatprep.subr.bf16.mxu0 %v4879
    %7485 = vmatpush1.bf16.msra.mxu0 %v4878
    %7486 = vmatprep.subr.bf16.mxu0 %v4883
    %7487 = vmatpush1.bf16.msra.mxu0 %v4882
    %7488 = vmatprep.subr.bf16.mxu0 %v4887
    %7489 = vmatpush1.bf16.msra.mxu0 %v4886
    %7490 = vmatprep.subr.bf16.mxu0 %v4891
    %7491 = vmatpush1.bf16.msra.mxu0 %v4890
    %7492 = vmatprep.subr.bf16.mxu0 %v4895
    %7493 = vmatpush1.bf16.msra.mxu0 %v4894
    %7494 = vmatprep.subr.bf16.mxu0 %v4899
    %7495 = vmatpush1.bf16.msra.mxu0 %v4898
    %7496 = vmatprep.subr.bf16.mxu0 %v4903
    %7497 = vmatpush1.bf16.msra.mxu0 %v4902
    %7498 = vmatprep.subr.bf16.mxu0 %v4907
    %7499 = vmatpush1.bf16.msra.mxu0 %v4906
    %7500 = vmatprep.subr.bf16.mxu0 %v4911
    %7501 = vmatpush1.bf16.msra.mxu0 %v4910
    %7502 = vmatprep.subr.bf16.mxu0 %v4915
    %7503 = vmatpush1.bf16.msra.mxu0 %v4914
    %7504 = vmatprep.subr.bf16.mxu0 %v4919
    %7505 = vmatpush1.bf16.msra.mxu0 %v4918
    %7506 = vmatprep.subr.bf16.mxu0 %v4923
    %7507 = vmatpush1.bf16.msra.mxu0 %v4922
    %7508 = vmatprep.subr.bf16.mxu0 %v4927
    %7509 = vmatpush1.bf16.msra.mxu0 %v4926
    %7510 = vmatprep.subr.bf16.mxu0 %v4931
    %7511 = vmatpush1.bf16.msra.mxu0 %v4930
    %7512 = vmatprep.mubr.bf16.mxu0 %v1485
    %7513 = vmatmul.mubr.bf16.gmra.mrb[0].mxu0 %v1484
    %v7514 = vpop.f32.mrb[0].mxu0
    %v7515 = vadd.f32 %v7474, %v7514
    %v7516 = vpop.f32.mrb[0].mxu0
    %v7517 = vadd.f32 %v7476, %v7516
    %v7518 = vpop.f32.mrb[0].mxu0
    %v7519 = vpop.f32.mrb[0].mxu0
    %7520 = vdwg.mxu0
    %7521 = vmatprep.subr.bf16.mxu0 %v4935
    %7522 = vmatpush1.bf16.msra.mxu0 %v4934
    %7523 = vmatprep.subr.bf16.mxu0 %v4939
    %7524 = vmatpush1.bf16.msra.mxu0 %v4938
    %7525 = vmatprep.subr.bf16.mxu0 %v4943
    %7526 = vmatpush1.bf16.msra.mxu0 %v4942
    %7527 = vmatprep.subr.bf16.mxu0 %v4947
    %7528 = vmatpush1.bf16.msra.mxu0 %v4946
    %7529 = vmatprep.subr.bf16.mxu0 %v4951
    %7530 = vmatpush1.bf16.msra.mxu0 %v4950
    %7531 = vmatprep.subr.bf16.mxu0 %v4955
    %7532 = vmatpush1.bf16.msra.mxu0 %v4954
    %7533 = vmatprep.subr.bf16.mxu0 %v4959
    %7534 = vmatpush1.bf16.msra.mxu0 %v4958
    %7535 = vmatprep.subr.bf16.mxu0 %v4963
    %7536 = vmatpush1.bf16.msra.mxu0 %v4962
    %7537 = vmatprep.subr.bf16.mxu0 %v4967
    %7538 = vmatpush1.bf16.msra.mxu0 %v4966
    %7539 = vmatprep.subr.bf16.mxu0 %v4971
    %7540 = vmatpush1.bf16.msra.mxu0 %v4970
    %7541 = vmatprep.subr.bf16.mxu0 %v4975
    %7542 = vmatpush1.bf16.msra.mxu0 %v4974
    %7543 = vmatprep.subr.bf16.mxu0 %v4979
    %7544 = vmatpush1.bf16.msra.mxu0 %v4978
    %7545 = vmatprep.subr.bf16.mxu0 %v4983
    %7546 = vmatpush1.bf16.msra.mxu0 %v4982
    %7547 = vmatprep.subr.bf16.mxu0 %v4987
    %7548 = vmatpush1.bf16.msra.mxu0 %v4986
    %7549 = vmatprep.subr.bf16.mxu0 %v4991
    %7550 = vmatpush1.bf16.msra.mxu0 %v4990
    %7551 = vmatprep.subr.bf16.mxu0 %v4995
    %7552 = vmatpush1.bf16.msra.mxu0 %v4994
    %7553 = vmatprep.mubr.bf16.mxu0 %v1487
    %7554 = vmatmul.mubr.bf16.gmra.mrb[0].mxu0 %v1486
    %v7555 = vpop.f32.mrb[0].mxu0
    %v7556 = vadd.f32 %v7515, %v7555
    %v7557 = vpop.f32.mrb[0].mxu0
    %v7558 = vadd.f32 %v7517, %v7557
    %v7559 = vpop.f32.mrb[0].mxu0
    %v7560 = vpop.f32.mrb[0].mxu0
    %7561 = vdwg.mxu0
    %7562 = vmatprep.subr.bf16.mxu0 %v4999
    %7563 = vmatpush1.bf16.msra.mxu0 %v4998
    %7564 = vmatprep.subr.bf16.mxu0 %v5003
    %7565 = vmatpush1.bf16.msra.mxu0 %v5002
    %7566 = vmatprep.subr.bf16.mxu0 %v5007
    %7567 = vmatpush1.bf16.msra.mxu0 %v5006
    %7568 = vmatprep.subr.bf16.mxu0 %v5011
    %7569 = vmatpush1.bf16.msra.mxu0 %v5010
    %7570 = vmatprep.subr.bf16.mxu0 %v5015
    %7571 = vmatpush1.bf16.msra.mxu0 %v5014
    %7572 = vmatprep.subr.bf16.mxu0 %v5019
    %7573 = vmatpush1.bf16.msra.mxu0 %v5018
    %7574 = vmatprep.subr.bf16.mxu0 %v5023
    %7575 = vmatpush1.bf16.msra.mxu0 %v5022
    %7576 = vmatprep.subr.bf16.mxu0 %v5027
    %7577 = vmatpush1.bf16.msra.mxu0 %v5026
    %7578 = vmatprep.subr.bf16.mxu0 %v5031
    %7579 = vmatpush1.bf16.msra.mxu0 %v5030
    %7580 = vmatprep.subr.bf16.mxu0 %v5035
    %7581 = vmatpush1.bf16.msra.mxu0 %v5034
    %7582 = vmatprep.subr.bf16.mxu0 %v5039
    %7583 = vmatpush1.bf16.msra.mxu0 %v5038
    %7584 = vmatprep.subr.bf16.mxu0 %v5043
    %7585 = vmatpush1.bf16.msra.mxu0 %v5042
    %7586 = vmatprep.subr.bf16.mxu0 %v5047
    %7587 = vmatpush1.bf16.msra.mxu0 %v5046
    %7588 = vmatprep.subr.bf16.mxu0 %v5051
    %7589 = vmatpush1.bf16.msra.mxu0 %v5050
    %7590 = vmatprep.subr.bf16.mxu0 %v5055
    %7591 = vmatpush1.bf16.msra.mxu0 %v5054
    %7592 = vmatprep.subr.bf16.mxu0 %v5059
    %7593 = vmatpush1.bf16.msra.mxu0 %v5058
    %7594 = vmatprep.mubr.bf16.mxu0 %v1489
    %7595 = vmatmul.mubr.bf16.gmra.mrb[0].mxu0 %v1488
    %v7596 = vpop.f32.mrb[0].mxu0
    %v7597 = vadd.f32 %v7556, %v7596
    %v7598 = vpop.f32.mrb[0].mxu0
    %v7599 = vadd.f32 %v7558, %v7598
    %v7600 = vpop.f32.mrb[0].mxu0
    %v7601 = vpop.f32.mrb[0].mxu0
    %7602 = vdwg.mxu0
    %7603 = vmatprep.subr.bf16.mxu0 %v5063
    %7604 = vmatpush1.bf16.msra.mxu0 %v5062
    %7605 = vmatprep.subr.bf16.mxu0 %v5067
    %7606 = vmatpush1.bf16.msra.mxu0 %v5066
    %7607 = vmatprep.subr.bf16.mxu0 %v5071
    %7608 = vmatpush1.bf16.msra.mxu0 %v5070
    %7609 = vmatprep.subr.bf16.mxu0 %v5075
    %7610 = vmatpush1.bf16.msra.mxu0 %v5074
    %7611 = vmatprep.subr.bf16.mxu0 %v5079
    %7612 = vmatpush1.bf16.msra.mxu0 %v5078
    %7613 = vmatprep.subr.bf16.mxu0 %v5083
    %7614 = vmatpush1.bf16.msra.mxu0 %v5082
    %7615 = vmatprep.subr.bf16.mxu0 %v5087
    %7616 = vmatpush1.bf16.msra.mxu0 %v5086
    %7617 = vmatprep.subr.bf16.mxu0 %v5091
    %7618 = vmatpush1.bf16.msra.mxu0 %v5090
    %7619 = vmatprep.subr.bf16.mxu0 %v5095
    %7620 = vmatpush1.bf16.msra.mxu0 %v5094
    %7621 = vmatprep.subr.bf16.mxu0 %v5099
    %7622 = vmatpush1.bf16.msra.mxu0 %v5098
    %7623 = vmatprep.subr.bf16.mxu0 %v5103
    %7624 = vmatpush1.bf16.msra.mxu0 %v5102
    %7625 = vmatprep.subr.bf16.mxu0 %v5107
    %7626 = vmatpush1.bf16.msra.mxu0 %v5106
    %7627 = vmatprep.subr.bf16.mxu0 %v5111
    %7628 = vmatpush1.bf16.msra.mxu0 %v5110
    %7629 = vmatprep.subr.bf16.mxu0 %v5115
    %7630 = vmatpush1.bf16.msra.mxu0 %v5114
    %7631 = vmatprep.subr.bf16.mxu0 %v5119
    %7632 = vmatpush1.bf16.msra.mxu0 %v5118
    %7633 = vmatprep.subr.bf16.mxu0 %v5123
    %7634 = vmatpush1.bf16.msra.mxu0 %v5122
    %7635 = vmatprep.mubr.bf16.mxu0 %v1491
    %7636 = vmatmul.mubr.bf16.gmra.mrb[0].mxu0 %v1490
    %v7637 = vpop.f32.mrb[0].mxu0
    %v7638 = vadd.f32 %v7597, %v7637
    %v7639 = vpop.f32.mrb[0].mxu0
    %v7640 = vadd.f32 %v7599, %v7639
    %v7641 = vpop.f32.mrb[0].mxu0
    %v7642 = vpop.f32.mrb[0].mxu0
    %7643 = vdwg.mxu0
    %7644 = vmatprep.subr.bf16.mxu0 %v5127
    %7645 = vmatpush1.bf16.msra.mxu0 %v5126
    %7646 = vmatprep.subr.bf16.mxu0 %v5131
    %7647 = vmatpush1.bf16.msra.mxu0 %v5130
    %7648 = vmatprep.subr.bf16.mxu0 %v5135
    %7649 = vmatpush1.bf16.msra.mxu0 %v5134
    %7650 = vmatprep.subr.bf16.mxu0 %v5139
    %7651 = vmatpush1.bf16.msra.mxu0 %v5138
    %7652 = vmatprep.subr.bf16.mxu0 %v5143
    %7653 = vmatpush1.bf16.msra.mxu0 %v5142
    %7654 = vmatprep.subr.bf16.mxu0 %v5147
    %7655 = vmatpush1.bf16.msra.mxu0 %v5146
    %7656 = vmatprep.subr.bf16.mxu0 %v5151
    %7657 = vmatpush1.bf16.msra.mxu0 %v5150
    %7658 = vmatprep.subr.bf16.mxu0 %v5155
    %7659 = vmatpush1.bf16.msra.mxu0 %v5154
    %7660 = vmatprep.subr.bf16.mxu0 %v5159
    %7661 = vmatpush1.bf16.msra.mxu0 %v5158
    %7662 = vmatprep.subr.bf16.mxu0 %v5163
    %7663 = vmatpush1.bf16.msra.mxu0 %v5162
    %7664 = vmatprep.subr.bf16.mxu0 %v5167
    %7665 = vmatpush1.bf16.msra.mxu0 %v5166
    %7666 = vmatprep.subr.bf16.mxu0 %v5171
    %7667 = vmatpush1.bf16.msra.mxu0 %v5170
    %7668 = vmatprep.subr.bf16.mxu0 %v5175
    %7669 = vmatpush1.bf16.msra.mxu0 %v5174
    %7670 = vmatprep.subr.bf16.mxu0 %v5179
    %7671 = vmatpush1.bf16.msra.mxu0 %v5178
    %7672 = vmatprep.subr.bf16.mxu0 %v5183
    %7673 = vmatpush1.bf16.msra.mxu0 %v5182
    %7674 = vmatprep.subr.bf16.mxu0 %v5187
    %7675 = vmatpush1.bf16.msra.mxu0 %v5186
    %7676 = vmatprep.mubr.bf16.mxu0 %v1493
    %7677 = vmatmul.mubr.bf16.gmra.mrb[0].mxu0 %v1492
    %v7678 = vpop.f32.mrb[0].mxu0
    %v7679 = vadd.f32 %v7638, %v7678
    %v7680 = vpop.f32.mrb[0].mxu0
    %v7681 = vadd.f32 %v7640, %v7680
    %v7682 = vpop.f32.mrb[0].mxu0
    %v7683 = vpop.f32.mrb[0].mxu0
    %7684 = vdwg.mxu0
    %7685 = vmatprep.subr.bf16.mxu0 %v5191
    %7686 = vmatpush1.bf16.msra.mxu0 %v5190
    %7687 = vmatprep.subr.bf16.mxu0 %v5195
    %7688 = vmatpush1.bf16.msra.mxu0 %v5194
    %7689 = vmatprep.subr.bf16.mxu0 %v5199
    %7690 = vmatpush1.bf16.msra.mxu0 %v5198
    %7691 = vmatprep.subr.bf16.mxu0 %v5203
    %7692 = vmatpush1.bf16.msra.mxu0 %v5202
    %7693 = vmatprep.subr.bf16.mxu0 %v5207
    %7694 = vmatpush1.bf16.msra.mxu0 %v5206
    %7695 = vmatprep.subr.bf16.mxu0 %v5211
    %7696 = vmatpush1.bf16.msra.mxu0 %v5210
    %7697 = vmatprep.subr.bf16.mxu0 %v5215
    %7698 = vmatpush1.bf16.msra.mxu0 %v5214
    %7699 = vmatprep.subr.bf16.mxu0 %v5219
    %7700 = vmatpush1.bf16.msra.mxu0 %v5218
    %7701 = vmatprep.subr.bf16.mxu0 %v5223
    %7702 = vmatpush1.bf16.msra.mxu0 %v5222
    %7703 = vmatprep.subr.bf16.mxu0 %v5227
    %7704 = vmatpush1.bf16.msra.mxu0 %v5226
    %7705 = vmatprep.subr.bf16.mxu0 %v5231
    %7706 = vmatpush1.bf16.msra.mxu0 %v5230
    %7707 = vmatprep.subr.bf16.mxu0 %v5235
    %7708 = vmatpush1.bf16.msra.mxu0 %v5234
    %7709 = vmatprep.subr.bf16.mxu0 %v5239
    %7710 = vmatpush1.bf16.msra.mxu0 %v5238
    %7711 = vmatprep.subr.bf16.mxu0 %v5243
    %7712 = vmatpush1.bf16.msra.mxu0 %v5242
    %7713 = vmatprep.subr.bf16.mxu0 %v5247
    %7714 = vmatpush1.bf16.msra.mxu0 %v5246
    %7715 = vmatprep.subr.bf16.mxu0 %v5251
    %7716 = vmatpush1.bf16.msra.mxu0 %v5250
    %7717 = vmatprep.mubr.bf16.mxu0 %v1495
    %7718 = vmatmul.mubr.bf16.gmra.mrb[0].mxu0 %v1494
    %v7719 = vpop.f32.mrb[0].mxu0
    %v7720 = vadd.f32 %v7679, %v7719
    %v7721 = vpop.f32.mrb[0].mxu0
    %v7722 = vadd.f32 %v7681, %v7721
    %v7723 = vpop.f32.mrb[0].mxu0
    %v7724 = vpop.f32.mrb[0].mxu0
    %7725 = vdwg.mxu0
    %7726 = vmatprep.subr.bf16.mxu0 %v5255
    %7727 = vmatpush1.bf16.msra.mxu0 %v5254
    %7728 = vmatprep.subr.bf16.mxu0 %v5259
    %7729 = vmatpush1.bf16.msra.mxu0 %v5258
    %7730 = vmatprep.subr.bf16.mxu0 %v5263
    %7731 = vmatpush1.bf16.msra.mxu0 %v5262
    %7732 = vmatprep.subr.bf16.mxu0 %v5267
    %7733 = vmatpush1.bf16.msra.mxu0 %v5266
    %7734 = vmatprep.subr.bf16.mxu0 %v5271
    %7735 = vmatpush1.bf16.msra.mxu0 %v5270
    %7736 = vmatprep.subr.bf16.mxu0 %v5275
    %7737 = vmatpush1.bf16.msra.mxu0 %v5274
    %7738 = vmatprep.subr.bf16.mxu0 %v5279
    %7739 = vmatpush1.bf16.msra.mxu0 %v5278
    %7740 = vmatprep.subr.bf16.mxu0 %v5283
    %7741 = vmatpush1.bf16.msra.mxu0 %v5282
    %7742 = vmatprep.subr.bf16.mxu0 %v5287
    %7743 = vmatpush1.bf16.msra.mxu0 %v5286
    %7744 = vmatprep.subr.bf16.mxu0 %v5291
    %7745 = vmatpush1.bf16.msra.mxu0 %v5290
    %7746 = vmatprep.subr.bf16.mxu0 %v5295
    %7747 = vmatpush1.bf16.msra.mxu0 %v5294
    %7748 = vmatprep.subr.bf16.mxu0 %v5299
    %7749 = vmatpush1.bf16.msra.mxu0 %v5298
    %7750 = vmatprep.subr.bf16.mxu0 %v5303
    %7751 = vmatpush1.bf16.msra.mxu0 %v5302
    %7752 = vmatprep.subr.bf16.mxu0 %v5307
    %7753 = vmatpush1.bf16.msra.mxu0 %v5306
    %7754 = vmatprep.subr.bf16.mxu0 %v5311
    %7755 = vmatpush1.bf16.msra.mxu0 %v5310
    %7756 = vmatprep.subr.bf16.mxu0 %v5315
    %7757 = vmatpush1.bf16.msra.mxu0 %v5314
    %7758 = vmatprep.mubr.bf16.mxu0 %v1497
    %7759 = vmatmul.mubr.bf16.gmra.mrb[0].mxu0 %v1496
    %v7760 = vpop.f32.mrb[0].mxu0
    %v7761 = vadd.f32 %v7720, %v7760
    %v7762 = vpop.f32.mrb[0].mxu0
    %v7763 = vadd.f32 %v7722, %v7762
    %v7764 = vpop.f32.mrb[0].mxu0
    %v7765 = vpop.f32.mrb[0].mxu0
    %7766 = vdwg.mxu0
    %7767 = vmatprep.subr.bf16.mxu0 %v5319
    %7768 = vmatpush1.bf16.msra.mxu0 %v5318
    %7769 = vmatprep.subr.bf16.mxu0 %v5323
    %7770 = vmatpush1.bf16.msra.mxu0 %v5322
    %7771 = vmatprep.subr.bf16.mxu0 %v5327
    %7772 = vmatpush1.bf16.msra.mxu0 %v5326
    %7773 = vmatprep.subr.bf16.mxu0 %v5331
    %7774 = vmatpush1.bf16.msra.mxu0 %v5330
    %7775 = vmatprep.subr.bf16.mxu0 %v5335
    %7776 = vmatpush1.bf16.msra.mxu0 %v5334
    %7777 = vmatprep.subr.bf16.mxu0 %v5339
    %7778 = vmatpush1.bf16.msra.mxu0 %v5338
    %7779 = vmatprep.subr.bf16.mxu0 %v5343
    %7780 = vmatpush1.bf16.msra.mxu0 %v5342
    %7781 = vmatprep.subr.bf16.mxu0 %v5347
    %7782 = vmatpush1.bf16.msra.mxu0 %v5346
    %7783 = vmatprep.subr.bf16.mxu0 %v5351
    %7784 = vmatpush1.bf16.msra.mxu0 %v5350
    %7785 = vmatprep.subr.bf16.mxu0 %v5355
    %7786 = vmatpush1.bf16.msra.mxu0 %v5354
    %7787 = vmatprep.subr.bf16.mxu0 %v5359
    %7788 = vmatpush1.bf16.msra.mxu0 %v5358
    %7789 = vmatprep.subr.bf16.mxu0 %v5363
    %7790 = vmatpush1.bf16.msra.mxu0 %v5362
    %7791 = vmatprep.subr.bf16.mxu0 %v5367
    %7792 = vmatpush1.bf16.msra.mxu0 %v5366
    %7793 = vmatprep.subr.bf16.mxu0 %v5371
    %7794 = vmatpush1.bf16.msra.mxu0 %v5370
    %7795 = vmatprep.subr.bf16.mxu0 %v5375
    %7796 = vmatpush1.bf16.msra.mxu0 %v5374
    %7797 = vmatprep.subr.bf16.mxu0 %v5379
    %7798 = vmatpush1.bf16.msra.mxu0 %v5378
    %7799 = vmatprep.mubr.bf16.mxu0 %v1499
    %7800 = vmatmul.mubr.bf16.gmra.mrb[0].mxu0 %v1498
    %v7801 = vpop.f32.mrb[0].mxu0
    %v7802 = vadd.f32 %v7761, %v7801
    %v7803 = vpop.f32.mrb[0].mxu0
    %v7804 = vadd.f32 %v7763, %v7803
    %v7805 = vpop.f32.mrb[0].mxu0
    %v7806 = vpop.f32.mrb[0].mxu0
    %7807 = vdwg.mxu0
    %7808 = vmatprep.subr.bf16.mxu0 %v5383
    %7809 = vmatpush1.bf16.msra.mxu0 %v5382
    %7810 = vmatprep.subr.bf16.mxu0 %v5387
    %7811 = vmatpush1.bf16.msra.mxu0 %v5386
    %7812 = vmatprep.subr.bf16.mxu0 %v5391
    %7813 = vmatpush1.bf16.msra.mxu0 %v5390
    %7814 = vmatprep.subr.bf16.mxu0 %v5395
    %7815 = vmatpush1.bf16.msra.mxu0 %v5394
    %7816 = vmatprep.subr.bf16.mxu0 %v5399
    %7817 = vmatpush1.bf16.msra.mxu0 %v5398
    %7818 = vmatprep.subr.bf16.mxu0 %v5403
    %7819 = vmatpush1.bf16.msra.mxu0 %v5402
    %7820 = vmatprep.subr.bf16.mxu0 %v5407
    %7821 = vmatpush1.bf16.msra.mxu0 %v5406
    %7822 = vmatprep.subr.bf16.mxu0 %v5411
    %7823 = vmatpush1.bf16.msra.mxu0 %v5410
    %7824 = vmatprep.subr.bf16.mxu0 %v5415
    %7825 = vmatpush1.bf16.msra.mxu0 %v5414
    %7826 = vmatprep.subr.bf16.mxu0 %v5419
    %7827 = vmatpush1.bf16.msra.mxu0 %v5418
    %7828 = vmatprep.subr.bf16.mxu0 %v5423
    %7829 = vmatpush1.bf16.msra.mxu0 %v5422
    %7830 = vmatprep.subr.bf16.mxu0 %v5427
    %7831 = vmatpush1.bf16.msra.mxu0 %v5426
    %7832 = vmatprep.subr.bf16.mxu0 %v5431
    %7833 = vmatpush1.bf16.msra.mxu0 %v5430
    %7834 = vmatprep.subr.bf16.mxu0 %v5435
    %7835 = vmatpush1.bf16.msra.mxu0 %v5434
    %7836 = vmatprep.subr.bf16.mxu0 %v5439
    %7837 = vmatpush1.bf16.msra.mxu0 %v5438
    %7838 = vmatprep.subr.bf16.mxu0 %v5443
    %7839 = vmatpush1.bf16.msra.mxu0 %v5442
    %7840 = vmatprep.mubr.bf16.mxu0 %v1501
    %7841 = vmatmul.mubr.bf16.gmra.mrb[0].mxu0 %v1500
    %v7842 = vpop.f32.mrb[0].mxu0
    %v7843 = vadd.f32 %v7802, %v7842
    %v7844 = vpop.f32.mrb[0].mxu0
    %v7845 = vadd.f32 %v7804, %v7844
    %v7846 = vpop.f32.mrb[0].mxu0
    %v7847 = vpop.f32.mrb[0].mxu0
    %7848 = vdwg.mxu0
    %7849 = vmatprep.subr.bf16.mxu0 %v5447
    %7850 = vmatpush1.bf16.msra.mxu0 %v5446
    %7851 = vmatprep.subr.bf16.mxu0 %v5451
    %7852 = vmatpush1.bf16.msra.mxu0 %v5450
    %7853 = vmatprep.subr.bf16.mxu0 %v5455
    %7854 = vmatpush1.bf16.msra.mxu0 %v5454
    %7855 = vmatprep.subr.bf16.mxu0 %v5459
    %7856 = vmatpush1.bf16.msra.mxu0 %v5458
    %7857 = vmatprep.subr.bf16.mxu0 %v5463
    %7858 = vmatpush1.bf16.msra.mxu0 %v5462
    %7859 = vmatprep.subr.bf16.mxu0 %v5467
    %7860 = vmatpush1.bf16.msra.mxu0 %v5466
    %7861 = vmatprep.subr.bf16.mxu0 %v5471
    %7862 = vmatpush1.bf16.msra.mxu0 %v5470
    %7863 = vmatprep.subr.bf16.mxu0 %v5475
    %7864 = vmatpush1.bf16.msra.mxu0 %v5474
    %7865 = vmatprep.subr.bf16.mxu0 %v5479
    %7866 = vmatpush1.bf16.msra.mxu0 %v5478
    %7867 = vmatprep.subr.bf16.mxu0 %v5483
    %7868 = vmatpush1.bf16.msra.mxu0 %v5482
    %7869 = vmatprep.subr.bf16.mxu0 %v5487
    %7870 = vmatpush1.bf16.msra.mxu0 %v5486
    %7871 = vmatprep.subr.bf16.mxu0 %v5491
    %7872 = vmatpush1.bf16.msra.mxu0 %v5490
    %7873 = vmatprep.subr.bf16.mxu0 %v5495
    %7874 = vmatpush1.bf16.msra.mxu0 %v5494
    %7875 = vmatprep.subr.bf16.mxu0 %v5499
    %7876 = vmatpush1.bf16.msra.mxu0 %v5498
    %7877 = vmatprep.subr.bf16.mxu0 %v5503
    %7878 = vmatpush1.bf16.msra.mxu0 %v5502
    %7879 = vmatprep.subr.bf16.mxu0 %v5507
    %7880 = vmatpush1.bf16.msra.mxu0 %v5506
    %7881 = vmatprep.mubr.bf16.mxu0 %v1503
    %7882 = vmatmul.mubr.bf16.gmra.mrb[0].mxu0 %v1502
    %v7883 = vpop.f32.mrb[0].mxu0
    %v7884 = vadd.f32 %v7843, %v7883
    %v7885 = vpop.f32.mrb[0].mxu0
    %v7886 = vadd.f32 %v7845, %v7885
    %v7887 = vpop.f32.mrb[0].mxu0
    %v7888 = vpop.f32.mrb[0].mxu0
    %7889 = vdwg.mxu0
    %7890 = vmatprep.subr.bf16.mxu0 %v5511
    %7891 = vmatpush1.bf16.msra.mxu0 %v5510
    %7892 = vmatprep.subr.bf16.mxu0 %v5515
    %7893 = vmatpush1.bf16.msra.mxu0 %v5514
    %7894 = vmatprep.subr.bf16.mxu0 %v5519
    %7895 = vmatpush1.bf16.msra.mxu0 %v5518
    %7896 = vmatprep.subr.bf16.mxu0 %v5523
    %7897 = vmatpush1.bf16.msra.mxu0 %v5522
    %7898 = vmatprep.subr.bf16.mxu0 %v5527
    %7899 = vmatpush1.bf16.msra.mxu0 %v5526
    %7900 = vmatprep.subr.bf16.mxu0 %v5531
    %7901 = vmatpush1.bf16.msra.mxu0 %v5530
    %7902 = vmatprep.subr.bf16.mxu0 %v5535
    %7903 = vmatpush1.bf16.msra.mxu0 %v5534
    %7904 = vmatprep.subr.bf16.mxu0 %v5539
    %7905 = vmatpush1.bf16.msra.mxu0 %v5538
    %7906 = vmatprep.subr.bf16.mxu0 %v5543
    %7907 = vmatpush1.bf16.msra.mxu0 %v5542
    %7908 = vmatprep.subr.bf16.mxu0 %v5547
    %7909 = vmatpush1.bf16.msra.mxu0 %v5546
    %7910 = vmatprep.subr.bf16.mxu0 %v5551
    %7911 = vmatpush1.bf16.msra.mxu0 %v5550
    %7912 = vmatprep.subr.bf16.mxu0 %v5555
    %7913 = vmatpush1.bf16.msra.mxu0 %v5554
    %7914 = vmatprep.subr.bf16.mxu0 %v5559
    %7915 = vmatpush1.bf16.msra.mxu0 %v5558
    %7916 = vmatprep.subr.bf16.mxu0 %v5563
    %7917 = vmatpush1.bf16.msra.mxu0 %v5562
    %7918 = vmatprep.subr.bf16.mxu0 %v5567
    %7919 = vmatpush1.bf16.msra.mxu0 %v5566
    %7920 = vmatprep.subr.bf16.mxu0 %v5571
    %7921 = vmatpush1.bf16.msra.mxu0 %v5570
    %7922 = vmatprep.mubr.bf16.mxu0 %v1505
    %7923 = vmatmul.mubr.bf16.gmra.mrb[0].mxu0 %v1504
    %v7924 = vpop.f32.mrb[0].mxu0
    %v7925 = vadd.f32 %v7884, %v7924
    %v7926 = vpop.f32.mrb[0].mxu0
    %v7927 = vadd.f32 %v7886, %v7926
    %v7928 = vpop.f32.mrb[0].mxu0
    %v7929 = vpop.f32.mrb[0].mxu0
    %7930 = vdwg.mxu0
    %7931 = vmatprep.subr.bf16.mxu0 %v5575
    %7932 = vmatpush1.bf16.msra.mxu0 %v5574
    %7933 = vmatprep.subr.bf16.mxu0 %v5579
    %7934 = vmatpush1.bf16.msra.mxu0 %v5578
    %7935 = vmatprep.subr.bf16.mxu0 %v5583
    %7936 = vmatpush1.bf16.msra.mxu0 %v5582
    %7937 = vmatprep.subr.bf16.mxu0 %v5587
    %7938 = vmatpush1.bf16.msra.mxu0 %v5586
    %7939 = vmatprep.subr.bf16.mxu0 %v5591
    %7940 = vmatpush1.bf16.msra.mxu0 %v5590
    %7941 = vmatprep.subr.bf16.mxu0 %v5595
    %7942 = vmatpush1.bf16.msra.mxu0 %v5594
    %7943 = vmatprep.subr.bf16.mxu0 %v5599
    %7944 = vmatpush1.bf16.msra.mxu0 %v5598
    %7945 = vmatprep.subr.bf16.mxu0 %v5603
    %7946 = vmatpush1.bf16.msra.mxu0 %v5602
    %7947 = vmatprep.subr.bf16.mxu0 %v5607
    %7948 = vmatpush1.bf16.msra.mxu0 %v5606
    %7949 = vmatprep.subr.bf16.mxu0 %v5611
    %7950 = vmatpush1.bf16.msra.mxu0 %v5610
    %7951 = vmatprep.subr.bf16.mxu0 %v5615
    %7952 = vmatpush1.bf16.msra.mxu0 %v5614
    %7953 = vmatprep.subr.bf16.mxu0 %v5619
    %7954 = vmatpush1.bf16.msra.mxu0 %v5618
    %7955 = vmatprep.subr.bf16.mxu0 %v5623
    %7956 = vmatpush1.bf16.msra.mxu0 %v5622
    %7957 = vmatprep.subr.bf16.mxu0 %v5627
    %7958 = vmatpush1.bf16.msra.mxu0 %v5626
    %7959 = vmatprep.subr.bf16.mxu0 %v5631
    %7960 = vmatpush1.bf16.msra.mxu0 %v5630
    %7961 = vmatprep.subr.bf16.mxu0 %v5635
    %7962 = vmatpush1.bf16.msra.mxu0 %v5634
    %7963 = vmatprep.mubr.bf16.mxu0 %v1507
    %7964 = vmatmul.mubr.bf16.gmra.mrb[0].mxu0 %v1506
    %v7965 = vpop.f32.mrb[0].mxu0
    %v7966 = vadd.f32 %v7925, %v7965
    %v7967 = vpop.f32.mrb[0].mxu0
    %v7968 = vadd.f32 %v7927, %v7967
    %v7969 = vpop.f32.mrb[0].mxu0
    %v7970 = vpop.f32.mrb[0].mxu0
    %7971 = vdwg.mxu0
    %v7972 = vmax.f32 %v7310, 0.0
    %v7973 = vmax.f32 %v7312, 0.0
    %v7974 = vmax.f32 %v7966, 0.0
    %v7975 = vmax.f32 %v7968, 0.0
    %v7976 = vpack.c.bf16 %v7972, %v7972
    %v7977 = vpack.c.bf16 %v7973, %v7973
    %v7978 = vpack.c.bf16 %v7974, %v7974
    %v7979 = vpack.c.bf16 %v7975, %v7975
    %v7980 = vld [vmem:[#allocation9] sm:$0xff]
    %v7981 = vld [vmem:[#allocation9 + $0x8] sm:$0xff]
    %v7982 = vld [vmem:[#allocation9 + $0x10] sm:$0xff]
    %v7983 = vld [vmem:[#allocation9 + $0x18] sm:$0xff]
    %v7984 = vld [vmem:[#allocation9 + $0x20] sm:$0xff]
    %v7985 = vld [vmem:[#allocation9 + $0x28] sm:$0xff]
    %v7986 = vld [vmem:[#allocation9 + $0x30] sm:$0xff]
    %v7987 = vld [vmem:[#allocation9 + $0x38] sm:$0xff]
    %v7988 = vld [vmem:[#allocation9 + $0x40] sm:$0xff]
    %v7989 = vld [vmem:[#allocation9 + $0x48] sm:$0xff]
    %v7990 = vld [vmem:[#allocation9 + $0x50] sm:$0xff]
    %v7991 = vld [vmem:[#allocation9 + $0x58] sm:$0xff]
    %v7992 = vld [vmem:[#allocation9 + $0x60] sm:$0xff]
    %v7993 = vld [vmem:[#allocation9 + $0x68] sm:$0xff]
    %v7994 = vld [vmem:[#allocation9 + $0x70] sm:$0xff]
    %v7995 = vld [vmem:[#allocation9 + $0x78] sm:$0xff]
    %v7996 = vld [vmem:[#allocation9 + $0x80] sm:$0xff]
    %v7997 = vld [vmem:[#allocation9 + $0x88] sm:$0xff]
    %v7998 = vld [vmem:[#allocation9 + $0x90] sm:$0xff]
    %v7999 = vld [vmem:[#allocation9 + $0x98] sm:$0xff]
    %v8000 = vld [vmem:[#allocation9 + $0xa0] sm:$0xff]
    %v8001 = vld [vmem:[#allocation9 + $0xa8] sm:$0xff]
    %v8002 = vld [vmem:[#allocation9 + $0xb0] sm:$0xff]
    %v8003 = vld [vmem:[#allocation9 + $0xb8] sm:$0xff]
    %v8004 = vld [vmem:[#allocation9 + $0xc0] sm:$0xff]
    %v8005 = vld [vmem:[#allocation9 + $0xc8] sm:$0xff]
    %v8006 = vld [vmem:[#allocation9 + $0xd0] sm:$0xff]
    %v8007 = vld [vmem:[#allocation9 + $0xd8] sm:$0xff]
    %v8008 = vld [vmem:[#allocation9 + $0xe0] sm:$0xff]
    %v8009 = vld [vmem:[#allocation9 + $0xe8] sm:$0xff]
    %v8010 = vld [vmem:[#allocation9 + $0xf0] sm:$0xff]
    %v8011 = vld [vmem:[#allocation9 + $0xf8] sm:$0xff]
    %v8012 = vld [vmem:[#allocation9 + $0x100] sm:$0xff]
    %v8013 = vld [vmem:[#allocation9 + $0x108] sm:$0xff]
    %v8014 = vld [vmem:[#allocation9 + $0x110] sm:$0xff]
    %v8015 = vld [vmem:[#allocation9 + $0x118] sm:$0xff]
    %v8016 = vld [vmem:[#allocation9 + $0x120] sm:$0xff]
    %v8017 = vld [vmem:[#allocation9 + $0x128] sm:$0xff]
    %v8018 = vld [vmem:[#allocation9 + $0x130] sm:$0xff]
    %v8019 = vld [vmem:[#allocation9 + $0x138] sm:$0xff]
    %v8020 = vld [vmem:[#allocation9 + $0x140] sm:$0xff]
    %v8021 = vld [vmem:[#allocation9 + $0x148] sm:$0xff]
    %v8022 = vld [vmem:[#allocation9 + $0x150] sm:$0xff]
    %v8023 = vld [vmem:[#allocation9 + $0x158] sm:$0xff]
    %v8024 = vld [vmem:[#allocation9 + $0x160] sm:$0xff]
    %v8025 = vld [vmem:[#allocation9 + $0x168] sm:$0xff]
    %v8026 = vld [vmem:[#allocation9 + $0x170] sm:$0xff]
    %v8027 = vld [vmem:[#allocation9 + $0x178] sm:$0xff]
    %v8028 = vld [vmem:[#allocation9 + $0x180] sm:$0xff]
    %v8029 = vld [vmem:[#allocation9 + $0x188] sm:$0xff]
    %v8030 = vld [vmem:[#allocation9 + $0x190] sm:$0xff]
    %v8031 = vld [vmem:[#allocation9 + $0x198] sm:$0xff]
    %v8032 = vld [vmem:[#allocation9 + $0x1a0] sm:$0xff]
    %v8033 = vld [vmem:[#allocation9 + $0x1a8] sm:$0xff]
    %v8034 = vld [vmem:[#allocation9 + $0x1b0] sm:$0xff]
    %v8035 = vld [vmem:[#allocation9 + $0x1b8] sm:$0xff]
    %v8036 = vld [vmem:[#allocation9 + $0x1c0] sm:$0xff]
    %v8037 = vld [vmem:[#allocation9 + $0x1c8] sm:$0xff]
    %v8038 = vld [vmem:[#allocation9 + $0x1d0] sm:$0xff]
    %v8039 = vld [vmem:[#allocation9 + $0x1d8] sm:$0xff]
    %v8040 = vld [vmem:[#allocation9 + $0x1e0] sm:$0xff]
    %v8041 = vld [vmem:[#allocation9 + $0x1e8] sm:$0xff]
    %v8042 = vld [vmem:[#allocation9 + $0x1f0] sm:$0xff]
    %v8043 = vld [vmem:[#allocation9 + $0x1f8] sm:$0xff]
    %v8044 = vld [vmem:[#allocation9 + $0x200] sm:$0xff]
    %v8045 = vld [vmem:[#allocation9 + $0x208] sm:$0xff]
    %v8046 = vld [vmem:[#allocation9 + $0x210] sm:$0xff]
    %v8047 = vld [vmem:[#allocation9 + $0x218] sm:$0xff]
    %v8048 = vld [vmem:[#allocation9 + $0x220] sm:$0xff]
    %v8049 = vld [vmem:[#allocation9 + $0x228] sm:$0xff]
    %v8050 = vld [vmem:[#allocation9 + $0x230] sm:$0xff]
    %v8051 = vld [vmem:[#allocation9 + $0x238] sm:$0xff]
    %v8052 = vld [vmem:[#allocation9 + $0x240] sm:$0xff]
    %v8053 = vld [vmem:[#allocation9 + $0x248] sm:$0xff]
    %v8054 = vld [vmem:[#allocation9 + $0x250] sm:$0xff]
    %v8055 = vld [vmem:[#allocation9 + $0x258] sm:$0xff]
    %v8056 = vld [vmem:[#allocation9 + $0x260] sm:$0xff]
    %v8057 = vld [vmem:[#allocation9 + $0x268] sm:$0xff]
    %v8058 = vld [vmem:[#allocation9 + $0x270] sm:$0xff]
    %v8059 = vld [vmem:[#allocation9 + $0x278] sm:$0xff]
    %v8060 = vld [vmem:[#allocation9 + $0x280] sm:$0xff]
    %v8061 = vld [vmem:[#allocation9 + $0x288] sm:$0xff]
    %v8062 = vld [vmem:[#allocation9 + $0x290] sm:$0xff]
    %v8063 = vld [vmem:[#allocation9 + $0x298] sm:$0xff]
    %v8064 = vld [vmem:[#allocation9 + $0x2a0] sm:$0xff]
    %v8065 = vld [vmem:[#allocation9 + $0x2a8] sm:$0xff]
    %v8066 = vld [vmem:[#allocation9 + $0x2b0] sm:$0xff]
    %v8067 = vld [vmem:[#allocation9 + $0x2b8] sm:$0xff]
    %v8068 = vld [vmem:[#allocation9 + $0x2c0] sm:$0xff]
    %v8069 = vld [vmem:[#allocation9 + $0x2c8] sm:$0xff]
    %v8070 = vld [vmem:[#allocation9 + $0x2d0] sm:$0xff]
    %v8071 = vld [vmem:[#allocation9 + $0x2d8] sm:$0xff]
    %v8072 = vld [vmem:[#allocation9 + $0x2e0] sm:$0xff]
    %v8073 = vld [vmem:[#allocation9 + $0x2e8] sm:$0xff]
    %v8074 = vld [vmem:[#allocation9 + $0x2f0] sm:$0xff]
    %v8075 = vld [vmem:[#allocation9 + $0x2f8] sm:$0xff]
    %v8076 = vld [vmem:[#allocation9 + $0x300] sm:$0xff]
    %v8077 = vld [vmem:[#allocation9 + $0x308] sm:$0xff]
    %v8078 = vld [vmem:[#allocation9 + $0x310] sm:$0xff]
    %v8079 = vld [vmem:[#allocation9 + $0x318] sm:$0xff]
    %v8080 = vld [vmem:[#allocation9 + $0x320] sm:$0xff]
    %v8081 = vld [vmem:[#allocation9 + $0x328] sm:$0xff]
    %v8082 = vld [vmem:[#allocation9 + $0x330] sm:$0xff]
    %v8083 = vld [vmem:[#allocation9 + $0x338] sm:$0xff]
    %v8084 = vld [vmem:[#allocation9 + $0x340] sm:$0xff]
    %v8085 = vld [vmem:[#allocation9 + $0x348] sm:$0xff]
    %v8086 = vld [vmem:[#allocation9 + $0x350] sm:$0xff]
    %v8087 = vld [vmem:[#allocation9 + $0x358] sm:$0xff]
    %v8088 = vld [vmem:[#allocation9 + $0x360] sm:$0xff]
    %v8089 = vld [vmem:[#allocation9 + $0x368] sm:$0xff]
    %v8090 = vld [vmem:[#allocation9 + $0x370] sm:$0xff]
    %v8091 = vld [vmem:[#allocation9 + $0x378] sm:$0xff]
    %v8092 = vld [vmem:[#allocation9 + $0x380] sm:$0xff]
    %v8093 = vld [vmem:[#allocation9 + $0x388] sm:$0xff]
    %v8094 = vld [vmem:[#allocation9 + $0x390] sm:$0xff]
    %v8095 = vld [vmem:[#allocation9 + $0x398] sm:$0xff]
    %v8096 = vld [vmem:[#allocation9 + $0x3a0] sm:$0xff]
    %v8097 = vld [vmem:[#allocation9 + $0x3a8] sm:$0xff]
    %v8098 = vld [vmem:[#allocation9 + $0x3b0] sm:$0xff]
    %v8099 = vld [vmem:[#allocation9 + $0x3b8] sm:$0xff]
    %v8100 = vld [vmem:[#allocation9 + $0x3c0] sm:$0xff]
    %v8101 = vld [vmem:[#allocation9 + $0x3c8] sm:$0xff]
    %v8102 = vld [vmem:[#allocation9 + $0x3d0] sm:$0xff]
    %v8103 = vld [vmem:[#allocation9 + $0x3d8] sm:$0xff]
    %v8104 = vld [vmem:[#allocation9 + $0x3e0] sm:$0xff]
    %v8105 = vld [vmem:[#allocation9 + $0x3e8] sm:$0xff]
    %v8106 = vld [vmem:[#allocation9 + $0x3f0] sm:$0xff]
    %v8107 = vld [vmem:[#allocation9 + $0x3f8] sm:$0xff]
    %v8108 = vld [vmem:[#allocation11] sm:$0xf]
    %v8110 = vlaneseq
    %v8111 = vshrl.u32 %v8110, 7
    %v8112 = vsub.s32 0, %v8111
    %v8113 = vrot.slane %v8108, %v8112
    %v8114 = vlaneseq
    %v8115 = vshrl.u32 %v8114, 7
    %v8116 = vsub.s32 1, %v8115
    %v8117 = vrot.slane %v8108, %v8116
    %v8118 = vlaneseq
    %v8119 = vshrl.u32 %v8118, 7
    %v8120 = vsub.s32 2, %v8119
    %v8121 = vrot.slane %v8108, %v8120
    %v8122 = vlaneseq
    %v8123 = vshrl.u32 %v8122, 7
    %v8124 = vsub.s32 3, %v8123
    %v8125 = vrot.slane %v8108, %v8124
    %v8258 = vunpack.c.l.b16 %v7980
    %v8259 = vunpack.c.h.b16 %v7980
    %v8260 = vunpack.c.l.b16 %v7981
    %v8261 = vunpack.c.h.b16 %v7981
    %v8262 = vunpack.c.l.b16 %v7982
    %v8263 = vunpack.c.h.b16 %v7982
    %v8264 = vunpack.c.l.b16 %v7983
    %v8265 = vunpack.c.h.b16 %v7983
    %v8266 = vunpack.c.l.b16 %v7984
    %v8267 = vunpack.c.h.b16 %v7984
    %v8268 = vunpack.c.l.b16 %v7985
    %v8269 = vunpack.c.h.b16 %v7985
    %v8270 = vunpack.c.l.b16 %v7986
    %v8271 = vunpack.c.h.b16 %v7986
    %v8272 = vunpack.c.l.b16 %v7987
    %v8273 = vunpack.c.h.b16 %v7987
    %v8274 = vunpack.c.l.b16 %v7988
    %v8275 = vunpack.c.h.b16 %v7988
    %v8276 = vunpack.c.l.b16 %v7989
    %v8277 = vunpack.c.h.b16 %v7989
    %v8278 = vunpack.c.l.b16 %v7990
    %v8279 = vunpack.c.h.b16 %v7990
    %v8280 = vunpack.c.l.b16 %v7991
    %v8281 = vunpack.c.h.b16 %v7991
    %v8282 = vunpack.c.l.b16 %v7992
    %v8283 = vunpack.c.h.b16 %v7992
    %v8284 = vunpack.c.l.b16 %v7993
    %v8285 = vunpack.c.h.b16 %v7993
    %v8286 = vunpack.c.l.b16 %v7994
    %v8287 = vunpack.c.h.b16 %v7994
    %v8288 = vunpack.c.l.b16 %v7995
    %v8289 = vunpack.c.h.b16 %v7995
    %v8290 = vunpack.c.l.b16 %v7996
    %v8291 = vunpack.c.h.b16 %v7996
    %v8292 = vunpack.c.l.b16 %v7997
    %v8293 = vunpack.c.h.b16 %v7997
    %v8294 = vunpack.c.l.b16 %v7998
    %v8295 = vunpack.c.h.b16 %v7998
    %v8296 = vunpack.c.l.b16 %v7999
    %v8297 = vunpack.c.h.b16 %v7999
    %v8298 = vunpack.c.l.b16 %v8000
    %v8299 = vunpack.c.h.b16 %v8000
    %v8300 = vunpack.c.l.b16 %v8001
    %v8301 = vunpack.c.h.b16 %v8001
    %v8302 = vunpack.c.l.b16 %v8002
    %v8303 = vunpack.c.h.b16 %v8002
    %v8304 = vunpack.c.l.b16 %v8003
    %v8305 = vunpack.c.h.b16 %v8003
    %v8306 = vunpack.c.l.b16 %v8004
    %v8307 = vunpack.c.h.b16 %v8004
    %v8308 = vunpack.c.l.b16 %v8005
    %v8309 = vunpack.c.h.b16 %v8005
    %v8310 = vunpack.c.l.b16 %v8006
    %v8311 = vunpack.c.h.b16 %v8006
    %v8312 = vunpack.c.l.b16 %v8007
    %v8313 = vunpack.c.h.b16 %v8007
    %v8314 = vunpack.c.l.b16 %v8008
    %v8315 = vunpack.c.h.b16 %v8008
    %v8316 = vunpack.c.l.b16 %v8009
    %v8317 = vunpack.c.h.b16 %v8009
    %v8318 = vunpack.c.l.b16 %v8010
    %v8319 = vunpack.c.h.b16 %v8010
    %v8320 = vunpack.c.l.b16 %v8011
    %v8321 = vunpack.c.h.b16 %v8011
    %v8322 = vunpack.c.l.b16 %v8012
    %v8323 = vunpack.c.h.b16 %v8012
    %v8324 = vunpack.c.l.b16 %v8013
    %v8325 = vunpack.c.h.b16 %v8013
    %v8326 = vunpack.c.l.b16 %v8014
    %v8327 = vunpack.c.h.b16 %v8014
    %v8328 = vunpack.c.l.b16 %v8015
    %v8329 = vunpack.c.h.b16 %v8015
    %v8330 = vunpack.c.l.b16 %v8016
    %v8331 = vunpack.c.h.b16 %v8016
    %v8332 = vunpack.c.l.b16 %v8017
    %v8333 = vunpack.c.h.b16 %v8017
    %v8334 = vunpack.c.l.b16 %v8018
    %v8335 = vunpack.c.h.b16 %v8018
    %v8336 = vunpack.c.l.b16 %v8019
    %v8337 = vunpack.c.h.b16 %v8019
    %v8338 = vunpack.c.l.b16 %v8020
    %v8339 = vunpack.c.h.b16 %v8020
    %v8340 = vunpack.c.l.b16 %v8021
    %v8341 = vunpack.c.h.b16 %v8021
    %v8342 = vunpack.c.l.b16 %v8022
    %v8343 = vunpack.c.h.b16 %v8022
    %v8344 = vunpack.c.l.b16 %v8023
    %v8345 = vunpack.c.h.b16 %v8023
    %v8346 = vunpack.c.l.b16 %v8024
    %v8347 = vunpack.c.h.b16 %v8024
    %v8348 = vunpack.c.l.b16 %v8025
    %v8349 = vunpack.c.h.b16 %v8025
    %v8350 = vunpack.c.l.b16 %v8026
    %v8351 = vunpack.c.h.b16 %v8026
    %v8352 = vunpack.c.l.b16 %v8027
    %v8353 = vunpack.c.h.b16 %v8027
    %v8354 = vunpack.c.l.b16 %v8028
    %v8355 = vunpack.c.h.b16 %v8028
    %v8356 = vunpack.c.l.b16 %v8029
    %v8357 = vunpack.c.h.b16 %v8029
    %v8358 = vunpack.c.l.b16 %v8030
    %v8359 = vunpack.c.h.b16 %v8030
    %v8360 = vunpack.c.l.b16 %v8031
    %v8361 = vunpack.c.h.b16 %v8031
    %v8362 = vunpack.c.l.b16 %v8032
    %v8363 = vunpack.c.h.b16 %v8032
    %v8364 = vunpack.c.l.b16 %v8033
    %v8365 = vunpack.c.h.b16 %v8033
    %v8366 = vunpack.c.l.b16 %v8034
    %v8367 = vunpack.c.h.b16 %v8034
    %v8368 = vunpack.c.l.b16 %v8035
    %v8369 = vunpack.c.h.b16 %v8035
    %v8370 = vunpack.c.l.b16 %v8036
    %v8371 = vunpack.c.h.b16 %v8036
    %v8372 = vunpack.c.l.b16 %v8037
    %v8373 = vunpack.c.h.b16 %v8037
    %v8374 = vunpack.c.l.b16 %v8038
    %v8375 = vunpack.c.h.b16 %v8038
    %v8376 = vunpack.c.l.b16 %v8039
    %v8377 = vunpack.c.h.b16 %v8039
    %v8378 = vunpack.c.l.b16 %v8040
    %v8379 = vunpack.c.h.b16 %v8040
    %v8380 = vunpack.c.l.b16 %v8041
    %v8381 = vunpack.c.h.b16 %v8041
    %v8382 = vunpack.c.l.b16 %v8042
    %v8383 = vunpack.c.h.b16 %v8042
    %v8384 = vunpack.c.l.b16 %v8043
    %v8385 = vunpack.c.h.b16 %v8043
    %v8386 = vunpack.c.l.b16 %v8044
    %v8387 = vunpack.c.h.b16 %v8044
    %v8388 = vunpack.c.l.b16 %v8045
    %v8389 = vunpack.c.h.b16 %v8045
    %v8390 = vunpack.c.l.b16 %v8046
    %v8391 = vunpack.c.h.b16 %v8046
    %v8392 = vunpack.c.l.b16 %v8047
    %v8393 = vunpack.c.h.b16 %v8047
    %v8394 = vunpack.c.l.b16 %v8048
    %v8395 = vunpack.c.h.b16 %v8048
    %v8396 = vunpack.c.l.b16 %v8049
    %v8397 = vunpack.c.h.b16 %v8049
    %v8398 = vunpack.c.l.b16 %v8050
    %v8399 = vunpack.c.h.b16 %v8050
    %v8400 = vunpack.c.l.b16 %v8051
    %v8401 = vunpack.c.h.b16 %v8051
    %v8402 = vunpack.c.l.b16 %v8052
    %v8403 = vunpack.c.h.b16 %v8052
    %v8404 = vunpack.c.l.b16 %v8053
    %v8405 = vunpack.c.h.b16 %v8053
    %v8406 = vunpack.c.l.b16 %v8054
    %v8407 = vunpack.c.h.b16 %v8054
    %v8408 = vunpack.c.l.b16 %v8055
    %v8409 = vunpack.c.h.b16 %v8055
    %v8410 = vunpack.c.l.b16 %v8056
    %v8411 = vunpack.c.h.b16 %v8056
    %v8412 = vunpack.c.l.b16 %v8057
    %v8413 = vunpack.c.h.b16 %v8057
    %v8414 = vunpack.c.l.b16 %v8058
    %v8415 = vunpack.c.h.b16 %v8058
    %v8416 = vunpack.c.l.b16 %v8059
    %v8417 = vunpack.c.h.b16 %v8059
    %v8418 = vunpack.c.l.b16 %v8060
    %v8419 = vunpack.c.h.b16 %v8060
    %v8420 = vunpack.c.l.b16 %v8061
    %v8421 = vunpack.c.h.b16 %v8061
    %v8422 = vunpack.c.l.b16 %v8062
    %v8423 = vunpack.c.h.b16 %v8062
    %v8424 = vunpack.c.l.b16 %v8063
    %v8425 = vunpack.c.h.b16 %v8063
    %v8426 = vunpack.c.l.b16 %v8064
    %v8427 = vunpack.c.h.b16 %v8064
    %v8428 = vunpack.c.l.b16 %v8065
    %v8429 = vunpack.c.h.b16 %v8065
    %v8430 = vunpack.c.l.b16 %v8066
    %v8431 = vunpack.c.h.b16 %v8066
    %v8432 = vunpack.c.l.b16 %v8067
    %v8433 = vunpack.c.h.b16 %v8067
    %v8434 = vunpack.c.l.b16 %v8068
    %v8435 = vunpack.c.h.b16 %v8068
    %v8436 = vunpack.c.l.b16 %v8069
    %v8437 = vunpack.c.h.b16 %v8069
    %v8438 = vunpack.c.l.b16 %v8070
    %v8439 = vunpack.c.h.b16 %v8070
    %v8440 = vunpack.c.l.b16 %v8071
    %v8441 = vunpack.c.h.b16 %v8071
    %v8442 = vunpack.c.l.b16 %v8072
    %v8443 = vunpack.c.h.b16 %v8072
    %v8444 = vunpack.c.l.b16 %v8073
    %v8445 = vunpack.c.h.b16 %v8073
    %v8446 = vunpack.c.l.b16 %v8074
    %v8447 = vunpack.c.h.b16 %v8074
    %v8448 = vunpack.c.l.b16 %v8075
    %v8449 = vunpack.c.h.b16 %v8075
    %v8450 = vunpack.c.l.b16 %v8076
    %v8451 = vunpack.c.h.b16 %v8076
    %v8452 = vunpack.c.l.b16 %v8077
    %v8453 = vunpack.c.h.b16 %v8077
    %v8454 = vunpack.c.l.b16 %v8078
    %v8455 = vunpack.c.h.b16 %v8078
    %v8456 = vunpack.c.l.b16 %v8079
    %v8457 = vunpack.c.h.b16 %v8079
    %v8458 = vunpack.c.l.b16 %v8080
    %v8459 = vunpack.c.h.b16 %v8080
    %v8460 = vunpack.c.l.b16 %v8081
    %v8461 = vunpack.c.h.b16 %v8081
    %v8462 = vunpack.c.l.b16 %v8082
    %v8463 = vunpack.c.h.b16 %v8082
    %v8464 = vunpack.c.l.b16 %v8083
    %v8465 = vunpack.c.h.b16 %v8083
    %v8466 = vunpack.c.l.b16 %v8084
    %v8467 = vunpack.c.h.b16 %v8084
    %v8468 = vunpack.c.l.b16 %v8085
    %v8469 = vunpack.c.h.b16 %v8085
    %v8470 = vunpack.c.l.b16 %v8086
    %v8471 = vunpack.c.h.b16 %v8086
    %v8472 = vunpack.c.l.b16 %v8087
    %v8473 = vunpack.c.h.b16 %v8087
    %v8474 = vunpack.c.l.b16 %v8088
    %v8475 = vunpack.c.h.b16 %v8088
    %v8476 = vunpack.c.l.b16 %v8089
    %v8477 = vunpack.c.h.b16 %v8089
    %v8478 = vunpack.c.l.b16 %v8090
    %v8479 = vunpack.c.h.b16 %v8090
    %v8480 = vunpack.c.l.b16 %v8091
    %v8481 = vunpack.c.h.b16 %v8091
    %v8482 = vunpack.c.l.b16 %v8092
    %v8483 = vunpack.c.h.b16 %v8092
    %v8484 = vunpack.c.l.b16 %v8093
    %v8485 = vunpack.c.h.b16 %v8093
    %v8486 = vunpack.c.l.b16 %v8094
    %v8487 = vunpack.c.h.b16 %v8094
    %v8488 = vunpack.c.l.b16 %v8095
    %v8489 = vunpack.c.h.b16 %v8095
    %v8490 = vunpack.c.l.b16 %v8096
    %v8491 = vunpack.c.h.b16 %v8096
    %v8492 = vunpack.c.l.b16 %v8097
    %v8493 = vunpack.c.h.b16 %v8097
    %v8494 = vunpack.c.l.b16 %v8098
    %v8495 = vunpack.c.h.b16 %v8098
    %v8496 = vunpack.c.l.b16 %v8099
    %v8497 = vunpack.c.h.b16 %v8099
    %v8498 = vunpack.c.l.b16 %v8100
    %v8499 = vunpack.c.h.b16 %v8100
    %v8500 = vunpack.c.l.b16 %v8101
    %v8501 = vunpack.c.h.b16 %v8101
    %v8502 = vunpack.c.l.b16 %v8102
    %v8503 = vunpack.c.h.b16 %v8102
    %v8504 = vunpack.c.l.b16 %v8103
    %v8505 = vunpack.c.h.b16 %v8103
    %v8506 = vunpack.c.l.b16 %v8104
    %v8507 = vunpack.c.h.b16 %v8104
    %v8508 = vunpack.c.l.b16 %v8105
    %v8509 = vunpack.c.h.b16 %v8105
    %v8510 = vunpack.c.l.b16 %v8106
    %v8511 = vunpack.c.h.b16 %v8106
    %v8512 = vunpack.c.l.b16 %v8107
    %v8513 = vunpack.c.h.b16 %v8107
    %v8514 = vpack.c.b16 %v8262, %v8258
    %v8515 = vpack.c.b16 %v8263, %v8259
    %v8516 = vpack.c.b16 %v8264, %v8260
    %v8517 = vpack.c.b16 %v8265, %v8261
    %v8518 = vpack.c.b16 %v8270, %v8266
    %v8519 = vpack.c.b16 %v8271, %v8267
    %v8520 = vpack.c.b16 %v8272, %v8268
    %v8521 = vpack.c.b16 %v8273, %v8269
    %v8522 = vpack.c.b16 %v8278, %v8274
    %v8523 = vpack.c.b16 %v8279, %v8275
    %v8524 = vpack.c.b16 %v8280, %v8276
    %v8525 = vpack.c.b16 %v8281, %v8277
    %v8526 = vpack.c.b16 %v8286, %v8282
    %v8527 = vpack.c.b16 %v8287, %v8283
    %v8528 = vpack.c.b16 %v8288, %v8284
    %v8529 = vpack.c.b16 %v8289, %v8285
    %v8530 = vpack.c.b16 %v8294, %v8290
    %v8531 = vpack.c.b16 %v8295, %v8291
    %v8532 = vpack.c.b16 %v8296, %v8292
    %v8533 = vpack.c.b16 %v8297, %v8293
    %v8534 = vpack.c.b16 %v8302, %v8298
    %v8535 = vpack.c.b16 %v8303, %v8299
    %v8536 = vpack.c.b16 %v8304, %v8300
    %v8537 = vpack.c.b16 %v8305, %v8301
    %v8538 = vpack.c.b16 %v8310, %v8306
    %v8539 = vpack.c.b16 %v8311, %v8307
    %v8540 = vpack.c.b16 %v8312, %v8308
    %v8541 = vpack.c.b16 %v8313, %v8309
    %v8542 = vpack.c.b16 %v8318, %v8314
    %v8543 = vpack.c.b16 %v8319, %v8315
    %v8544 = vpack.c.b16 %v8320, %v8316
    %v8545 = vpack.c.b16 %v8321, %v8317
    %v8546 = vpack.c.b16 %v8326, %v8322
    %v8547 = vpack.c.b16 %v8327, %v8323
    %v8548 = vpack.c.b16 %v8328, %v8324
    %v8549 = vpack.c.b16 %v8329, %v8325
    %v8550 = vpack.c.b16 %v8334, %v8330
    %v8551 = vpack.c.b16 %v8335, %v8331
    %v8552 = vpack.c.b16 %v8336, %v8332
    %v8553 = vpack.c.b16 %v8337, %v8333
    %v8554 = vpack.c.b16 %v8342, %v8338
    %v8555 = vpack.c.b16 %v8343, %v8339
    %v8556 = vpack.c.b16 %v8344, %v8340
    %v8557 = vpack.c.b16 %v8345, %v8341
    %v8558 = vpack.c.b16 %v8350, %v8346
    %v8559 = vpack.c.b16 %v8351, %v8347
    %v8560 = vpack.c.b16 %v8352, %v8348
    %v8561 = vpack.c.b16 %v8353, %v8349
    %v8562 = vpack.c.b16 %v8358, %v8354
    %v8563 = vpack.c.b16 %v8359, %v8355
    %v8564 = vpack.c.b16 %v8360, %v8356
    %v8565 = vpack.c.b16 %v8361, %v8357
    %v8566 = vpack.c.b16 %v8366, %v8362
    %v8567 = vpack.c.b16 %v8367, %v8363
    %v8568 = vpack.c.b16 %v8368, %v8364
    %v8569 = vpack.c.b16 %v8369, %v8365
    %v8570 = vpack.c.b16 %v8374, %v8370
    %v8571 = vpack.c.b16 %v8375, %v8371
    %v8572 = vpack.c.b16 %v8376, %v8372
    %v8573 = vpack.c.b16 %v8377, %v8373
    %v8574 = vpack.c.b16 %v8382, %v8378
    %v8575 = vpack.c.b16 %v8383, %v8379
    %v8576 = vpack.c.b16 %v8384, %v8380
    %v8577 = vpack.c.b16 %v8385, %v8381
    %v8578 = vpack.c.b16 %v8390, %v8386
    %v8579 = vpack.c.b16 %v8391, %v8387
    %v8580 = vpack.c.b16 %v8392, %v8388
    %v8581 = vpack.c.b16 %v8393, %v8389
    %v8582 = vpack.c.b16 %v8398, %v8394
    %v8583 = vpack.c.b16 %v8399, %v8395
    %v8584 = vpack.c.b16 %v8400, %v8396
    %v8585 = vpack.c.b16 %v8401, %v8397
    %v8586 = vpack.c.b16 %v8406, %v8402
    %v8587 = vpack.c.b16 %v8407, %v8403
    %v8588 = vpack.c.b16 %v8408, %v8404
    %v8589 = vpack.c.b16 %v8409, %v8405
    %v8590 = vpack.c.b16 %v8414, %v8410
    %v8591 = vpack.c.b16 %v8415, %v8411
    %v8592 = vpack.c.b16 %v8416, %v8412
    %v8593 = vpack.c.b16 %v8417, %v8413
    %v8594 = vpack.c.b16 %v8422, %v8418
    %v8595 = vpack.c.b16 %v8423, %v8419
    %v8596 = vpack.c.b16 %v8424, %v8420
    %v8597 = vpack.c.b16 %v8425, %v8421
    %v8598 = vpack.c.b16 %v8430, %v8426
    %v8599 = vpack.c.b16 %v8431, %v8427
    %v8600 = vpack.c.b16 %v8432, %v8428
    %v8601 = vpack.c.b16 %v8433, %v8429
    %v8602 = vpack.c.b16 %v8438, %v8434
    %v8603 = vpack.c.b16 %v8439, %v8435
    %v8604 = vpack.c.b16 %v8440, %v8436
    %v8605 = vpack.c.b16 %v8441, %v8437
    %v8606 = vpack.c.b16 %v8446, %v8442
    %v8607 = vpack.c.b16 %v8447, %v8443
    %v8608 = vpack.c.b16 %v8448, %v8444
    %v8609 = vpack.c.b16 %v8449, %v8445
    %v8610 = vpack.c.b16 %v8454, %v8450
    %v8611 = vpack.c.b16 %v8455, %v8451
    %v8612 = vpack.c.b16 %v8456, %v8452
    %v8613 = vpack.c.b16 %v8457, %v8453
    %v8614 = vpack.c.b16 %v8462, %v8458
    %v8615 = vpack.c.b16 %v8463, %v8459
    %v8616 = vpack.c.b16 %v8464, %v8460
    %v8617 = vpack.c.b16 %v8465, %v8461
    %v8618 = vpack.c.b16 %v8470, %v8466
    %v8619 = vpack.c.b16 %v8471, %v8467
    %v8620 = vpack.c.b16 %v8472, %v8468
    %v8621 = vpack.c.b16 %v8473, %v8469
    %v8622 = vpack.c.b16 %v8478, %v8474
    %v8623 = vpack.c.b16 %v8479, %v8475
    %v8624 = vpack.c.b16 %v8480, %v8476
    %v8625 = vpack.c.b16 %v8481, %v8477
    %v8626 = vpack.c.b16 %v8486, %v8482
    %v8627 = vpack.c.b16 %v8487, %v8483
    %v8628 = vpack.c.b16 %v8488, %v8484
    %v8629 = vpack.c.b16 %v8489, %v8485
    %v8630 = vpack.c.b16 %v8494, %v8490
    %v8631 = vpack.c.b16 %v8495, %v8491
    %v8632 = vpack.c.b16 %v8496, %v8492
    %v8633 = vpack.c.b16 %v8497, %v8493
    %v8634 = vpack.c.b16 %v8502, %v8498
    %v8635 = vpack.c.b16 %v8503, %v8499
    %v8636 = vpack.c.b16 %v8504, %v8500
    %v8637 = vpack.c.b16 %v8505, %v8501
    %v8638 = vpack.c.b16 %v8510, %v8506
    %v8639 = vpack.c.b16 %v8511, %v8507
    %v8640 = vpack.c.b16 %v8512, %v8508
    %v8641 = vpack.c.b16 %v8513, %v8509
    %8770 = vmatprep.subr.bf16.mxu0 %v8515
    %8771 = vmatpush1.bf16.msra.mxu0 %v8514
    %8772 = vmatprep.subr.bf16.mxu0 %v8519
    %8773 = vmatpush1.bf16.msra.mxu0 %v8518
    %8774 = vmatprep.subr.bf16.mxu0 %v8523
    %8775 = vmatpush1.bf16.msra.mxu0 %v8522
    %8776 = vmatprep.subr.bf16.mxu0 %v8527
    %8777 = vmatpush1.bf16.msra.mxu0 %v8526
    %8778 = vmatprep.subr.bf16.mxu0 %v8531
    %8779 = vmatpush1.bf16.msra.mxu0 %v8530
    %8780 = vmatprep.subr.bf16.mxu0 %v8535
    %8781 = vmatpush1.bf16.msra.mxu0 %v8534
    %8782 = vmatprep.subr.bf16.mxu0 %v8539
    %8783 = vmatpush1.bf16.msra.mxu0 %v8538
    %8784 = vmatprep.subr.bf16.mxu0 %v8543
    %8785 = vmatpush1.bf16.msra.mxu0 %v8542
    %8786 = vmatprep.subr.bf16.mxu0 %v8547
    %8787 = vmatpush1.bf16.msra.mxu0 %v8546
    %8788 = vmatprep.subr.bf16.mxu0 %v8551
    %8789 = vmatpush1.bf16.msra.mxu0 %v8550
    %8790 = vmatprep.subr.bf16.mxu0 %v8555
    %8791 = vmatpush1.bf16.msra.mxu0 %v8554
    %8792 = vmatprep.subr.bf16.mxu0 %v8559
    %8793 = vmatpush1.bf16.msra.mxu0 %v8558
    %8794 = vmatprep.subr.bf16.mxu0 %v8563
    %8795 = vmatpush1.bf16.msra.mxu0 %v8562
    %8796 = vmatprep.subr.bf16.mxu0 %v8567
    %8797 = vmatpush1.bf16.msra.mxu0 %v8566
    %8798 = vmatprep.subr.bf16.mxu0 %v8571
    %8799 = vmatpush1.bf16.msra.mxu0 %v8570
    %8800 = vmatprep.subr.bf16.mxu0 %v8575
    %8801 = vmatpush1.bf16.msra.mxu0 %v8574
    %8802 = vmatprep.mubr.bf16.mxu0 %v7977
    %8803 = vmatmul.mubr.bf16.gmra.mrb[0].mxu0 %v7976
    %v8804 = vpop.f32.mrb[0].mxu0
    %v8805 = vadd.f32 %v8113, %v8804
    %v8806 = vpop.f32.mrb[0].mxu0
    %v8807 = vadd.f32 %v8117, %v8806
    %v8808 = vpop.f32.mrb[0].mxu0
    %v8809 = vpop.f32.mrb[0].mxu0
    %8810 = vdwg.mxu0
    %8811 = vmatprep.subr.bf16.mxu0 %v8579
    %8812 = vmatpush1.bf16.msra.mxu0 %v8578
    %8813 = vmatprep.subr.bf16.mxu0 %v8583
    %8814 = vmatpush1.bf16.msra.mxu0 %v8582
    %8815 = vmatprep.subr.bf16.mxu0 %v8587
    %8816 = vmatpush1.bf16.msra.mxu0 %v8586
    %8817 = vmatprep.subr.bf16.mxu0 %v8591
    %8818 = vmatpush1.bf16.msra.mxu0 %v8590
    %8819 = vmatprep.subr.bf16.mxu0 %v8595
    %8820 = vmatpush1.bf16.msra.mxu0 %v8594
    %8821 = vmatprep.subr.bf16.mxu0 %v8599
    %8822 = vmatpush1.bf16.msra.mxu0 %v8598
    %8823 = vmatprep.subr.bf16.mxu0 %v8603
    %8824 = vmatpush1.bf16.msra.mxu0 %v8602
    %8825 = vmatprep.subr.bf16.mxu0 %v8607
    %8826 = vmatpush1.bf16.msra.mxu0 %v8606
    %8827 = vmatprep.subr.bf16.mxu0 %v8611
    %8828 = vmatpush1.bf16.msra.mxu0 %v8610
    %8829 = vmatprep.subr.bf16.mxu0 %v8615
    %8830 = vmatpush1.bf16.msra.mxu0 %v8614
    %8831 = vmatprep.subr.bf16.mxu0 %v8619
    %8832 = vmatpush1.bf16.msra.mxu0 %v8618
    %8833 = vmatprep.subr.bf16.mxu0 %v8623
    %8834 = vmatpush1.bf16.msra.mxu0 %v8622
    %8835 = vmatprep.subr.bf16.mxu0 %v8627
    %8836 = vmatpush1.bf16.msra.mxu0 %v8626
    %8837 = vmatprep.subr.bf16.mxu0 %v8631
    %8838 = vmatpush1.bf16.msra.mxu0 %v8630
    %8839 = vmatprep.subr.bf16.mxu0 %v8635
    %8840 = vmatpush1.bf16.msra.mxu0 %v8634
    %8841 = vmatprep.subr.bf16.mxu0 %v8639
    %8842 = vmatpush1.bf16.msra.mxu0 %v8638
    %8843 = vmatprep.mubr.bf16.mxu0 %v7979
    %8844 = vmatmul.mubr.bf16.gmra.mrb[0].mxu0 %v7978
    %v8845 = vpop.f32.mrb[0].mxu0
    %v8846 = vadd.f32 %v8805, %v8845
    %v8847 = vpop.f32.mrb[0].mxu0
    %v8848 = vadd.f32 %v8807, %v8847
    %v8849 = vpop.f32.mrb[0].mxu0
    %v8850 = vpop.f32.mrb[0].mxu0
    %8851 = vdwg.mxu0
    %8852 = vmatprep.subr.bf16.mxu0 %v8517
    %8853 = vmatpush1.bf16.msra.mxu0 %v8516
    %8854 = vmatprep.subr.bf16.mxu0 %v8521
    %8855 = vmatpush1.bf16.msra.mxu0 %v8520
    %8856 = vmatprep.subr.bf16.mxu0 %v8525
    %8857 = vmatpush1.bf16.msra.mxu0 %v8524
    %8858 = vmatprep.subr.bf16.mxu0 %v8529
    %8859 = vmatpush1.bf16.msra.mxu0 %v8528
    %8860 = vmatprep.subr.bf16.mxu0 %v8533
    %8861 = vmatpush1.bf16.msra.mxu0 %v8532
    %8862 = vmatprep.subr.bf16.mxu0 %v8537
    %8863 = vmatpush1.bf16.msra.mxu0 %v8536
    %8864 = vmatprep.subr.bf16.mxu0 %v8541
    %8865 = vmatpush1.bf16.msra.mxu0 %v8540
    %8866 = vmatprep.subr.bf16.mxu0 %v8545
    %8867 = vmatpush1.bf16.msra.mxu0 %v8544
    %8868 = vmatprep.subr.bf16.mxu0 %v8549
    %8869 = vmatpush1.bf16.msra.mxu0 %v8548
    %8870 = vmatprep.subr.bf16.mxu0 %v8553
    %8871 = vmatpush1.bf16.msra.mxu0 %v8552
    %8872 = vmatprep.subr.bf16.mxu0 %v8557
    %8873 = vmatpush1.bf16.msra.mxu0 %v8556
    %8874 = vmatprep.subr.bf16.mxu0 %v8561
    %8875 = vmatpush1.bf16.msra.mxu0 %v8560
    %8876 = vmatprep.subr.bf16.mxu0 %v8565
    %8877 = vmatpush1.bf16.msra.mxu0 %v8564
    %8878 = vmatprep.subr.bf16.mxu0 %v8569
    %8879 = vmatpush1.bf16.msra.mxu0 %v8568
    %8880 = vmatprep.subr.bf16.mxu0 %v8573
    %8881 = vmatpush1.bf16.msra.mxu0 %v8572
    %8882 = vmatprep.subr.bf16.mxu0 %v8577
    %8883 = vmatpush1.bf16.msra.mxu0 %v8576
    %8884 = vmatprep.mubr.bf16.mxu0 %v7977
    %8885 = vmatmul.mubr.bf16.gmra.mrb[0].mxu0 %v7976
    %v8886 = vpop.f32.mrb[0].mxu0
    %v8887 = vadd.f32 %v8121, %v8886
    %v8888 = vpop.f32.mrb[0].mxu0
    %v8889 = vadd.f32 %v8125, %v8888
    %v8890 = vpop.f32.mrb[0].mxu0
    %v8891 = vpop.f32.mrb[0].mxu0
    %8892 = vdwg.mxu0
    %8893 = vmatprep.subr.bf16.mxu0 %v8581
    %8894 = vmatpush1.bf16.msra.mxu0 %v8580
    %8895 = vmatprep.subr.bf16.mxu0 %v8585
    %8896 = vmatpush1.bf16.msra.mxu0 %v8584
    %8897 = vmatprep.subr.bf16.mxu0 %v8589
    %8898 = vmatpush1.bf16.msra.mxu0 %v8588
    %8899 = vmatprep.subr.bf16.mxu0 %v8593
    %8900 = vmatpush1.bf16.msra.mxu0 %v8592
    %8901 = vmatprep.subr.bf16.mxu0 %v8597
    %8902 = vmatpush1.bf16.msra.mxu0 %v8596
    %8903 = vmatprep.subr.bf16.mxu0 %v8601
    %8904 = vmatpush1.bf16.msra.mxu0 %v8600
    %8905 = vmatprep.subr.bf16.mxu0 %v8605
    %8906 = vmatpush1.bf16.msra.mxu0 %v8604
    %8907 = vmatprep.subr.bf16.mxu0 %v8609
    %8908 = vmatpush1.bf16.msra.mxu0 %v8608
    %8909 = vmatprep.subr.bf16.mxu0 %v8613
    %8910 = vmatpush1.bf16.msra.mxu0 %v8612
    %8911 = vmatprep.subr.bf16.mxu0 %v8617
    %8912 = vmatpush1.bf16.msra.mxu0 %v8616
    %8913 = vmatprep.subr.bf16.mxu0 %v8621
    %8914 = vmatpush1.bf16.msra.mxu0 %v8620
    %8915 = vmatprep.subr.bf16.mxu0 %v8625
    %8916 = vmatpush1.bf16.msra.mxu0 %v8624
    %8917 = vmatprep.subr.bf16.mxu0 %v8629
    %8918 = vmatpush1.bf16.msra.mxu0 %v8628
    %8919 = vmatprep.subr.bf16.mxu0 %v8633
    %8920 = vmatpush1.bf16.msra.mxu0 %v8632
    %8921 = vmatprep.subr.bf16.mxu0 %v8637
    %8922 = vmatpush1.bf16.msra.mxu0 %v8636
    %8923 = vmatprep.subr.bf16.mxu0 %v8641
    %8924 = vmatpush1.bf16.msra.mxu0 %v8640
    %8925 = vmatprep.mubr.bf16.mxu0 %v7979
    %8926 = vmatmul.mubr.bf16.gmra.mrb[0].mxu0 %v7978
    %v8927 = vpop.f32.mrb[0].mxu0
    %v8928 = vadd.f32 %v8887, %v8927
    %v8929 = vpop.f32.mrb[0].mxu0
    %v8930 = vadd.f32 %v8889, %v8929
    %v8931 = vpop.f32.mrb[0].mxu0
    %v8932 = vpop.f32.mrb[0].mxu0
    %8933 = vdwg.mxu0
    %v8934 = vmax.f32 %v8846, 0.0
    %v8935 = vmax.f32 %v8848, 0.0
    %v8936 = vmax.f32 %v8928, 0.0
    %v8937 = vmax.f32 %v8930, 0.0
    %v8938 = vpack.c.bf16 %v8934, %v8934
    %v8939 = vpack.c.bf16 %v8935, %v8935
    %v8940 = vpack.c.bf16 %v8936, %v8936
    %v8941 = vpack.c.bf16 %v8937, %v8937
    %v8942 = vld [vmem:[#allocation12] sm:$0xff]
    %v8943 = vld [vmem:[#allocation12 + $0x8] sm:$0xff]
    %v8944 = vld [vmem:[#allocation12 + $0x10] sm:$0xff]
    %v8945 = vld [vmem:[#allocation12 + $0x18] sm:$0xff]
    %v8946 = vld [vmem:[#allocation12 + $0x20] sm:$0xff]
    %v8947 = vld [vmem:[#allocation12 + $0x28] sm:$0xff]
    %v8948 = vld [vmem:[#allocation12 + $0x30] sm:$0xff]
    %v8949 = vld [vmem:[#allocation12 + $0x38] sm:$0xff]
    %v8950 = vld [vmem:[#allocation12 + $0x40] sm:$0xff]
    %v8951 = vld [vmem:[#allocation12 + $0x48] sm:$0xff]
    %v8952 = vld [vmem:[#allocation12 + $0x50] sm:$0xff]
    %v8953 = vld [vmem:[#allocation12 + $0x58] sm:$0xff]
    %v8954 = vld [vmem:[#allocation12 + $0x60] sm:$0xff]
    %v8955 = vld [vmem:[#allocation12 + $0x68] sm:$0xff]
    %v8956 = vld [vmem:[#allocation12 + $0x70] sm:$0xff]
    %v8957 = vld [vmem:[#allocation12 + $0x78] sm:$0xff]
    %v8958 = vld [vmem:[#allocation12 + $0x80] sm:$0xff]
    %v8959 = vld [vmem:[#allocation12 + $0x88] sm:$0xff]
    %v8960 = vld [vmem:[#allocation12 + $0x90] sm:$0xff]
    %v8961 = vld [vmem:[#allocation12 + $0x98] sm:$0xff]
    %v8962 = vld [vmem:[#allocation12 + $0xa0] sm:$0xff]
    %v8963 = vld [vmem:[#allocation12 + $0xa8] sm:$0xff]
    %v8964 = vld [vmem:[#allocation12 + $0xb0] sm:$0xff]
    %v8965 = vld [vmem:[#allocation12 + $0xb8] sm:$0xff]
    %v8966 = vld [vmem:[#allocation12 + $0xc0] sm:$0xff]
    %v8967 = vld [vmem:[#allocation12 + $0xc8] sm:$0xff]
    %v8968 = vld [vmem:[#allocation12 + $0xd0] sm:$0xff]
    %v8969 = vld [vmem:[#allocation12 + $0xd8] sm:$0xff]
    %v8970 = vld [vmem:[#allocation12 + $0xe0] sm:$0xff]
    %v8971 = vld [vmem:[#allocation12 + $0xe8] sm:$0xff]
    %v8972 = vld [vmem:[#allocation12 + $0xf0] sm:$0xff]
    %v8973 = vld [vmem:[#allocation12 + $0xf8] sm:$0xff]
    %v8974 = vld [vmem:[#allocation12 + $0x100] sm:$0xff]
    %v8975 = vld [vmem:[#allocation12 + $0x108] sm:$0xff]
    %v8976 = vld [vmem:[#allocation12 + $0x110] sm:$0xff]
    %v8977 = vld [vmem:[#allocation12 + $0x118] sm:$0xff]
    %v8978 = vld [vmem:[#allocation12 + $0x120] sm:$0xff]
    %v8979 = vld [vmem:[#allocation12 + $0x128] sm:$0xff]
    %v8980 = vld [vmem:[#allocation12 + $0x130] sm:$0xff]
    %v8981 = vld [vmem:[#allocation12 + $0x138] sm:$0xff]
    %v8982 = vld [vmem:[#allocation12 + $0x140] sm:$0xff]
    %v8983 = vld [vmem:[#allocation12 + $0x148] sm:$0xff]
    %v8984 = vld [vmem:[#allocation12 + $0x150] sm:$0xff]
    %v8985 = vld [vmem:[#allocation12 + $0x158] sm:$0xff]
    %v8986 = vld [vmem:[#allocation12 + $0x160] sm:$0xff]
    %v8987 = vld [vmem:[#allocation12 + $0x168] sm:$0xff]
    %v8988 = vld [vmem:[#allocation12 + $0x170] sm:$0xff]
    %v8989 = vld [vmem:[#allocation12 + $0x178] sm:$0xff]
    %v8990 = vld [vmem:[#allocation12 + $0x180] sm:$0xff]
    %v8991 = vld [vmem:[#allocation12 + $0x188] sm:$0xff]
    %v8992 = vld [vmem:[#allocation12 + $0x190] sm:$0xff]
    %v8993 = vld [vmem:[#allocation12 + $0x198] sm:$0xff]
    %v8994 = vld [vmem:[#allocation12 + $0x1a0] sm:$0xff]
    %v8995 = vld [vmem:[#allocation12 + $0x1a8] sm:$0xff]
    %v8996 = vld [vmem:[#allocation12 + $0x1b0] sm:$0xff]
    %v8997 = vld [vmem:[#allocation12 + $0x1b8] sm:$0xff]
    %v8998 = vld [vmem:[#allocation12 + $0x1c0] sm:$0xff]
    %v8999 = vld [vmem:[#allocation12 + $0x1c8] sm:$0xff]
    %v9000 = vld [vmem:[#allocation12 + $0x1d0] sm:$0xff]
    %v9001 = vld [vmem:[#allocation12 + $0x1d8] sm:$0xff]
    %v9002 = vld [vmem:[#allocation12 + $0x1e0] sm:$0xff]
    %v9003 = vld [vmem:[#allocation12 + $0x1e8] sm:$0xff]
    %v9004 = vld [vmem:[#allocation12 + $0x1f0] sm:$0xff]
    %v9005 = vld [vmem:[#allocation12 + $0x1f8] sm:$0xff]
    %v9006 = vld [vmem:[#allocation12 + $0x200] sm:$0xff]
    %v9007 = vld [vmem:[#allocation12 + $0x208] sm:$0xff]
    %v9008 = vld [vmem:[#allocation12 + $0x210] sm:$0xff]
    %v9009 = vld [vmem:[#allocation12 + $0x218] sm:$0xff]
    %v9010 = vld [vmem:[#allocation12 + $0x220] sm:$0xff]
    %v9011 = vld [vmem:[#allocation12 + $0x228] sm:$0xff]
    %v9012 = vld [vmem:[#allocation12 + $0x230] sm:$0xff]
    %v9013 = vld [vmem:[#allocation12 + $0x238] sm:$0xff]
    %v9014 = vld [vmem:[#allocation12 + $0x240] sm:$0xff]
    %v9015 = vld [vmem:[#allocation12 + $0x248] sm:$0xff]
    %v9016 = vld [vmem:[#allocation12 + $0x250] sm:$0xff]
    %v9017 = vld [vmem:[#allocation12 + $0x258] sm:$0xff]
    %v9018 = vld [vmem:[#allocation12 + $0x260] sm:$0xff]
    %v9019 = vld [vmem:[#allocation12 + $0x268] sm:$0xff]
    %v9020 = vld [vmem:[#allocation12 + $0x270] sm:$0xff]
    %v9021 = vld [vmem:[#allocation12 + $0x278] sm:$0xff]
    %v9022 = vld [vmem:[#allocation12 + $0x280] sm:$0xff]
    %v9023 = vld [vmem:[#allocation12 + $0x288] sm:$0xff]
    %v9024 = vld [vmem:[#allocation12 + $0x290] sm:$0xff]
    %v9025 = vld [vmem:[#allocation12 + $0x298] sm:$0xff]
    %v9026 = vld [vmem:[#allocation12 + $0x2a0] sm:$0xff]
    %v9027 = vld [vmem:[#allocation12 + $0x2a8] sm:$0xff]
    %v9028 = vld [vmem:[#allocation12 + $0x2b0] sm:$0xff]
    %v9029 = vld [vmem:[#allocation12 + $0x2b8] sm:$0xff]
    %v9030 = vld [vmem:[#allocation12 + $0x2c0] sm:$0xff]
    %v9031 = vld [vmem:[#allocation12 + $0x2c8] sm:$0xff]
    %v9032 = vld [vmem:[#allocation12 + $0x2d0] sm:$0xff]
    %v9033 = vld [vmem:[#allocation12 + $0x2d8] sm:$0xff]
    %v9034 = vld [vmem:[#allocation12 + $0x2e0] sm:$0xff]
    %v9035 = vld [vmem:[#allocation12 + $0x2e8] sm:$0xff]
    %v9036 = vld [vmem:[#allocation12 + $0x2f0] sm:$0xff]
    %v9037 = vld [vmem:[#allocation12 + $0x2f8] sm:$0xff]
    %v9038 = vld [vmem:[#allocation12 + $0x300] sm:$0xff]
    %v9039 = vld [vmem:[#allocation12 + $0x308] sm:$0xff]
    %v9040 = vld [vmem:[#allocation12 + $0x310] sm:$0xff]
    %v9041 = vld [vmem:[#allocation12 + $0x318] sm:$0xff]
    %v9042 = vld [vmem:[#allocation12 + $0x320] sm:$0xff]
    %v9043 = vld [vmem:[#allocation12 + $0x328] sm:$0xff]
    %v9044 = vld [vmem:[#allocation12 + $0x330] sm:$0xff]
    %v9045 = vld [vmem:[#allocation12 + $0x338] sm:$0xff]
    %v9046 = vld [vmem:[#allocation12 + $0x340] sm:$0xff]
    %v9047 = vld [vmem:[#allocation12 + $0x348] sm:$0xff]
    %v9048 = vld [vmem:[#allocation12 + $0x350] sm:$0xff]
    %v9049 = vld [vmem:[#allocation12 + $0x358] sm:$0xff]
    %v9050 = vld [vmem:[#allocation12 + $0x360] sm:$0xff]
    %v9051 = vld [vmem:[#allocation12 + $0x368] sm:$0xff]
    %v9052 = vld [vmem:[#allocation12 + $0x370] sm:$0xff]
    %v9053 = vld [vmem:[#allocation12 + $0x378] sm:$0xff]
    %v9054 = vld [vmem:[#allocation12 + $0x380] sm:$0xff]
    %v9055 = vld [vmem:[#allocation12 + $0x388] sm:$0xff]
    %v9056 = vld [vmem:[#allocation12 + $0x390] sm:$0xff]
    %v9057 = vld [vmem:[#allocation12 + $0x398] sm:$0xff]
    %v9058 = vld [vmem:[#allocation12 + $0x3a0] sm:$0xff]
    %v9059 = vld [vmem:[#allocation12 + $0x3a8] sm:$0xff]
    %v9060 = vld [vmem:[#allocation12 + $0x3b0] sm:$0xff]
    %v9061 = vld [vmem:[#allocation12 + $0x3b8] sm:$0xff]
    %v9062 = vld [vmem:[#allocation12 + $0x3c0] sm:$0xff]
    %v9063 = vld [vmem:[#allocation12 + $0x3c8] sm:$0xff]
    %v9064 = vld [vmem:[#allocation12 + $0x3d0] sm:$0xff]
    %v9065 = vld [vmem:[#allocation12 + $0x3d8] sm:$0xff]
    %v9066 = vld [vmem:[#allocation12 + $0x3e0] sm:$0xff]
    %v9067 = vld [vmem:[#allocation12 + $0x3e8] sm:$0xff]
    %v9068 = vld [vmem:[#allocation12 + $0x3f0] sm:$0xff]
    %v9069 = vld [vmem:[#allocation12 + $0x3f8] sm:$0xff]
    %v9070 = vld [vmem:[#allocation14] sm:$0xf]
    %v9072 = vlaneseq
    %v9073 = vshrl.u32 %v9072, 7
    %v9074 = vsub.s32 0, %v9073
    %v9075 = vrot.slane %v9070, %v9074
    %v9076 = vlaneseq
    %v9077 = vshrl.u32 %v9076, 7
    %v9078 = vsub.s32 1, %v9077
    %v9079 = vrot.slane %v9070, %v9078
    %v9080 = vlaneseq
    %v9081 = vshrl.u32 %v9080, 7
    %v9082 = vsub.s32 2, %v9081
    %v9083 = vrot.slane %v9070, %v9082
    %v9084 = vlaneseq
    %v9085 = vshrl.u32 %v9084, 7
    %v9086 = vsub.s32 3, %v9085
    %v9087 = vrot.slane %v9070, %v9086
    %v9220 = vunpack.c.l.b16 %v8942
    %v9221 = vunpack.c.h.b16 %v8942
    %v9222 = vunpack.c.l.b16 %v8943
    %v9223 = vunpack.c.h.b16 %v8943
    %v9224 = vunpack.c.l.b16 %v8944
    %v9225 = vunpack.c.h.b16 %v8944
    %v9226 = vunpack.c.l.b16 %v8945
    %v9227 = vunpack.c.h.b16 %v8945
    %v9228 = vunpack.c.l.b16 %v8946
    %v9229 = vunpack.c.h.b16 %v8946
    %v9230 = vunpack.c.l.b16 %v8947
    %v9231 = vunpack.c.h.b16 %v8947
    %v9232 = vunpack.c.l.b16 %v8948
    %v9233 = vunpack.c.h.b16 %v8948
    %v9234 = vunpack.c.l.b16 %v8949
    %v9235 = vunpack.c.h.b16 %v8949
    %v9236 = vunpack.c.l.b16 %v8950
    %v9237 = vunpack.c.h.b16 %v8950
    %v9238 = vunpack.c.l.b16 %v8951
    %v9239 = vunpack.c.h.b16 %v8951
    %v9240 = vunpack.c.l.b16 %v8952
    %v9241 = vunpack.c.h.b16 %v8952
    %v9242 = vunpack.c.l.b16 %v8953
    %v9243 = vunpack.c.h.b16 %v8953
    %v9244 = vunpack.c.l.b16 %v8954
    %v9245 = vunpack.c.h.b16 %v8954
    %v9246 = vunpack.c.l.b16 %v8955
    %v9247 = vunpack.c.h.b16 %v8955
    %v9248 = vunpack.c.l.b16 %v8956
    %v9249 = vunpack.c.h.b16 %v8956
    %v9250 = vunpack.c.l.b16 %v8957
    %v9251 = vunpack.c.h.b16 %v8957
    %v9252 = vunpack.c.l.b16 %v8958
    %v9253 = vunpack.c.h.b16 %v8958
    %v9254 = vunpack.c.l.b16 %v8959
    %v9255 = vunpack.c.h.b16 %v8959
    %v9256 = vunpack.c.l.b16 %v8960
    %v9257 = vunpack.c.h.b16 %v8960
    %v9258 = vunpack.c.l.b16 %v8961
    %v9259 = vunpack.c.h.b16 %v8961
    %v9260 = vunpack.c.l.b16 %v8962
    %v9261 = vunpack.c.h.b16 %v8962
    %v9262 = vunpack.c.l.b16 %v8963
    %v9263 = vunpack.c.h.b16 %v8963
    %v9264 = vunpack.c.l.b16 %v8964
    %v9265 = vunpack.c.h.b16 %v8964
    %v9266 = vunpack.c.l.b16 %v8965
    %v9267 = vunpack.c.h.b16 %v8965
    %v9268 = vunpack.c.l.b16 %v8966
    %v9269 = vunpack.c.h.b16 %v8966
    %v9270 = vunpack.c.l.b16 %v8967
    %v9271 = vunpack.c.h.b16 %v8967
    %v9272 = vunpack.c.l.b16 %v8968
    %v9273 = vunpack.c.h.b16 %v8968
    %v9274 = vunpack.c.l.b16 %v8969
    %v9275 = vunpack.c.h.b16 %v8969
    %v9276 = vunpack.c.l.b16 %v8970
    %v9277 = vunpack.c.h.b16 %v8970
    %v9278 = vunpack.c.l.b16 %v8971
    %v9279 = vunpack.c.h.b16 %v8971
    %v9280 = vunpack.c.l.b16 %v8972
    %v9281 = vunpack.c.h.b16 %v8972
    %v9282 = vunpack.c.l.b16 %v8973
    %v9283 = vunpack.c.h.b16 %v8973
    %v9284 = vunpack.c.l.b16 %v8974
    %v9285 = vunpack.c.h.b16 %v8974
    %v9286 = vunpack.c.l.b16 %v8975
    %v9287 = vunpack.c.h.b16 %v8975
    %v9288 = vunpack.c.l.b16 %v8976
    %v9289 = vunpack.c.h.b16 %v8976
    %v9290 = vunpack.c.l.b16 %v8977
    %v9291 = vunpack.c.h.b16 %v8977
    %v9292 = vunpack.c.l.b16 %v8978
    %v9293 = vunpack.c.h.b16 %v8978
    %v9294 = vunpack.c.l.b16 %v8979
    %v9295 = vunpack.c.h.b16 %v8979
    %v9296 = vunpack.c.l.b16 %v8980
    %v9297 = vunpack.c.h.b16 %v8980
    %v9298 = vunpack.c.l.b16 %v8981
    %v9299 = vunpack.c.h.b16 %v8981
    %v9300 = vunpack.c.l.b16 %v8982
    %v9301 = vunpack.c.h.b16 %v8982
    %v9302 = vunpack.c.l.b16 %v8983
    %v9303 = vunpack.c.h.b16 %v8983
    %v9304 = vunpack.c.l.b16 %v8984
    %v9305 = vunpack.c.h.b16 %v8984
    %v9306 = vunpack.c.l.b16 %v8985
    %v9307 = vunpack.c.h.b16 %v8985
    %v9308 = vunpack.c.l.b16 %v8986
    %v9309 = vunpack.c.h.b16 %v8986
    %v9310 = vunpack.c.l.b16 %v8987
    %v9311 = vunpack.c.h.b16 %v8987
    %v9312 = vunpack.c.l.b16 %v8988
    %v9313 = vunpack.c.h.b16 %v8988
    %v9314 = vunpack.c.l.b16 %v8989
    %v9315 = vunpack.c.h.b16 %v8989
    %v9316 = vunpack.c.l.b16 %v8990
    %v9317 = vunpack.c.h.b16 %v8990
    %v9318 = vunpack.c.l.b16 %v8991
    %v9319 = vunpack.c.h.b16 %v8991
    %v9320 = vunpack.c.l.b16 %v8992
    %v9321 = vunpack.c.h.b16 %v8992
    %v9322 = vunpack.c.l.b16 %v8993
    %v9323 = vunpack.c.h.b16 %v8993
    %v9324 = vunpack.c.l.b16 %v8994
    %v9325 = vunpack.c.h.b16 %v8994
    %v9326 = vunpack.c.l.b16 %v8995
    %v9327 = vunpack.c.h.b16 %v8995
    %v9328 = vunpack.c.l.b16 %v8996
    %v9329 = vunpack.c.h.b16 %v8996
    %v9330 = vunpack.c.l.b16 %v8997
    %v9331 = vunpack.c.h.b16 %v8997
    %v9332 = vunpack.c.l.b16 %v8998
    %v9333 = vunpack.c.h.b16 %v8998
    %v9334 = vunpack.c.l.b16 %v8999
    %v9335 = vunpack.c.h.b16 %v8999
    %v9336 = vunpack.c.l.b16 %v9000
    %v9337 = vunpack.c.h.b16 %v9000
    %v9338 = vunpack.c.l.b16 %v9001
    %v9339 = vunpack.c.h.b16 %v9001
    %v9340 = vunpack.c.l.b16 %v9002
    %v9341 = vunpack.c.h.b16 %v9002
    %v9342 = vunpack.c.l.b16 %v9003
    %v9343 = vunpack.c.h.b16 %v9003
    %v9344 = vunpack.c.l.b16 %v9004
    %v9345 = vunpack.c.h.b16 %v9004
    %v9346 = vunpack.c.l.b16 %v9005
    %v9347 = vunpack.c.h.b16 %v9005
    %v9348 = vunpack.c.l.b16 %v9006
    %v9349 = vunpack.c.h.b16 %v9006
    %v9350 = vunpack.c.l.b16 %v9007
    %v9351 = vunpack.c.h.b16 %v9007
    %v9352 = vunpack.c.l.b16 %v9008
    %v9353 = vunpack.c.h.b16 %v9008
    %v9354 = vunpack.c.l.b16 %v9009
    %v9355 = vunpack.c.h.b16 %v9009
    %v9356 = vunpack.c.l.b16 %v9010
    %v9357 = vunpack.c.h.b16 %v9010
    %v9358 = vunpack.c.l.b16 %v9011
    %v9359 = vunpack.c.h.b16 %v9011
    %v9360 = vunpack.c.l.b16 %v9012
    %v9361 = vunpack.c.h.b16 %v9012
    %v9362 = vunpack.c.l.b16 %v9013
    %v9363 = vunpack.c.h.b16 %v9013
    %v9364 = vunpack.c.l.b16 %v9014
    %v9365 = vunpack.c.h.b16 %v9014
    %v9366 = vunpack.c.l.b16 %v9015
    %v9367 = vunpack.c.h.b16 %v9015
    %v9368 = vunpack.c.l.b16 %v9016
    %v9369 = vunpack.c.h.b16 %v9016
    %v9370 = vunpack.c.l.b16 %v9017
    %v9371 = vunpack.c.h.b16 %v9017
    %v9372 = vunpack.c.l.b16 %v9018
    %v9373 = vunpack.c.h.b16 %v9018
    %v9374 = vunpack.c.l.b16 %v9019
    %v9375 = vunpack.c.h.b16 %v9019
    %v9376 = vunpack.c.l.b16 %v9020
    %v9377 = vunpack.c.h.b16 %v9020
    %v9378 = vunpack.c.l.b16 %v9021
    %v9379 = vunpack.c.h.b16 %v9021
    %v9380 = vunpack.c.l.b16 %v9022
    %v9381 = vunpack.c.h.b16 %v9022
    %v9382 = vunpack.c.l.b16 %v9023
    %v9383 = vunpack.c.h.b16 %v9023
    %v9384 = vunpack.c.l.b16 %v9024
    %v9385 = vunpack.c.h.b16 %v9024
    %v9386 = vunpack.c.l.b16 %v9025
    %v9387 = vunpack.c.h.b16 %v9025
    %v9388 = vunpack.c.l.b16 %v9026
    %v9389 = vunpack.c.h.b16 %v9026
    %v9390 = vunpack.c.l.b16 %v9027
    %v9391 = vunpack.c.h.b16 %v9027
    %v9392 = vunpack.c.l.b16 %v9028
    %v9393 = vunpack.c.h.b16 %v9028
    %v9394 = vunpack.c.l.b16 %v9029
    %v9395 = vunpack.c.h.b16 %v9029
    %v9396 = vunpack.c.l.b16 %v9030
    %v9397 = vunpack.c.h.b16 %v9030
    %v9398 = vunpack.c.l.b16 %v9031
    %v9399 = vunpack.c.h.b16 %v9031
    %v9400 = vunpack.c.l.b16 %v9032
    %v9401 = vunpack.c.h.b16 %v9032
    %v9402 = vunpack.c.l.b16 %v9033
    %v9403 = vunpack.c.h.b16 %v9033
    %v9404 = vunpack.c.l.b16 %v9034
    %v9405 = vunpack.c.h.b16 %v9034
    %v9406 = vunpack.c.l.b16 %v9035
    %v9407 = vunpack.c.h.b16 %v9035
    %v9408 = vunpack.c.l.b16 %v9036
    %v9409 = vunpack.c.h.b16 %v9036
    %v9410 = vunpack.c.l.b16 %v9037
    %v9411 = vunpack.c.h.b16 %v9037
    %v9412 = vunpack.c.l.b16 %v9038
    %v9413 = vunpack.c.h.b16 %v9038
    %v9414 = vunpack.c.l.b16 %v9039
    %v9415 = vunpack.c.h.b16 %v9039
    %v9416 = vunpack.c.l.b16 %v9040
    %v9417 = vunpack.c.h.b16 %v9040
    %v9418 = vunpack.c.l.b16 %v9041
    %v9419 = vunpack.c.h.b16 %v9041
    %v9420 = vunpack.c.l.b16 %v9042
    %v9421 = vunpack.c.h.b16 %v9042
    %v9422 = vunpack.c.l.b16 %v9043
    %v9423 = vunpack.c.h.b16 %v9043
    %v9424 = vunpack.c.l.b16 %v9044
    %v9425 = vunpack.c.h.b16 %v9044
    %v9426 = vunpack.c.l.b16 %v9045
    %v9427 = vunpack.c.h.b16 %v9045
    %v9428 = vunpack.c.l.b16 %v9046
    %v9429 = vunpack.c.h.b16 %v9046
    %v9430 = vunpack.c.l.b16 %v9047
    %v9431 = vunpack.c.h.b16 %v9047
    %v9432 = vunpack.c.l.b16 %v9048
    %v9433 = vunpack.c.h.b16 %v9048
    %v9434 = vunpack.c.l.b16 %v9049
    %v9435 = vunpack.c.h.b16 %v9049
    %v9436 = vunpack.c.l.b16 %v9050
    %v9437 = vunpack.c.h.b16 %v9050
    %v9438 = vunpack.c.l.b16 %v9051
    %v9439 = vunpack.c.h.b16 %v9051
    %v9440 = vunpack.c.l.b16 %v9052
    %v9441 = vunpack.c.h.b16 %v9052
    %v9442 = vunpack.c.l.b16 %v9053
    %v9443 = vunpack.c.h.b16 %v9053
    %v9444 = vunpack.c.l.b16 %v9054
    %v9445 = vunpack.c.h.b16 %v9054
    %v9446 = vunpack.c.l.b16 %v9055
    %v9447 = vunpack.c.h.b16 %v9055
    %v9448 = vunpack.c.l.b16 %v9056
    %v9449 = vunpack.c.h.b16 %v9056
    %v9450 = vunpack.c.l.b16 %v9057
    %v9451 = vunpack.c.h.b16 %v9057
    %v9452 = vunpack.c.l.b16 %v9058
    %v9453 = vunpack.c.h.b16 %v9058
    %v9454 = vunpack.c.l.b16 %v9059
    %v9455 = vunpack.c.h.b16 %v9059
    %v9456 = vunpack.c.l.b16 %v9060
    %v9457 = vunpack.c.h.b16 %v9060
    %v9458 = vunpack.c.l.b16 %v9061
    %v9459 = vunpack.c.h.b16 %v9061
    %v9460 = vunpack.c.l.b16 %v9062
    %v9461 = vunpack.c.h.b16 %v9062
    %v9462 = vunpack.c.l.b16 %v9063
    %v9463 = vunpack.c.h.b16 %v9063
    %v9464 = vunpack.c.l.b16 %v9064
    %v9465 = vunpack.c.h.b16 %v9064
    %v9466 = vunpack.c.l.b16 %v9065
    %v9467 = vunpack.c.h.b16 %v9065
    %v9468 = vunpack.c.l.b16 %v9066
    %v9469 = vunpack.c.h.b16 %v9066
    %v9470 = vunpack.c.l.b16 %v9067
    %v9471 = vunpack.c.h.b16 %v9067
    %v9472 = vunpack.c.l.b16 %v9068
    %v9473 = vunpack.c.h.b16 %v9068
    %v9474 = vunpack.c.l.b16 %v9069
    %v9475 = vunpack.c.h.b16 %v9069
    %v9476 = vpack.c.b16 %v9224, %v9220
    %v9477 = vpack.c.b16 %v9225, %v9221
    %v9478 = vpack.c.b16 %v9226, %v9222
    %v9479 = vpack.c.b16 %v9227, %v9223
    %v9480 = vpack.c.b16 %v9232, %v9228
    %v9481 = vpack.c.b16 %v9233, %v9229
    %v9482 = vpack.c.b16 %v9234, %v9230
    %v9483 = vpack.c.b16 %v9235, %v9231
    %v9484 = vpack.c.b16 %v9240, %v9236
    %v9485 = vpack.c.b16 %v9241, %v9237
    %v9486 = vpack.c.b16 %v9242, %v9238
    %v9487 = vpack.c.b16 %v9243, %v9239
    %v9488 = vpack.c.b16 %v9248, %v9244
    %v9489 = vpack.c.b16 %v9249, %v9245
    %v9490 = vpack.c.b16 %v9250, %v9246
    %v9491 = vpack.c.b16 %v9251, %v9247
    %v9492 = vpack.c.b16 %v9256, %v9252
    %v9493 = vpack.c.b16 %v9257, %v9253
    %v9494 = vpack.c.b16 %v9258, %v9254
    %v9495 = vpack.c.b16 %v9259, %v9255
    %v9496 = vpack.c.b16 %v9264, %v9260
    %v9497 = vpack.c.b16 %v9265, %v9261
    %v9498 = vpack.c.b16 %v9266, %v9262
    %v9499 = vpack.c.b16 %v9267, %v9263
    %v9500 = vpack.c.b16 %v9272, %v9268
    %v9501 = vpack.c.b16 %v9273, %v9269
    %v9502 = vpack.c.b16 %v9274, %v9270
    %v9503 = vpack.c.b16 %v9275, %v9271
    %v9504 = vpack.c.b16 %v9280, %v9276
    %v9505 = vpack.c.b16 %v9281, %v9277
    %v9506 = vpack.c.b16 %v9282, %v9278
    %v9507 = vpack.c.b16 %v9283, %v9279
    %v9508 = vpack.c.b16 %v9288, %v9284
    %v9509 = vpack.c.b16 %v9289, %v9285
    %v9510 = vpack.c.b16 %v9290, %v9286
    %v9511 = vpack.c.b16 %v9291, %v9287
    %v9512 = vpack.c.b16 %v9296, %v9292
    %v9513 = vpack.c.b16 %v9297, %v9293
    %v9514 = vpack.c.b16 %v9298, %v9294
    %v9515 = vpack.c.b16 %v9299, %v9295
    %v9516 = vpack.c.b16 %v9304, %v9300
    %v9517 = vpack.c.b16 %v9305, %v9301
    %v9518 = vpack.c.b16 %v9306, %v9302
    %v9519 = vpack.c.b16 %v9307, %v9303
    %v9520 = vpack.c.b16 %v9312, %v9308
    %v9521 = vpack.c.b16 %v9313, %v9309
    %v9522 = vpack.c.b16 %v9314, %v9310
    %v9523 = vpack.c.b16 %v9315, %v9311
    %v9524 = vpack.c.b16 %v9320, %v9316
    %v9525 = vpack.c.b16 %v9321, %v9317
    %v9526 = vpack.c.b16 %v9322, %v9318
    %v9527 = vpack.c.b16 %v9323, %v9319
    %v9528 = vpack.c.b16 %v9328, %v9324
    %v9529 = vpack.c.b16 %v9329, %v9325
    %v9530 = vpack.c.b16 %v9330, %v9326
    %v9531 = vpack.c.b16 %v9331, %v9327
    %v9532 = vpack.c.b16 %v9336, %v9332
    %v9533 = vpack.c.b16 %v9337, %v9333
    %v9534 = vpack.c.b16 %v9338, %v9334
    %v9535 = vpack.c.b16 %v9339, %v9335
    %v9536 = vpack.c.b16 %v9344, %v9340
    %v9537 = vpack.c.b16 %v9345, %v9341
    %v9538 = vpack.c.b16 %v9346, %v9342
    %v9539 = vpack.c.b16 %v9347, %v9343
    %v9540 = vpack.c.b16 %v9352, %v9348
    %v9541 = vpack.c.b16 %v9353, %v9349
    %v9542 = vpack.c.b16 %v9354, %v9350
    %v9543 = vpack.c.b16 %v9355, %v9351
    %v9544 = vpack.c.b16 %v9360, %v9356
    %v9545 = vpack.c.b16 %v9361, %v9357
    %v9546 = vpack.c.b16 %v9362, %v9358
    %v9547 = vpack.c.b16 %v9363, %v9359
    %v9548 = vpack.c.b16 %v9368, %v9364
    %v9549 = vpack.c.b16 %v9369, %v9365
    %v9550 = vpack.c.b16 %v9370, %v9366
    %v9551 = vpack.c.b16 %v9371, %v9367
    %v9552 = vpack.c.b16 %v9376, %v9372
    %v9553 = vpack.c.b16 %v9377, %v9373
    %v9554 = vpack.c.b16 %v9378, %v9374
    %v9555 = vpack.c.b16 %v9379, %v9375
    %v9556 = vpack.c.b16 %v9384, %v9380
    %v9557 = vpack.c.b16 %v9385, %v9381
    %v9558 = vpack.c.b16 %v9386, %v9382
    %v9559 = vpack.c.b16 %v9387, %v9383
    %v9560 = vpack.c.b16 %v9392, %v9388
    %v9561 = vpack.c.b16 %v9393, %v9389
    %v9562 = vpack.c.b16 %v9394, %v9390
    %v9563 = vpack.c.b16 %v9395, %v9391
    %v9564 = vpack.c.b16 %v9400, %v9396
    %v9565 = vpack.c.b16 %v9401, %v9397
    %v9566 = vpack.c.b16 %v9402, %v9398
    %v9567 = vpack.c.b16 %v9403, %v9399
    %v9568 = vpack.c.b16 %v9408, %v9404
    %v9569 = vpack.c.b16 %v9409, %v9405
    %v9570 = vpack.c.b16 %v9410, %v9406
    %v9571 = vpack.c.b16 %v9411, %v9407
    %v9572 = vpack.c.b16 %v9416, %v9412
    %v9573 = vpack.c.b16 %v9417, %v9413
    %v9574 = vpack.c.b16 %v9418, %v9414
    %v9575 = vpack.c.b16 %v9419, %v9415
    %v9576 = vpack.c.b16 %v9424, %v9420
    %v9577 = vpack.c.b16 %v9425, %v9421
    %v9578 = vpack.c.b16 %v9426, %v9422
    %v9579 = vpack.c.b16 %v9427, %v9423
    %v9580 = vpack.c.b16 %v9432, %v9428
    %v9581 = vpack.c.b16 %v9433, %v9429
    %v9582 = vpack.c.b16 %v9434, %v9430
    %v9583 = vpack.c.b16 %v9435, %v9431
    %v9584 = vpack.c.b16 %v9440, %v9436
    %v9585 = vpack.c.b16 %v9441, %v9437
    %v9586 = vpack.c.b16 %v9442, %v9438
    %v9587 = vpack.c.b16 %v9443, %v9439
    %v9588 = vpack.c.b16 %v9448, %v9444
    %v9589 = vpack.c.b16 %v9449, %v9445
    %v9590 = vpack.c.b16 %v9450, %v9446
    %v9591 = vpack.c.b16 %v9451, %v9447
    %v9592 = vpack.c.b16 %v9456, %v9452
    %v9593 = vpack.c.b16 %v9457, %v9453
    %v9594 = vpack.c.b16 %v9458, %v9454
    %v9595 = vpack.c.b16 %v9459, %v9455
    %v9596 = vpack.c.b16 %v9464, %v9460
    %v9597 = vpack.c.b16 %v9465, %v9461
    %v9598 = vpack.c.b16 %v9466, %v9462
    %v9599 = vpack.c.b16 %v9467, %v9463
    %v9600 = vpack.c.b16 %v9472, %v9468
    %v9601 = vpack.c.b16 %v9473, %v9469
    %v9602 = vpack.c.b16 %v9474, %v9470
    %v9603 = vpack.c.b16 %v9475, %v9471
    %9732 = vmatprep.subr.bf16.mxu0 %v9477
    %9733 = vmatpush1.bf16.msra.mxu0 %v9476
    %9734 = vmatprep.subr.bf16.mxu0 %v9481
    %9735 = vmatpush1.bf16.msra.mxu0 %v9480
    %9736 = vmatprep.subr.bf16.mxu0 %v9485
    %9737 = vmatpush1.bf16.msra.mxu0 %v9484
    %9738 = vmatprep.subr.bf16.mxu0 %v9489
    %9739 = vmatpush1.bf16.msra.mxu0 %v9488
    %9740 = vmatprep.subr.bf16.mxu0 %v9493
    %9741 = vmatpush1.bf16.msra.mxu0 %v9492
    %9742 = vmatprep.subr.bf16.mxu0 %v9497
    %9743 = vmatpush1.bf16.msra.mxu0 %v9496
    %9744 = vmatprep.subr.bf16.mxu0 %v9501
    %9745 = vmatpush1.bf16.msra.mxu0 %v9500
    %9746 = vmatprep.subr.bf16.mxu0 %v9505
    %9747 = vmatpush1.bf16.msra.mxu0 %v9504
    %9748 = vmatprep.subr.bf16.mxu0 %v9509
    %9749 = vmatpush1.bf16.msra.mxu0 %v9508
    %9750 = vmatprep.subr.bf16.mxu0 %v9513
    %9751 = vmatpush1.bf16.msra.mxu0 %v9512
    %9752 = vmatprep.subr.bf16.mxu0 %v9517
    %9753 = vmatpush1.bf16.msra.mxu0 %v9516
    %9754 = vmatprep.subr.bf16.mxu0 %v9521
    %9755 = vmatpush1.bf16.msra.mxu0 %v9520
    %9756 = vmatprep.subr.bf16.mxu0 %v9525
    %9757 = vmatpush1.bf16.msra.mxu0 %v9524
    %9758 = vmatprep.subr.bf16.mxu0 %v9529
    %9759 = vmatpush1.bf16.msra.mxu0 %v9528
    %9760 = vmatprep.subr.bf16.mxu0 %v9533
    %9761 = vmatpush1.bf16.msra.mxu0 %v9532
    %9762 = vmatprep.subr.bf16.mxu0 %v9537
    %9763 = vmatpush1.bf16.msra.mxu0 %v9536
    %9764 = vmatprep.mubr.bf16.mxu0 %v8939
    %9765 = vmatmul.mubr.bf16.gmra.mrb[0].mxu0 %v8938
    %v9766 = vpop.f32.mrb[0].mxu0
    %v9767 = vadd.f32 %v9075, %v9766
    %v9768 = vpop.f32.mrb[0].mxu0
    %v9769 = vadd.f32 %v9079, %v9768
    %v9770 = vpop.f32.mrb[0].mxu0
    %v9771 = vpop.f32.mrb[0].mxu0
    %9772 = vdwg.mxu0
    %9773 = vmatprep.subr.bf16.mxu0 %v9541
    %9774 = vmatpush1.bf16.msra.mxu0 %v9540
    %9775 = vmatprep.subr.bf16.mxu0 %v9545
    %9776 = vmatpush1.bf16.msra.mxu0 %v9544
    %9777 = vmatprep.subr.bf16.mxu0 %v9549
    %9778 = vmatpush1.bf16.msra.mxu0 %v9548
    %9779 = vmatprep.subr.bf16.mxu0 %v9553
    %9780 = vmatpush1.bf16.msra.mxu0 %v9552
    %9781 = vmatprep.subr.bf16.mxu0 %v9557
    %9782 = vmatpush1.bf16.msra.mxu0 %v9556
    %9783 = vmatprep.subr.bf16.mxu0 %v9561
    %9784 = vmatpush1.bf16.msra.mxu0 %v9560
    %9785 = vmatprep.subr.bf16.mxu0 %v9565
    %9786 = vmatpush1.bf16.msra.mxu0 %v9564
    %9787 = vmatprep.subr.bf16.mxu0 %v9569
    %9788 = vmatpush1.bf16.msra.mxu0 %v9568
    %9789 = vmatprep.subr.bf16.mxu0 %v9573
    %9790 = vmatpush1.bf16.msra.mxu0 %v9572
    %9791 = vmatprep.subr.bf16.mxu0 %v9577
    %9792 = vmatpush1.bf16.msra.mxu0 %v9576
    %9793 = vmatprep.subr.bf16.mxu0 %v9581
    %9794 = vmatpush1.bf16.msra.mxu0 %v9580
    %9795 = vmatprep.subr.bf16.mxu0 %v9585
    %9796 = vmatpush1.bf16.msra.mxu0 %v9584
    %9797 = vmatprep.subr.bf16.mxu0 %v9589
    %9798 = vmatpush1.bf16.msra.mxu0 %v9588
    %9799 = vmatprep.subr.bf16.mxu0 %v9593
    %9800 = vmatpush1.bf16.msra.mxu0 %v9592
    %9801 = vmatprep.subr.bf16.mxu0 %v9597
    %9802 = vmatpush1.bf16.msra.mxu0 %v9596
    %9803 = vmatprep.subr.bf16.mxu0 %v9601
    %9804 = vmatpush1.bf16.msra.mxu0 %v9600
    %9805 = vmatprep.mubr.bf16.mxu0 %v8941
    %9806 = vmatmul.mubr.bf16.gmra.mrb[0].mxu0 %v8940
    %v9807 = vpop.f32.mrb[0].mxu0
    %v9808 = vadd.f32 %v9767, %v9807
    %v9809 = vpop.f32.mrb[0].mxu0
    %v9810 = vadd.f32 %v9769, %v9809
    %v9811 = vpop.f32.mrb[0].mxu0
    %v9812 = vpop.f32.mrb[0].mxu0
    %9813 = vdwg.mxu0
    %9814 = vmatprep.subr.bf16.mxu0 %v9479
    %9815 = vmatpush1.bf16.msra.mxu0 %v9478
    %9816 = vmatprep.subr.bf16.mxu0 %v9483
    %9817 = vmatpush1.bf16.msra.mxu0 %v9482
    %9818 = vmatprep.subr.bf16.mxu0 %v9487
    %9819 = vmatpush1.bf16.msra.mxu0 %v9486
    %9820 = vmatprep.subr.bf16.mxu0 %v9491
    %9821 = vmatpush1.bf16.msra.mxu0 %v9490
    %9822 = vmatprep.subr.bf16.mxu0 %v9495
    %9823 = vmatpush1.bf16.msra.mxu0 %v9494
    %9824 = vmatprep.subr.bf16.mxu0 %v9499
    %9825 = vmatpush1.bf16.msra.mxu0 %v9498
    %9826 = vmatprep.subr.bf16.mxu0 %v9503
    %9827 = vmatpush1.bf16.msra.mxu0 %v9502
    %9828 = vmatprep.subr.bf16.mxu0 %v9507
    %9829 = vmatpush1.bf16.msra.mxu0 %v9506
    %9830 = vmatprep.subr.bf16.mxu0 %v9511
    %9831 = vmatpush1.bf16.msra.mxu0 %v9510
    %9832 = vmatprep.subr.bf16.mxu0 %v9515
    %9833 = vmatpush1.bf16.msra.mxu0 %v9514
    %9834 = vmatprep.subr.bf16.mxu0 %v9519
    %9835 = vmatpush1.bf16.msra.mxu0 %v9518
    %9836 = vmatprep.subr.bf16.mxu0 %v9523
    %9837 = vmatpush1.bf16.msra.mxu0 %v9522
    %9838 = vmatprep.subr.bf16.mxu0 %v9527
    %9839 = vmatpush1.bf16.msra.mxu0 %v9526
    %9840 = vmatprep.subr.bf16.mxu0 %v9531
    %9841 = vmatpush1.bf16.msra.mxu0 %v9530
    %9842 = vmatprep.subr.bf16.mxu0 %v9535
    %9843 = vmatpush1.bf16.msra.mxu0 %v9534
    %9844 = vmatprep.subr.bf16.mxu0 %v9539
    %9845 = vmatpush1.bf16.msra.mxu0 %v9538
    %9846 = vmatprep.mubr.bf16.mxu0 %v8939
    %9847 = vmatmul.mubr.bf16.gmra.mrb[0].mxu0 %v8938
    %v9848 = vpop.f32.mrb[0].mxu0
    %v9849 = vadd.f32 %v9083, %v9848
    %v9850 = vpop.f32.mrb[0].mxu0
    %v9851 = vadd.f32 %v9087, %v9850
    %v9852 = vpop.f32.mrb[0].mxu0
    %v9853 = vpop.f32.mrb[0].mxu0
    %9854 = vdwg.mxu0
    %9855 = vmatprep.subr.bf16.mxu0 %v9543
    %9856 = vmatpush1.bf16.msra.mxu0 %v9542
    %9857 = vmatprep.subr.bf16.mxu0 %v9547
    %9858 = vmatpush1.bf16.msra.mxu0 %v9546
    %9859 = vmatprep.subr.bf16.mxu0 %v9551
    %9860 = vmatpush1.bf16.msra.mxu0 %v9550
    %9861 = vmatprep.subr.bf16.mxu0 %v9555
    %9862 = vmatpush1.bf16.msra.mxu0 %v9554
    %9863 = vmatprep.subr.bf16.mxu0 %v9559
    %9864 = vmatpush1.bf16.msra.mxu0 %v9558
    %9865 = vmatprep.subr.bf16.mxu0 %v9563
    %9866 = vmatpush1.bf16.msra.mxu0 %v9562
    %9867 = vmatprep.subr.bf16.mxu0 %v9567
    %9868 = vmatpush1.bf16.msra.mxu0 %v9566
    %9869 = vmatprep.subr.bf16.mxu0 %v9571
    %9870 = vmatpush1.bf16.msra.mxu0 %v9570
    %9871 = vmatprep.subr.bf16.mxu0 %v9575
    %9872 = vmatpush1.bf16.msra.mxu0 %v9574
    %9873 = vmatprep.subr.bf16.mxu0 %v9579
    %9874 = vmatpush1.bf16.msra.mxu0 %v9578
    %9875 = vmatprep.subr.bf16.mxu0 %v9583
    %9876 = vmatpush1.bf16.msra.mxu0 %v9582
    %9877 = vmatprep.subr.bf16.mxu0 %v9587
    %9878 = vmatpush1.bf16.msra.mxu0 %v9586
    %9879 = vmatprep.subr.bf16.mxu0 %v9591
    %9880 = vmatpush1.bf16.msra.mxu0 %v9590
    %9881 = vmatprep.subr.bf16.mxu0 %v9595
    %9882 = vmatpush1.bf16.msra.mxu0 %v9594
    %9883 = vmatprep.subr.bf16.mxu0 %v9599
    %9884 = vmatpush1.bf16.msra.mxu0 %v9598
    %9885 = vmatprep.subr.bf16.mxu0 %v9603
    %9886 = vmatpush1.bf16.msra.mxu0 %v9602
    %9887 = vmatprep.mubr.bf16.mxu0 %v8941
    %9888 = vmatmul.mubr.bf16.gmra.mrb[0].mxu0 %v8940
    %v9889 = vpop.f32.mrb[0].mxu0
    %v9890 = vadd.f32 %v9849, %v9889
    %v9891 = vpop.f32.mrb[0].mxu0
    %v9892 = vadd.f32 %v9851, %v9891
    %v9893 = vpop.f32.mrb[0].mxu0
    %v9894 = vpop.f32.mrb[0].mxu0
    %9895 = vdwg.mxu0
    %v9896 = vmax.f32 %v9808, 0.0
    %v9897 = vmax.f32 %v9810, 0.0
    %v9898 = vmax.f32 %v9890, 0.0
    %v9899 = vmax.f32 %v9892, 0.0
    %v9900 = vpack.c.bf16 %v9896, %v9896
    %v9901 = vpack.c.bf16 %v9897, %v9897
    %v9902 = vpack.c.bf16 %v9898, %v9898
    %v9903 = vpack.c.bf16 %v9899, %v9899
    %v9904 = vld [vmem:[#allocation15] sm:$0xff]
    %v9905 = vld [vmem:[#allocation15 + $0x8] sm:$0xff]
    %v9906 = vld [vmem:[#allocation15 + $0x10] sm:$0xff]
    %v9907 = vld [vmem:[#allocation15 + $0x18] sm:$0xff]
    %v9908 = vld [vmem:[#allocation15 + $0x20] sm:$0xff]
    %v9909 = vld [vmem:[#allocation15 + $0x28] sm:$0xff]
    %v9910 = vld [vmem:[#allocation15 + $0x30] sm:$0xff]
    %v9911 = vld [vmem:[#allocation15 + $0x38] sm:$0xff]
    %v9912 = vld [vmem:[#allocation15 + $0x40] sm:$0xff]
    %v9913 = vld [vmem:[#allocation15 + $0x48] sm:$0xff]
    %v9914 = vld [vmem:[#allocation15 + $0x50] sm:$0xff]
    %v9915 = vld [vmem:[#allocation15 + $0x58] sm:$0xff]
    %v9916 = vld [vmem:[#allocation15 + $0x60] sm:$0xff]
    %v9917 = vld [vmem:[#allocation15 + $0x68] sm:$0xff]
    %v9918 = vld [vmem:[#allocation15 + $0x70] sm:$0xff]
    %v9919 = vld [vmem:[#allocation15 + $0x78] sm:$0xff]
    %v9920 = vld [vmem:[#allocation15 + $0x80] sm:$0xff]
    %v9921 = vld [vmem:[#allocation15 + $0x88] sm:$0xff]
    %v9922 = vld [vmem:[#allocation15 + $0x90] sm:$0xff]
    %v9923 = vld [vmem:[#allocation15 + $0x98] sm:$0xff]
    %v9924 = vld [vmem:[#allocation15 + $0xa0] sm:$0xff]
    %v9925 = vld [vmem:[#allocation15 + $0xa8] sm:$0xff]
    %v9926 = vld [vmem:[#allocation15 + $0xb0] sm:$0xff]
    %v9927 = vld [vmem:[#allocation15 + $0xb8] sm:$0xff]
    %v9928 = vld [vmem:[#allocation15 + $0xc0] sm:$0xff]
    %v9929 = vld [vmem:[#allocation15 + $0xc8] sm:$0xff]
    %v9930 = vld [vmem:[#allocation15 + $0xd0] sm:$0xff]
    %v9931 = vld [vmem:[#allocation15 + $0xd8] sm:$0xff]
    %v9932 = vld [vmem:[#allocation15 + $0xe0] sm:$0xff]
    %v9933 = vld [vmem:[#allocation15 + $0xe8] sm:$0xff]
    %v9934 = vld [vmem:[#allocation15 + $0xf0] sm:$0xff]
    %v9935 = vld [vmem:[#allocation15 + $0xf8] sm:$0xff]
    %v9936 = vld [vmem:[#allocation15 + $0x100] sm:$0xff]
    %v9937 = vld [vmem:[#allocation15 + $0x108] sm:$0xff]
    %v9938 = vld [vmem:[#allocation15 + $0x110] sm:$0xff]
    %v9939 = vld [vmem:[#allocation15 + $0x118] sm:$0xff]
    %v9940 = vld [vmem:[#allocation15 + $0x120] sm:$0xff]
    %v9941 = vld [vmem:[#allocation15 + $0x128] sm:$0xff]
    %v9942 = vld [vmem:[#allocation15 + $0x130] sm:$0xff]
    %v9943 = vld [vmem:[#allocation15 + $0x138] sm:$0xff]
    %v9944 = vld [vmem:[#allocation15 + $0x140] sm:$0xff]
    %v9945 = vld [vmem:[#allocation15 + $0x148] sm:$0xff]
    %v9946 = vld [vmem:[#allocation15 + $0x150] sm:$0xff]
    %v9947 = vld [vmem:[#allocation15 + $0x158] sm:$0xff]
    %v9948 = vld [vmem:[#allocation15 + $0x160] sm:$0xff]
    %v9949 = vld [vmem:[#allocation15 + $0x168] sm:$0xff]
    %v9950 = vld [vmem:[#allocation15 + $0x170] sm:$0xff]
    %v9951 = vld [vmem:[#allocation15 + $0x178] sm:$0xff]
    %v9952 = vld [vmem:[#allocation15 + $0x180] sm:$0xff]
    %v9953 = vld [vmem:[#allocation15 + $0x188] sm:$0xff]
    %v9954 = vld [vmem:[#allocation15 + $0x190] sm:$0xff]
    %v9955 = vld [vmem:[#allocation15 + $0x198] sm:$0xff]
    %v9956 = vld [vmem:[#allocation15 + $0x1a0] sm:$0xff]
    %v9957 = vld [vmem:[#allocation15 + $0x1a8] sm:$0xff]
    %v9958 = vld [vmem:[#allocation15 + $0x1b0] sm:$0xff]
    %v9959 = vld [vmem:[#allocation15 + $0x1b8] sm:$0xff]
    %v9960 = vld [vmem:[#allocation15 + $0x1c0] sm:$0xff]
    %v9961 = vld [vmem:[#allocation15 + $0x1c8] sm:$0xff]
    %v9962 = vld [vmem:[#allocation15 + $0x1d0] sm:$0xff]
    %v9963 = vld [vmem:[#allocation15 + $0x1d8] sm:$0xff]
    %v9964 = vld [vmem:[#allocation15 + $0x1e0] sm:$0xff]
    %v9965 = vld [vmem:[#allocation15 + $0x1e8] sm:$0xff]
    %v9966 = vld [vmem:[#allocation15 + $0x1f0] sm:$0xff]
    %v9967 = vld [vmem:[#allocation15 + $0x1f8] sm:$0xff]
    %v9968 = vld [vmem:[#allocation17] sm:$0x3]
    %v9970 = vlaneseq
    %v9971 = vshrl.u32 %v9970, 7
    %v9972 = vsub.s32 0, %v9971
    %v9973 = vrot.slane %v9968, %v9972
    %v9974 = vlaneseq
    %v9975 = vshrl.u32 %v9974, 7
    %v9976 = vsub.s32 1, %v9975
    %v9977 = vrot.slane %v9968, %v9976
    %v10044 = vunpack.c.l.b16 %v9904
    %v10045 = vunpack.c.h.b16 %v9904
    %v10046 = vunpack.c.l.b16 %v9905
    %v10047 = vunpack.c.h.b16 %v9905
    %v10048 = vunpack.c.l.b16 %v9906
    %v10049 = vunpack.c.h.b16 %v9906
    %v10050 = vunpack.c.l.b16 %v9907
    %v10051 = vunpack.c.h.b16 %v9907
    %v10052 = vunpack.c.l.b16 %v9908
    %v10053 = vunpack.c.h.b16 %v9908
    %v10054 = vunpack.c.l.b16 %v9909
    %v10055 = vunpack.c.h.b16 %v9909
    %v10056 = vunpack.c.l.b16 %v9910
    %v10057 = vunpack.c.h.b16 %v9910
    %v10058 = vunpack.c.l.b16 %v9911
    %v10059 = vunpack.c.h.b16 %v9911
    %v10060 = vunpack.c.l.b16 %v9912
    %v10061 = vunpack.c.h.b16 %v9912
    %v10062 = vunpack.c.l.b16 %v9913
    %v10063 = vunpack.c.h.b16 %v9913
    %v10064 = vunpack.c.l.b16 %v9914
    %v10065 = vunpack.c.h.b16 %v9914
    %v10066 = vunpack.c.l.b16 %v9915
    %v10067 = vunpack.c.h.b16 %v9915
    %v10068 = vunpack.c.l.b16 %v9916
    %v10069 = vunpack.c.h.b16 %v9916
    %v10070 = vunpack.c.l.b16 %v9917
    %v10071 = vunpack.c.h.b16 %v9917
    %v10072 = vunpack.c.l.b16 %v9918
    %v10073 = vunpack.c.h.b16 %v9918
    %v10074 = vunpack.c.l.b16 %v9919
    %v10075 = vunpack.c.h.b16 %v9919
    %v10076 = vunpack.c.l.b16 %v9920
    %v10077 = vunpack.c.h.b16 %v9920
    %v10078 = vunpack.c.l.b16 %v9921
    %v10079 = vunpack.c.h.b16 %v9921
    %v10080 = vunpack.c.l.b16 %v9922
    %v10081 = vunpack.c.h.b16 %v9922
    %v10082 = vunpack.c.l.b16 %v9923
    %v10083 = vunpack.c.h.b16 %v9923
    %v10084 = vunpack.c.l.b16 %v9924
    %v10085 = vunpack.c.h.b16 %v9924
    %v10086 = vunpack.c.l.b16 %v9925
    %v10087 = vunpack.c.h.b16 %v9925
    %v10088 = vunpack.c.l.b16 %v9926
    %v10089 = vunpack.c.h.b16 %v9926
    %v10090 = vunpack.c.l.b16 %v9927
    %v10091 = vunpack.c.h.b16 %v9927
    %v10092 = vunpack.c.l.b16 %v9928
    %v10093 = vunpack.c.h.b16 %v9928
    %v10094 = vunpack.c.l.b16 %v9929
    %v10095 = vunpack.c.h.b16 %v9929
    %v10096 = vunpack.c.l.b16 %v9930
    %v10097 = vunpack.c.h.b16 %v9930
    %v10098 = vunpack.c.l.b16 %v9931
    %v10099 = vunpack.c.h.b16 %v9931
    %v10100 = vunpack.c.l.b16 %v9932
    %v10101 = vunpack.c.h.b16 %v9932
    %v10102 = vunpack.c.l.b16 %v9933
    %v10103 = vunpack.c.h.b16 %v9933
    %v10104 = vunpack.c.l.b16 %v9934
    %v10105 = vunpack.c.h.b16 %v9934
    %v10106 = vunpack.c.l.b16 %v9935
    %v10107 = vunpack.c.h.b16 %v9935
    %v10108 = vunpack.c.l.b16 %v9936
    %v10109 = vunpack.c.h.b16 %v9936
    %v10110 = vunpack.c.l.b16 %v9937
    %v10111 = vunpack.c.h.b16 %v9937
    %v10112 = vunpack.c.l.b16 %v9938
    %v10113 = vunpack.c.h.b16 %v9938
    %v10114 = vunpack.c.l.b16 %v9939
    %v10115 = vunpack.c.h.b16 %v9939
    %v10116 = vunpack.c.l.b16 %v9940
    %v10117 = vunpack.c.h.b16 %v9940
    %v10118 = vunpack.c.l.b16 %v9941
    %v10119 = vunpack.c.h.b16 %v9941
    %v10120 = vunpack.c.l.b16 %v9942
    %v10121 = vunpack.c.h.b16 %v9942
    %v10122 = vunpack.c.l.b16 %v9943
    %v10123 = vunpack.c.h.b16 %v9943
    %v10124 = vunpack.c.l.b16 %v9944
    %v10125 = vunpack.c.h.b16 %v9944
    %v10126 = vunpack.c.l.b16 %v9945
    %v10127 = vunpack.c.h.b16 %v9945
    %v10128 = vunpack.c.l.b16 %v9946
    %v10129 = vunpack.c.h.b16 %v9946
    %v10130 = vunpack.c.l.b16 %v9947
    %v10131 = vunpack.c.h.b16 %v9947
    %v10132 = vunpack.c.l.b16 %v9948
    %v10133 = vunpack.c.h.b16 %v9948
    %v10134 = vunpack.c.l.b16 %v9949
    %v10135 = vunpack.c.h.b16 %v9949
    %v10136 = vunpack.c.l.b16 %v9950
    %v10137 = vunpack.c.h.b16 %v9950
    %v10138 = vunpack.c.l.b16 %v9951
    %v10139 = vunpack.c.h.b16 %v9951
    %v10140 = vunpack.c.l.b16 %v9952
    %v10141 = vunpack.c.h.b16 %v9952
    %v10142 = vunpack.c.l.b16 %v9953
    %v10143 = vunpack.c.h.b16 %v9953
    %v10144 = vunpack.c.l.b16 %v9954
    %v10145 = vunpack.c.h.b16 %v9954
    %v10146 = vunpack.c.l.b16 %v9955
    %v10147 = vunpack.c.h.b16 %v9955
    %v10148 = vunpack.c.l.b16 %v9956
    %v10149 = vunpack.c.h.b16 %v9956
    %v10150 = vunpack.c.l.b16 %v9957
    %v10151 = vunpack.c.h.b16 %v9957
    %v10152 = vunpack.c.l.b16 %v9958
    %v10153 = vunpack.c.h.b16 %v9958
    %v10154 = vunpack.c.l.b16 %v9959
    %v10155 = vunpack.c.h.b16 %v9959
    %v10156 = vunpack.c.l.b16 %v9960
    %v10157 = vunpack.c.h.b16 %v9960
    %v10158 = vunpack.c.l.b16 %v9961
    %v10159 = vunpack.c.h.b16 %v9961
    %v10160 = vunpack.c.l.b16 %v9962
    %v10161 = vunpack.c.h.b16 %v9962
    %v10162 = vunpack.c.l.b16 %v9963
    %v10163 = vunpack.c.h.b16 %v9963
    %v10164 = vunpack.c.l.b16 %v9964
    %v10165 = vunpack.c.h.b16 %v9964
    %v10166 = vunpack.c.l.b16 %v9965
    %v10167 = vunpack.c.h.b16 %v9965
    %v10168 = vunpack.c.l.b16 %v9966
    %v10169 = vunpack.c.h.b16 %v9966
    %v10170 = vunpack.c.l.b16 %v9967
    %v10171 = vunpack.c.h.b16 %v9967
    %v10172 = vpack.c.b16 %v10046, %v10044
    %v10173 = vpack.c.b16 %v10047, %v10045
    %v10174 = vpack.c.b16 %v10050, %v10048
    %v10175 = vpack.c.b16 %v10051, %v10049
    %v10176 = vpack.c.b16 %v10054, %v10052
    %v10177 = vpack.c.b16 %v10055, %v10053
    %v10178 = vpack.c.b16 %v10058, %v10056
    %v10179 = vpack.c.b16 %v10059, %v10057
    %v10180 = vpack.c.b16 %v10062, %v10060
    %v10181 = vpack.c.b16 %v10063, %v10061
    %v10182 = vpack.c.b16 %v10066, %v10064
    %v10183 = vpack.c.b16 %v10067, %v10065
    %v10184 = vpack.c.b16 %v10070, %v10068
    %v10185 = vpack.c.b16 %v10071, %v10069
    %v10186 = vpack.c.b16 %v10074, %v10072
    %v10187 = vpack.c.b16 %v10075, %v10073
    %v10188 = vpack.c.b16 %v10078, %v10076
    %v10189 = vpack.c.b16 %v10079, %v10077
    %v10190 = vpack.c.b16 %v10082, %v10080
    %v10191 = vpack.c.b16 %v10083, %v10081
    %v10192 = vpack.c.b16 %v10086, %v10084
    %v10193 = vpack.c.b16 %v10087, %v10085
    %v10194 = vpack.c.b16 %v10090, %v10088
    %v10195 = vpack.c.b16 %v10091, %v10089
    %v10196 = vpack.c.b16 %v10094, %v10092
    %v10197 = vpack.c.b16 %v10095, %v10093
    %v10198 = vpack.c.b16 %v10098, %v10096
    %v10199 = vpack.c.b16 %v10099, %v10097
    %v10200 = vpack.c.b16 %v10102, %v10100
    %v10201 = vpack.c.b16 %v10103, %v10101
    %v10202 = vpack.c.b16 %v10106, %v10104
    %v10203 = vpack.c.b16 %v10107, %v10105
    %v10204 = vpack.c.b16 %v10110, %v10108
    %v10205 = vpack.c.b16 %v10111, %v10109
    %v10206 = vpack.c.b16 %v10114, %v10112
    %v10207 = vpack.c.b16 %v10115, %v10113
    %v10208 = vpack.c.b16 %v10118, %v10116
    %v10209 = vpack.c.b16 %v10119, %v10117
    %v10210 = vpack.c.b16 %v10122, %v10120
    %v10211 = vpack.c.b16 %v10123, %v10121
    %v10212 = vpack.c.b16 %v10126, %v10124
    %v10213 = vpack.c.b16 %v10127, %v10125
    %v10214 = vpack.c.b16 %v10130, %v10128
    %v10215 = vpack.c.b16 %v10131, %v10129
    %v10216 = vpack.c.b16 %v10134, %v10132
    %v10217 = vpack.c.b16 %v10135, %v10133
    %v10218 = vpack.c.b16 %v10138, %v10136
    %v10219 = vpack.c.b16 %v10139, %v10137
    %v10220 = vpack.c.b16 %v10142, %v10140
    %v10221 = vpack.c.b16 %v10143, %v10141
    %v10222 = vpack.c.b16 %v10146, %v10144
    %v10223 = vpack.c.b16 %v10147, %v10145
    %v10224 = vpack.c.b16 %v10150, %v10148
    %v10225 = vpack.c.b16 %v10151, %v10149
    %v10226 = vpack.c.b16 %v10154, %v10152
    %v10227 = vpack.c.b16 %v10155, %v10153
    %v10228 = vpack.c.b16 %v10158, %v10156
    %v10229 = vpack.c.b16 %v10159, %v10157
    %v10230 = vpack.c.b16 %v10162, %v10160
    %v10231 = vpack.c.b16 %v10163, %v10161
    %v10232 = vpack.c.b16 %v10166, %v10164
    %v10233 = vpack.c.b16 %v10167, %v10165
    %v10234 = vpack.c.b16 %v10170, %v10168
    %v10235 = vpack.c.b16 %v10171, %v10169
    %10300 = vmatprep.subr.bf16.mxu0 %v10173
    %10301 = vmatpush1.bf16.msra.mxu0 %v10172
    %10302 = vmatprep.subr.bf16.mxu0 %v10175
    %10303 = vmatpush1.bf16.msra.mxu0 %v10174
    %10304 = vmatprep.subr.bf16.mxu0 %v10177
    %10305 = vmatpush1.bf16.msra.mxu0 %v10176
    %10306 = vmatprep.subr.bf16.mxu0 %v10179
    %10307 = vmatpush1.bf16.msra.mxu0 %v10178
    %10308 = vmatprep.subr.bf16.mxu0 %v10181
    %10309 = vmatpush1.bf16.msra.mxu0 %v10180
    %10310 = vmatprep.subr.bf16.mxu0 %v10183
    %10311 = vmatpush1.bf16.msra.mxu0 %v10182
    %10312 = vmatprep.subr.bf16.mxu0 %v10185
    %10313 = vmatpush1.bf16.msra.mxu0 %v10184
    %10314 = vmatprep.subr.bf16.mxu0 %v10187
    %10315 = vmatpush1.bf16.msra.mxu0 %v10186
    %10316 = vmatprep.subr.bf16.mxu0 %v10189
    %10317 = vmatpush1.bf16.msra.mxu0 %v10188
    %10318 = vmatprep.subr.bf16.mxu0 %v10191
    %10319 = vmatpush1.bf16.msra.mxu0 %v10190
    %10320 = vmatprep.subr.bf16.mxu0 %v10193
    %10321 = vmatpush1.bf16.msra.mxu0 %v10192
    %10322 = vmatprep.subr.bf16.mxu0 %v10195
    %10323 = vmatpush1.bf16.msra.mxu0 %v10194
    %10324 = vmatprep.subr.bf16.mxu0 %v10197
    %10325 = vmatpush1.bf16.msra.mxu0 %v10196
    %10326 = vmatprep.subr.bf16.mxu0 %v10199
    %10327 = vmatpush1.bf16.msra.mxu0 %v10198
    %10328 = vmatprep.subr.bf16.mxu0 %v10201
    %10329 = vmatpush1.bf16.msra.mxu0 %v10200
    %10330 = vmatprep.subr.bf16.mxu0 %v10203
    %10331 = vmatpush1.bf16.msra.mxu0 %v10202
    %10332 = vmatprep.mubr.bf16.mxu0 %v9901
    %10333 = vmatmul.mubr.bf16.gmra.mrb[0].mxu0 %v9900
    %v10334 = vpop.f32.mrb[0].mxu0
    %v10335 = vadd.f32 %v9973, %v10334
    %v10336 = vpop.f32.mrb[0].mxu0
    %v10337 = vadd.f32 %v9977, %v10336
    %v10338 = vpop.f32.mrb[0].mxu0
    %v10339 = vpop.f32.mrb[0].mxu0
    %10340 = vdwg.mxu0
    %10341 = vmatprep.subr.bf16.mxu0 %v10205
    %10342 = vmatpush1.bf16.msra.mxu0 %v10204
    %10343 = vmatprep.subr.bf16.mxu0 %v10207
    %10344 = vmatpush1.bf16.msra.mxu0 %v10206
    %10345 = vmatprep.subr.bf16.mxu0 %v10209
    %10346 = vmatpush1.bf16.msra.mxu0 %v10208
    %10347 = vmatprep.subr.bf16.mxu0 %v10211
    %10348 = vmatpush1.bf16.msra.mxu0 %v10210
    %10349 = vmatprep.subr.bf16.mxu0 %v10213
    %10350 = vmatpush1.bf16.msra.mxu0 %v10212
    %10351 = vmatprep.subr.bf16.mxu0 %v10215
    %10352 = vmatpush1.bf16.msra.mxu0 %v10214
    %10353 = vmatprep.subr.bf16.mxu0 %v10217
    %10354 = vmatpush1.bf16.msra.mxu0 %v10216
    %10355 = vmatprep.subr.bf16.mxu0 %v10219
    %10356 = vmatpush1.bf16.msra.mxu0 %v10218
    %10357 = vmatprep.subr.bf16.mxu0 %v10221
    %10358 = vmatpush1.bf16.msra.mxu0 %v10220
    %10359 = vmatprep.subr.bf16.mxu0 %v10223
    %10360 = vmatpush1.bf16.msra.mxu0 %v10222
    %10361 = vmatprep.subr.bf16.mxu0 %v10225
    %10362 = vmatpush1.bf16.msra.mxu0 %v10224
    %10363 = vmatprep.subr.bf16.mxu0 %v10227
    %10364 = vmatpush1.bf16.msra.mxu0 %v10226
    %10365 = vmatprep.subr.bf16.mxu0 %v10229
    %10366 = vmatpush1.bf16.msra.mxu0 %v10228
    %10367 = vmatprep.subr.bf16.mxu0 %v10231
    %10368 = vmatpush1.bf16.msra.mxu0 %v10230
    %10369 = vmatprep.subr.bf16.mxu0 %v10233
    %10370 = vmatpush1.bf16.msra.mxu0 %v10232
    %10371 = vmatprep.subr.bf16.mxu0 %v10235
    %10372 = vmatpush1.bf16.msra.mxu0 %v10234
    %10373 = vmatprep.mubr.bf16.mxu0 %v9903
    %10374 = vmatmul.mubr.bf16.gmra.mrb[0].mxu0 %v9902
    %v10375 = vpop.f32.mrb[0].mxu0
    %v10376 = vadd.f32 %v10335, %v10375
    %v10377 = vpop.f32.mrb[0].mxu0
    %v10378 = vadd.f32 %v10337, %v10377
    %v10379 = vpop.f32.mrb[0].mxu0
    %v10380 = vpop.f32.mrb[0].mxu0
    %10381 = vdwg.mxu0
    %v10382 = vmax.f32 %v10376, 0.0
    %v10383 = vmax.f32 %v10378, 0.0
    %v10384 = vpack.c.bf16 %v10382, %v10382
    %v10385 = vpack.c.bf16 %v10383, %v10383
    %v10386 = vld [vmem:[%s9] sm:$0xf]
    %v10387 = vld [vmem:[%s9 + $0x4] sm:$0xf]
    %v10388 = vld [vmem:[%s9 + $0x8] sm:$0xf]
    %v10389 = vld [vmem:[%s9 + $0xc] sm:$0xf]
    %v10390 = vld [vmem:[%s9 + $0x10] sm:$0xf]
    %v10391 = vld [vmem:[%s9 + $0x14] sm:$0xf]
    %v10392 = vld [vmem:[%s9 + $0x18] sm:$0xf]
    %v10393 = vld [vmem:[%s9 + $0x1c] sm:$0xf]
    %v10394 = vld [vmem:[%s9 + $0x20] sm:$0xf]
    %v10395 = vld [vmem:[%s9 + $0x24] sm:$0xf]
    %v10396 = vld [vmem:[%s9 + $0x28] sm:$0xf]
    %v10397 = vld [vmem:[%s9 + $0x2c] sm:$0xf]
    %v10398 = vld [vmem:[%s9 + $0x30] sm:$0xf]
    %v10399 = vld [vmem:[%s9 + $0x34] sm:$0xf]
    %v10400 = vld [vmem:[%s9 + $0x38] sm:$0xf]
    %v10401 = vld [vmem:[%s9 + $0x3c] sm:$0xf]
    %v10402 = vld [vmem:[%s9 + $0x40] sm:$0xf]
    %v10403 = vld [vmem:[%s9 + $0x44] sm:$0xf]
    %v10404 = vld [vmem:[%s9 + $0x48] sm:$0xf]
    %v10405 = vld [vmem:[%s9 + $0x4c] sm:$0xf]
    %v10406 = vld [vmem:[%s9 + $0x50] sm:$0xf]
    %v10407 = vld [vmem:[%s9 + $0x54] sm:$0xf]
    %v10408 = vld [vmem:[%s9 + $0x58] sm:$0xf]
    %v10409 = vld [vmem:[%s9 + $0x5c] sm:$0xf]
    %v10410 = vld [vmem:[%s9 + $0x60] sm:$0xf]
    %v10411 = vld [vmem:[%s9 + $0x64] sm:$0xf]
    %v10412 = vld [vmem:[%s9 + $0x68] sm:$0xf]
    %v10413 = vld [vmem:[%s9 + $0x6c] sm:$0xf]
    %v10414 = vld [vmem:[%s9 + $0x70] sm:$0xf]
    %v10415 = vld [vmem:[%s9 + $0x74] sm:$0xf]
    %v10416 = vld [vmem:[%s9 + $0x78] sm:$0xf]
    %v10417 = vld [vmem:[%s9 + $0x7c] sm:$0xf]
    %v10418 = vld [vmem:[#allocation18] sm:$0x1]
    %v10420 = vlaneseq
    %v10421 = vshrl.u32 %v10420, 7
    %v10422 = vsub.s32 0, %v10421
    %v10423 = vrot.slane %v10418, %v10422
    %v10457 = vunpack.c.l.b16 %v10386
    %v10458 = vunpack.c.l.b16 %v10387
    %v10459 = vunpack.c.l.b16 %v10388
    %v10460 = vunpack.c.l.b16 %v10389
    %v10461 = vunpack.c.l.b16 %v10390
    %v10462 = vunpack.c.l.b16 %v10391
    %v10463 = vunpack.c.l.b16 %v10392
    %v10464 = vunpack.c.l.b16 %v10393
    %v10465 = vunpack.c.l.b16 %v10394
    %v10466 = vunpack.c.l.b16 %v10395
    %v10467 = vunpack.c.l.b16 %v10396
    %v10468 = vunpack.c.l.b16 %v10397
    %v10469 = vunpack.c.l.b16 %v10398
    %v10470 = vunpack.c.l.b16 %v10399
    %v10471 = vunpack.c.l.b16 %v10400
    %v10472 = vunpack.c.l.b16 %v10401
    %v10473 = vunpack.c.l.b16 %v10402
    %v10474 = vunpack.c.l.b16 %v10403
    %v10475 = vunpack.c.l.b16 %v10404
    %v10476 = vunpack.c.l.b16 %v10405
    %v10477 = vunpack.c.l.b16 %v10406
    %v10478 = vunpack.c.l.b16 %v10407
    %v10479 = vunpack.c.l.b16 %v10408
    %v10480 = vunpack.c.l.b16 %v10409
    %v10481 = vunpack.c.l.b16 %v10410
    %v10482 = vunpack.c.l.b16 %v10411
    %v10483 = vunpack.c.l.b16 %v10412
    %v10484 = vunpack.c.l.b16 %v10413
    %v10485 = vunpack.c.l.b16 %v10414
    %v10486 = vunpack.c.l.b16 %v10415
    %v10487 = vunpack.c.l.b16 %v10416
    %v10488 = vunpack.c.l.b16 %v10417
    %v10489 = vpack.c.b16 %v10458, %v10457
    %v10490 = vpack.c.b16 %v10460, %v10459
    %v10491 = vpack.c.b16 %v10462, %v10461
    %v10492 = vpack.c.b16 %v10464, %v10463
    %v10493 = vpack.c.b16 %v10466, %v10465
    %v10494 = vpack.c.b16 %v10468, %v10467
    %v10495 = vpack.c.b16 %v10470, %v10469
    %v10496 = vpack.c.b16 %v10472, %v10471
    %v10497 = vpack.c.b16 %v10474, %v10473
    %v10498 = vpack.c.b16 %v10476, %v10475
    %v10499 = vpack.c.b16 %v10478, %v10477
    %v10500 = vpack.c.b16 %v10480, %v10479
    %v10501 = vpack.c.b16 %v10482, %v10481
    %v10502 = vpack.c.b16 %v10484, %v10483
    %v10503 = vpack.c.b16 %v10486, %v10485
    %v10504 = vpack.c.b16 %v10488, %v10487
    %10521 = vmatprep.subr.bf16.mxu0 0
    %10522 = vmatpush1.bf16.msra.mxu0 %v10489
    %10523 = vmatprep.subr.bf16.mxu0 0
    %10524 = vmatpush1.bf16.msra.mxu0 %v10490
    %10525 = vmatprep.subr.bf16.mxu0 0
    %10526 = vmatpush1.bf16.msra.mxu0 %v10491
    %10527 = vmatprep.subr.bf16.mxu0 0
    %10528 = vmatpush1.bf16.msra.mxu0 %v10492
    %10529 = vmatprep.subr.bf16.mxu0 0
    %10530 = vmatpush1.bf16.msra.mxu0 %v10493
    %10531 = vmatprep.subr.bf16.mxu0 0
    %10532 = vmatpush1.bf16.msra.mxu0 %v10494
    %10533 = vmatprep.subr.bf16.mxu0 0
    %10534 = vmatpush1.bf16.msra.mxu0 %v10495
    %10535 = vmatprep.subr.bf16.mxu0 0
    %10536 = vmatpush1.bf16.msra.mxu0 %v10496
    %10537 = vmatprep.subr.bf16.mxu0 0
    %10538 = vmatpush1.bf16.msra.mxu0 %v10497
    %10539 = vmatprep.subr.bf16.mxu0 0
    %10540 = vmatpush1.bf16.msra.mxu0 %v10498
    %10541 = vmatprep.subr.bf16.mxu0 0
    %10542 = vmatpush1.bf16.msra.mxu0 %v10499
    %10543 = vmatprep.subr.bf16.mxu0 0
    %10544 = vmatpush1.bf16.msra.mxu0 %v10500
    %10545 = vmatprep.subr.bf16.mxu0 0
    %10546 = vmatpush1.bf16.msra.mxu0 %v10501
    %10547 = vmatprep.subr.bf16.mxu0 0
    %10548 = vmatpush1.bf16.msra.mxu0 %v10502
    %10549 = vmatprep.subr.bf16.mxu0 0
    %10550 = vmatpush1.bf16.msra.mxu0 %v10503
    %10551 = vmatprep.subr.bf16.mxu0 0
    %10552 = vmatpush1.bf16.msra.mxu0 %v10504
    %10553 = vmatprep.mubr.bf16.mxu0 %v10385
    %10554 = vmatmul.mubr.bf16.gmra.mrb[0].mxu0 %v10384
    %v10555 = vpop.f32.mrb[0].mxu0
    %v10556 = vadd.f32 %v10423, %v10555
    %v10557 = vpop.f32.mrb[0].mxu0
    %v10558 = vpop.f32.mrb[0].mxu0
    %v10559 = vpop.f32.mrb[0].mxu0
    %10560 = vdwg.mxu0
    %v10561 = vmax.f32 %v10556, 0.0
    %v10562 = vpack.c.bf16 %v10561, %v10561
    %v10563 = vld [vmem:[%s11] sm:$0xf]
    %v10564 = vld [vmem:[%s11 + $0x4] sm:$0xf]
    %v10565 = vld [vmem:[%s11 + $0x8] sm:$0xf]
    %v10566 = vld [vmem:[%s11 + $0xc] sm:$0xf]
    %v10567 = vld [vmem:[%s11 + $0x10] sm:$0xf]
    %v10568 = vld [vmem:[%s11 + $0x14] sm:$0xf]
    %v10569 = vld [vmem:[%s11 + $0x18] sm:$0xf]
    %v10570 = vld [vmem:[%s11 + $0x1c] sm:$0xf]
    %v10571 = vld [vmem:[#allocation3] sm:$0x1]
    %v10573 = vlaneseq
    %v10574 = vshrl.u32 %v10573, 7
    %v10575 = vsub.s32 0, %v10574
    %v10576 = vrot.slane %v10571, %v10575
    %v10586 = vunpack.c.l.b16 %v10563
    %v10587 = vunpack.c.l.b16 %v10564
    %v10588 = vunpack.c.l.b16 %v10565
    %v10589 = vunpack.c.l.b16 %v10566
    %v10590 = vunpack.c.l.b16 %v10567
    %v10591 = vunpack.c.l.b16 %v10568
    %v10592 = vunpack.c.l.b16 %v10569
    %v10593 = vunpack.c.l.b16 %v10570
    %v10594 = vpack.c.b16 %v10587, %v10586
    %v10595 = vpack.c.b16 %v10589, %v10588
    %v10596 = vpack.c.b16 %v10591, %v10590
    %v10597 = vpack.c.b16 %v10593, %v10592
    %vm10602 = vcmask 523264
    %v10604 = vsel %vm10602, %v10562, 0
    %10606 = vmatprep.subr.bf16.mxu0 0
    %10607 = vmatpush1.bf16.msra.mxu0 %v10594
    %10608 = vmatprep.subr.bf16.mxu0 0
    %10609 = vmatpush1.bf16.msra.mxu0 %v10595
    %10610 = vmatprep.subr.bf16.mxu0 0
    %10611 = vmatpush1.bf16.msra.mxu0 %v10596
    %10612 = vmatprep.subr.bf16.mxu0 0
    %10613 = vmatpush1.bf16.msra.mxu0 %v10597
    %10614 = vmatprep.subr.bf16.mxu0 0
    %10615 = vmatpush1.bf16.msra.mxu0 0
    %10616 = vmatprep.subr.bf16.mxu0 0
    %10617 = vmatpush1.bf16.msra.mxu0 0
    %10618 = vmatprep.subr.bf16.mxu0 0
    %10619 = vmatpush1.bf16.msra.mxu0 0
    %10620 = vmatprep.subr.bf16.mxu0 0
    %10621 = vmatpush1.bf16.msra.mxu0 0
    %10622 = vmatprep.subr.bf16.mxu0 0
    %10623 = vmatpush1.bf16.msra.mxu0 0
    %10624 = vmatprep.subr.bf16.mxu0 0
    %10625 = vmatpush1.bf16.msra.mxu0 0
    %10626 = vmatprep.subr.bf16.mxu0 0
    %10627 = vmatpush1.bf16.msra.mxu0 0
    %10628 = vmatprep.subr.bf16.mxu0 0
    %10629 = vmatpush1.bf16.msra.mxu0 0
    %10630 = vmatprep.subr.bf16.mxu0 0
    %10631 = vmatpush1.bf16.msra.mxu0 0
    %10632 = vmatprep.subr.bf16.mxu0 0
    %10633 = vmatpush1.bf16.msra.mxu0 0
    %10634 = vmatprep.subr.bf16.mxu0 0
    %10635 = vmatpush1.bf16.msra.mxu0 0
    %10636 = vmatprep.subr.bf16.mxu0 0
    %10637 = vmatpush1.bf16.msra.mxu0 0
    %10638 = vmatprep.mubr.bf16.mxu0 0
    %10639 = vmatmul.mubr.bf16.gmra.mrb[0].mxu0 %v10604
    %v10640 = vpop.f32.mrb[0].mxu0
    %v10641 = vadd.f32 %v10576, %v10640
    %v10642 = vpop.f32.mrb[0].mxu0
    %v10643 = vpop.f32.mrb[0].mxu0
    %v10644 = vpop.f32.mrb[0].mxu0
    %10645 = vdwg.mxu0
    %v10646 = vxor.u32 %v10641, 2147483648
    %v10647 = vmul.f32 %v10646, 1.442695
    %v10648 = vpow.pop %v10647
    %v10649 = vadd.f32 %v10648, 1.0
    %v10650 = vrcp.pop %v10649
    %v10651 = vmul.f32 1.0, %v10650
    %vm10652 = vcmask 7168
    %10653 = vst.msk [vmem:[%s13] sm:$0xff] %vm10652, %v10651
    // Predicated region
    $region94: #{forward.1} parent=1 // pred_check
      _
    $region95: #{forward.1} parent=1 // pred_check_branch
      %10655 = sbr.rel (0) target = $region97
    $region96: #{forward.1} parent=1 // pred_region
      _
    $region97: #{forward.1} parent=1 // pred_fallthru
      _
    // Predicated region
    $region98: #{forward.1} parent=1 // pred_check
      _
    $region99: #{forward.1} parent=1 // pred_check_branch
      %10657 = sbr.rel (0) target = $region101
    $region100: #{forward.1} parent=1 // pred_region
      _
    $region101: #{forward.1} parent=1 // pred_fallthru
      _
    %10658 = vsyncpa [#allocation5], 1
    %10659 = vsyncpa [#allocation7], 1
    %10660 = vsyncpa [#allocation10], 1
    %10661 = vsyncpa [#allocation13], 1
    %10662 = vsyncpa [#allocation16], 1
    %10663 = vsyncpa [#allocation19], 1

</llo_original>
